<compile_context>
chip_gen: v7x
topology: tpu7x:2x2x1
jax: 0.10.0
libtpu: 0.0.40
codegen_flags: <defaults>
</compile_context>

<pallas_src>
import numpy as np
import jax
import jax.numpy as jnp
from jax.experimental import pallas as pl
from jax.experimental.pallas import tpu as pltpu

# ----------------------------- configuration ---------------------------------
IN_CHANNEL = 1
OUT_CHANNEL = 10
LAYERS = [1, 1, 1, 1]          # one BasicBlock per stage
EXPANSION = 1
BATCH = 2
LENGTH = 142                   # conv1 (k=15, no pad) -> 128, maxpool -> 64, strides -> 8
BN_EPS = 1e-5

K1 = 15                        # conv1 kernel size
L0 = LENGTH - K1 + 1           # 128 (conv1 output length)
LP = L0 // 2                   # 64  (after maxpool / layer1)
L2, L3, L4 = LP // 2, LP // 4, LP // 8   # 32, 16, 8
CONV1_KPAD = 128               # conv1 contraction (15) padded to a full lane tile
PAD_OFF = 8                    # aligned offset of logical row 0 inside padded scratch buffers


# ----------------------------- Pallas kernel ----------------------------------
def _fused_resnet_kernel(*refs):
    (xe_ref, xo_ref, w1_ref, b1_ref,
     wa1_ref, ba1_ref, wa2_ref, ba2_ref,
     s2m_ref, s2z_ref, s2p_ref, wb1_ref, bb1_ref, wb2_ref, bb2_ref, wbd_ref, bbd_ref,
     s3m_ref, s3z_ref, s3p_ref, wc1_ref, bc1_ref, wc2_ref, bc2_ref, wcd_ref, bcd_ref,
     s4m_ref, s4z_ref, s4p_ref, wd1_ref, bd1_ref, wd2_ref, bd2_ref, wdd_ref, bdd_ref,
     apool_ref, wfc_ref, bfc_ref,
     out_ref,
     pP_ref, pA_ref, pB_ref, pC_ref, pD_ref) = refs

    def dot32(a, b):
        return jnp.dot(a, b, preferred_element_type=jnp.float32)

    def store_padded(pref, val, L, C):
        # pref: (N, L+16, C). Logical row l of the activation lives at PAD_OFF + l,
        # with zero rows at PAD_OFF-1 and PAD_OFF+L (the pad=1 halo).
        zrow = jnp.zeros((BATCH, 1, C), jnp.float32)
        pref[:, PAD_OFF - 1:PAD_OFF, :] = zrow
        pref[:, PAD_OFF + L:PAD_OFF + L + 1, :] = zrow
        pref[:, PAD_OFF:PAD_OFF + L, :] = val.reshape(BATCH, L, C)

    def conv3_s1(pref, L, w_ref, b_ref):
        # K=3, stride=1, pad=1 conv as one (N*L, 3C) @ (3C, Cout) matmul.
        t0 = pref[:, PAD_OFF - 1:PAD_OFF - 1 + L, :]   # row l-1
        t1 = pref[:, PAD_OFF:PAD_OFF + L, :]           # row l
        t2 = pref[:, PAD_OFF + 1:PAD_OFF + 1 + L, :]   # row l+1
        col = jnp.concatenate([t0, t1, t2], axis=-1)   # (N, L, 3C)
        col = col.reshape(BATCH * L, col.shape[-1]).astype(jnp.bfloat16)
        return dot32(col, w_ref[...]) + b_ref[...]

    def conv3_s2(u, sm_ref, sz_ref, sp_ref, w_ref, b_ref):
        # K=3, stride=2, pad=1 conv on value u (N*Lin, C): row selection (rows 2l-1, 2l, 2l+1)
        # via exact 0/1 selection matrices on the MXU, then one (N*Lout, 3C) @ (3C, Cout) matmul.
        tm1 = dot32(sm_ref[...], u)
        tz = dot32(sz_ref[...], u)
        tp1 = dot32(sp_ref[...], u)
        col = jnp.concatenate([tm1, tz, tp1], axis=-1).astype(jnp.bfloat16)
        return dot32(col, w_ref[...]) + b_ref[...], tz

    # ---- conv1 (k=15) + BN + ReLU + MaxPool(2,2), via even/odd output positions ----
    he = dot32(xe_ref[...], w1_ref[...]) + b1_ref[...]       # (N*64, 64)
    ho = dot32(xo_ref[...], w1_ref[...]) + b1_ref[...]
    act = jnp.maximum(jnp.maximum(he, ho), 0.0)              # maxpool∘relu (relu is monotone)

    # ---- layer1: BasicBlock(64 -> 64, stride 1, no downsample) ----
    store_padded(pP_ref, act, LP, 64)
    h = jnp.maximum(conv3_s1(pP_ref, LP, wa1_ref, ba1_ref), 0.0)
    # TODO(synk): DropBlock1d would act here (training-only; identity at inference).
    store_padded(pA_ref, h, LP, 64)
    z = conv3_s1(pA_ref, LP, wa2_ref, ba2_ref)
    act = jnp.maximum(z + act, 0.0)                          # (N*64, 64)

    # ---- layer2: BasicBlock(64 -> 128, stride 2, conv1x1 downsample) ----
    h, tz = conv3_s2(act, s2m_ref, s2z_ref, s2p_ref, wb1_ref, bb1_ref)
    h = jnp.maximum(h, 0.0)
    store_padded(pB_ref, h, L2, 128)
    z = conv3_s1(pB_ref, L2, wb2_ref, bb2_ref)
    idn = dot32(tz.astype(jnp.bfloat16), wbd_ref[...]) + bbd_ref[...]
    act = jnp.maximum(z + idn, 0.0)                          # (N*32, 128)

    # ---- layer3: BasicBlock(128 -> 256, stride 2) ----
    h, tz = conv3_s2(act, s3m_ref, s3z_ref, s3p_ref, wc1_ref, bc1_ref)
    h = jnp.maximum(h, 0.0)
    store_padded(pC_ref, h, L3, 256)
    z = conv3_s1(pC_ref, L3, wc2_ref, bc2_ref)
    idn = dot32(tz.astype(jnp.bfloat16), wcd_ref[...]) + bcd_ref[...]
    act = jnp.maximum(z + idn, 0.0)                          # (N*16, 256)

    # ---- layer4: BasicBlock(256 -> 512, stride 2) ----
    h, tz = conv3_s2(act, s4m_ref, s4z_ref, s4p_ref, wd1_ref, bd1_ref)
    h = jnp.maximum(h, 0.0)
    store_padded(pD_ref, h, L4, 512)
    z = conv3_s1(pD_ref, L4, wd2_ref, bd2_ref)
    idn = dot32(tz.astype(jnp.bfloat16), wdd_ref[...]) + bdd_ref[...]
    act = jnp.maximum(z + idn, 0.0)                          # (N*8, 512)

    # ---- head: AdaptiveAvgPool1d(1) + flatten + Linear ----
    pooled = dot32(apool_ref[...], act)                      # (N, 512) per-sample mean over L
    out_ref[...] = dot32(pooled, wfc_ref[...]) + bfc_ref[...]


# ----------------------------- parameters -------------------------------------
def bn_init(c):
    return dict(
        gamma=jnp.ones((c,), jnp.float32),
        beta=jnp.zeros((c,), jnp.float32),
        mean=jnp.zeros((c,), jnp.float32),
        var=jnp.ones((c,), jnp.float32),
    )


def kaiming_conv(key, cout, cin, k):
    # kaiming_normal_(mode='fan_out', nonlinearity='relu') for Conv1d
    fan_out = cout * k
    std = (2.0 / fan_out) ** 0.5
    return jax.random.normal(key, (cout, cin, k), jnp.float32) * std


def init_params(key):
    keys = iter(jax.random.split(key, 64))
    params = {
        "conv1_w": kaiming_conv(next(keys), 64, IN_CHANNEL, K1),
        "bn1": bn_init(64),
        "layers": [],
    }
    inplanes = 64
    stage_cfg = [(64, LAYERS[0], 1), (128, LAYERS[1], 2),
                 (256, LAYERS[2], 2), (512, LAYERS[3], 2)]
    for planes, blocks, stride in stage_cfg:
        layer = []
        for bidx in range(blocks):
            s = stride if bidx == 0 else 1
            bp = {
                "w1": kaiming_conv(next(keys), planes, inplanes, 3),
                "bn1": bn_init(planes),
                "w2": kaiming_conv(next(keys), planes, planes, 3),
                "bn2": bn_init(planes),
                "stride": s,
            }
            if s != 1 or inplanes != planes * EXPANSION:
                bp["down_w"] = kaiming_conv(next(keys), planes * EXPANSION, inplanes, 1)
                bp["down_bn"] = bn_init(planes * EXPANSION)
            layer.append(bp)
            inplanes = planes * EXPANSION
        params["layers"].append(layer)
    lim = 1.0 / (512 * EXPANSION) ** 0.5
    params["fc_w"] = jax.random.uniform(next(keys), (OUT_CHANNEL, 512 * EXPANSION),
                                        jnp.float32, -lim, lim)
    params["fc_b"] = jax.random.uniform(next(keys), (OUT_CHANNEL,),
                                        jnp.float32, -lim, lim)
    return params


# ----------------------------- parameter preparation ---------------------------
def _fold_bn(bn):
    scale = bn["gamma"] / jnp.sqrt(bn["var"] + BN_EPS)
    shift = bn["beta"] - bn["mean"] * scale
    return scale, shift


def _prep_conv(w, bn):
    """(Cout, Cin, K) torch-layout conv + BN -> bf16 (K*Cin, Cout) weight, f32 (1, Cout) bias."""
    cout, cin, k = w.shape
    scale, shift = _fold_bn(bn)
    wf = jnp.transpose(w, (2, 1, 0)).reshape(k * cin, cout) * scale[None, :]
    return wf.astype(jnp.bfloat16), shift.reshape(1, cout).astype(jnp.float32)


def _make_sel(lout, lin):
    """0/1 row-selection matrices (N*lout, N*lin) picking rows 2l-1 / 2l / 2l+1 per sample."""
    rows, cols = BATCH * lout, BATCH * lin
    sm = np.zeros((rows, cols), np.float32)
    sz = np.zeros((rows, cols), np.float32)
    sp = np.zeros((rows, cols), np.float32)
    r = np.arange(rows)
    sz[r, 2 * r] = 1.0
    sp[r, 2 * r + 1] = 1.0
    keep = (r % lout) != 0                 # l == 0 row stays all-zero (the pad=1 halo)
    sm[r[keep], 2 * r[keep] - 1] = 1.0
    return jnp.asarray(sm), jnp.asarray(sz), jnp.asarray(sp)


def prepare_params(params):
    """One-time host-side prep: fold BN, flatten/transpose weights, build selection matrices."""
    # conv1: fold BN, flatten taps, pad contraction 15 -> 128 for lane density.
    w1f, b1 = _prep_conv(params["conv1_w"], params["bn1"])
    w1p = jnp.zeros((CONV1_KPAD, 64), jnp.bfloat16).at[:K1 * IN_CHANNEL, :].set(w1f)

    l1 = params["layers"][0][0]
    l2b = params["layers"][1][0]
    l3b = params["layers"][2][0]
    l4b = params["layers"][3][0]

    wa1, ba1 = _prep_conv(l1["w1"], l1["bn1"])
    wa2, ba2 = _prep_conv(l1["w2"], l1["bn2"])
    wb1, bb1 = _prep_conv(l2b["w1"], l2b["bn1"])
    wb2, bb2 = _prep_conv(l2b["w2"], l2b["bn2"])
    wbd, bbd = _prep_conv(l2b["down_w"], l2b["down_bn"])
    wc1, bc1 = _prep_conv(l3b["w1"], l3b["bn1"])
    wc2, bc2 = _prep_conv(l3b["w2"], l3b["bn2"])
    wcd, bcd = _prep_conv(l3b["down_w"], l3b["down_bn"])
    wd1, bd1 = _prep_conv(l4b["w1"], l4b["bn1"])
    wd2, bd2 = _prep_conv(l4b["w2"], l4b["bn2"])
    wdd, bdd = _prep_conv(l4b["down_w"], l4b["down_bn"])

    s2m, s2z, s2p = _make_sel(L2, LP)
    s3m, s3z, s3p = _make_sel(L3, L2)
    s4m, s4z, s4p = _make_sel(L4, L3)

    # AdaptiveAvgPool1d(1) over L4 positions as a per-sample averaging matrix.
    apool = np.zeros((BATCH, BATCH * L4), np.float32)
    for n in range(BATCH):
        apool[n, n * L4:(n + 1) * L4] = 1.0 / L4
    apool = jnp.asarray(apool)

    wfc = jnp.transpose(params["fc_w"]).astype(jnp.float32)      # (512, 10)
    bfc = params["fc_b"].reshape(1, OUT_CHANNEL).astype(jnp.float32)

    return (w1p, b1,
            wa1, ba1, wa2, ba2,
            s2m, s2z, s2p, wb1, bb1, wb2, bb2, wbd, bbd,
            s3m, s3z, s3p, wc1, bc1, wc2, bc2, wcd, bcd,
            s4m, s4z, s4p, wd1, bd1, wd2, bd2, wdd, bdd,
            apool, wfc, bfc)


# ----------------------------- forward pass ------------------------------------
def _conv1_im2col(x_ncl):
    """(N, 1, 142) -> bf16 im2col windows for conv1 (k=15) at even/odd output positions."""
    xs = x_ncl[:, 0, :]                                                    # (N, 142); Cin == 1
    cols = jnp.stack([xs[:, j:j + L0] for j in range(K1)], axis=-1)        # (N, 128, 15)
    xe = cols[:, 0::2, :].reshape(BATCH * LP, K1)
    xo = cols[:, 1::2, :].reshape(BATCH * LP, K1)
    pad = ((0, 0), (0, CONV1_KPAD - K1))
    return (jnp.pad(xe, pad).astype(jnp.bfloat16),
            jnp.pad(xo, pad).astype(jnp.bfloat16))


@jax.jit
def forward(prep, x_ncl):
    xe, xo = _conv1_im2col(x_ncl)
    args = (xe, xo) + prep
    return pl.pallas_call(
        _fused_resnet_kernel,
        out_shape=jax.ShapeDtypeStruct((BATCH, OUT_CHANNEL), jnp.float32),
        scratch_shapes=[
            pltpu.VMEM((BATCH, LP + 16, 64), jnp.float32),    # layer1 input (padded)
            pltpu.VMEM((BATCH, LP + 16, 64), jnp.float32),    # layer1 mid
            pltpu.VMEM((BATCH, L2 + 16, 128), jnp.float32),   # layer2 mid
            pltpu.VMEM((BATCH, L3 + 16, 256), jnp.float32),   # layer3 mid
            pltpu.VMEM((BATCH, L4 + 16, 512), jnp.float32),   # layer4 mid
        ],
    )(*args)


# ----------------------------- main ---------------------------------------------
if __name__ == "__main__":
    key = jax.random.PRNGKey(0)
    k_param, k_x = jax.random.split(key)
    params = init_params(k_param)
    prep = prepare_params(params)                                  # one-time weight prep
    x = jax.random.normal(k_x, (BATCH, IN_CHANNEL, LENGTH), jnp.float32)  # PyTorch NCL input

    y = forward(prep, x)
    y = jax.block_until_ready(y)

    assert y.shape == (BATCH, OUT_CHANNEL), y.shape
    assert bool(jnp.all(jnp.isfinite(y)))
    print("KERNEL_OK")
</pallas_src>

<mosaic_0001>
module attributes {stable_mosaic.version = 11 : i64} {
  func.func @_fused_resnet_kernel(%arg0: memref<128x128xbf16, #tpu.memory_space<vmem>>, %arg1: memref<128x128xbf16, #tpu.memory_space<vmem>>, %arg2: memref<128x64xbf16, #tpu.memory_space<vmem>>, %arg3: memref<1x64xf32, #tpu.memory_space<vmem>>, %arg4: memref<192x64xbf16, #tpu.memory_space<vmem>>, %arg5: memref<1x64xf32, #tpu.memory_space<vmem>>, %arg6: memref<192x64xbf16, #tpu.memory_space<vmem>>, %arg7: memref<1x64xf32, #tpu.memory_space<vmem>>, %arg8: memref<64x128xf32, #tpu.memory_space<vmem>>, %arg9: memref<64x128xf32, #tpu.memory_space<vmem>>, %arg10: memref<64x128xf32, #tpu.memory_space<vmem>>, %arg11: memref<192x128xbf16, #tpu.memory_space<vmem>>, %arg12: memref<1x128xf32, #tpu.memory_space<vmem>>, %arg13: memref<384x128xbf16, #tpu.memory_space<vmem>>, %arg14: memref<1x128xf32, #tpu.memory_space<vmem>>, %arg15: memref<64x128xbf16, #tpu.memory_space<vmem>>, %arg16: memref<1x128xf32, #tpu.memory_space<vmem>>, %arg17: memref<32x64xf32, #tpu.memory_space<vmem>>, %arg18: memref<32x64xf32, #tpu.memory_space<vmem>>, %arg19: memref<32x64xf32, #tpu.memory_space<vmem>>, %arg20: memref<384x256xbf16, #tpu.memory_space<vmem>>, %arg21: memref<1x256xf32, #tpu.memory_space<vmem>>, %arg22: memref<768x256xbf16, #tpu.memory_space<vmem>>, %arg23: memref<1x256xf32, #tpu.memory_space<vmem>>, %arg24: memref<128x256xbf16, #tpu.memory_space<vmem>>, %arg25: memref<1x256xf32, #tpu.memory_space<vmem>>, %arg26: memref<16x32xf32, #tpu.memory_space<vmem>>, %arg27: memref<16x32xf32, #tpu.memory_space<vmem>>, %arg28: memref<16x32xf32, #tpu.memory_space<vmem>>, %arg29: memref<768x512xbf16, #tpu.memory_space<vmem>>, %arg30: memref<1x512xf32, #tpu.memory_space<vmem>>, %arg31: memref<1536x512xbf16, #tpu.memory_space<vmem>>, %arg32: memref<1x512xf32, #tpu.memory_space<vmem>>, %arg33: memref<256x512xbf16, #tpu.memory_space<vmem>>, %arg34: memref<1x512xf32, #tpu.memory_space<vmem>>, %arg35: memref<2x16xf32, #tpu.memory_space<vmem>>, %arg36: memref<512x10xf32, #tpu.memory_space<vmem>>, %arg37: memref<1x10xf32, #tpu.memory_space<vmem>>, %arg38: memref<2x10xf32, #tpu.memory_space<vmem>>, %arg39: memref<2x80x64xf32, #tpu.memory_space<vmem>>, %arg40: memref<2x80x64xf32, #tpu.memory_space<vmem>>, %arg41: memref<2x48x128xf32, #tpu.memory_space<vmem>>, %arg42: memref<2x32x256xf32, #tpu.memory_space<vmem>>, %arg43: memref<2x24x512xf32, #tpu.memory_space<vmem>>) attributes {dimension_semantics = [], scalar_prefetch = 0 : i64, scratch_operands = 5 : i64, tpu.core_type = #tpu.core_type<tc>} {
    %c0 = arith.constant 0 : index
    %c0_0 = arith.constant 0 : index
    %0 = vector.load %arg0[%c0, %c0_0] : memref<128x128xbf16, #tpu.memory_space<vmem>>, vector<128x128xbf16>
    %c0_1 = arith.constant 0 : index
    %c0_2 = arith.constant 0 : index
    %1 = vector.load %arg2[%c0_1, %c0_2] : memref<128x64xbf16, #tpu.memory_space<vmem>>, vector<128x64xbf16>
    %cst = arith.constant dense<0.000000e+00> : vector<128x64xf32>
    %2 = tpu.matmul %0, %1, %cst {dimension_numbers = #tpu.dot_dimension_numbers<[1], [0], [0], [1], [0, 0, 1, 1], [], []>} : vector<128x128xbf16>, vector<128x64xbf16>, vector<128x64xf32> -> vector<128x64xf32>
    %c0_3 = arith.constant 0 : index
    %c0_4 = arith.constant 0 : index
    %3 = vector.load %arg3[%c0_3, %c0_4] : memref<1x64xf32, #tpu.memory_space<vmem>>, vector<1x64xf32>
    %4 = vector.broadcast %3 : vector<1x64xf32> to vector<128x64xf32>
    %5 = arith.addf %2, %4 : vector<128x64xf32>
    %c0_5 = arith.constant 0 : index
    %c0_6 = arith.constant 0 : index
    %6 = vector.load %arg1[%c0_5, %c0_6] : memref<128x128xbf16, #tpu.memory_space<vmem>>, vector<128x128xbf16>
    %c0_7 = arith.constant 0 : index
    %c0_8 = arith.constant 0 : index
    %7 = vector.load %arg2[%c0_7, %c0_8] : memref<128x64xbf16, #tpu.memory_space<vmem>>, vector<128x64xbf16>
    %cst_9 = arith.constant dense<0.000000e+00> : vector<128x64xf32>
    %8 = tpu.matmul %6, %7, %cst_9 {dimension_numbers = #tpu.dot_dimension_numbers<[1], [0], [0], [1], [0, 0, 1, 1], [], []>} : vector<128x128xbf16>, vector<128x64xbf16>, vector<128x64xf32> -> vector<128x64xf32>
    %c0_10 = arith.constant 0 : index
    %c0_11 = arith.constant 0 : index
    %9 = vector.load %arg3[%c0_10, %c0_11] : memref<1x64xf32, #tpu.memory_space<vmem>>, vector<1x64xf32>
    %10 = vector.broadcast %9 : vector<1x64xf32> to vector<128x64xf32>
    %11 = arith.addf %8, %10 : vector<128x64xf32>
    %12 = arith.maximumf %5, %11 : vector<128x64xf32>
    %cst_12 = arith.constant 0.000000e+00 : f32
    %13 = vector.broadcast %cst_12 : f32 to vector<128x64xf32>
    %14 = arith.maximumf %12, %13 : vector<128x64xf32>
    %cst_13 = arith.constant 0.000000e+00 : f32
    %15 = vector.broadcast %cst_13 : f32 to vector<2x1x64xf32>
    %c0_14 = arith.constant 0 : index
    %c7 = arith.constant 7 : index
    %c0_15 = arith.constant 0 : index
    %16 = vector.load %arg39[%c0_14, %c7, %c0_15] : memref<2x80x64xf32, #tpu.memory_space<vmem>>, vector<2x1x64xf32>
    tpu.vector_store %arg39[%c0_14, %c7, %c0_15], %15 {strides = array<i32>} : memref<2x80x64xf32, #tpu.memory_space<vmem>>, vector<2x1x64xf32>,
    %c0_16 = arith.constant 0 : index
    %c72 = arith.constant 72 : index
    %c0_17 = arith.constant 0 : index
    %17 = vector.load %arg39[%c0_16, %c72, %c0_17] : memref<2x80x64xf32, #tpu.memory_space<vmem>>, vector<2x1x64xf32>
    tpu.vector_store %arg39[%c0_16, %c72, %c0_17], %15 {strides = array<i32>} : memref<2x80x64xf32, #tpu.memory_space<vmem>>, vector<2x1x64xf32>,
    %18 = vector.shape_cast %14 : vector<128x64xf32> to vector<2x64x64xf32>
    %c0_18 = arith.constant 0 : index
    %c8 = arith.constant 8 : index
    %c0_19 = arith.constant 0 : index
    %19 = vector.load %arg39[%c0_18, %c8, %c0_19] : memref<2x80x64xf32, #tpu.memory_space<vmem>>, vector<2x64x64xf32>
    tpu.vector_store %arg39[%c0_18, %c8, %c0_19], %18 {strides = array<i32>} : memref<2x80x64xf32, #tpu.memory_space<vmem>>, vector<2x64x64xf32>,
    %c0_20 = arith.constant 0 : index
    %c7_21 = arith.constant 7 : index
    %c0_22 = arith.constant 0 : index
    %20 = vector.load %arg39[%c0_20, %c7_21, %c0_22] : memref<2x80x64xf32, #tpu.memory_space<vmem>>, vector<2x64x64xf32>
    %c0_23 = arith.constant 0 : index
    %c8_24 = arith.constant 8 : index
    %c0_25 = arith.constant 0 : index
    %21 = vector.load %arg39[%c0_23, %c8_24, %c0_25] : memref<2x80x64xf32, #tpu.memory_space<vmem>>, vector<2x64x64xf32>
    %c0_26 = arith.constant 0 : index
    %c9 = arith.constant 9 : index
    %c0_27 = arith.constant 0 : index
    %22 = vector.load %arg39[%c0_26, %c9, %c0_27] : memref<2x80x64xf32, #tpu.memory_space<vmem>>, vector<2x64x64xf32>
    %23 = tpu.concatenate %20, %21, %22 in 2 : vector<2x64x64xf32>, vector<2x64x64xf32>, vector<2x64x64xf32> -> vector<2x64x192xf32>
    %24 = vector.shape_cast %23 : vector<2x64x192xf32> to vector<128x192xf32>
    %25 = arith.truncf %24 : vector<128x192xf32> to vector<128x192xbf16>
    %c0_28 = arith.constant 0 : index
    %c0_29 = arith.constant 0 : index
    %26 = vector.load %arg4[%c0_28, %c0_29] : memref<192x64xbf16, #tpu.memory_space<vmem>>, vector<192x64xbf16>
    %cst_30 = arith.constant dense<0.000000e+00> : vector<128x64xf32>
    %27 = tpu.matmul %25, %26, %cst_30 {dimension_numbers = #tpu.dot_dimension_numbers<[1], [0], [0], [1], [0, 0, 1, 1], [], []>} : vector<128x192xbf16>, vector<192x64xbf16>, vector<128x64xf32> -> vector<128x64xf32>
    %c0_31 = arith.constant 0 : index
    %c0_32 = arith.constant 0 : index
    %28 = vector.load %arg5[%c0_31, %c0_32] : memref<1x64xf32, #tpu.memory_space<vmem>>, vector<1x64xf32>
    %29 = vector.broadcast %28 : vector<1x64xf32> to vector<128x64xf32>
    %30 = arith.addf %27, %29 : vector<128x64xf32>
    %cst_33 = arith.constant 0.000000e+00 : f32
    %31 = vector.broadcast %cst_33 : f32 to vector<128x64xf32>
    %32 = arith.maximumf %30, %31 : vector<128x64xf32>
    %cst_34 = arith.constant 0.000000e+00 : f32
    %33 = vector.broadcast %cst_34 : f32 to vector<2x1x64xf32>
    %c0_35 = arith.constant 0 : index
    %c7_36 = arith.constant 7 : index
    %c0_37 = arith.constant 0 : index
    %34 = vector.load %arg40[%c0_35, %c7_36, %c0_37] : memref<2x80x64xf32, #tpu.memory_space<vmem>>, vector<2x1x64xf32>
    tpu.vector_store %arg40[%c0_35, %c7_36, %c0_37], %33 {strides = array<i32>} : memref<2x80x64xf32, #tpu.memory_space<vmem>>, vector<2x1x64xf32>,
    %c0_38 = arith.constant 0 : index
    %c72_39 = arith.constant 72 : index
    %c0_40 = arith.constant 0 : index
    %35 = vector.load %arg40[%c0_38, %c72_39, %c0_40] : memref<2x80x64xf32, #tpu.memory_space<vmem>>, vector<2x1x64xf32>
    tpu.vector_store %arg40[%c0_38, %c72_39, %c0_40], %33 {strides = array<i32>} : memref<2x80x64xf32, #tpu.memory_space<vmem>>, vector<2x1x64xf32>,
    %36 = vector.shape_cast %32 : vector<128x64xf32> to vector<2x64x64xf32>
    %c0_41 = arith.constant 0 : index
    %c8_42 = arith.constant 8 : index
    %c0_43 = arith.constant 0 : index
    %37 = vector.load %arg40[%c0_41, %c8_42, %c0_43] : memref<2x80x64xf32, #tpu.memory_space<vmem>>, vector<2x64x64xf32>
    tpu.vector_store %arg40[%c0_41, %c8_42, %c0_43], %36 {strides = array<i32>} : memref<2x80x64xf32, #tpu.memory_space<vmem>>, vector<2x64x64xf32>,
    %c0_44 = arith.constant 0 : index
    %c7_45 = arith.constant 7 : index
    %c0_46 = arith.constant 0 : index
    %38 = vector.load %arg40[%c0_44, %c7_45, %c0_46] : memref<2x80x64xf32, #tpu.memory_space<vmem>>, vector<2x64x64xf32>
    %c0_47 = arith.constant 0 : index
    %c8_48 = arith.constant 8 : index
    %c0_49 = arith.constant 0 : index
    %39 = vector.load %arg40[%c0_47, %c8_48, %c0_49] : memref<2x80x64xf32, #tpu.memory_space<vmem>>, vector<2x64x64xf32>
    %c0_50 = arith.constant 0 : index
    %c9_51 = arith.constant 9 : index
    %c0_52 = arith.constant 0 : index
    %40 = vector.load %arg40[%c0_50, %c9_51, %c0_52] : memref<2x80x64xf32, #tpu.memory_space<vmem>>, vector<2x64x64xf32>
    %41 = tpu.concatenate %38, %39, %40 in 2 : vector<2x64x64xf32>, vector<2x64x64xf32>, vector<2x64x64xf32> -> vector<2x64x192xf32>
    %42 = vector.shape_cast %41 : vector<2x64x192xf32> to vector<128x192xf32>
    %43 = arith.truncf %42 : vector<128x192xf32> to vector<128x192xbf16>
    %c0_53 = arith.constant 0 : index
    %c0_54 = arith.constant 0 : index
    %44 = vector.load %arg6[%c0_53, %c0_54] : memref<192x64xbf16, #tpu.memory_space<vmem>>, vector<192x64xbf16>
    %cst_55 = arith.constant dense<0.000000e+00> : vector<128x64xf32>
    %45 = tpu.matmul %43, %44, %cst_55 {dimension_numbers = #tpu.dot_dimension_numbers<[1], [0], [0], [1], [0, 0, 1, 1], [], []>} : vector<128x192xbf16>, vector<192x64xbf16>, vector<128x64xf32> -> vector<128x64xf32>
    %c0_56 = arith.constant 0 : index
    %c0_57 = arith.constant 0 : index
    %46 = vector.load %arg7[%c0_56, %c0_57] : memref<1x64xf32, #tpu.memory_space<vmem>>, vector<1x64xf32>
    %47 = vector.broadcast %46 : vector<1x64xf32> to vector<128x64xf32>
    %48 = arith.addf %45, %47 : vector<128x64xf32>
    %49 = arith.addf %48, %14 : vector<128x64xf32>
    %cst_58 = arith.constant 0.000000e+00 : f32
    %50 = vector.broadcast %cst_58 : f32 to vector<128x64xf32>
    %51 = arith.maximumf %49, %50 : vector<128x64xf32>
    %c0_59 = arith.constant 0 : index
    %c0_60 = arith.constant 0 : index
    %52 = vector.load %arg8[%c0_59, %c0_60] : memref<64x128xf32, #tpu.memory_space<vmem>>, vector<64x128xf32>
    %cst_61 = arith.constant dense<0.000000e+00> : vector<64x64xf32>
    %53 = tpu.matmul %52, %51, %cst_61 {dimension_numbers = #tpu.dot_dimension_numbers<[1], [0], [0], [1], [0, 0, 1, 1], [], []>} : vector<64x128xf32>, vector<128x64xf32>, vector<64x64xf32> -> vector<64x64xf32>
    %c0_62 = arith.constant 0 : index
    %c0_63 = arith.constant 0 : index
    %54 = vector.load %arg9[%c0_62, %c0_63] : memref<64x128xf32, #tpu.memory_space<vmem>>, vector<64x128xf32>
    %cst_64 = arith.constant dense<0.000000e+00> : vector<64x64xf32>
    %55 = tpu.matmul %54, %51, %cst_64 {dimension_numbers = #tpu.dot_dimension_numbers<[1], [0], [0], [1], [0, 0, 1, 1], [], []>} : vector<64x128xf32>, vector<128x64xf32>, vector<64x64xf32> -> vector<64x64xf32>
    %c0_65 = arith.constant 0 : index
    %c0_66 = arith.constant 0 : index
    %56 = vector.load %arg10[%c0_65, %c0_66] : memref<64x128xf32, #tpu.memory_space<vmem>>, vector<64x128xf32>
    %cst_67 = arith.constant dense<0.000000e+00> : vector<64x64xf32>
    %57 = tpu.matmul %56, %51, %cst_67 {dimension_numbers = #tpu.dot_dimension_numbers<[1], [0], [0], [1], [0, 0, 1, 1], [], []>} : vector<64x128xf32>, vector<128x64xf32>, vector<64x64xf32> -> vector<64x64xf32>
    %58 = tpu.concatenate %53, %55, %57 in 1 : vector<64x64xf32>, vector<64x64xf32>, vector<64x64xf32> -> vector<64x192xf32>
    %59 = arith.truncf %58 : vector<64x192xf32> to vector<64x192xbf16>
    %c0_68 = arith.constant 0 : index
    %c0_69 = arith.constant 0 : index
    %60 = vector.load %arg11[%c0_68, %c0_69] : memref<192x128xbf16, #tpu.memory_space<vmem>>, vector<192x128xbf16>
    %cst_70 = arith.constant dense<0.000000e+00> : vector<64x128xf32>
    %61 = tpu.matmul %59, %60, %cst_70 {dimension_numbers = #tpu.dot_dimension_numbers<[1], [0], [0], [1], [0, 0, 1, 1], [], []>} : vector<64x192xbf16>, vector<192x128xbf16>, vector<64x128xf32> -> vector<64x128xf32>
    %c0_71 = arith.constant 0 : index
    %c0_72 = arith.constant 0 : index
    %62 = vector.load %arg12[%c0_71, %c0_72] : memref<1x128xf32, #tpu.memory_space<vmem>>, vector<1x128xf32>
    %63 = vector.broadcast %62 : vector<1x128xf32> to vector<64x128xf32>
    %64 = arith.addf %61, %63 : vector<64x128xf32>
    %cst_73 = arith.constant 0.000000e+00 : f32
    %65 = vector.broadcast %cst_73 : f32 to vector<64x128xf32>
    %66 = arith.maximumf %64, %65 : vector<64x128xf32>
    %cst_74 = arith.constant 0.000000e+00 : f32
    %67 = vector.broadcast %cst_74 : f32 to vector<2x1x128xf32>
    %c0_75 = arith.constant 0 : index
    %c7_76 = arith.constant 7 : index
    %c0_77 = arith.constant 0 : index
    %68 = vector.load %arg41[%c0_75, %c7_76, %c0_77] : memref<2x48x128xf32, #tpu.memory_space<vmem>>, vector<2x1x128xf32>
    tpu.vector_store %arg41[%c0_75, %c7_76, %c0_77], %67 {strides = array<i32>} : memref<2x48x128xf32, #tpu.memory_space<vmem>>, vector<2x1x128xf32>,
    %c0_78 = arith.constant 0 : index
    %c40 = arith.constant 40 : index
    %c0_79 = arith.constant 0 : index
    %69 = vector.load %arg41[%c0_78, %c40, %c0_79] : memref<2x48x128xf32, #tpu.memory_space<vmem>>, vector<2x1x128xf32>
    tpu.vector_store %arg41[%c0_78, %c40, %c0_79], %67 {strides = array<i32>} : memref<2x48x128xf32, #tpu.memory_space<vmem>>, vector<2x1x128xf32>,
    %70 = vector.shape_cast %66 : vector<64x128xf32> to vector<2x32x128xf32>
    %c0_80 = arith.constant 0 : index
    %c8_81 = arith.constant 8 : index
    %c0_82 = arith.constant 0 : index
    %71 = vector.load %arg41[%c0_80, %c8_81, %c0_82] : memref<2x48x128xf32, #tpu.memory_space<vmem>>, vector<2x32x128xf32>
    tpu.vector_store %arg41[%c0_80, %c8_81, %c0_82], %70 {strides = array<i32>} : memref<2x48x128xf32, #tpu.memory_space<vmem>>, vector<2x32x128xf32>,
    %c0_83 = arith.constant 0 : index
    %c7_84 = arith.constant 7 : index
    %c0_85 = arith.constant 0 : index
    %72 = vector.load %arg41[%c0_83, %c7_84, %c0_85] : memref<2x48x128xf32, #tpu.memory_space<vmem>>, vector<2x32x128xf32>
    %c0_86 = arith.constant 0 : index
    %c8_87 = arith.constant 8 : index
    %c0_88 = arith.constant 0 : index
    %73 = vector.load %arg41[%c0_86, %c8_87, %c0_88] : memref<2x48x128xf32, #tpu.memory_space<vmem>>, vector<2x32x128xf32>
    %c0_89 = arith.constant 0 : index
    %c9_90 = arith.constant 9 : index
    %c0_91 = arith.constant 0 : index
    %74 = vector.load %arg41[%c0_89, %c9_90, %c0_91] : memref<2x48x128xf32, #tpu.memory_space<vmem>>, vector<2x32x128xf32>
    %75 = tpu.concatenate %72, %73, %74 in 2 : vector<2x32x128xf32>, vector<2x32x128xf32>, vector<2x32x128xf32> -> vector<2x32x384xf32>
    %76 = vector.shape_cast %75 : vector<2x32x384xf32> to vector<64x384xf32>
    %77 = arith.truncf %76 : vector<64x384xf32> to vector<64x384xbf16>
    %c0_92 = arith.constant 0 : index
    %c0_93 = arith.constant 0 : index
    %78 = vector.load %arg13[%c0_92, %c0_93] : memref<384x128xbf16, #tpu.memory_space<vmem>>, vector<384x128xbf16>
    %cst_94 = arith.constant dense<0.000000e+00> : vector<64x128xf32>
    %79 = tpu.matmul %77, %78, %cst_94 {dimension_numbers = #tpu.dot_dimension_numbers<[1], [0], [0], [1], [0, 0, 1, 1], [], []>} : vector<64x384xbf16>, vector<384x128xbf16>, vector<64x128xf32> -> vector<64x128xf32>
    %c0_95 = arith.constant 0 : index
    %c0_96 = arith.constant 0 : index
    %80 = vector.load %arg14[%c0_95, %c0_96] : memref<1x128xf32, #tpu.memory_space<vmem>>, vector<1x128xf32>
    %81 = vector.broadcast %80 : vector<1x128xf32> to vector<64x128xf32>
    %82 = arith.addf %79, %81 : vector<64x128xf32>
    %83 = arith.truncf %55 : vector<64x64xf32> to vector<64x64xbf16>
    %c0_97 = arith.constant 0 : index
    %c0_98 = arith.constant 0 : index
    %84 = vector.load %arg15[%c0_97, %c0_98] : memref<64x128xbf16, #tpu.memory_space<vmem>>, vector<64x128xbf16>
    %cst_99 = arith.constant dense<0.000000e+00> : vector<64x128xf32>
    %85 = tpu.matmul %83, %84, %cst_99 {dimension_numbers = #tpu.dot_dimension_numbers<[1], [0], [0], [1], [0, 0, 1, 1], [], []>} : vector<64x64xbf16>, vector<64x128xbf16>, vector<64x128xf32> -> vector<64x128xf32>
    %c0_100 = arith.constant 0 : index
    %c0_101 = arith.constant 0 : index
    %86 = vector.load %arg16[%c0_100, %c0_101] : memref<1x128xf32, #tpu.memory_space<vmem>>, vector<1x128xf32>
    %87 = vector.broadcast %86 : vector<1x128xf32> to vector<64x128xf32>
    %88 = arith.addf %85, %87 : vector<64x128xf32>
    %89 = arith.addf %82, %88 : vector<64x128xf32>
    %cst_102 = arith.constant 0.000000e+00 : f32
    %90 = vector.broadcast %cst_102 : f32 to vector<64x128xf32>
    %91 = arith.maximumf %89, %90 : vector<64x128xf32>
    %c0_103 = arith.constant 0 : index
    %c0_104 = arith.constant 0 : index
    %92 = vector.load %arg17[%c0_103, %c0_104] : memref<32x64xf32, #tpu.memory_space<vmem>>, vector<32x64xf32>
    %cst_105 = arith.constant dense<0.000000e+00> : vector<32x128xf32>
    %93 = tpu.matmul %92, %91, %cst_105 {dimension_numbers = #tpu.dot_dimension_numbers<[1], [0], [0], [1], [0, 0, 1, 1], [], []>} : vector<32x64xf32>, vector<64x128xf32>, vector<32x128xf32> -> vector<32x128xf32>
    %c0_106 = arith.constant 0 : index
    %c0_107 = arith.constant 0 : index
    %94 = vector.load %arg18[%c0_106, %c0_107] : memref<32x64xf32, #tpu.memory_space<vmem>>, vector<32x64xf32>
    %cst_108 = arith.constant dense<0.000000e+00> : vector<32x128xf32>
    %95 = tpu.matmul %94, %91, %cst_108 {dimension_numbers = #tpu.dot_dimension_numbers<[1], [0], [0], [1], [0, 0, 1, 1], [], []>} : vector<32x64xf32>, vector<64x128xf32>, vector<32x128xf32> -> vector<32x128xf32>
    %c0_109 = arith.constant 0 : index
    %c0_110 = arith.constant 0 : index
    %96 = vector.load %arg19[%c0_109, %c0_110] : memref<32x64xf32, #tpu.memory_space<vmem>>, vector<32x64xf32>
    %cst_111 = arith.constant dense<0.000000e+00> : vector<32x128xf32>
    %97 = tpu.matmul %96, %91, %cst_111 {dimension_numbers = #tpu.dot_dimension_numbers<[1], [0], [0], [1], [0, 0, 1, 1], [], []>} : vector<32x64xf32>, vector<64x128xf32>, vector<32x128xf32> -> vector<32x128xf32>
    %98 = tpu.concatenate %93, %95, %97 in 1 : vector<32x128xf32>, vector<32x128xf32>, vector<32x128xf32> -> vector<32x384xf32>
    %99 = arith.truncf %98 : vector<32x384xf32> to vector<32x384xbf16>
    %c0_112 = arith.constant 0 : index
    %c0_113 = arith.constant 0 : index
    %100 = vector.load %arg20[%c0_112, %c0_113] : memref<384x256xbf16, #tpu.memory_space<vmem>>, vector<384x256xbf16>
    %cst_114 = arith.constant dense<0.000000e+00> : vector<32x256xf32>
    %101 = tpu.matmul %99, %100, %cst_114 {dimension_numbers = #tpu.dot_dimension_numbers<[1], [0], [0], [1], [0, 0, 1, 1], [], []>} : vector<32x384xbf16>, vector<384x256xbf16>, vector<32x256xf32> -> vector<32x256xf32>
    %c0_115 = arith.constant 0 : index
    %c0_116 = arith.constant 0 : index
    %102 = vector.load %arg21[%c0_115, %c0_116] : memref<1x256xf32, #tpu.memory_space<vmem>>, vector<1x256xf32>
    %103 = vector.broadcast %102 : vector<1x256xf32> to vector<32x256xf32>
    %104 = arith.addf %101, %103 : vector<32x256xf32>
    %cst_117 = arith.constant 0.000000e+00 : f32
    %105 = vector.broadcast %cst_117 : f32 to vector<32x256xf32>
    %106 = arith.maximumf %104, %105 : vector<32x256xf32>
    %cst_118 = arith.constant 0.000000e+00 : f32
    %107 = vector.broadcast %cst_118 : f32 to vector<2x1x256xf32>
    %c0_119 = arith.constant 0 : index
    %c7_120 = arith.constant 7 : index
    %c0_121 = arith.constant 0 : index
    %108 = vector.load %arg42[%c0_119, %c7_120, %c0_121] : memref<2x32x256xf32, #tpu.memory_space<vmem>>, vector<2x1x256xf32>
    tpu.vector_store %arg42[%c0_119, %c7_120, %c0_121], %107 {strides = array<i32>} : memref<2x32x256xf32, #tpu.memory_space<vmem>>, vector<2x1x256xf32>,
    %c0_122 = arith.constant 0 : index
    %c24 = arith.constant 24 : index
    %c0_123 = arith.constant 0 : index
    %109 = vector.load %arg42[%c0_122, %c24, %c0_123] : memref<2x32x256xf32, #tpu.memory_space<vmem>>, vector<2x1x256xf32>
    tpu.vector_store %arg42[%c0_122, %c24, %c0_123], %107 {strides = array<i32>} : memref<2x32x256xf32, #tpu.memory_space<vmem>>, vector<2x1x256xf32>,
    %110 = vector.shape_cast %106 : vector<32x256xf32> to vector<2x16x256xf32>
    %c0_124 = arith.constant 0 : index
    %c8_125 = arith.constant 8 : index
    %c0_126 = arith.constant 0 : index
    %111 = vector.load %arg42[%c0_124, %c8_125, %c0_126] : memref<2x32x256xf32, #tpu.memory_space<vmem>>, vector<2x16x256xf32>
    tpu.vector_store %arg42[%c0_124, %c8_125, %c0_126], %110 {strides = array<i32>} : memref<2x32x256xf32, #tpu.memory_space<vmem>>, vector<2x16x256xf32>,
    %c0_127 = arith.constant 0 : index
    %c7_128 = arith.constant 7 : index
    %c0_129 = arith.constant 0 : index
    %112 = vector.load %arg42[%c0_127, %c7_128, %c0_129] : memref<2x32x256xf32, #tpu.memory_space<vmem>>, vector<2x16x256xf32>
    %c0_130 = arith.constant 0 : index
    %c8_131 = arith.constant 8 : index
    %c0_132 = arith.constant 0 : index
    %113 = vector.load %arg42[%c0_130, %c8_131, %c0_132] : memref<2x32x256xf32, #tpu.memory_space<vmem>>, vector<2x16x256xf32>
    %c0_133 = arith.constant 0 : index
    %c9_134 = arith.constant 9 : index
    %c0_135 = arith.constant 0 : index
    %114 = vector.load %arg42[%c0_133, %c9_134, %c0_135] : memref<2x32x256xf32, #tpu.memory_space<vmem>>, vector<2x16x256xf32>
    %115 = tpu.concatenate %112, %113, %114 in 2 : vector<2x16x256xf32>, vector<2x16x256xf32>, vector<2x16x256xf32> -> vector<2x16x768xf32>
    %116 = vector.shape_cast %115 : vector<2x16x768xf32> to vector<32x768xf32>
    %117 = arith.truncf %116 : vector<32x768xf32> to vector<32x768xbf16>
    %c0_136 = arith.constant 0 : index
    %c0_137 = arith.constant 0 : index
    %118 = vector.load %arg22[%c0_136, %c0_137] : memref<768x256xbf16, #tpu.memory_space<vmem>>, vector<768x256xbf16>
    %cst_138 = arith.constant dense<0.000000e+00> : vector<32x256xf32>
    %119 = tpu.matmul %117, %118, %cst_138 {dimension_numbers = #tpu.dot_dimension_numbers<[1], [0], [0], [1], [0, 0, 1, 1], [], []>} : vector<32x768xbf16>, vector<768x256xbf16>, vector<32x256xf32> -> vector<32x256xf32>
    %c0_139 = arith.constant 0 : index
    %c0_140 = arith.constant 0 : index
    %120 = vector.load %arg23[%c0_139, %c0_140] : memref<1x256xf32, #tpu.memory_space<vmem>>, vector<1x256xf32>
    %121 = vector.broadcast %120 : vector<1x256xf32> to vector<32x256xf32>
    %122 = arith.addf %119, %121 : vector<32x256xf32>
    %123 = arith.truncf %95 : vector<32x128xf32> to vector<32x128xbf16>
    %c0_141 = arith.constant 0 : index
    %c0_142 = arith.constant 0 : index
    %124 = vector.load %arg24[%c0_141, %c0_142] : memref<128x256xbf16, #tpu.memory_space<vmem>>, vector<128x256xbf16>
    %cst_143 = arith.constant dense<0.000000e+00> : vector<32x256xf32>
    %125 = tpu.matmul %123, %124, %cst_143 {dimension_numbers = #tpu.dot_dimension_numbers<[1], [0], [0], [1], [0, 0, 1, 1], [], []>} : vector<32x128xbf16>, vector<128x256xbf16>, vector<32x256xf32> -> vector<32x256xf32>
    %c0_144 = arith.constant 0 : index
    %c0_145 = arith.constant 0 : index
    %126 = vector.load %arg25[%c0_144, %c0_145] : memref<1x256xf32, #tpu.memory_space<vmem>>, vector<1x256xf32>
    %127 = vector.broadcast %126 : vector<1x256xf32> to vector<32x256xf32>
    %128 = arith.addf %125, %127 : vector<32x256xf32>
    %129 = arith.addf %122, %128 : vector<32x256xf32>
    %cst_146 = arith.constant 0.000000e+00 : f32
    %130 = vector.broadcast %cst_146 : f32 to vector<32x256xf32>
    %131 = arith.maximumf %129, %130 : vector<32x256xf32>
    %c0_147 = arith.constant 0 : index
    %c0_148 = arith.constant 0 : index
    %132 = vector.load %arg26[%c0_147, %c0_148] : memref<16x32xf32, #tpu.memory_space<vmem>>, vector<16x32xf32>
    %cst_149 = arith.constant dense<0.000000e+00> : vector<16x256xf32>
    %133 = tpu.matmul %132, %131, %cst_149 {dimension_numbers = #tpu.dot_dimension_numbers<[1], [0], [0], [1], [0, 0, 1, 1], [], []>} : vector<16x32xf32>, vector<32x256xf32>, vector<16x256xf32> -> vector<16x256xf32>
    %c0_150 = arith.constant 0 : index
    %c0_151 = arith.constant 0 : index
    %134 = vector.load %arg27[%c0_150, %c0_151] : memref<16x32xf32, #tpu.memory_space<vmem>>, vector<16x32xf32>
    %cst_152 = arith.constant dense<0.000000e+00> : vector<16x256xf32>
    %135 = tpu.matmul %134, %131, %cst_152 {dimension_numbers = #tpu.dot_dimension_numbers<[1], [0], [0], [1], [0, 0, 1, 1], [], []>} : vector<16x32xf32>, vector<32x256xf32>, vector<16x256xf32> -> vector<16x256xf32>
    %c0_153 = arith.constant 0 : index
    %c0_154 = arith.constant 0 : index
    %136 = vector.load %arg28[%c0_153, %c0_154] : memref<16x32xf32, #tpu.memory_space<vmem>>, vector<16x32xf32>
    %cst_155 = arith.constant dense<0.000000e+00> : vector<16x256xf32>
    %137 = tpu.matmul %136, %131, %cst_155 {dimension_numbers = #tpu.dot_dimension_numbers<[1], [0], [0], [1], [0, 0, 1, 1], [], []>} : vector<16x32xf32>, vector<32x256xf32>, vector<16x256xf32> -> vector<16x256xf32>
    %138 = tpu.concatenate %133, %135, %137 in 1 : vector<16x256xf32>, vector<16x256xf32>, vector<16x256xf32> -> vector<16x768xf32>
    %139 = arith.truncf %138 : vector<16x768xf32> to vector<16x768xbf16>
    %c0_156 = arith.constant 0 : index
    %c0_157 = arith.constant 0 : index
    %140 = vector.load %arg29[%c0_156, %c0_157] : memref<768x512xbf16, #tpu.memory_space<vmem>>, vector<768x512xbf16>
    %cst_158 = arith.constant dense<0.000000e+00> : vector<16x512xf32>
    %141 = tpu.matmul %139, %140, %cst_158 {dimension_numbers = #tpu.dot_dimension_numbers<[1], [0], [0], [1], [0, 0, 1, 1], [], []>} : vector<16x768xbf16>, vector<768x512xbf16>, vector<16x512xf32> -> vector<16x512xf32>
    %c0_159 = arith.constant 0 : index
    %c0_160 = arith.constant 0 : index
    %142 = vector.load %arg30[%c0_159, %c0_160] : memref<1x512xf32, #tpu.memory_space<vmem>>, vector<1x512xf32>
    %143 = vector.broadcast %142 : vector<1x512xf32> to vector<16x512xf32>
    %144 = arith.addf %141, %143 : vector<16x512xf32>
    %cst_161 = arith.constant 0.000000e+00 : f32
    %145 = vector.broadcast %cst_161 : f32 to vector<16x512xf32>
    %146 = arith.maximumf %144, %145 : vector<16x512xf32>
    %cst_162 = arith.constant 0.000000e+00 : f32
    %147 = vector.broadcast %cst_162 : f32 to vector<2x1x512xf32>
    %c0_163 = arith.constant 0 : index
    %c7_164 = arith.constant 7 : index
    %c0_165 = arith.constant 0 : index
    %148 = vector.load %arg43[%c0_163, %c7_164, %c0_165] : memref<2x24x512xf32, #tpu.memory_space<vmem>>, vector<2x1x512xf32>
    tpu.vector_store %arg43[%c0_163, %c7_164, %c0_165], %147 {strides = array<i32>} : memref<2x24x512xf32, #tpu.memory_space<vmem>>, vector<2x1x512xf32>,
    %c0_166 = arith.constant 0 : index
    %c16 = arith.constant 16 : index
    %c0_167 = arith.constant 0 : index
    %149 = vector.load %arg43[%c0_166, %c16, %c0_167] : memref<2x24x512xf32, #tpu.memory_space<vmem>>, vector<2x1x512xf32>
    tpu.vector_store %arg43[%c0_166, %c16, %c0_167], %147 {strides = array<i32>} : memref<2x24x512xf32, #tpu.memory_space<vmem>>, vector<2x1x512xf32>,
    %150 = vector.shape_cast %146 : vector<16x512xf32> to vector<2x8x512xf32>
    %c0_168 = arith.constant 0 : index
    %c8_169 = arith.constant 8 : index
    %c0_170 = arith.constant 0 : index
    %151 = vector.load %arg43[%c0_168, %c8_169, %c0_170] : memref<2x24x512xf32, #tpu.memory_space<vmem>>, vector<2x8x512xf32>
    tpu.vector_store %arg43[%c0_168, %c8_169, %c0_170], %150 {strides = array<i32>} : memref<2x24x512xf32, #tpu.memory_space<vmem>>, vector<2x8x512xf32>,
    %c0_171 = arith.constant 0 : index
    %c7_172 = arith.constant 7 : index
    %c0_173 = arith.constant 0 : index
    %152 = vector.load %arg43[%c0_171, %c7_172, %c0_173] : memref<2x24x512xf32, #tpu.memory_space<vmem>>, vector<2x8x512xf32>
    %c0_174 = arith.constant 0 : index
    %c8_175 = arith.constant 8 : index
    %c0_176 = arith.constant 0 : index
    %153 = vector.load %arg43[%c0_174, %c8_175, %c0_176] : memref<2x24x512xf32, #tpu.memory_space<vmem>>, vector<2x8x512xf32>
    %c0_177 = arith.constant 0 : index
    %c9_178 = arith.constant 9 : index
    %c0_179 = arith.constant 0 : index
    %154 = vector.load %arg43[%c0_177, %c9_178, %c0_179] : memref<2x24x512xf32, #tpu.memory_space<vmem>>, vector<2x8x512xf32>
    %155 = tpu.concatenate %152, %153, %154 in 2 : vector<2x8x512xf32>, vector<2x8x512xf32>, vector<2x8x512xf32> -> vector<2x8x1536xf32>
    %156 = vector.shape_cast %155 : vector<2x8x1536xf32> to vector<16x1536xf32>
    %157 = arith.truncf %156 : vector<16x1536xf32> to vector<16x1536xbf16>
    %c0_180 = arith.constant 0 : index
    %c0_181 = arith.constant 0 : index
    %158 = vector.load %arg31[%c0_180, %c0_181] : memref<1536x512xbf16, #tpu.memory_space<vmem>>, vector<1536x512xbf16>
    %cst_182 = arith.constant dense<0.000000e+00> : vector<16x512xf32>
    %159 = tpu.matmul %157, %158, %cst_182 {dimension_numbers = #tpu.dot_dimension_numbers<[1], [0], [0], [1], [0, 0, 1, 1], [], []>} : vector<16x1536xbf16>, vector<1536x512xbf16>, vector<16x512xf32> -> vector<16x512xf32>
    %c0_183 = arith.constant 0 : index
    %c0_184 = arith.constant 0 : index
    %160 = vector.load %arg32[%c0_183, %c0_184] : memref<1x512xf32, #tpu.memory_space<vmem>>, vector<1x512xf32>
    %161 = vector.broadcast %160 : vector<1x512xf32> to vector<16x512xf32>
    %162 = arith.addf %159, %161 : vector<16x512xf32>
    %163 = arith.truncf %135 : vector<16x256xf32> to vector<16x256xbf16>
    %c0_185 = arith.constant 0 : index
    %c0_186 = arith.constant 0 : index
    %164 = vector.load %arg33[%c0_185, %c0_186] : memref<256x512xbf16, #tpu.memory_space<vmem>>, vector<256x512xbf16>
    %cst_187 = arith.constant dense<0.000000e+00> : vector<16x512xf32>
    %165 = tpu.matmul %163, %164, %cst_187 {dimension_numbers = #tpu.dot_dimension_numbers<[1], [0], [0], [1], [0, 0, 1, 1], [], []>} : vector<16x256xbf16>, vector<256x512xbf16>, vector<16x512xf32> -> vector<16x512xf32>
    %c0_188 = arith.constant 0 : index
    %c0_189 = arith.constant 0 : index
    %166 = vector.load %arg34[%c0_188, %c0_189] : memref<1x512xf32, #tpu.memory_space<vmem>>, vector<1x512xf32>
    %167 = vector.broadcast %166 : vector<1x512xf32> to vector<16x512xf32>
    %168 = arith.addf %165, %167 : vector<16x512xf32>
    %169 = arith.addf %162, %168 : vector<16x512xf32>
    %cst_190 = arith.constant 0.000000e+00 : f32
    %170 = vector.broadcast %cst_190 : f32 to vector<16x512xf32>
    %171 = arith.maximumf %169, %170 : vector<16x512xf32>
    %c0_191 = arith.constant 0 : index
    %c0_192 = arith.constant 0 : index
    %172 = vector.load %arg35[%c0_191, %c0_192] : memref<2x16xf32, #tpu.memory_space<vmem>>, vector<2x16xf32>
    %cst_193 = arith.constant dense<0.000000e+00> : vector<2x512xf32>
    %173 = tpu.matmul %172, %171, %cst_193 {dimension_numbers = #tpu.dot_dimension_numbers<[1], [0], [0], [1], [0, 0, 1, 1], [], []>} : vector<2x16xf32>, vector<16x512xf32>, vector<2x512xf32> -> vector<2x512xf32>
    %c0_194 = arith.constant 0 : index
    %c0_195 = arith.constant 0 : index
    %174 = vector.load %arg36[%c0_194, %c0_195] : memref<512x10xf32, #tpu.memory_space<vmem>>, vector<512x10xf32>
    %cst_196 = arith.constant dense<0.000000e+00> : vector<2x10xf32>
    %175 = tpu.matmul %173, %174, %cst_196 {dimension_numbers = #tpu.dot_dimension_numbers<[1], [0], [0], [1], [0, 0, 1, 1], [], []>} : vector<2x512xf32>, vector<512x10xf32>, vector<2x10xf32> -> vector<2x10xf32>
    %c0_197 = arith.constant 0 : index
    %c0_198 = arith.constant 0 : index
    %176 = vector.load %arg37[%c0_197, %c0_198] : memref<1x10xf32, #tpu.memory_space<vmem>>, vector<1x10xf32>
    %177 = vector.broadcast %176 : vector<1x10xf32> to vector<2x10xf32>
    %178 = arith.addf %175, %177 : vector<2x10xf32>
    %c0_199 = arith.constant 0 : index
    %c0_200 = arith.constant 0 : index
    %179 = vector.load %arg38[%c0_199, %c0_200] : memref<2x10xf32, #tpu.memory_space<vmem>>, vector<2x10xf32>
    tpu.vector_store %arg38[%c0_199, %c0_200], %178 {strides = array<i32>} : memref<2x10xf32, #tpu.memory_space<vmem>>, vector<2x10xf32>,
    return
  }
}

</mosaic_0001>

<llo_original>
// kernel: forward.1
$region0: #{forward.1}
  #allocation0 [shape = 'u32[]', space=smem, size = 0x4, offset = 0x4, fixed_abs, tag = 'smem constant byte address 0x4 - core index']
  #allocation1 [shape = 'u32[144,128]{1,0:T(1,128)}', space=vmem, size = 0x12000, scoped, tag = 'internal scratch']
  #allocation2 [shape = 'f32[2,80,64]{2,1,0:T(8,128)}', space=vmem, size = 0x14000, scoped, tag = 'scratch operand']
  #allocation3 [shape = 'f32[2,80,64]{2,1,0:T(8,128)}', space=vmem, size = 0x14000, scoped, tag = 'scratch operand']
  #allocation4 [shape = 'f32[2,48,128]{2,1,0:T(8,128)}', space=vmem, size = 0xc000, scoped, tag = 'scratch operand']
  #allocation5 [shape = 'f32[2,32,256]{2,1,0:T(8,128)}', space=vmem, size = 0x10000, scoped, tag = 'scratch operand']
  #allocation6 [shape = 'f32[2,24,512]{2,1,0:T(8,128)}', space=vmem, size = 0x18000, scoped, tag = 'scratch operand']
  %s0 = inlined_call_operand.smem [shape: u32[39], index: -1, kind: input, shape index: {}]
  %s1 = sld [smem:[%s0]]
  %s2 = scalar_lea.smem %s0, 1
  %s3 = sld [smem:[%s2]]
  %s4 = scalar_lea.smem %s0, 2
  %s5 = sld [smem:[%s4]]
  %s6 = scalar_lea.smem %s0, 3
  %s7 = sld [smem:[%s6]]
  %s8 = scalar_lea.smem %s0, 4
  %s9 = sld [smem:[%s8]]
  %s10 = scalar_lea.smem %s0, 5
  %s11 = sld [smem:[%s10]]
  %s12 = scalar_lea.smem %s0, 6
  %s13 = sld [smem:[%s12]]
  %s14 = scalar_lea.smem %s0, 7
  %s15 = sld [smem:[%s14]]
  %s16 = scalar_lea.smem %s0, 8
  %s17 = sld [smem:[%s16]]
  %s18 = scalar_lea.smem %s0, 9
  %s19 = sld [smem:[%s18]]
  %s20 = scalar_lea.smem %s0, 10
  %s21 = sld [smem:[%s20]]
  %s22 = scalar_lea.smem %s0, 11
  %s23 = sld [smem:[%s22]]
  %s24 = scalar_lea.smem %s0, 12
  %s25 = sld [smem:[%s24]]
  %s26 = scalar_lea.smem %s0, 13
  %s27 = sld [smem:[%s26]]
  %s28 = scalar_lea.smem %s0, 14
  %s29 = sld [smem:[%s28]]
  %s30 = scalar_lea.smem %s0, 15
  %s31 = sld [smem:[%s30]]
  %s32 = scalar_lea.smem %s0, 16
  %s33 = sld [smem:[%s32]]
  %s34 = scalar_lea.smem %s0, 17
  %s35 = sld [smem:[%s34]]
  %s36 = scalar_lea.smem %s0, 18
  %s37 = sld [smem:[%s36]]
  %s38 = scalar_lea.smem %s0, 19
  %s39 = sld [smem:[%s38]]
  %s40 = scalar_lea.smem %s0, 20
  %s41 = sld [smem:[%s40]]
  %s42 = scalar_lea.smem %s0, 21
  %s43 = sld [smem:[%s42]]
  %s44 = scalar_lea.smem %s0, 22
  %s45 = sld [smem:[%s44]]
  %s46 = scalar_lea.smem %s0, 23
  %s47 = sld [smem:[%s46]]
  %s48 = scalar_lea.smem %s0, 24
  %s49 = sld [smem:[%s48]]
  %s50 = scalar_lea.smem %s0, 25
  %s51 = sld [smem:[%s50]]
  %s52 = scalar_lea.smem %s0, 26
  %s53 = sld [smem:[%s52]]
  %s54 = scalar_lea.smem %s0, 27
  %s55 = sld [smem:[%s54]]
  %s56 = scalar_lea.smem %s0, 28
  %s57 = sld [smem:[%s56]]
  %s58 = scalar_lea.smem %s0, 29
  %s59 = sld [smem:[%s58]]
  %s60 = scalar_lea.smem %s0, 30
  %s61 = sld [smem:[%s60]]
  %s62 = scalar_lea.smem %s0, 31
  %s63 = sld [smem:[%s62]]
  %s64 = scalar_lea.smem %s0, 32
  %s65 = sld [smem:[%s64]]
  %s66 = scalar_lea.smem %s0, 33
  %s67 = sld [smem:[%s66]]
  %s68 = scalar_lea.smem %s0, 34
  %s69 = sld [smem:[%s68]]
  %s70 = scalar_lea.smem %s0, 35
  %s71 = sld [smem:[%s70]]
  %s72 = scalar_lea.smem %s0, 36
  %s73 = sld [smem:[%s72]]
  %s74 = scalar_lea.smem %s0, 37
  %s75 = sld [smem:[%s74]]
  %s76 = scalar_lea.smem %s0, 38
  %s77 = sld [smem:[%s76]]
  %s78 = sld [smem:[#allocation0]]
  $region290: #{forward.1} parent=0
    _
  %s80 = ssub.s32 1, %s78
  %s81 = scalar_select 0, %s80, %s78
  $region1: #{forward.1} parent=0
    #allocation7 [shape = 'u8[512]{0}', space=vmem, size = 0x400, scoped, tag = 'input window, operand 3, single buffered']
    #allocation8 [shape = 's32[1]{0}', space=sflag, size = 0x4, scoped, tag = 'scoped memory for forward.1']
    #allocation9 [shape = 's32[1]{0}', space=sflag, size = 0x4, scoped, tag = 'scoped memory for forward.1']
    #allocation10 [shape = 'u8[512]{0}', space=vmem, size = 0x400, scoped, tag = 'input window, operand 5, single buffered']
    #allocation11 [shape = 's32[1]{0}', space=sflag, size = 0x4, scoped, tag = 'scoped memory for forward.1']
    #allocation12 [shape = 'u8[512]{0}', space=vmem, size = 0x400, scoped, tag = 'input window, operand 7, single buffered']
    #allocation13 [shape = 'u8[32768]{0}', space=vmem, size = 0x8000, scoped, tag = 'input window, operand 8, single buffered']
    #allocation14 [shape = 's32[1]{0}', space=sflag, size = 0x4, scoped, tag = 'scoped memory for forward.1']
    #allocation15 [shape = 'u8[32768]{0}', space=vmem, size = 0x8000, scoped, tag = 'input window, operand 9, single buffered']
    #allocation16 [shape = 'u8[32768]{0}', space=vmem, size = 0x8000, scoped, tag = 'input window, operand 10, single buffered']
    #allocation17 [shape = 's32[1]{0}', space=sflag, size = 0x4, scoped, tag = 'scoped memory for forward.1']
    #allocation18 [shape = 'u8[49152]{0}', space=vmem, size = 0xc000, scoped, tag = 'input window, operand 11, single buffered']
    #allocation19 [shape = 'u8[512]{0}', space=vmem, size = 0x400, scoped, tag = 'input window, operand 12, single buffered']
    #allocation20 [shape = 's32[1]{0}', space=sflag, size = 0x4, scoped, tag = 'scoped memory for forward.1']
    #allocation21 [shape = 'u8[98304]{0}', space=vmem, size = 0x18000, scoped, tag = 'input window, operand 13, single buffered']
    #allocation22 [shape = 'u8[512]{0}', space=vmem, size = 0x400, scoped, tag = 'input window, operand 14, single buffered']
    #allocation23 [shape = 's32[1]{0}', space=sflag, size = 0x4, scoped, tag = 'scoped memory for forward.1']
    #allocation24 [shape = 'u8[16384]{0}', space=vmem, size = 0x4000, scoped, tag = 'input window, operand 15, single buffered']
    #allocation25 [shape = 'u8[512]{0}', space=vmem, size = 0x400, scoped, tag = 'input window, operand 16, single buffered']
    #allocation26 [shape = 's32[1]{0}', space=sflag, size = 0x4, scoped, tag = 'scoped memory for forward.1']
    #allocation27 [shape = 'u8[16384]{0}', space=vmem, size = 0x4000, scoped, tag = 'input window, operand 17, single buffered']
    #allocation28 [shape = 'u8[16384]{0}', space=vmem, size = 0x4000, scoped, tag = 'input window, operand 18, single buffered']
    #allocation29 [shape = 's32[1]{0}', space=sflag, size = 0x4, scoped, tag = 'scoped memory for forward.1']
    #allocation30 [shape = 'u8[16384]{0}', space=vmem, size = 0x4000, scoped, tag = 'input window, operand 19, single buffered']
    #allocation31 [shape = 'u8[196608]{0}', space=vmem, size = 0x30000, scoped, tag = 'input window, operand 20, single buffered']
    #allocation32 [shape = 's32[1]{0}', space=sflag, size = 0x4, scoped, tag = 'scoped memory for forward.1']
    #allocation33 [shape = 'u8[1024]{0}', space=vmem, size = 0x400, scoped, tag = 'input window, operand 21, single buffered']
    #allocation34 [shape = 'u8[393216]{0}', space=vmem, size = 0x60000, scoped, tag = 'input window, operand 22, single buffered']
    #allocation35 [shape = 's32[1]{0}', space=sflag, size = 0x4, scoped, tag = 'scoped memory for forward.1']
    #allocation36 [shape = 'u8[1024]{0}', space=vmem, size = 0x400, scoped, tag = 'input window, operand 23, single buffered']
    #allocation37 [shape = 'u8[65536]{0}', space=vmem, size = 0x10000, scoped, tag = 'input window, operand 24, single buffered']
    #allocation38 [shape = 's32[1]{0}', space=sflag, size = 0x4, scoped, tag = 'scoped memory for forward.1']
    #allocation39 [shape = 'u8[1024]{0}', space=vmem, size = 0x400, scoped, tag = 'input window, operand 25, single buffered']
    #allocation40 [shape = 'u8[8192]{0}', space=vmem, size = 0x2000, scoped, tag = 'input window, operand 26, single buffered']
    #allocation41 [shape = 's32[1]{0}', space=sflag, size = 0x4, scoped, tag = 'scoped memory for forward.1']
    #allocation42 [shape = 'u8[8192]{0}', space=vmem, size = 0x2000, scoped, tag = 'input window, operand 27, single buffered']
    #allocation43 [shape = 'u8[8192]{0}', space=vmem, size = 0x2000, scoped, tag = 'input window, operand 28, single buffered']
    #allocation44 [shape = 's32[1]{0}', space=sflag, size = 0x4, scoped, tag = 'scoped memory for forward.1']
    #allocation45 [shape = 'u8[786432]{0}', space=vmem, size = 0xc0000, scoped, tag = 'input window, operand 29, single buffered']
    #allocation46 [shape = 'u8[2048]{0}', space=vmem, size = 0x800, scoped, tag = 'input window, operand 30, single buffered']
    #allocation47 [shape = 's32[1]{0}', space=sflag, size = 0x4, scoped, tag = 'scoped memory for forward.1']
    #allocation48 [shape = 'u8[1572864]{0}', space=vmem, size = 0x180000, scoped, tag = 'input window, operand 31, single buffered']
    #allocation49 [shape = 'u8[2048]{0}', space=vmem, size = 0x800, scoped, tag = 'input window, operand 32, single buffered']
    #allocation50 [shape = 's32[1]{0}', space=sflag, size = 0x4, scoped, tag = 'scoped memory for forward.1']
    #allocation51 [shape = 'u8[262144]{0}', space=vmem, size = 0x40000, scoped, tag = 'input window, operand 33, single buffered']
    #allocation52 [shape = 'u8[2048]{0}', space=vmem, size = 0x800, scoped, tag = 'input window, operand 34, single buffered']
    #allocation53 [shape = 's32[1]{0}', space=sflag, size = 0x4, scoped, tag = 'scoped memory for forward.1']
    #allocation54 [shape = 'u8[1024]{0}', space=vmem, size = 0x400, scoped, tag = 'input window, operand 35, single buffered']
    #allocation55 [shape = 'u8[512]{0}', space=vmem, size = 0x400, scoped, tag = 'input window, operand 37, single buffered']
    #allocation56 [shape = 's32[1]{0}', space=sflag, size = 0x4, scoped, tag = 'scoped memory for forward.1']
    #allocation57 [shape = 'u8[1024]{0}', space=vmem, size = 0x400, scoped, tag = 'output window, operand 0, single buffered']
    %82 = vsyncpa [#allocation8], 0
    %83 = vsyncpa [#allocation11], 0
    %84 = vsyncpa [#allocation14], 0
    %85 = vsyncpa [#allocation17], 0
    %86 = vsyncpa [#allocation20], 0
    %87 = vsyncpa [#allocation23], 0
    %88 = vsyncpa [#allocation26], 0
    %89 = vsyncpa [#allocation29], 0
    %90 = vsyncpa [#allocation32], 0
    %91 = vsyncpa [#allocation35], 0
    %92 = vsyncpa [#allocation38], 0
    %93 = vsyncpa [#allocation41], 0
    %94 = vsyncpa [#allocation44], 0
    %95 = vsyncpa [#allocation47], 0
    %96 = vsyncpa [#allocation50], 0
    %97 = vsyncpa [#allocation53], 0
    %98 = vsyncpa [#allocation56], 0
    %99 = vsyncpa [#allocation9], 0
    // Predicated region
    $region2: #{forward.1} parent=1 // pred_check
      _
    $region3: #{forward.1} parent=1 // pred_check_branch
      %101 = sbr.rel (0) target = $region5
    $region4: #{forward.1} parent=1 // pred_region
      _
    $region5: #{forward.1} parent=1 // pred_fallthru
      _
    // Predicated region
    $region6: #{forward.1} parent=1 // pred_check
      _
    $region7: #{forward.1} parent=1 // pred_check_branch
      %103 = sbr.rel (0) target = $region9
    $region8: #{forward.1} parent=1 // pred_region
      _
    $region9: #{forward.1} parent=1 // pred_fallthru
      _
    // Predicated region
    $region10: #{forward.1} parent=1 // pred_check
      _
    $region11: #{forward.1} parent=1 // pred_check_branch
      %105 = sbr.rel (0) target = $region13
    $region12: #{forward.1} parent=1 // pred_region
      _
    $region13: #{forward.1} parent=1 // pred_fallthru
      _
    // Predicated region
    $region14: #{forward.1} parent=1 // pred_check
      _
    $region15: #{forward.1} parent=1 // pred_check_branch
      %107 = sbr.rel (0) target = $region17
    $region16: #{forward.1} parent=1 // pred_region
      %s109 = ssub.s32 16, 16
      %110 = vsyncadd [#allocation8], %s109
      %s112 = sshll.u32 [#allocation7], 4
      %s113 = int_to_ptr.vmem [resolvable:$true] %s112
      %115 = dma.hbm_to_vmem [thread:$0]  %s7, 16, %s113, [#allocation8]
    $region17: #{forward.1} parent=1 // pred_fallthru
      _
    // Predicated region
    $region18: #{forward.1} parent=1 // pred_check
      _
    $region19: #{forward.1} parent=1 // pred_check_branch
      %117 = sbr.rel (0) target = $region21
    $region20: #{forward.1} parent=1 // pred_region
      _
    $region21: #{forward.1} parent=1 // pred_fallthru
      _
    // Predicated region
    $region22: #{forward.1} parent=1 // pred_check
      _
    $region23: #{forward.1} parent=1 // pred_check_branch
      %119 = sbr.rel (0) target = $region25
    $region24: #{forward.1} parent=1 // pred_region
      %s121 = ssub.s32 16, 16
      %122 = vsyncadd [#allocation11], %s121
      %s124 = sshll.u32 [#allocation10], 4
      %s125 = int_to_ptr.vmem [resolvable:$true] %s124
      %127 = dma.hbm_to_vmem [thread:$0]  %s11, 16, %s125, [#allocation11]
    $region25: #{forward.1} parent=1 // pred_fallthru
      _
    // Predicated region
    $region26: #{forward.1} parent=1 // pred_check
      _
    $region27: #{forward.1} parent=1 // pred_check_branch
      %129 = sbr.rel (0) target = $region29
    $region28: #{forward.1} parent=1 // pred_region
      _
    $region29: #{forward.1} parent=1 // pred_fallthru
      _
    // Predicated region
    $region30: #{forward.1} parent=1 // pred_check
      _
    $region31: #{forward.1} parent=1 // pred_check_branch
      %131 = sbr.rel (0) target = $region33
    $region32: #{forward.1} parent=1 // pred_region
      %s133 = ssub.s32 16, 16
      %134 = vsyncadd [#allocation11], %s133
      %s136 = sshll.u32 [#allocation12], 4
      %s137 = int_to_ptr.vmem [resolvable:$true] %s136
      %139 = dma.hbm_to_vmem [thread:$0]  %s15, 16, %s137, [#allocation11]
    $region33: #{forward.1} parent=1 // pred_fallthru
      _
    // Predicated region
    $region34: #{forward.1} parent=1 // pred_check
      _
    $region35: #{forward.1} parent=1 // pred_check_branch
      %141 = sbr.rel (0) target = $region37
    $region36: #{forward.1} parent=1 // pred_region
      %s143 = ssub.s32 1024, 1024
      %144 = vsyncadd [#allocation14], %s143
      %s145 = sshll.u32 [#allocation13], 4
      %s146 = int_to_ptr.vmem [resolvable:$true] %s145
      %151 = dma.hbm_to_vmem [thread:$0]  %s17, 1024, %s146, [#allocation14], 128, 128, 8
    $region37: #{forward.1} parent=1 // pred_fallthru
      _
    // Predicated region
    $region38: #{forward.1} parent=1 // pred_check
      _
    $region39: #{forward.1} parent=1 // pred_check_branch
      %153 = sbr.rel (0) target = $region41
    $region40: #{forward.1} parent=1 // pred_region
      %s155 = ssub.s32 1024, 1024
      %156 = vsyncadd [#allocation14], %s155
      %s157 = sshll.u32 [#allocation15], 4
      %s158 = int_to_ptr.vmem [resolvable:$true] %s157
      %163 = dma.hbm_to_vmem [thread:$0]  %s19, 1024, %s158, [#allocation14], 128, 128, 8
    $region41: #{forward.1} parent=1 // pred_fallthru
      _
    // Predicated region
    $region42: #{forward.1} parent=1 // pred_check
      _
    $region43: #{forward.1} parent=1 // pred_check_branch
      %165 = sbr.rel (0) target = $region45
    $region44: #{forward.1} parent=1 // pred_region
      %s167 = ssub.s32 1024, 1024
      %168 = vsyncadd [#allocation17], %s167
      %s169 = sshll.u32 [#allocation16], 4
      %s170 = int_to_ptr.vmem [resolvable:$true] %s169
      %175 = dma.hbm_to_vmem [thread:$0]  %s21, 1024, %s170, [#allocation17], 128, 128, 8
    $region45: #{forward.1} parent=1 // pred_fallthru
      _
    // Predicated region
    $region46: #{forward.1} parent=1 // pred_check
      _
    $region47: #{forward.1} parent=1 // pred_check_branch
      %177 = sbr.rel (0) target = $region49
    $region48: #{forward.1} parent=1 // pred_region
      %s179 = ssub.s32 1536, 1536
      %180 = vsyncadd [#allocation17], %s179
      %s181 = sshll.u32 [#allocation18], 4
      %s182 = int_to_ptr.vmem [resolvable:$true] %s181
      %187 = dma.hbm_to_vmem [thread:$0]  %s23, 1536, %s182, [#allocation17], 64, 64, 4
    $region49: #{forward.1} parent=1 // pred_fallthru
      _
    // Predicated region
    $region50: #{forward.1} parent=1 // pred_check
      _
    $region51: #{forward.1} parent=1 // pred_check_branch
      %189 = sbr.rel (0) target = $region53
    $region52: #{forward.1} parent=1 // pred_region
      %s191 = ssub.s32 16, 16
      %192 = vsyncadd [#allocation20], %s191
      %s194 = sshll.u32 [#allocation19], 4
      %s195 = int_to_ptr.vmem [resolvable:$true] %s194
      %197 = dma.hbm_to_vmem [thread:$0]  %s25, 16, %s195, [#allocation20]
    $region53: #{forward.1} parent=1 // pred_fallthru
      _
    // Predicated region
    $region54: #{forward.1} parent=1 // pred_check
      _
    $region55: #{forward.1} parent=1 // pred_check_branch
      %199 = sbr.rel (0) target = $region57
    $region56: #{forward.1} parent=1 // pred_region
      %s201 = ssub.s32 3072, 3072
      %202 = vsyncadd [#allocation20], %s201
      %s203 = sshll.u32 [#allocation21], 4
      %s204 = int_to_ptr.vmem [resolvable:$true] %s203
      %209 = dma.hbm_to_vmem [thread:$0]  %s27, 3072, %s204, [#allocation20], 64, 64, 4
    $region57: #{forward.1} parent=1 // pred_fallthru
      _
    // Predicated region
    $region58: #{forward.1} parent=1 // pred_check
      _
    $region59: #{forward.1} parent=1 // pred_check_branch
      %211 = sbr.rel (0) target = $region61
    $region60: #{forward.1} parent=1 // pred_region
      %s213 = ssub.s32 16, 16
      %214 = vsyncadd [#allocation23], %s213
      %s216 = sshll.u32 [#allocation22], 4
      %s217 = int_to_ptr.vmem [resolvable:$true] %s216
      %219 = dma.hbm_to_vmem [thread:$0]  %s29, 16, %s217, [#allocation23]
    $region61: #{forward.1} parent=1 // pred_fallthru
      _
    // Predicated region
    $region62: #{forward.1} parent=1 // pred_check
      _
    $region63: #{forward.1} parent=1 // pred_check_branch
      %221 = sbr.rel (0) target = $region65
    $region64: #{forward.1} parent=1 // pred_region
      %s223 = ssub.s32 512, 512
      %224 = vsyncadd [#allocation23], %s223
      %s225 = sshll.u32 [#allocation24], 4
      %s226 = int_to_ptr.vmem [resolvable:$true] %s225
      %231 = dma.hbm_to_vmem [thread:$0]  %s31, 512, %s226, [#allocation23], 64, 64, 4
    $region65: #{forward.1} parent=1 // pred_fallthru
      _
    // Predicated region
    $region66: #{forward.1} parent=1 // pred_check
      _
    $region67: #{forward.1} parent=1 // pred_check_branch
      %233 = sbr.rel (0) target = $region69
    $region68: #{forward.1} parent=1 // pred_region
      %s235 = ssub.s32 16, 16
      %236 = vsyncadd [#allocation26], %s235
      %s238 = sshll.u32 [#allocation25], 4
      %s239 = int_to_ptr.vmem [resolvable:$true] %s238
      %241 = dma.hbm_to_vmem [thread:$0]  %s33, 16, %s239, [#allocation26]
    $region69: #{forward.1} parent=1 // pred_fallthru
      _
    // Predicated region
    $region70: #{forward.1} parent=1 // pred_check
      _
    $region71: #{forward.1} parent=1 // pred_check_branch
      %243 = sbr.rel (0) target = $region73
    $region72: #{forward.1} parent=1 // pred_region
      %s245 = ssub.s32 512, 512
      %246 = vsyncadd [#allocation26], %s245
      %s247 = sshll.u32 [#allocation27], 4
      %s248 = int_to_ptr.vmem [resolvable:$true] %s247
      %253 = dma.hbm_to_vmem [thread:$0]  %s35, 512, %s248, [#allocation26], 128, 128, 8
    $region73: #{forward.1} parent=1 // pred_fallthru
      _
    // Predicated region
    $region74: #{forward.1} parent=1 // pred_check
      _
    $region75: #{forward.1} parent=1 // pred_check_branch
      %255 = sbr.rel (0) target = $region77
    $region76: #{forward.1} parent=1 // pred_region
      %s257 = ssub.s32 512, 512
      %258 = vsyncadd [#allocation29], %s257
      %s259 = sshll.u32 [#allocation28], 4
      %s260 = int_to_ptr.vmem [resolvable:$true] %s259
      %265 = dma.hbm_to_vmem [thread:$0]  %s37, 512, %s260, [#allocation29], 128, 128, 8
    $region77: #{forward.1} parent=1 // pred_fallthru
      _
    // Predicated region
    $region78: #{forward.1} parent=1 // pred_check
      _
    $region79: #{forward.1} parent=1 // pred_check_branch
      %267 = sbr.rel (0) target = $region81
    $region80: #{forward.1} parent=1 // pred_region
      %s269 = ssub.s32 512, 512
      %270 = vsyncadd [#allocation29], %s269
      %s271 = sshll.u32 [#allocation30], 4
      %s272 = int_to_ptr.vmem [resolvable:$true] %s271
      %277 = dma.hbm_to_vmem [thread:$0]  %s39, 512, %s272, [#allocation29], 128, 128, 8
    $region81: #{forward.1} parent=1 // pred_fallthru
      _
    // Predicated region
    $region82: #{forward.1} parent=1 // pred_check
      _
    $region83: #{forward.1} parent=1 // pred_check_branch
      %279 = sbr.rel (0) target = $region85
    $region84: #{forward.1} parent=1 // pred_region
      %s281 = ssub.s32 6144, 6144
      %282 = vsyncadd [#allocation32], %s281
      %s283 = sshll.u32 [#allocation31], 4
      %s284 = int_to_ptr.vmem [resolvable:$true] %s283
      %289 = dma.hbm_to_vmem [thread:$0]  %s41, 6144, %s284, [#allocation32], 128, 128, 8
    $region85: #{forward.1} parent=1 // pred_fallthru
      _
    // Predicated region
    $region86: #{forward.1} parent=1 // pred_check
      _
    $region87: #{forward.1} parent=1 // pred_check_branch
      %291 = sbr.rel (0) target = $region89
    $region88: #{forward.1} parent=1 // pred_region
      %s293 = ssub.s32 32, 32
      %294 = vsyncadd [#allocation32], %s293
      %s296 = sshll.u32 [#allocation33], 4
      %s297 = int_to_ptr.vmem [resolvable:$true] %s296
      %299 = dma.hbm_to_vmem [thread:$0]  %s43, 32, %s297, [#allocation32]
    $region89: #{forward.1} parent=1 // pred_fallthru
      _
    // Predicated region
    $region90: #{forward.1} parent=1 // pred_check
      _
    $region91: #{forward.1} parent=1 // pred_check_branch
      %301 = sbr.rel (0) target = $region93
    $region92: #{forward.1} parent=1 // pred_region
      %s303 = ssub.s32 12288, 12288
      %304 = vsyncadd [#allocation35], %s303
      %s305 = sshll.u32 [#allocation34], 4
      %s306 = int_to_ptr.vmem [resolvable:$true] %s305
      %311 = dma.hbm_to_vmem [thread:$0]  %s45, 12288, %s306, [#allocation35], 128, 128, 8
    $region93: #{forward.1} parent=1 // pred_fallthru
      _
    // Predicated region
    $region94: #{forward.1} parent=1 // pred_check
      _
    $region95: #{forward.1} parent=1 // pred_check_branch
      %313 = sbr.rel (0) target = $region97
    $region96: #{forward.1} parent=1 // pred_region
      %s315 = ssub.s32 32, 32
      %316 = vsyncadd [#allocation35], %s315
      %s318 = sshll.u32 [#allocation36], 4
      %s319 = int_to_ptr.vmem [resolvable:$true] %s318
      %321 = dma.hbm_to_vmem [thread:$0]  %s47, 32, %s319, [#allocation35]
    $region97: #{forward.1} parent=1 // pred_fallthru
      _
    // Predicated region
    $region98: #{forward.1} parent=1 // pred_check
      _
    $region99: #{forward.1} parent=1 // pred_check_branch
      %323 = sbr.rel (0) target = $region101
    $region100: #{forward.1} parent=1 // pred_region
      %s325 = ssub.s32 2048, 2048
      %326 = vsyncadd [#allocation38], %s325
      %s327 = sshll.u32 [#allocation37], 4
      %s328 = int_to_ptr.vmem [resolvable:$true] %s327
      %333 = dma.hbm_to_vmem [thread:$0]  %s49, 2048, %s328, [#allocation38], 128, 128, 8
    $region101: #{forward.1} parent=1 // pred_fallthru
      _
    // Predicated region
    $region102: #{forward.1} parent=1 // pred_check
      _
    $region103: #{forward.1} parent=1 // pred_check_branch
      %335 = sbr.rel (0) target = $region105
    $region104: #{forward.1} parent=1 // pred_region
      %s337 = ssub.s32 32, 32
      %338 = vsyncadd [#allocation38], %s337
      %s340 = sshll.u32 [#allocation39], 4
      %s341 = int_to_ptr.vmem [resolvable:$true] %s340
      %343 = dma.hbm_to_vmem [thread:$0]  %s51, 32, %s341, [#allocation38]
    $region105: #{forward.1} parent=1 // pred_fallthru
      _
    // Predicated region
    $region106: #{forward.1} parent=1 // pred_check
      _
    $region107: #{forward.1} parent=1 // pred_check_branch
      %345 = sbr.rel (0) target = $region109
    $region108: #{forward.1} parent=1 // pred_region
      %s347 = ssub.s32 256, 256
      %348 = vsyncadd [#allocation41], %s347
      %s349 = sshll.u32 [#allocation40], 4
      %s350 = int_to_ptr.vmem [resolvable:$true] %s349
      %355 = dma.hbm_to_vmem [thread:$0]  %s53, 256, %s350, [#allocation41], 128, 128, 8
    $region109: #{forward.1} parent=1 // pred_fallthru
      _
    // Predicated region
    $region110: #{forward.1} parent=1 // pred_check
      _
    $region111: #{forward.1} parent=1 // pred_check_branch
      %357 = sbr.rel (0) target = $region113
    $region112: #{forward.1} parent=1 // pred_region
      %s359 = ssub.s32 256, 256
      %360 = vsyncadd [#allocation41], %s359
      %s361 = sshll.u32 [#allocation42], 4
      %s362 = int_to_ptr.vmem [resolvable:$true] %s361
      %367 = dma.hbm_to_vmem [thread:$0]  %s55, 256, %s362, [#allocation41], 128, 128, 8
    $region113: #{forward.1} parent=1 // pred_fallthru
      _
    // Predicated region
    $region114: #{forward.1} parent=1 // pred_check
      _
    $region115: #{forward.1} parent=1 // pred_check_branch
      %369 = sbr.rel (0) target = $region117
    $region116: #{forward.1} parent=1 // pred_region
      %s371 = ssub.s32 256, 256
      %372 = vsyncadd [#allocation44], %s371
      %s373 = sshll.u32 [#allocation43], 4
      %s374 = int_to_ptr.vmem [resolvable:$true] %s373
      %379 = dma.hbm_to_vmem [thread:$0]  %s57, 256, %s374, [#allocation44], 128, 128, 8
    $region117: #{forward.1} parent=1 // pred_fallthru
      _
    // Predicated region
    $region118: #{forward.1} parent=1 // pred_check
      _
    $region119: #{forward.1} parent=1 // pred_check_branch
      %381 = sbr.rel (0) target = $region121
    $region120: #{forward.1} parent=1 // pred_region
      %s383 = ssub.s32 24576, 24576
      %384 = vsyncadd [#allocation44], %s383
      %s385 = sshll.u32 [#allocation45], 4
      %s386 = int_to_ptr.vmem [resolvable:$true] %s385
      %391 = dma.hbm_to_vmem [thread:$0]  %s59, 24576, %s386, [#allocation44], 256, 256, 16
    $region121: #{forward.1} parent=1 // pred_fallthru
      _
    // Predicated region
    $region122: #{forward.1} parent=1 // pred_check
      _
    $region123: #{forward.1} parent=1 // pred_check_branch
      %393 = sbr.rel (0) target = $region125
    $region124: #{forward.1} parent=1 // pred_region
      %s395 = ssub.s32 64, 64
      %396 = vsyncadd [#allocation47], %s395
      %s398 = sshll.u32 [#allocation46], 4
      %s399 = int_to_ptr.vmem [resolvable:$true] %s398
      %401 = dma.hbm_to_vmem [thread:$0]  %s61, 64, %s399, [#allocation47]
    $region125: #{forward.1} parent=1 // pred_fallthru
      _
    // Predicated region
    $region126: #{forward.1} parent=1 // pred_check
      _
    $region127: #{forward.1} parent=1 // pred_check_branch
      %403 = sbr.rel (0) target = $region129
    $region128: #{forward.1} parent=1 // pred_region
      %s405 = ssub.s32 49152, 49152
      %406 = vsyncadd [#allocation47], %s405
      %s407 = sshll.u32 [#allocation48], 4
      %s408 = int_to_ptr.vmem [resolvable:$true] %s407
      %413 = dma.hbm_to_vmem [thread:$0]  %s63, 49152, %s408, [#allocation47], 256, 256, 16
    $region129: #{forward.1} parent=1 // pred_fallthru
      _
    // Predicated region
    $region130: #{forward.1} parent=1 // pred_check
      _
    $region131: #{forward.1} parent=1 // pred_check_branch
      %415 = sbr.rel (0) target = $region133
    $region132: #{forward.1} parent=1 // pred_region
      %s417 = ssub.s32 64, 64
      %418 = vsyncadd [#allocation50], %s417
      %s420 = sshll.u32 [#allocation49], 4
      %s421 = int_to_ptr.vmem [resolvable:$true] %s420
      %423 = dma.hbm_to_vmem [thread:$0]  %s65, 64, %s421, [#allocation50]
    $region133: #{forward.1} parent=1 // pred_fallthru
      _
    // Predicated region
    $region134: #{forward.1} parent=1 // pred_check
      _
    $region135: #{forward.1} parent=1 // pred_check_branch
      %425 = sbr.rel (0) target = $region137
    $region136: #{forward.1} parent=1 // pred_region
      %s427 = ssub.s32 8192, 8192
      %428 = vsyncadd [#allocation50], %s427
      %s429 = sshll.u32 [#allocation51], 4
      %s430 = int_to_ptr.vmem [resolvable:$true] %s429
      %435 = dma.hbm_to_vmem [thread:$0]  %s67, 8192, %s430, [#allocation50], 256, 256, 16
    $region137: #{forward.1} parent=1 // pred_fallthru
      _
    // Predicated region
    $region138: #{forward.1} parent=1 // pred_check
      _
    $region139: #{forward.1} parent=1 // pred_check_branch
      %437 = sbr.rel (0) target = $region141
    $region140: #{forward.1} parent=1 // pred_region
      %s439 = ssub.s32 64, 64
      %440 = vsyncadd [#allocation53], %s439
      %s442 = sshll.u32 [#allocation52], 4
      %s443 = int_to_ptr.vmem [resolvable:$true] %s442
      %445 = dma.hbm_to_vmem [thread:$0]  %s69, 64, %s443, [#allocation53]
    $region141: #{forward.1} parent=1 // pred_fallthru
      _
    // Predicated region
    $region142: #{forward.1} parent=1 // pred_check
      _
    $region143: #{forward.1} parent=1 // pred_check_branch
      %447 = sbr.rel (0) target = $region145
    $region144: #{forward.1} parent=1 // pred_region
      %s449 = ssub.s32 32, 32
      %450 = vsyncadd [#allocation53], %s449
      %s452 = sshll.u32 [#allocation54], 4
      %s453 = int_to_ptr.vmem [resolvable:$true] %s452
      %455 = dma.hbm_to_vmem [thread:$0]  %s71, 32, %s453, [#allocation53]
    $region145: #{forward.1} parent=1 // pred_fallthru
      _
    // Predicated region
    $region146: #{forward.1} parent=1 // pred_check
      _
    $region147: #{forward.1} parent=1 // pred_check_branch
      %457 = sbr.rel (0) target = $region149
    $region148: #{forward.1} parent=1 // pred_region
      _
    $region149: #{forward.1} parent=1 // pred_fallthru
      _
    // Predicated region
    $region150: #{forward.1} parent=1 // pred_check
      _
    $region151: #{forward.1} parent=1 // pred_check_branch
      %459 = sbr.rel (0) target = $region153
    $region152: #{forward.1} parent=1 // pred_region
      %s461 = ssub.s32 16, 16
      %462 = vsyncadd [#allocation56], %s461
      %s464 = sshll.u32 [#allocation55], 4
      %s465 = int_to_ptr.vmem [resolvable:$true] %s464
      %467 = dma.hbm_to_vmem [thread:$0]  %s75, 16, %s465, [#allocation56]
    $region153: #{forward.1} parent=1 // pred_fallthru
      _
    // Predicated region
    $region154: #{forward.1} parent=1 // pred_check
      _
    $region155: #{forward.1} parent=1 // pred_check_branch
      %469 = sbr.rel (0) target = $region157
    $region156: #{forward.1} parent=1 // pred_region
      %470 = dma.done [#allocation8], 16
    $region157: #{forward.1} parent=1 // pred_fallthru
      _
    // Predicated region
    $region158: #{forward.1} parent=1 // pred_check
      _
    $region159: #{forward.1} parent=1 // pred_check_branch
      %472 = sbr.rel (0) target = $region161
    $region160: #{forward.1} parent=1 // pred_region
      %473 = dma.done [#allocation11], 16
    $region161: #{forward.1} parent=1 // pred_fallthru
      _
    // Predicated region
    $region162: #{forward.1} parent=1 // pred_check
      _
    $region163: #{forward.1} parent=1 // pred_check_branch
      %475 = sbr.rel (0) target = $region165
    $region164: #{forward.1} parent=1 // pred_region
      %476 = dma.done [#allocation11], 16
    $region165: #{forward.1} parent=1 // pred_fallthru
      _
    // Predicated region
    $region166: #{forward.1} parent=1 // pred_check
      _
    $region167: #{forward.1} parent=1 // pred_check_branch
      %478 = sbr.rel (0) target = $region169
    $region168: #{forward.1} parent=1 // pred_region
      %479 = dma.done [#allocation14], 1024
    $region169: #{forward.1} parent=1 // pred_fallthru
      _
    // Predicated region
    $region170: #{forward.1} parent=1 // pred_check
      _
    $region171: #{forward.1} parent=1 // pred_check_branch
      %481 = sbr.rel (0) target = $region173
    $region172: #{forward.1} parent=1 // pred_region
      %482 = dma.done [#allocation14], 1024
    $region173: #{forward.1} parent=1 // pred_fallthru
      _
    // Predicated region
    $region174: #{forward.1} parent=1 // pred_check
      _
    $region175: #{forward.1} parent=1 // pred_check_branch
      %484 = sbr.rel (0) target = $region177
    $region176: #{forward.1} parent=1 // pred_region
      %485 = dma.done [#allocation17], 1024
    $region177: #{forward.1} parent=1 // pred_fallthru
      _
    // Predicated region
    $region178: #{forward.1} parent=1 // pred_check
      _
    $region179: #{forward.1} parent=1 // pred_check_branch
      %487 = sbr.rel (0) target = $region181
    $region180: #{forward.1} parent=1 // pred_region
      %488 = dma.done [#allocation17], 1536
    $region181: #{forward.1} parent=1 // pred_fallthru
      _
    // Predicated region
    $region182: #{forward.1} parent=1 // pred_check
      _
    $region183: #{forward.1} parent=1 // pred_check_branch
      %490 = sbr.rel (0) target = $region185
    $region184: #{forward.1} parent=1 // pred_region
      %491 = dma.done [#allocation20], 16
    $region185: #{forward.1} parent=1 // pred_fallthru
      _
    // Predicated region
    $region186: #{forward.1} parent=1 // pred_check
      _
    $region187: #{forward.1} parent=1 // pred_check_branch
      %493 = sbr.rel (0) target = $region189
    $region188: #{forward.1} parent=1 // pred_region
      %494 = dma.done [#allocation20], 3072
    $region189: #{forward.1} parent=1 // pred_fallthru
      _
    // Predicated region
    $region190: #{forward.1} parent=1 // pred_check
      _
    $region191: #{forward.1} parent=1 // pred_check_branch
      %496 = sbr.rel (0) target = $region193
    $region192: #{forward.1} parent=1 // pred_region
      %497 = dma.done [#allocation23], 16
    $region193: #{forward.1} parent=1 // pred_fallthru
      _
    // Predicated region
    $region194: #{forward.1} parent=1 // pred_check
      _
    $region195: #{forward.1} parent=1 // pred_check_branch
      %499 = sbr.rel (0) target = $region197
    $region196: #{forward.1} parent=1 // pred_region
      %500 = dma.done [#allocation23], 512
    $region197: #{forward.1} parent=1 // pred_fallthru
      _
    // Predicated region
    $region198: #{forward.1} parent=1 // pred_check
      _
    $region199: #{forward.1} parent=1 // pred_check_branch
      %502 = sbr.rel (0) target = $region201
    $region200: #{forward.1} parent=1 // pred_region
      %503 = dma.done [#allocation26], 16
    $region201: #{forward.1} parent=1 // pred_fallthru
      _
    // Predicated region
    $region202: #{forward.1} parent=1 // pred_check
      _
    $region203: #{forward.1} parent=1 // pred_check_branch
      %505 = sbr.rel (0) target = $region205
    $region204: #{forward.1} parent=1 // pred_region
      %506 = dma.done [#allocation26], 512
    $region205: #{forward.1} parent=1 // pred_fallthru
      _
    // Predicated region
    $region206: #{forward.1} parent=1 // pred_check
      _
    $region207: #{forward.1} parent=1 // pred_check_branch
      %508 = sbr.rel (0) target = $region209
    $region208: #{forward.1} parent=1 // pred_region
      %509 = dma.done [#allocation29], 512
    $region209: #{forward.1} parent=1 // pred_fallthru
      _
    // Predicated region
    $region210: #{forward.1} parent=1 // pred_check
      _
    $region211: #{forward.1} parent=1 // pred_check_branch
      %511 = sbr.rel (0) target = $region213
    $region212: #{forward.1} parent=1 // pred_region
      %512 = dma.done [#allocation29], 512
    $region213: #{forward.1} parent=1 // pred_fallthru
      _
    // Predicated region
    $region214: #{forward.1} parent=1 // pred_check
      _
    $region215: #{forward.1} parent=1 // pred_check_branch
      %514 = sbr.rel (0) target = $region217
    $region216: #{forward.1} parent=1 // pred_region
      %515 = dma.done [#allocation32], 6144
    $region217: #{forward.1} parent=1 // pred_fallthru
      _
    // Predicated region
    $region218: #{forward.1} parent=1 // pred_check
      _
    $region219: #{forward.1} parent=1 // pred_check_branch
      %517 = sbr.rel (0) target = $region221
    $region220: #{forward.1} parent=1 // pred_region
      %518 = dma.done [#allocation32], 32
    $region221: #{forward.1} parent=1 // pred_fallthru
      _
    // Predicated region
    $region222: #{forward.1} parent=1 // pred_check
      _
    $region223: #{forward.1} parent=1 // pred_check_branch
      %520 = sbr.rel (0) target = $region225
    $region224: #{forward.1} parent=1 // pred_region
      %521 = dma.done [#allocation35], 12288
    $region225: #{forward.1} parent=1 // pred_fallthru
      _
    // Predicated region
    $region226: #{forward.1} parent=1 // pred_check
      _
    $region227: #{forward.1} parent=1 // pred_check_branch
      %523 = sbr.rel (0) target = $region229
    $region228: #{forward.1} parent=1 // pred_region
      %524 = dma.done [#allocation35], 32
    $region229: #{forward.1} parent=1 // pred_fallthru
      _
    // Predicated region
    $region230: #{forward.1} parent=1 // pred_check
      _
    $region231: #{forward.1} parent=1 // pred_check_branch
      %526 = sbr.rel (0) target = $region233
    $region232: #{forward.1} parent=1 // pred_region
      %527 = dma.done [#allocation38], 2048
    $region233: #{forward.1} parent=1 // pred_fallthru
      _
    // Predicated region
    $region234: #{forward.1} parent=1 // pred_check
      _
    $region235: #{forward.1} parent=1 // pred_check_branch
      %529 = sbr.rel (0) target = $region237
    $region236: #{forward.1} parent=1 // pred_region
      %530 = dma.done [#allocation38], 32
    $region237: #{forward.1} parent=1 // pred_fallthru
      _
    // Predicated region
    $region238: #{forward.1} parent=1 // pred_check
      _
    $region239: #{forward.1} parent=1 // pred_check_branch
      %532 = sbr.rel (0) target = $region241
    $region240: #{forward.1} parent=1 // pred_region
      %533 = dma.done [#allocation41], 256
    $region241: #{forward.1} parent=1 // pred_fallthru
      _
    // Predicated region
    $region242: #{forward.1} parent=1 // pred_check
      _
    $region243: #{forward.1} parent=1 // pred_check_branch
      %535 = sbr.rel (0) target = $region245
    $region244: #{forward.1} parent=1 // pred_region
      %536 = dma.done [#allocation41], 256
    $region245: #{forward.1} parent=1 // pred_fallthru
      _
    // Predicated region
    $region246: #{forward.1} parent=1 // pred_check
      _
    $region247: #{forward.1} parent=1 // pred_check_branch
      %538 = sbr.rel (0) target = $region249
    $region248: #{forward.1} parent=1 // pred_region
      %539 = dma.done [#allocation44], 256
    $region249: #{forward.1} parent=1 // pred_fallthru
      _
    // Predicated region
    $region250: #{forward.1} parent=1 // pred_check
      _
    $region251: #{forward.1} parent=1 // pred_check_branch
      %541 = sbr.rel (0) target = $region253
    $region252: #{forward.1} parent=1 // pred_region
      %542 = dma.done [#allocation44], 24576
    $region253: #{forward.1} parent=1 // pred_fallthru
      _
    // Predicated region
    $region254: #{forward.1} parent=1 // pred_check
      _
    $region255: #{forward.1} parent=1 // pred_check_branch
      %544 = sbr.rel (0) target = $region257
    $region256: #{forward.1} parent=1 // pred_region
      %545 = dma.done [#allocation47], 64
    $region257: #{forward.1} parent=1 // pred_fallthru
      _
    // Predicated region
    $region258: #{forward.1} parent=1 // pred_check
      _
    $region259: #{forward.1} parent=1 // pred_check_branch
      %547 = sbr.rel (0) target = $region261
    $region260: #{forward.1} parent=1 // pred_region
      %548 = dma.done [#allocation47], 49152
    $region261: #{forward.1} parent=1 // pred_fallthru
      _
    // Predicated region
    $region262: #{forward.1} parent=1 // pred_check
      _
    $region263: #{forward.1} parent=1 // pred_check_branch
      %550 = sbr.rel (0) target = $region265
    $region264: #{forward.1} parent=1 // pred_region
      %551 = dma.done [#allocation50], 64
    $region265: #{forward.1} parent=1 // pred_fallthru
      _
    // Predicated region
    $region266: #{forward.1} parent=1 // pred_check
      _
    $region267: #{forward.1} parent=1 // pred_check_branch
      %553 = sbr.rel (0) target = $region269
    $region268: #{forward.1} parent=1 // pred_region
      %554 = dma.done [#allocation50], 8192
    $region269: #{forward.1} parent=1 // pred_fallthru
      _
    // Predicated region
    $region270: #{forward.1} parent=1 // pred_check
      _
    $region271: #{forward.1} parent=1 // pred_check_branch
      %556 = sbr.rel (0) target = $region273
    $region272: #{forward.1} parent=1 // pred_region
      %557 = dma.done [#allocation53], 64
    $region273: #{forward.1} parent=1 // pred_fallthru
      _
    // Predicated region
    $region274: #{forward.1} parent=1 // pred_check
      _
    $region275: #{forward.1} parent=1 // pred_check_branch
      %559 = sbr.rel (0) target = $region277
    $region276: #{forward.1} parent=1 // pred_region
      %560 = dma.done [#allocation53], 32
    $region277: #{forward.1} parent=1 // pred_fallthru
      _
    // Predicated region
    $region278: #{forward.1} parent=1 // pred_check
      _
    $region279: #{forward.1} parent=1 // pred_check_branch
      %562 = sbr.rel (0) target = $region281
    $region280: #{forward.1} parent=1 // pred_region
      %563 = dma.done [#allocation56], 16
    $region281: #{forward.1} parent=1 // pred_fallthru
      _
    %v565 = vld [vmem:[%s1] sm:$0xf]
    %v566 = vld [vmem:[%s1 + $0x4] sm:$0xf]
    %v567 = vld [vmem:[%s1 + $0x8] sm:$0xf]
    %v568 = vld [vmem:[%s1 + $0xc] sm:$0xf]
    %v569 = vld [vmem:[%s1 + $0x10] sm:$0xf]
    %v570 = vld [vmem:[%s1 + $0x14] sm:$0xf]
    %v571 = vld [vmem:[%s1 + $0x18] sm:$0xf]
    %v572 = vld [vmem:[%s1 + $0x1c] sm:$0xf]
    %v573 = vld [vmem:[%s1 + $0x20] sm:$0xf]
    %v574 = vld [vmem:[%s1 + $0x24] sm:$0xf]
    %v575 = vld [vmem:[%s1 + $0x28] sm:$0xf]
    %v576 = vld [vmem:[%s1 + $0x2c] sm:$0xf]
    %v577 = vld [vmem:[%s1 + $0x30] sm:$0xf]
    %v578 = vld [vmem:[%s1 + $0x34] sm:$0xf]
    %v579 = vld [vmem:[%s1 + $0x38] sm:$0xf]
    %v580 = vld [vmem:[%s1 + $0x3c] sm:$0xf]
    %v581 = vld [vmem:[%s5] sm:$0xf]
    %v582 = vld [vmem:[%s5 + $0x4] sm:$0xf]
    %v583 = vld [vmem:[%s5 + $0x8] sm:$0xf]
    %v584 = vld [vmem:[%s5 + $0xc] sm:$0xf]
    %v585 = vld [vmem:[%s5 + $0x10] sm:$0xf]
    %v586 = vld [vmem:[%s5 + $0x14] sm:$0xf]
    %v587 = vld [vmem:[%s5 + $0x18] sm:$0xf]
    %v588 = vld [vmem:[%s5 + $0x1c] sm:$0xf]
    %v589 = vld [vmem:[%s5 + $0x20] sm:$0xf]
    %v590 = vld [vmem:[%s5 + $0x24] sm:$0xf]
    %v591 = vld [vmem:[%s5 + $0x28] sm:$0xf]
    %v592 = vld [vmem:[%s5 + $0x2c] sm:$0xf]
    %v593 = vld [vmem:[%s5 + $0x30] sm:$0xf]
    %v594 = vld [vmem:[%s5 + $0x34] sm:$0xf]
    %v595 = vld [vmem:[%s5 + $0x38] sm:$0xf]
    %v596 = vld [vmem:[%s5 + $0x3c] sm:$0xf]
    %v597 = vld [vmem:[#allocation7] sm:$0x1]
    %v599 = vlaneseq
    %v600 = vshrl.u32 %v599, 7
    %v601 = vsub.s32 0, %v600
    %v602 = vrot.slane %v597, %v601
    %v620 = vunpack.c.l.b16 %v565
    %v621 = vunpack.c.l.b16 %v566
    %v622 = vunpack.c.l.b16 %v567
    %v623 = vunpack.c.l.b16 %v568
    %v624 = vunpack.c.l.b16 %v569
    %v625 = vunpack.c.l.b16 %v570
    %v626 = vunpack.c.l.b16 %v571
    %v627 = vunpack.c.l.b16 %v572
    %v628 = vunpack.c.l.b16 %v573
    %v629 = vunpack.c.l.b16 %v574
    %v630 = vunpack.c.l.b16 %v575
    %v631 = vunpack.c.l.b16 %v576
    %v632 = vunpack.c.l.b16 %v577
    %v633 = vunpack.c.l.b16 %v578
    %v634 = vunpack.c.l.b16 %v579
    %v635 = vunpack.c.l.b16 %v580
    %v636 = vpack.c.b16 %v621, %v620
    %v637 = vpack.c.b16 %v623, %v622
    %v638 = vpack.c.b16 %v625, %v624
    %v639 = vpack.c.b16 %v627, %v626
    %v640 = vpack.c.b16 %v629, %v628
    %v641 = vpack.c.b16 %v631, %v630
    %v642 = vpack.c.b16 %v633, %v632
    %v643 = vpack.c.b16 %v635, %v634
    %v668 = vunpack.c.l.b16 %v581
    %v669 = vunpack.c.l.b16 %v582
    %v670 = vunpack.c.l.b16 %v583
    %v671 = vunpack.c.l.b16 %v584
    %v672 = vunpack.c.l.b16 %v585
    %v673 = vunpack.c.l.b16 %v586
    %v674 = vunpack.c.l.b16 %v587
    %v675 = vunpack.c.l.b16 %v588
    %v676 = vunpack.c.l.b16 %v589
    %v677 = vunpack.c.l.b16 %v590
    %v678 = vunpack.c.l.b16 %v591
    %v679 = vunpack.c.l.b16 %v592
    %v680 = vunpack.c.l.b16 %v593
    %v681 = vunpack.c.l.b16 %v594
    %v682 = vunpack.c.l.b16 %v595
    %v683 = vunpack.c.l.b16 %v596
    %v684 = vpack.c.b16 %v669, %v668
    %v685 = vpack.c.b16 %v671, %v670
    %v686 = vpack.c.b16 %v673, %v672
    %v687 = vpack.c.b16 %v675, %v674
    %v688 = vpack.c.b16 %v677, %v676
    %v689 = vpack.c.b16 %v679, %v678
    %v690 = vpack.c.b16 %v681, %v680
    %v691 = vpack.c.b16 %v683, %v682
    %700 = vmatprep.subr.bf16.mxu0 0
    %701 = vmatpush1.bf16.msra.mxu0 %v684
    %702 = vmatprep.subr.bf16.mxu0 0
    %703 = vmatpush1.bf16.msra.mxu0 %v685
    %704 = vmatprep.subr.bf16.mxu0 0
    %705 = vmatpush1.bf16.msra.mxu0 %v686
    %706 = vmatprep.subr.bf16.mxu0 0
    %707 = vmatpush1.bf16.msra.mxu0 %v687
    %708 = vmatprep.subr.bf16.mxu0 0
    %709 = vmatpush1.bf16.msra.mxu0 %v688
    %710 = vmatprep.subr.bf16.mxu0 0
    %711 = vmatpush1.bf16.msra.mxu0 %v689
    %712 = vmatprep.subr.bf16.mxu0 0
    %713 = vmatpush1.bf16.msra.mxu0 %v690
    %714 = vmatprep.subr.bf16.mxu0 0
    %715 = vmatpush1.bf16.msra.mxu0 %v691
    %716 = vmatprep.subr.bf16.mxu0 0
    %717 = vmatpush1.bf16.msra.mxu0 0
    %718 = vmatprep.subr.bf16.mxu0 0
    %719 = vmatpush1.bf16.msra.mxu0 0
    %720 = vmatprep.subr.bf16.mxu0 0
    %721 = vmatpush1.bf16.msra.mxu0 0
    %722 = vmatprep.subr.bf16.mxu0 0
    %723 = vmatpush1.bf16.msra.mxu0 0
    %724 = vmatprep.subr.bf16.mxu0 0
    %725 = vmatpush1.bf16.msra.mxu0 0
    %726 = vmatprep.subr.bf16.mxu0 0
    %727 = vmatpush1.bf16.msra.mxu0 0
    %728 = vmatprep.subr.bf16.mxu0 0
    %729 = vmatpush1.bf16.msra.mxu0 0
    %730 = vmatprep.subr.bf16.mxu0 0
    %731 = vmatpush1.bf16.msra.mxu0 0
    %732 = vmatprep.mubr.bf16.mxu0 0
    %733 = vmatmul.mubr.bf16.gmra.mrb[0].mxu0 %v636
    %v734 = vpop.f32.mrb[0].mxu0
    %v735 = vadd.f32 %v602, %v734
    %v736 = vpop.f32.mrb[0].mxu0
    %v737 = vpop.f32.mrb[0].mxu0
    %v738 = vadd.f32 %v602, %v737
    %v739 = vpop.f32.mrb[0].mxu0
    %740 = vmatprep.mubr.bf16.mxu0 0
    %741 = vmatmul.mubr.bf16.gmra.mrb[0].mxu0 %v637
    %v742 = vpop.f32.mrb[0].mxu0
    %v743 = vadd.f32 %v602, %v742
    %v744 = vpop.f32.mrb[0].mxu0
    %v745 = vpop.f32.mrb[0].mxu0
    %v746 = vadd.f32 %v602, %v745
    %v747 = vpop.f32.mrb[0].mxu0
    %748 = vmatprep.mubr.bf16.mxu0 0
    %749 = vmatmul.mubr.bf16.gmra.mrb[0].mxu0 %v638
    %v750 = vpop.f32.mrb[0].mxu0
    %v751 = vadd.f32 %v602, %v750
    %v752 = vpop.f32.mrb[0].mxu0
    %v753 = vpop.f32.mrb[0].mxu0
    %v754 = vadd.f32 %v602, %v753
    %v755 = vpop.f32.mrb[0].mxu0
    %756 = vmatprep.mubr.bf16.mxu0 0
    %757 = vmatmul.mubr.bf16.gmra.mrb[0].mxu0 %v639
    %v758 = vpop.f32.mrb[0].mxu0
    %v759 = vadd.f32 %v602, %v758
    %v760 = vpop.f32.mrb[0].mxu0
    %v761 = vpop.f32.mrb[0].mxu0
    %v762 = vadd.f32 %v602, %v761
    %v763 = vpop.f32.mrb[0].mxu0
    %764 = vmatprep.mubr.bf16.mxu0 0
    %765 = vmatmul.mubr.bf16.gmra.mrb[0].mxu0 %v640
    %v766 = vpop.f32.mrb[0].mxu0
    %v767 = vadd.f32 %v602, %v766
    %v768 = vpop.f32.mrb[0].mxu0
    %v769 = vpop.f32.mrb[0].mxu0
    %v770 = vadd.f32 %v602, %v769
    %v771 = vpop.f32.mrb[0].mxu0
    %772 = vmatprep.mubr.bf16.mxu0 0
    %773 = vmatmul.mubr.bf16.gmra.mrb[0].mxu0 %v641
    %v774 = vpop.f32.mrb[0].mxu0
    %v775 = vadd.f32 %v602, %v774
    %v776 = vpop.f32.mrb[0].mxu0
    %v777 = vpop.f32.mrb[0].mxu0
    %v778 = vadd.f32 %v602, %v777
    %v779 = vpop.f32.mrb[0].mxu0
    %780 = vmatprep.mubr.bf16.mxu0 0
    %781 = vmatmul.mubr.bf16.gmra.mrb[0].mxu0 %v642
    %v782 = vpop.f32.mrb[0].mxu0
    %v783 = vadd.f32 %v602, %v782
    %v784 = vpop.f32.mrb[0].mxu0
    %v785 = vpop.f32.mrb[0].mxu0
    %v786 = vadd.f32 %v602, %v785
    %v787 = vpop.f32.mrb[0].mxu0
    %788 = vmatprep.mubr.bf16.mxu0 0
    %789 = vmatmul.mubr.bf16.gmra.mrb[0].mxu0 %v643
    %v790 = vpop.f32.mrb[0].mxu0
    %v791 = vadd.f32 %v602, %v790
    %v792 = vpop.f32.mrb[0].mxu0
    %v793 = vpop.f32.mrb[0].mxu0
    %v794 = vadd.f32 %v602, %v793
    %v795 = vpop.f32.mrb[0].mxu0
    %796 = vdwg.mxu0
    %v797 = vld [vmem:[%s3] sm:$0xf]
    %v798 = vld [vmem:[%s3 + $0x4] sm:$0xf]
    %v799 = vld [vmem:[%s3 + $0x8] sm:$0xf]
    %v800 = vld [vmem:[%s3 + $0xc] sm:$0xf]
    %v801 = vld [vmem:[%s3 + $0x10] sm:$0xf]
    %v802 = vld [vmem:[%s3 + $0x14] sm:$0xf]
    %v803 = vld [vmem:[%s3 + $0x18] sm:$0xf]
    %v804 = vld [vmem:[%s3 + $0x1c] sm:$0xf]
    %v805 = vld [vmem:[%s3 + $0x20] sm:$0xf]
    %v806 = vld [vmem:[%s3 + $0x24] sm:$0xf]
    %v807 = vld [vmem:[%s3 + $0x28] sm:$0xf]
    %v808 = vld [vmem:[%s3 + $0x2c] sm:$0xf]
    %v809 = vld [vmem:[%s3 + $0x30] sm:$0xf]
    %v810 = vld [vmem:[%s3 + $0x34] sm:$0xf]
    %v811 = vld [vmem:[%s3 + $0x38] sm:$0xf]
    %v812 = vld [vmem:[%s3 + $0x3c] sm:$0xf]
    %v829 = vunpack.c.l.b16 %v797
    %v830 = vunpack.c.l.b16 %v798
    %v831 = vunpack.c.l.b16 %v799
    %v832 = vunpack.c.l.b16 %v800
    %v833 = vunpack.c.l.b16 %v801
    %v834 = vunpack.c.l.b16 %v802
    %v835 = vunpack.c.l.b16 %v803
    %v836 = vunpack.c.l.b16 %v804
    %v837 = vunpack.c.l.b16 %v805
    %v838 = vunpack.c.l.b16 %v806
    %v839 = vunpack.c.l.b16 %v807
    %v840 = vunpack.c.l.b16 %v808
    %v841 = vunpack.c.l.b16 %v809
    %v842 = vunpack.c.l.b16 %v810
    %v843 = vunpack.c.l.b16 %v811
    %v844 = vunpack.c.l.b16 %v812
    %v845 = vpack.c.b16 %v830, %v829
    %v846 = vpack.c.b16 %v832, %v831
    %v847 = vpack.c.b16 %v834, %v833
    %v848 = vpack.c.b16 %v836, %v835
    %v849 = vpack.c.b16 %v838, %v837
    %v850 = vpack.c.b16 %v840, %v839
    %v851 = vpack.c.b16 %v842, %v841
    %v852 = vpack.c.b16 %v844, %v843
    %861 = vmatprep.subr.bf16.mxu0 0
    %862 = vmatpush1.bf16.msra.mxu0 %v684
    %863 = vmatprep.subr.bf16.mxu0 0
    %864 = vmatpush1.bf16.msra.mxu0 %v685
    %865 = vmatprep.subr.bf16.mxu0 0
    %866 = vmatpush1.bf16.msra.mxu0 %v686
    %867 = vmatprep.subr.bf16.mxu0 0
    %868 = vmatpush1.bf16.msra.mxu0 %v687
    %869 = vmatprep.subr.bf16.mxu0 0
    %870 = vmatpush1.bf16.msra.mxu0 %v688
    %871 = vmatprep.subr.bf16.mxu0 0
    %872 = vmatpush1.bf16.msra.mxu0 %v689
    %873 = vmatprep.subr.bf16.mxu0 0
    %874 = vmatpush1.bf16.msra.mxu0 %v690
    %875 = vmatprep.subr.bf16.mxu0 0
    %876 = vmatpush1.bf16.msra.mxu0 %v691
    %877 = vmatprep.subr.bf16.mxu0 0
    %878 = vmatpush1.bf16.msra.mxu0 0
    %879 = vmatprep.subr.bf16.mxu0 0
    %880 = vmatpush1.bf16.msra.mxu0 0
    %881 = vmatprep.subr.bf16.mxu0 0
    %882 = vmatpush1.bf16.msra.mxu0 0
    %883 = vmatprep.subr.bf16.mxu0 0
    %884 = vmatpush1.bf16.msra.mxu0 0
    %885 = vmatprep.subr.bf16.mxu0 0
    %886 = vmatpush1.bf16.msra.mxu0 0
    %887 = vmatprep.subr.bf16.mxu0 0
    %888 = vmatpush1.bf16.msra.mxu0 0
    %889 = vmatprep.subr.bf16.mxu0 0
    %890 = vmatpush1.bf16.msra.mxu0 0
    %891 = vmatprep.subr.bf16.mxu0 0
    %892 = vmatpush1.bf16.msra.mxu0 0
    %893 = vmatprep.mubr.bf16.mxu0 0
    %894 = vmatmul.mubr.bf16.gmra.mrb[0].mxu0 %v845
    %v895 = vpop.f32.mrb[0].mxu0
    %v896 = vadd.f32 %v602, %v895
    %v897 = vpop.f32.mrb[0].mxu0
    %v898 = vpop.f32.mrb[0].mxu0
    %v899 = vadd.f32 %v602, %v898
    %v900 = vpop.f32.mrb[0].mxu0
    %901 = vmatprep.mubr.bf16.mxu0 0
    %902 = vmatmul.mubr.bf16.gmra.mrb[0].mxu0 %v846
    %v903 = vpop.f32.mrb[0].mxu0
    %v904 = vadd.f32 %v602, %v903
    %v905 = vpop.f32.mrb[0].mxu0
    %v906 = vpop.f32.mrb[0].mxu0
    %v907 = vadd.f32 %v602, %v906
    %v908 = vpop.f32.mrb[0].mxu0
    %909 = vmatprep.mubr.bf16.mxu0 0
    %910 = vmatmul.mubr.bf16.gmra.mrb[0].mxu0 %v847
    %v911 = vpop.f32.mrb[0].mxu0
    %v912 = vadd.f32 %v602, %v911
    %v913 = vpop.f32.mrb[0].mxu0
    %v914 = vpop.f32.mrb[0].mxu0
    %v915 = vadd.f32 %v602, %v914
    %v916 = vpop.f32.mrb[0].mxu0
    %917 = vmatprep.mubr.bf16.mxu0 0
    %918 = vmatmul.mubr.bf16.gmra.mrb[0].mxu0 %v848
    %v919 = vpop.f32.mrb[0].mxu0
    %v920 = vadd.f32 %v602, %v919
    %v921 = vpop.f32.mrb[0].mxu0
    %v922 = vpop.f32.mrb[0].mxu0
    %v923 = vadd.f32 %v602, %v922
    %v924 = vpop.f32.mrb[0].mxu0
    %925 = vmatprep.mubr.bf16.mxu0 0
    %926 = vmatmul.mubr.bf16.gmra.mrb[0].mxu0 %v849
    %v927 = vpop.f32.mrb[0].mxu0
    %v928 = vadd.f32 %v602, %v927
    %v929 = vpop.f32.mrb[0].mxu0
    %v930 = vpop.f32.mrb[0].mxu0
    %v931 = vadd.f32 %v602, %v930
    %v932 = vpop.f32.mrb[0].mxu0
    %933 = vmatprep.mubr.bf16.mxu0 0
    %934 = vmatmul.mubr.bf16.gmra.mrb[0].mxu0 %v850
    %v935 = vpop.f32.mrb[0].mxu0
    %v936 = vadd.f32 %v602, %v935
    %v937 = vpop.f32.mrb[0].mxu0
    %v938 = vpop.f32.mrb[0].mxu0
    %v939 = vadd.f32 %v602, %v938
    %v940 = vpop.f32.mrb[0].mxu0
    %941 = vmatprep.mubr.bf16.mxu0 0
    %942 = vmatmul.mubr.bf16.gmra.mrb[0].mxu0 %v851
    %v943 = vpop.f32.mrb[0].mxu0
    %v944 = vadd.f32 %v602, %v943
    %v945 = vpop.f32.mrb[0].mxu0
    %v946 = vpop.f32.mrb[0].mxu0
    %v947 = vadd.f32 %v602, %v946
    %v948 = vpop.f32.mrb[0].mxu0
    %949 = vmatprep.mubr.bf16.mxu0 0
    %950 = vmatmul.mubr.bf16.gmra.mrb[0].mxu0 %v852
    %v951 = vpop.f32.mrb[0].mxu0
    %v952 = vadd.f32 %v602, %v951
    %v953 = vpop.f32.mrb[0].mxu0
    %v954 = vpop.f32.mrb[0].mxu0
    %v955 = vadd.f32 %v602, %v954
    %v956 = vpop.f32.mrb[0].mxu0
    %957 = vdwg.mxu0
    %v958 = vmax.f32 %v735, %v896
    %v959 = vmax.f32 %v738, %v899
    %v960 = vmax.f32 %v743, %v904
    %v961 = vmax.f32 %v746, %v907
    %v962 = vmax.f32 %v751, %v912
    %v963 = vmax.f32 %v754, %v915
    %v964 = vmax.f32 %v759, %v920
    %v965 = vmax.f32 %v762, %v923
    %v966 = vmax.f32 %v767, %v928
    %v967 = vmax.f32 %v770, %v931
    %v968 = vmax.f32 %v775, %v936
    %v969 = vmax.f32 %v778, %v939
    %v970 = vmax.f32 %v783, %v944
    %v971 = vmax.f32 %v786, %v947
    %v972 = vmax.f32 %v791, %v952
    %v973 = vmax.f32 %v794, %v955
    %v974 = vmax.f32 %v958, 0.0
    %v975 = vmax.f32 %v959, 0.0
    %v976 = vmax.f32 %v960, 0.0
    %v977 = vmax.f32 %v961, 0.0
    %v978 = vmax.f32 %v962, 0.0
    %v979 = vmax.f32 %v963, 0.0
    %v980 = vmax.f32 %v964, 0.0
    %v981 = vmax.f32 %v965, 0.0
    %v982 = vmax.f32 %v966, 0.0
    %v983 = vmax.f32 %v967, 0.0
    %v984 = vmax.f32 %v968, 0.0
    %v985 = vmax.f32 %v969, 0.0
    %v986 = vmax.f32 %v970, 0.0
    %v987 = vmax.f32 %v971, 0.0
    %v988 = vmax.f32 %v972, 0.0
    %v989 = vmax.f32 %v973, 0.0
    %vm990 = vcmask 516096
    %991 = vst.msk [vmem:[#allocation2 + $0x7] sm:$0x1] %vm990, 0.0
    %992 = vst.msk [vmem:[#allocation2 + $0x57] sm:$0x1] %vm990, 0.0
    %993 = vst.msk [vmem:[#allocation2 + $0x48] sm:$0x1] %vm990, 0.0
    %994 = vst.msk [vmem:[#allocation2 + $0x98] sm:$0x1] %vm990, 0.0
    %vm995 = vcmask 523264
    %996 = vst.msk [vmem:[#allocation2 + $0x8] sm:$0xff] %vm995, %v974
    %997 = vst.msk [vmem:[#allocation2 + $0x10] sm:$0xff] %vm995, %v975
    %998 = vst.msk [vmem:[#allocation2 + $0x18] sm:$0xff] %vm995, %v976
    %999 = vst.msk [vmem:[#allocation2 + $0x20] sm:$0xff] %vm995, %v977
    %1000 = vst.msk [vmem:[#allocation2 + $0x28] sm:$0xff] %vm995, %v978
    %1001 = vst.msk [vmem:[#allocation2 + $0x30] sm:$0xff] %vm995, %v979
    %1002 = vst.msk [vmem:[#allocation2 + $0x38] sm:$0xff] %vm995, %v980
    %1003 = vst.msk [vmem:[#allocation2 + $0x40] sm:$0xff] %vm995, %v981
    %1004 = vst.msk [vmem:[#allocation2 + $0x58] sm:$0xff] %vm995, %v982
    %1005 = vst.msk [vmem:[#allocation2 + $0x60] sm:$0xff] %vm995, %v983
    %1006 = vst.msk [vmem:[#allocation2 + $0x68] sm:$0xff] %vm995, %v984
    %1007 = vst.msk [vmem:[#allocation2 + $0x70] sm:$0xff] %vm995, %v985
    %1008 = vst.msk [vmem:[#allocation2 + $0x78] sm:$0xff] %vm995, %v986
    %1009 = vst.msk [vmem:[#allocation2 + $0x80] sm:$0xff] %vm995, %v987
    %1010 = vst.msk [vmem:[#allocation2 + $0x88] sm:$0xff] %vm995, %v988
    %1011 = vst.msk [vmem:[#allocation2 + $0x90] sm:$0xff] %vm995, %v989
    %v1012 = vld [vmem:[#allocation2 + $0x7] sm:$0xff]
    %v1013 = vld [vmem:[#allocation2 + $0xf] sm:$0xff]
    %v1014 = vld [vmem:[#allocation2 + $0x17] sm:$0xff]
    %v1015 = vld [vmem:[#allocation2 + $0x1f] sm:$0xff]
    %v1016 = vld [vmem:[#allocation2 + $0x27] sm:$0xff]
    %v1017 = vld [vmem:[#allocation2 + $0x2f] sm:$0xff]
    %v1018 = vld [vmem:[#allocation2 + $0x37] sm:$0xff]
    %v1019 = vld [vmem:[#allocation2 + $0x3f] sm:$0xff]
    %v1020 = vld [vmem:[#allocation2 + $0x57] sm:$0xff]
    %v1021 = vld [vmem:[#allocation2 + $0x5f] sm:$0xff]
    %v1022 = vld [vmem:[#allocation2 + $0x67] sm:$0xff]
    %v1023 = vld [vmem:[#allocation2 + $0x6f] sm:$0xff]
    %v1024 = vld [vmem:[#allocation2 + $0x77] sm:$0xff]
    %v1025 = vld [vmem:[#allocation2 + $0x7f] sm:$0xff]
    %v1026 = vld [vmem:[#allocation2 + $0x87] sm:$0xff]
    %v1027 = vld [vmem:[#allocation2 + $0x8f] sm:$0xff]
    %v1028 = vld [vmem:[#allocation2 + $0x8] sm:$0xff]
    %v1029 = vld [vmem:[#allocation2 + $0x10] sm:$0xff]
    %v1030 = vld [vmem:[#allocation2 + $0x18] sm:$0xff]
    %v1031 = vld [vmem:[#allocation2 + $0x20] sm:$0xff]
    %v1032 = vld [vmem:[#allocation2 + $0x28] sm:$0xff]
    %v1033 = vld [vmem:[#allocation2 + $0x30] sm:$0xff]
    %v1034 = vld [vmem:[#allocation2 + $0x38] sm:$0xff]
    %v1035 = vld [vmem:[#allocation2 + $0x40] sm:$0xff]
    %v1036 = vld [vmem:[#allocation2 + $0x58] sm:$0xff]
    %v1037 = vld [vmem:[#allocation2 + $0x60] sm:$0xff]
    %v1038 = vld [vmem:[#allocation2 + $0x68] sm:$0xff]
    %v1039 = vld [vmem:[#allocation2 + $0x70] sm:$0xff]
    %v1040 = vld [vmem:[#allocation2 + $0x78] sm:$0xff]
    %v1041 = vld [vmem:[#allocation2 + $0x80] sm:$0xff]
    %v1042 = vld [vmem:[#allocation2 + $0x88] sm:$0xff]
    %v1043 = vld [vmem:[#allocation2 + $0x90] sm:$0xff]
    %v1044 = vld [vmem:[#allocation2 + $0x9] sm:$0xff]
    %v1045 = vld [vmem:[#allocation2 + $0x11] sm:$0xff]
    %v1046 = vld [vmem:[#allocation2 + $0x19] sm:$0xff]
    %v1047 = vld [vmem:[#allocation2 + $0x21] sm:$0xff]
    %v1048 = vld [vmem:[#allocation2 + $0x29] sm:$0xff]
    %v1049 = vld [vmem:[#allocation2 + $0x31] sm:$0xff]
    %v1050 = vld [vmem:[#allocation2 + $0x39] sm:$0xff]
    %v1051 = vld [vmem:[#allocation2 + $0x41] sm:$0xff]
    %v1052 = vld [vmem:[#allocation2 + $0x59] sm:$0xff]
    %v1053 = vld [vmem:[#allocation2 + $0x61] sm:$0xff]
    %v1054 = vld [vmem:[#allocation2 + $0x69] sm:$0xff]
    %v1055 = vld [vmem:[#allocation2 + $0x71] sm:$0xff]
    %v1056 = vld [vmem:[#allocation2 + $0x79] sm:$0xff]
    %v1057 = vld [vmem:[#allocation2 + $0x81] sm:$0xff]
    %v1058 = vld [vmem:[#allocation2 + $0x89] sm:$0xff]
    %v1059 = vld [vmem:[#allocation2 + $0x91] sm:$0xff]
    %1076 = vrot.lane.b32.xlu0 %v1028, 64
    %v1077 = vpop.permute.xlu0 %1076
    %1078 = vrot.lane.b32.xlu0 %v1029, 64
    %v1079 = vpop.permute.xlu0 %1078
    %1080 = vrot.lane.b32.xlu0 %v1030, 64
    %v1081 = vpop.permute.xlu0 %1080
    %1082 = vrot.lane.b32.xlu0 %v1031, 64
    %v1083 = vpop.permute.xlu0 %1082
    %1084 = vrot.lane.b32.xlu0 %v1032, 64
    %v1085 = vpop.permute.xlu0 %1084
    %1086 = vrot.lane.b32.xlu0 %v1033, 64
    %v1087 = vpop.permute.xlu0 %1086
    %1088 = vrot.lane.b32.xlu0 %v1034, 64
    %v1089 = vpop.permute.xlu0 %1088
    %1090 = vrot.lane.b32.xlu0 %v1035, 64
    %v1091 = vpop.permute.xlu0 %1090
    %1092 = vrot.lane.b32.xlu0 %v1036, 64
    %v1093 = vpop.permute.xlu0 %1092
    %1094 = vrot.lane.b32.xlu0 %v1037, 64
    %v1095 = vpop.permute.xlu0 %1094
    %1096 = vrot.lane.b32.xlu0 %v1038, 64
    %v1097 = vpop.permute.xlu0 %1096
    %1098 = vrot.lane.b32.xlu0 %v1039, 64
    %v1099 = vpop.permute.xlu0 %1098
    %1100 = vrot.lane.b32.xlu0 %v1040, 64
    %v1101 = vpop.permute.xlu0 %1100
    %1102 = vrot.lane.b32.xlu0 %v1041, 64
    %v1103 = vpop.permute.xlu0 %1102
    %1104 = vrot.lane.b32.xlu0 %v1042, 64
    %v1105 = vpop.permute.xlu0 %1104
    %1106 = vrot.lane.b32.xlu0 %v1043, 64
    %v1107 = vpop.permute.xlu0 %1106
    %v1124 = vsel %vm995, %v1012, %v1077
    %v1125 = vsel %vm995, %v1013, %v1079
    %v1126 = vsel %vm995, %v1014, %v1081
    %v1127 = vsel %vm995, %v1015, %v1083
    %v1128 = vsel %vm995, %v1016, %v1085
    %v1129 = vsel %vm995, %v1017, %v1087
    %v1130 = vsel %vm995, %v1018, %v1089
    %v1131 = vsel %vm995, %v1019, %v1091
    %v1132 = vsel %vm995, %v1020, %v1093
    %v1133 = vsel %vm995, %v1021, %v1095
    %v1134 = vsel %vm995, %v1022, %v1097
    %v1135 = vsel %vm995, %v1023, %v1099
    %v1136 = vsel %vm995, %v1024, %v1101
    %v1137 = vsel %vm995, %v1025, %v1103
    %v1138 = vsel %vm995, %v1026, %v1105
    %v1139 = vsel %vm995, %v1027, %v1107
    %v1140 = vpack.c.bf16 %v1125, %v1124
    %v1141 = vpack.c.bf16 %v1045, %v1044
    %v1142 = vpack.c.bf16 %v1127, %v1126
    %v1143 = vpack.c.bf16 %v1047, %v1046
    %v1144 = vpack.c.bf16 %v1129, %v1128
    %v1145 = vpack.c.bf16 %v1049, %v1048
    %v1146 = vpack.c.bf16 %v1131, %v1130
    %v1147 = vpack.c.bf16 %v1051, %v1050
    %v1148 = vpack.c.bf16 %v1133, %v1132
    %v1149 = vpack.c.bf16 %v1053, %v1052
    %v1150 = vpack.c.bf16 %v1135, %v1134
    %v1151 = vpack.c.bf16 %v1055, %v1054
    %v1152 = vpack.c.bf16 %v1137, %v1136
    %v1153 = vpack.c.bf16 %v1057, %v1056
    %v1154 = vpack.c.bf16 %v1139, %v1138
    %v1155 = vpack.c.bf16 %v1059, %v1058
    %v1156 = vld [vmem:[%s9] sm:$0xf]
    %v1157 = vld [vmem:[%s9 + $0x4] sm:$0xf]
    %v1158 = vld [vmem:[%s9 + $0x8] sm:$0xf]
    %v1159 = vld [vmem:[%s9 + $0xc] sm:$0xf]
    %v1160 = vld [vmem:[%s9 + $0x10] sm:$0xf]
    %v1161 = vld [vmem:[%s9 + $0x14] sm:$0xf]
    %v1162 = vld [vmem:[%s9 + $0x18] sm:$0xf]
    %v1163 = vld [vmem:[%s9 + $0x1c] sm:$0xf]
    %v1164 = vld [vmem:[%s9 + $0x20] sm:$0xf]
    %v1165 = vld [vmem:[%s9 + $0x24] sm:$0xf]
    %v1166 = vld [vmem:[%s9 + $0x28] sm:$0xf]
    %v1167 = vld [vmem:[%s9 + $0x2c] sm:$0xf]
    %v1168 = vld [vmem:[%s9 + $0x30] sm:$0xf]
    %v1169 = vld [vmem:[%s9 + $0x34] sm:$0xf]
    %v1170 = vld [vmem:[%s9 + $0x38] sm:$0xf]
    %v1171 = vld [vmem:[%s9 + $0x3c] sm:$0xf]
    %v1172 = vld [vmem:[%s9 + $0x40] sm:$0xf]
    %v1173 = vld [vmem:[%s9 + $0x44] sm:$0xf]
    %v1174 = vld [vmem:[%s9 + $0x48] sm:$0xf]
    %v1175 = vld [vmem:[%s9 + $0x4c] sm:$0xf]
    %v1176 = vld [vmem:[%s9 + $0x50] sm:$0xf]
    %v1177 = vld [vmem:[%s9 + $0x54] sm:$0xf]
    %v1178 = vld [vmem:[%s9 + $0x58] sm:$0xf]
    %v1179 = vld [vmem:[%s9 + $0x5c] sm:$0xf]
    %v1180 = vld [vmem:[#allocation10] sm:$0x1]
    %v1182 = vlaneseq
    %v1183 = vshrl.u32 %v1182, 7
    %v1184 = vsub.s32 0, %v1183
    %v1185 = vrot.slane %v1180, %v1184
    %v1211 = vunpack.c.l.b16 %v1156
    %v1212 = vunpack.c.l.b16 %v1157
    %v1213 = vunpack.c.l.b16 %v1158
    %v1214 = vunpack.c.l.b16 %v1159
    %v1215 = vunpack.c.l.b16 %v1160
    %v1216 = vunpack.c.l.b16 %v1161
    %v1217 = vunpack.c.l.b16 %v1162
    %v1218 = vunpack.c.l.b16 %v1163
    %v1219 = vunpack.c.l.b16 %v1164
    %v1220 = vunpack.c.l.b16 %v1165
    %v1221 = vunpack.c.l.b16 %v1166
    %v1222 = vunpack.c.l.b16 %v1167
    %v1223 = vunpack.c.l.b16 %v1168
    %v1224 = vunpack.c.l.b16 %v1169
    %v1225 = vunpack.c.l.b16 %v1170
    %v1226 = vunpack.c.l.b16 %v1171
    %v1227 = vunpack.c.l.b16 %v1172
    %v1228 = vunpack.c.l.b16 %v1173
    %v1229 = vunpack.c.l.b16 %v1174
    %v1230 = vunpack.c.l.b16 %v1175
    %v1231 = vunpack.c.l.b16 %v1176
    %v1232 = vunpack.c.l.b16 %v1177
    %v1233 = vunpack.c.l.b16 %v1178
    %v1234 = vunpack.c.l.b16 %v1179
    %v1235 = vpack.c.b16 %v1212, %v1211
    %v1236 = vpack.c.b16 %v1214, %v1213
    %v1237 = vpack.c.b16 %v1216, %v1215
    %v1238 = vpack.c.b16 %v1218, %v1217
    %v1239 = vpack.c.b16 %v1220, %v1219
    %v1240 = vpack.c.b16 %v1222, %v1221
    %v1241 = vpack.c.b16 %v1224, %v1223
    %v1242 = vpack.c.b16 %v1226, %v1225
    %v1243 = vpack.c.b16 %v1228, %v1227
    %v1244 = vpack.c.b16 %v1230, %v1229
    %v1245 = vpack.c.b16 %v1232, %v1231
    %v1246 = vpack.c.b16 %v1234, %v1233
    %v1260 = vsel %vm995, %v1141, 0
    %v1263 = vsel %vm995, %v1143, 0
    %v1266 = vsel %vm995, %v1145, 0
    %v1269 = vsel %vm995, %v1147, 0
    %v1272 = vsel %vm995, %v1149, 0
    %v1275 = vsel %vm995, %v1151, 0
    %v1278 = vsel %vm995, %v1153, 0
    %v1281 = vsel %vm995, %v1155, 0
    %1283 = vmatprep.subr.bf16.mxu0 0
    %1284 = vmatpush1.bf16.msra.mxu0 %v1235
    %1285 = vmatprep.subr.bf16.mxu0 0
    %1286 = vmatpush1.bf16.msra.mxu0 %v1236
    %1287 = vmatprep.subr.bf16.mxu0 0
    %1288 = vmatpush1.bf16.msra.mxu0 %v1237
    %1289 = vmatprep.subr.bf16.mxu0 0
    %1290 = vmatpush1.bf16.msra.mxu0 %v1238
    %1291 = vmatprep.subr.bf16.mxu0 0
    %1292 = vmatpush1.bf16.msra.mxu0 %v1239
    %1293 = vmatprep.subr.bf16.mxu0 0
    %1294 = vmatpush1.bf16.msra.mxu0 %v1240
    %1295 = vmatprep.subr.bf16.mxu0 0
    %1296 = vmatpush1.bf16.msra.mxu0 %v1241
    %1297 = vmatprep.subr.bf16.mxu0 0
    %1298 = vmatpush1.bf16.msra.mxu0 %v1242
    %1299 = vmatprep.subr.bf16.mxu0 0
    %1300 = vmatpush1.bf16.msra.mxu0 %v1243
    %1301 = vmatprep.subr.bf16.mxu0 0
    %1302 = vmatpush1.bf16.msra.mxu0 %v1244
    %1303 = vmatprep.subr.bf16.mxu0 0
    %1304 = vmatpush1.bf16.msra.mxu0 %v1245
    %1305 = vmatprep.subr.bf16.mxu0 0
    %1306 = vmatpush1.bf16.msra.mxu0 %v1246
    %1307 = vmatprep.subr.bf16.mxu0 0
    %1308 = vmatpush1.bf16.msra.mxu0 0
    %1309 = vmatprep.subr.bf16.mxu0 0
    %1310 = vmatpush1.bf16.msra.mxu0 0
    %1311 = vmatprep.subr.bf16.mxu0 0
    %1312 = vmatpush1.bf16.msra.mxu0 0
    %1313 = vmatprep.subr.bf16.mxu0 0
    %1314 = vmatpush1.bf16.msra.mxu0 0
    %1315 = vmatprep.mubr.bf16.mxu0 %v1260
    %1316 = vmatmul.mubr.bf16.gmra.mrb[0].mxu0 %v1140
    %v1317 = vpop.f32.mrb[0].mxu0
    %v1318 = vadd.f32 %v1185, %v1317
    %v1319 = vpop.f32.mrb[0].mxu0
    %v1320 = vpop.f32.mrb[0].mxu0
    %v1321 = vadd.f32 %v1185, %v1320
    %v1322 = vpop.f32.mrb[0].mxu0
    %1323 = vmatprep.mubr.bf16.mxu0 %v1263
    %1324 = vmatmul.mubr.bf16.gmra.mrb[0].mxu0 %v1142
    %v1325 = vpop.f32.mrb[0].mxu0
    %v1326 = vadd.f32 %v1185, %v1325
    %v1327 = vpop.f32.mrb[0].mxu0
    %v1328 = vpop.f32.mrb[0].mxu0
    %v1329 = vadd.f32 %v1185, %v1328
    %v1330 = vpop.f32.mrb[0].mxu0
    %1331 = vmatprep.mubr.bf16.mxu0 %v1266
    %1332 = vmatmul.mubr.bf16.gmra.mrb[0].mxu0 %v1144
    %v1333 = vpop.f32.mrb[0].mxu0
    %v1334 = vadd.f32 %v1185, %v1333
    %v1335 = vpop.f32.mrb[0].mxu0
    %v1336 = vpop.f32.mrb[0].mxu0
    %v1337 = vadd.f32 %v1185, %v1336
    %v1338 = vpop.f32.mrb[0].mxu0
    %1339 = vmatprep.mubr.bf16.mxu0 %v1269
    %1340 = vmatmul.mubr.bf16.gmra.mrb[0].mxu0 %v1146
    %v1341 = vpop.f32.mrb[0].mxu0
    %v1342 = vadd.f32 %v1185, %v1341
    %v1343 = vpop.f32.mrb[0].mxu0
    %v1344 = vpop.f32.mrb[0].mxu0
    %v1345 = vadd.f32 %v1185, %v1344
    %v1346 = vpop.f32.mrb[0].mxu0
    %1347 = vmatprep.mubr.bf16.mxu0 %v1272
    %1348 = vmatmul.mubr.bf16.gmra.mrb[0].mxu0 %v1148
    %v1349 = vpop.f32.mrb[0].mxu0
    %v1350 = vadd.f32 %v1185, %v1349
    %v1351 = vpop.f32.mrb[0].mxu0
    %v1352 = vpop.f32.mrb[0].mxu0
    %v1353 = vadd.f32 %v1185, %v1352
    %v1354 = vpop.f32.mrb[0].mxu0
    %1355 = vmatprep.mubr.bf16.mxu0 %v1275
    %1356 = vmatmul.mubr.bf16.gmra.mrb[0].mxu0 %v1150
    %v1357 = vpop.f32.mrb[0].mxu0
    %v1358 = vadd.f32 %v1185, %v1357
    %v1359 = vpop.f32.mrb[0].mxu0
    %v1360 = vpop.f32.mrb[0].mxu0
    %v1361 = vadd.f32 %v1185, %v1360
    %v1362 = vpop.f32.mrb[0].mxu0
    %1363 = vmatprep.mubr.bf16.mxu0 %v1278
    %1364 = vmatmul.mubr.bf16.gmra.mrb[0].mxu0 %v1152
    %v1365 = vpop.f32.mrb[0].mxu0
    %v1366 = vadd.f32 %v1185, %v1365
    %v1367 = vpop.f32.mrb[0].mxu0
    %v1368 = vpop.f32.mrb[0].mxu0
    %v1369 = vadd.f32 %v1185, %v1368
    %v1370 = vpop.f32.mrb[0].mxu0
    %1371 = vmatprep.mubr.bf16.mxu0 %v1281
    %1372 = vmatmul.mubr.bf16.gmra.mrb[0].mxu0 %v1154
    %v1373 = vpop.f32.mrb[0].mxu0
    %v1374 = vadd.f32 %v1185, %v1373
    %v1375 = vpop.f32.mrb[0].mxu0
    %v1376 = vpop.f32.mrb[0].mxu0
    %v1377 = vadd.f32 %v1185, %v1376
    %v1378 = vpop.f32.mrb[0].mxu0
    %1379 = vdwg.mxu0
    %v1380 = vmax.f32 %v1318, 0.0
    %v1381 = vmax.f32 %v1321, 0.0
    %v1382 = vmax.f32 %v1326, 0.0
    %v1383 = vmax.f32 %v1329, 0.0
    %v1384 = vmax.f32 %v1334, 0.0
    %v1385 = vmax.f32 %v1337, 0.0
    %v1386 = vmax.f32 %v1342, 0.0
    %v1387 = vmax.f32 %v1345, 0.0
    %v1388 = vmax.f32 %v1350, 0.0
    %v1389 = vmax.f32 %v1353, 0.0
    %v1390 = vmax.f32 %v1358, 0.0
    %v1391 = vmax.f32 %v1361, 0.0
    %v1392 = vmax.f32 %v1366, 0.0
    %v1393 = vmax.f32 %v1369, 0.0
    %v1394 = vmax.f32 %v1374, 0.0
    %v1395 = vmax.f32 %v1377, 0.0
    %1396 = vst.msk [vmem:[#allocation3 + $0x7] sm:$0x1] %vm990, 0.0
    %1397 = vst.msk [vmem:[#allocation3 + $0x57] sm:$0x1] %vm990, 0.0
    %1398 = vst.msk [vmem:[#allocation3 + $0x48] sm:$0x1] %vm990, 0.0
    %1399 = vst.msk [vmem:[#allocation3 + $0x98] sm:$0x1] %vm990, 0.0
    %1400 = vst.msk [vmem:[#allocation3 + $0x8] sm:$0xff] %vm995, %v1380
    %1401 = vst.msk [vmem:[#allocation3 + $0x10] sm:$0xff] %vm995, %v1381
    %1402 = vst.msk [vmem:[#allocation3 + $0x18] sm:$0xff] %vm995, %v1382
    %1403 = vst.msk [vmem:[#allocation3 + $0x20] sm:$0xff] %vm995, %v1383
    %1404 = vst.msk [vmem:[#allocation3 + $0x28] sm:$0xff] %vm995, %v1384
    %1405 = vst.msk [vmem:[#allocation3 + $0x30] sm:$0xff] %vm995, %v1385
    %1406 = vst.msk [vmem:[#allocation3 + $0x38] sm:$0xff] %vm995, %v1386
    %1407 = vst.msk [vmem:[#allocation3 + $0x40] sm:$0xff] %vm995, %v1387
    %1408 = vst.msk [vmem:[#allocation3 + $0x58] sm:$0xff] %vm995, %v1388
    %1409 = vst.msk [vmem:[#allocation3 + $0x60] sm:$0xff] %vm995, %v1389
    %1410 = vst.msk [vmem:[#allocation3 + $0x68] sm:$0xff] %vm995, %v1390
    %1411 = vst.msk [vmem:[#allocation3 + $0x70] sm:$0xff] %vm995, %v1391
    %1412 = vst.msk [vmem:[#allocation3 + $0x78] sm:$0xff] %vm995, %v1392
    %1413 = vst.msk [vmem:[#allocation3 + $0x80] sm:$0xff] %vm995, %v1393
    %1414 = vst.msk [vmem:[#allocation3 + $0x88] sm:$0xff] %vm995, %v1394
    %1415 = vst.msk [vmem:[#allocation3 + $0x90] sm:$0xff] %vm995, %v1395
    %v1416 = vld [vmem:[#allocation3 + $0x7] sm:$0xff]
    %v1417 = vld [vmem:[#allocation3 + $0xf] sm:$0xff]
    %v1418 = vld [vmem:[#allocation3 + $0x17] sm:$0xff]
    %v1419 = vld [vmem:[#allocation3 + $0x1f] sm:$0xff]
    %v1420 = vld [vmem:[#allocation3 + $0x27] sm:$0xff]
    %v1421 = vld [vmem:[#allocation3 + $0x2f] sm:$0xff]
    %v1422 = vld [vmem:[#allocation3 + $0x37] sm:$0xff]
    %v1423 = vld [vmem:[#allocation3 + $0x3f] sm:$0xff]
    %v1424 = vld [vmem:[#allocation3 + $0x57] sm:$0xff]
    %v1425 = vld [vmem:[#allocation3 + $0x5f] sm:$0xff]
    %v1426 = vld [vmem:[#allocation3 + $0x67] sm:$0xff]
    %v1427 = vld [vmem:[#allocation3 + $0x6f] sm:$0xff]
    %v1428 = vld [vmem:[#allocation3 + $0x77] sm:$0xff]
    %v1429 = vld [vmem:[#allocation3 + $0x7f] sm:$0xff]
    %v1430 = vld [vmem:[#allocation3 + $0x87] sm:$0xff]
    %v1431 = vld [vmem:[#allocation3 + $0x8f] sm:$0xff]
    %v1432 = vld [vmem:[#allocation3 + $0x8] sm:$0xff]
    %v1433 = vld [vmem:[#allocation3 + $0x10] sm:$0xff]
    %v1434 = vld [vmem:[#allocation3 + $0x18] sm:$0xff]
    %v1435 = vld [vmem:[#allocation3 + $0x20] sm:$0xff]
    %v1436 = vld [vmem:[#allocation3 + $0x28] sm:$0xff]
    %v1437 = vld [vmem:[#allocation3 + $0x30] sm:$0xff]
    %v1438 = vld [vmem:[#allocation3 + $0x38] sm:$0xff]
    %v1439 = vld [vmem:[#allocation3 + $0x40] sm:$0xff]
    %v1440 = vld [vmem:[#allocation3 + $0x58] sm:$0xff]
    %v1441 = vld [vmem:[#allocation3 + $0x60] sm:$0xff]
    %v1442 = vld [vmem:[#allocation3 + $0x68] sm:$0xff]
    %v1443 = vld [vmem:[#allocation3 + $0x70] sm:$0xff]
    %v1444 = vld [vmem:[#allocation3 + $0x78] sm:$0xff]
    %v1445 = vld [vmem:[#allocation3 + $0x80] sm:$0xff]
    %v1446 = vld [vmem:[#allocation3 + $0x88] sm:$0xff]
    %v1447 = vld [vmem:[#allocation3 + $0x90] sm:$0xff]
    %v1448 = vld [vmem:[#allocation3 + $0x9] sm:$0xff]
    %v1449 = vld [vmem:[#allocation3 + $0x11] sm:$0xff]
    %v1450 = vld [vmem:[#allocation3 + $0x19] sm:$0xff]
    %v1451 = vld [vmem:[#allocation3 + $0x21] sm:$0xff]
    %v1452 = vld [vmem:[#allocation3 + $0x29] sm:$0xff]
    %v1453 = vld [vmem:[#allocation3 + $0x31] sm:$0xff]
    %v1454 = vld [vmem:[#allocation3 + $0x39] sm:$0xff]
    %v1455 = vld [vmem:[#allocation3 + $0x41] sm:$0xff]
    %v1456 = vld [vmem:[#allocation3 + $0x59] sm:$0xff]
    %v1457 = vld [vmem:[#allocation3 + $0x61] sm:$0xff]
    %v1458 = vld [vmem:[#allocation3 + $0x69] sm:$0xff]
    %v1459 = vld [vmem:[#allocation3 + $0x71] sm:$0xff]
    %v1460 = vld [vmem:[#allocation3 + $0x79] sm:$0xff]
    %v1461 = vld [vmem:[#allocation3 + $0x81] sm:$0xff]
    %v1462 = vld [vmem:[#allocation3 + $0x89] sm:$0xff]
    %v1463 = vld [vmem:[#allocation3 + $0x91] sm:$0xff]
    %1480 = vrot.lane.b32.xlu0 %v1432, 64
    %v1481 = vpop.permute.xlu0 %1480
    %1482 = vrot.lane.b32.xlu0 %v1433, 64
    %v1483 = vpop.permute.xlu0 %1482
    %1484 = vrot.lane.b32.xlu0 %v1434, 64
    %v1485 = vpop.permute.xlu0 %1484
    %1486 = vrot.lane.b32.xlu0 %v1435, 64
    %v1487 = vpop.permute.xlu0 %1486
    %1488 = vrot.lane.b32.xlu0 %v1436, 64
    %v1489 = vpop.permute.xlu0 %1488
    %1490 = vrot.lane.b32.xlu0 %v1437, 64
    %v1491 = vpop.permute.xlu0 %1490
    %1492 = vrot.lane.b32.xlu0 %v1438, 64
    %v1493 = vpop.permute.xlu0 %1492
    %1494 = vrot.lane.b32.xlu0 %v1439, 64
    %v1495 = vpop.permute.xlu0 %1494
    %1496 = vrot.lane.b32.xlu0 %v1440, 64
    %v1497 = vpop.permute.xlu0 %1496
    %1498 = vrot.lane.b32.xlu0 %v1441, 64
    %v1499 = vpop.permute.xlu0 %1498
    %1500 = vrot.lane.b32.xlu0 %v1442, 64
    %v1501 = vpop.permute.xlu0 %1500
    %1502 = vrot.lane.b32.xlu0 %v1443, 64
    %v1503 = vpop.permute.xlu0 %1502
    %1504 = vrot.lane.b32.xlu0 %v1444, 64
    %v1505 = vpop.permute.xlu0 %1504
    %1506 = vrot.lane.b32.xlu0 %v1445, 64
    %v1507 = vpop.permute.xlu0 %1506
    %1508 = vrot.lane.b32.xlu0 %v1446, 64
    %v1509 = vpop.permute.xlu0 %1508
    %1510 = vrot.lane.b32.xlu0 %v1447, 64
    %v1511 = vpop.permute.xlu0 %1510
    %v1528 = vsel %vm995, %v1416, %v1481
    %v1529 = vsel %vm995, %v1417, %v1483
    %v1530 = vsel %vm995, %v1418, %v1485
    %v1531 = vsel %vm995, %v1419, %v1487
    %v1532 = vsel %vm995, %v1420, %v1489
    %v1533 = vsel %vm995, %v1421, %v1491
    %v1534 = vsel %vm995, %v1422, %v1493
    %v1535 = vsel %vm995, %v1423, %v1495
    %v1536 = vsel %vm995, %v1424, %v1497
    %v1537 = vsel %vm995, %v1425, %v1499
    %v1538 = vsel %vm995, %v1426, %v1501
    %v1539 = vsel %vm995, %v1427, %v1503
    %v1540 = vsel %vm995, %v1428, %v1505
    %v1541 = vsel %vm995, %v1429, %v1507
    %v1542 = vsel %vm995, %v1430, %v1509
    %v1543 = vsel %vm995, %v1431, %v1511
    %v1544 = vpack.c.bf16 %v1529, %v1528
    %v1545 = vpack.c.bf16 %v1449, %v1448
    %v1546 = vpack.c.bf16 %v1531, %v1530
    %v1547 = vpack.c.bf16 %v1451, %v1450
    %v1548 = vpack.c.bf16 %v1533, %v1532
    %v1549 = vpack.c.bf16 %v1453, %v1452
    %v1550 = vpack.c.bf16 %v1535, %v1534
    %v1551 = vpack.c.bf16 %v1455, %v1454
    %v1552 = vpack.c.bf16 %v1537, %v1536
    %v1553 = vpack.c.bf16 %v1457, %v1456
    %v1554 = vpack.c.bf16 %v1539, %v1538
    %v1555 = vpack.c.bf16 %v1459, %v1458
    %v1556 = vpack.c.bf16 %v1541, %v1540
    %v1557 = vpack.c.bf16 %v1461, %v1460
    %v1558 = vpack.c.bf16 %v1543, %v1542
    %v1559 = vpack.c.bf16 %v1463, %v1462
    %v1560 = vld [vmem:[%s13] sm:$0xf]
    %v1561 = vld [vmem:[%s13 + $0x4] sm:$0xf]
    %v1562 = vld [vmem:[%s13 + $0x8] sm:$0xf]
    %v1563 = vld [vmem:[%s13 + $0xc] sm:$0xf]
    %v1564 = vld [vmem:[%s13 + $0x10] sm:$0xf]
    %v1565 = vld [vmem:[%s13 + $0x14] sm:$0xf]
    %v1566 = vld [vmem:[%s13 + $0x18] sm:$0xf]
    %v1567 = vld [vmem:[%s13 + $0x1c] sm:$0xf]
    %v1568 = vld [vmem:[%s13 + $0x20] sm:$0xf]
    %v1569 = vld [vmem:[%s13 + $0x24] sm:$0xf]
    %v1570 = vld [vmem:[%s13 + $0x28] sm:$0xf]
    %v1571 = vld [vmem:[%s13 + $0x2c] sm:$0xf]
    %v1572 = vld [vmem:[%s13 + $0x30] sm:$0xf]
    %v1573 = vld [vmem:[%s13 + $0x34] sm:$0xf]
    %v1574 = vld [vmem:[%s13 + $0x38] sm:$0xf]
    %v1575 = vld [vmem:[%s13 + $0x3c] sm:$0xf]
    %v1576 = vld [vmem:[%s13 + $0x40] sm:$0xf]
    %v1577 = vld [vmem:[%s13 + $0x44] sm:$0xf]
    %v1578 = vld [vmem:[%s13 + $0x48] sm:$0xf]
    %v1579 = vld [vmem:[%s13 + $0x4c] sm:$0xf]
    %v1580 = vld [vmem:[%s13 + $0x50] sm:$0xf]
    %v1581 = vld [vmem:[%s13 + $0x54] sm:$0xf]
    %v1582 = vld [vmem:[%s13 + $0x58] sm:$0xf]
    %v1583 = vld [vmem:[%s13 + $0x5c] sm:$0xf]
    %v1584 = vld [vmem:[#allocation12] sm:$0x1]
    %v1586 = vlaneseq
    %v1587 = vshrl.u32 %v1586, 7
    %v1588 = vsub.s32 0, %v1587
    %v1589 = vrot.slane %v1584, %v1588
    %v1615 = vunpack.c.l.b16 %v1560
    %v1616 = vunpack.c.l.b16 %v1561
    %v1617 = vunpack.c.l.b16 %v1562
    %v1618 = vunpack.c.l.b16 %v1563
    %v1619 = vunpack.c.l.b16 %v1564
    %v1620 = vunpack.c.l.b16 %v1565
    %v1621 = vunpack.c.l.b16 %v1566
    %v1622 = vunpack.c.l.b16 %v1567
    %v1623 = vunpack.c.l.b16 %v1568
    %v1624 = vunpack.c.l.b16 %v1569
    %v1625 = vunpack.c.l.b16 %v1570
    %v1626 = vunpack.c.l.b16 %v1571
    %v1627 = vunpack.c.l.b16 %v1572
    %v1628 = vunpack.c.l.b16 %v1573
    %v1629 = vunpack.c.l.b16 %v1574
    %v1630 = vunpack.c.l.b16 %v1575
    %v1631 = vunpack.c.l.b16 %v1576
    %v1632 = vunpack.c.l.b16 %v1577
    %v1633 = vunpack.c.l.b16 %v1578
    %v1634 = vunpack.c.l.b16 %v1579
    %v1635 = vunpack.c.l.b16 %v1580
    %v1636 = vunpack.c.l.b16 %v1581
    %v1637 = vunpack.c.l.b16 %v1582
    %v1638 = vunpack.c.l.b16 %v1583
    %v1639 = vpack.c.b16 %v1616, %v1615
    %v1640 = vpack.c.b16 %v1618, %v1617
    %v1641 = vpack.c.b16 %v1620, %v1619
    %v1642 = vpack.c.b16 %v1622, %v1621
    %v1643 = vpack.c.b16 %v1624, %v1623
    %v1644 = vpack.c.b16 %v1626, %v1625
    %v1645 = vpack.c.b16 %v1628, %v1627
    %v1646 = vpack.c.b16 %v1630, %v1629
    %v1647 = vpack.c.b16 %v1632, %v1631
    %v1648 = vpack.c.b16 %v1634, %v1633
    %v1649 = vpack.c.b16 %v1636, %v1635
    %v1650 = vpack.c.b16 %v1638, %v1637
    %v1664 = vsel %vm995, %v1545, 0
    %v1667 = vsel %vm995, %v1547, 0
    %v1670 = vsel %vm995, %v1549, 0
    %v1673 = vsel %vm995, %v1551, 0
    %v1676 = vsel %vm995, %v1553, 0
    %v1679 = vsel %vm995, %v1555, 0
    %v1682 = vsel %vm995, %v1557, 0
    %v1685 = vsel %vm995, %v1559, 0
    %1687 = vmatprep.subr.bf16.mxu0 0
    %1688 = vmatpush1.bf16.msra.mxu0 %v1639
    %1689 = vmatprep.subr.bf16.mxu0 0
    %1690 = vmatpush1.bf16.msra.mxu0 %v1640
    %1691 = vmatprep.subr.bf16.mxu0 0
    %1692 = vmatpush1.bf16.msra.mxu0 %v1641
    %1693 = vmatprep.subr.bf16.mxu0 0
    %1694 = vmatpush1.bf16.msra.mxu0 %v1642
    %1695 = vmatprep.subr.bf16.mxu0 0
    %1696 = vmatpush1.bf16.msra.mxu0 %v1643
    %1697 = vmatprep.subr.bf16.mxu0 0
    %1698 = vmatpush1.bf16.msra.mxu0 %v1644
    %1699 = vmatprep.subr.bf16.mxu0 0
    %1700 = vmatpush1.bf16.msra.mxu0 %v1645
    %1701 = vmatprep.subr.bf16.mxu0 0
    %1702 = vmatpush1.bf16.msra.mxu0 %v1646
    %1703 = vmatprep.subr.bf16.mxu0 0
    %1704 = vmatpush1.bf16.msra.mxu0 %v1647
    %1705 = vmatprep.subr.bf16.mxu0 0
    %1706 = vmatpush1.bf16.msra.mxu0 %v1648
    %1707 = vmatprep.subr.bf16.mxu0 0
    %1708 = vmatpush1.bf16.msra.mxu0 %v1649
    %1709 = vmatprep.subr.bf16.mxu0 0
    %1710 = vmatpush1.bf16.msra.mxu0 %v1650
    %1711 = vmatprep.subr.bf16.mxu0 0
    %1712 = vmatpush1.bf16.msra.mxu0 0
    %1713 = vmatprep.subr.bf16.mxu0 0
    %1714 = vmatpush1.bf16.msra.mxu0 0
    %1715 = vmatprep.subr.bf16.mxu0 0
    %1716 = vmatpush1.bf16.msra.mxu0 0
    %1717 = vmatprep.subr.bf16.mxu0 0
    %1718 = vmatpush1.bf16.msra.mxu0 0
    %1719 = vmatprep.mubr.bf16.mxu0 %v1664
    %1720 = vmatmul.mubr.bf16.gmra.mrb[0].mxu0 %v1544
    %v1721 = vpop.f32.mrb[0].mxu0
    %v1722 = vadd.f32 %v1589, %v1721
    %v1723 = vpop.f32.mrb[0].mxu0
    %v1724 = vpop.f32.mrb[0].mxu0
    %v1725 = vadd.f32 %v1589, %v1724
    %v1726 = vpop.f32.mrb[0].mxu0
    %1727 = vmatprep.mubr.bf16.mxu0 %v1667
    %1728 = vmatmul.mubr.bf16.gmra.mrb[0].mxu0 %v1546
    %v1729 = vpop.f32.mrb[0].mxu0
    %v1730 = vadd.f32 %v1589, %v1729
    %v1731 = vpop.f32.mrb[0].mxu0
    %v1732 = vpop.f32.mrb[0].mxu0
    %v1733 = vadd.f32 %v1589, %v1732
    %v1734 = vpop.f32.mrb[0].mxu0
    %1735 = vmatprep.mubr.bf16.mxu0 %v1670
    %1736 = vmatmul.mubr.bf16.gmra.mrb[0].mxu0 %v1548
    %v1737 = vpop.f32.mrb[0].mxu0
    %v1738 = vadd.f32 %v1589, %v1737
    %v1739 = vpop.f32.mrb[0].mxu0
    %v1740 = vpop.f32.mrb[0].mxu0
    %v1741 = vadd.f32 %v1589, %v1740
    %v1742 = vpop.f32.mrb[0].mxu0
    %1743 = vmatprep.mubr.bf16.mxu0 %v1673
    %1744 = vmatmul.mubr.bf16.gmra.mrb[0].mxu0 %v1550
    %v1745 = vpop.f32.mrb[0].mxu0
    %v1746 = vadd.f32 %v1589, %v1745
    %v1747 = vpop.f32.mrb[0].mxu0
    %v1748 = vpop.f32.mrb[0].mxu0
    %v1749 = vadd.f32 %v1589, %v1748
    %v1750 = vpop.f32.mrb[0].mxu0
    %1751 = vmatprep.mubr.bf16.mxu0 %v1676
    %1752 = vmatmul.mubr.bf16.gmra.mrb[0].mxu0 %v1552
    %v1753 = vpop.f32.mrb[0].mxu0
    %v1754 = vadd.f32 %v1589, %v1753
    %v1755 = vpop.f32.mrb[0].mxu0
    %v1756 = vpop.f32.mrb[0].mxu0
    %v1757 = vadd.f32 %v1589, %v1756
    %v1758 = vpop.f32.mrb[0].mxu0
    %1759 = vmatprep.mubr.bf16.mxu0 %v1679
    %1760 = vmatmul.mubr.bf16.gmra.mrb[0].mxu0 %v1554
    %v1761 = vpop.f32.mrb[0].mxu0
    %v1762 = vadd.f32 %v1589, %v1761
    %v1763 = vpop.f32.mrb[0].mxu0
    %v1764 = vpop.f32.mrb[0].mxu0
    %v1765 = vadd.f32 %v1589, %v1764
    %v1766 = vpop.f32.mrb[0].mxu0
    %1767 = vmatprep.mubr.bf16.mxu0 %v1682
    %1768 = vmatmul.mubr.bf16.gmra.mrb[0].mxu0 %v1556
    %v1769 = vpop.f32.mrb[0].mxu0
    %v1770 = vadd.f32 %v1589, %v1769
    %v1771 = vpop.f32.mrb[0].mxu0
    %v1772 = vpop.f32.mrb[0].mxu0
    %v1773 = vadd.f32 %v1589, %v1772
    %v1774 = vpop.f32.mrb[0].mxu0
    %1775 = vmatprep.mubr.bf16.mxu0 %v1685
    %1776 = vmatmul.mubr.bf16.gmra.mrb[0].mxu0 %v1558
    %v1777 = vpop.f32.mrb[0].mxu0
    %v1778 = vadd.f32 %v1589, %v1777
    %v1779 = vpop.f32.mrb[0].mxu0
    %v1780 = vpop.f32.mrb[0].mxu0
    %v1781 = vadd.f32 %v1589, %v1780
    %v1782 = vpop.f32.mrb[0].mxu0
    %1783 = vdwg.mxu0
    %v1784 = vadd.f32 %v1722, %v974
    %v1785 = vadd.f32 %v1725, %v975
    %v1786 = vadd.f32 %v1730, %v976
    %v1787 = vadd.f32 %v1733, %v977
    %v1788 = vadd.f32 %v1738, %v978
    %v1789 = vadd.f32 %v1741, %v979
    %v1790 = vadd.f32 %v1746, %v980
    %v1791 = vadd.f32 %v1749, %v981
    %v1792 = vadd.f32 %v1754, %v982
    %v1793 = vadd.f32 %v1757, %v983
    %v1794 = vadd.f32 %v1762, %v984
    %v1795 = vadd.f32 %v1765, %v985
    %v1796 = vadd.f32 %v1770, %v986
    %v1797 = vadd.f32 %v1773, %v987
    %v1798 = vadd.f32 %v1778, %v988
    %v1799 = vadd.f32 %v1781, %v989
    %v1800 = vmax.f32 %v1784, 0.0
    %v1801 = vmax.f32 %v1785, 0.0
    %v1802 = vmax.f32 %v1786, 0.0
    %v1803 = vmax.f32 %v1787, 0.0
    %v1804 = vmax.f32 %v1788, 0.0
    %v1805 = vmax.f32 %v1789, 0.0
    %v1806 = vmax.f32 %v1790, 0.0
    %v1807 = vmax.f32 %v1791, 0.0
    %v1808 = vmax.f32 %v1792, 0.0
    %v1809 = vmax.f32 %v1793, 0.0
    %v1810 = vmax.f32 %v1794, 0.0
    %v1811 = vmax.f32 %v1795, 0.0
    %v1812 = vmax.f32 %v1796, 0.0
    %v1813 = vmax.f32 %v1797, 0.0
    %v1814 = vmax.f32 %v1798, 0.0
    %v1815 = vmax.f32 %v1799, 0.0
    %v1816 = vld [vmem:[#allocation13] sm:$0xff]
    %v1817 = vld [vmem:[#allocation13 + $0x8] sm:$0xff]
    %v1818 = vld [vmem:[#allocation13 + $0x10] sm:$0xff]
    %v1819 = vld [vmem:[#allocation13 + $0x18] sm:$0xff]
    %v1820 = vld [vmem:[#allocation13 + $0x20] sm:$0xff]
    %v1821 = vld [vmem:[#allocation13 + $0x28] sm:$0xff]
    %v1822 = vld [vmem:[#allocation13 + $0x30] sm:$0xff]
    %v1823 = vld [vmem:[#allocation13 + $0x38] sm:$0xff]
    %1824 = vmatprep.subr.mxu0 0.0
    %1825 = vmatpush1.msra.mxu0 %v1800
    %1826 = vmatprep.subr.mxu0 0.0
    %1827 = vmatpush1.msra.mxu0 %v1801
    %1828 = vmatprep.subr.mxu0 0.0
    %1829 = vmatpush1.msra.mxu0 %v1802
    %1830 = vmatprep.subr.mxu0 0.0
    %1831 = vmatpush1.msra.mxu0 %v1803
    %1832 = vmatprep.subr.mxu0 0.0
    %1833 = vmatpush1.msra.mxu0 %v1804
    %1834 = vmatprep.subr.mxu0 0.0
    %1835 = vmatpush1.msra.mxu0 %v1805
    %1836 = vmatprep.subr.mxu0 0.0
    %1837 = vmatpush1.msra.mxu0 %v1806
    %1838 = vmatprep.subr.mxu0 0.0
    %1839 = vmatpush1.msra.mxu0 %v1807
    %1840 = vmatprep.subr.mxu0 0.0
    %1841 = vmatpush1.msra.mxu0 %v1808
    %1842 = vmatprep.subr.mxu0 0.0
    %1843 = vmatpush1.msra.mxu0 %v1809
    %1844 = vmatprep.subr.mxu0 0.0
    %1845 = vmatpush1.msra.mxu0 %v1810
    %1846 = vmatprep.subr.mxu0 0.0
    %1847 = vmatpush1.msra.mxu0 %v1811
    %1848 = vmatprep.subr.mxu0 0.0
    %1849 = vmatpush1.msra.mxu0 %v1812
    %1850 = vmatprep.subr.mxu0 0.0
    %1851 = vmatpush1.msra.mxu0 %v1813
    %1852 = vmatprep.subr.mxu0 0.0
    %1853 = vmatpush1.msra.mxu0 %v1814
    %1854 = vmatprep.subr.mxu0 0.0
    %1855 = vmatpush1.msra.mxu0 %v1815
    %1856 = vmatprep.subr.mxu0 0.0
    %1857 = vmatpush1.msra.mxu0 0.0
    %1858 = vmatprep.subr.mxu0 0.0
    %1859 = vmatpush1.msra.mxu0 0.0
    %1860 = vmatprep.subr.mxu0 0.0
    %1861 = vmatpush1.msra.mxu0 0.0
    %1862 = vmatprep.subr.mxu0 0.0
    %1863 = vmatpush1.msra.mxu0 0.0
    %1864 = vmatprep.subr.mxu0 0.0
    %1865 = vmatpush1.msra.mxu0 0.0
    %1866 = vmatprep.subr.mxu0 0.0
    %1867 = vmatpush1.msra.mxu0 0.0
    %1868 = vmatprep.subr.mxu0 0.0
    %1869 = vmatpush1.msra.mxu0 0.0
    %1870 = vmatprep.subr.mxu0 0.0
    %1871 = vmatpush1.msra.mxu0 0.0
    %1872 = vmatprep.subr.mxu0 0.0
    %1873 = vmatpush1.msra.mxu0 0.0
    %1874 = vmatprep.subr.mxu0 0.0
    %1875 = vmatpush1.msra.mxu0 0.0
    %1876 = vmatprep.subr.mxu0 0.0
    %1877 = vmatpush1.msra.mxu0 0.0
    %1878 = vmatprep.subr.mxu0 0.0
    %1879 = vmatpush1.msra.mxu0 0.0
    %1880 = vmatprep.subr.mxu0 0.0
    %1881 = vmatpush1.msra.mxu0 0.0
    %1882 = vmatprep.subr.mxu0 0.0
    %1883 = vmatpush1.msra.mxu0 0.0
    %1884 = vmatprep.subr.mxu0 0.0
    %1885 = vmatpush1.msra.mxu0 0.0
    %1886 = vmatprep.subr.mxu0 0.0
    %1887 = vmatpush1.msra.mxu0 0.0
    %1888 = vmatprep.mubr.f32.mxu0 0.0
    %1889 = vmatmul.mubr.f32.gmra.mrb[0].mxu0 %v1816
    %v1890 = vpop.f32.mrb[0].mxu0
    %v1891 = vadd.f32 0.0, %v1890
    %v1892 = vpop.f32.mrb[0].mxu0
    %1893 = vmatprep.mubr.f32.mxu0 0.0
    %1894 = vmatmul.mubr.f32.gmra.mrb[0].mxu0 %v1817
    %v1895 = vpop.f32.mrb[0].mxu0
    %v1896 = vadd.f32 0.0, %v1895
    %v1897 = vpop.f32.mrb[0].mxu0
    %1898 = vmatprep.mubr.f32.mxu0 0.0
    %1899 = vmatmul.mubr.f32.gmra.mrb[0].mxu0 %v1818
    %v1900 = vpop.f32.mrb[0].mxu0
    %v1901 = vadd.f32 0.0, %v1900
    %v1902 = vpop.f32.mrb[0].mxu0
    %1903 = vmatprep.mubr.f32.mxu0 0.0
    %1904 = vmatmul.mubr.f32.gmra.mrb[0].mxu0 %v1819
    %v1905 = vpop.f32.mrb[0].mxu0
    %v1906 = vadd.f32 0.0, %v1905
    %v1907 = vpop.f32.mrb[0].mxu0
    %1908 = vmatprep.mubr.f32.mxu0 0.0
    %1909 = vmatmul.mubr.f32.gmra.mrb[0].mxu0 %v1820
    %v1910 = vpop.f32.mrb[0].mxu0
    %v1911 = vadd.f32 0.0, %v1910
    %v1912 = vpop.f32.mrb[0].mxu0
    %1913 = vmatprep.mubr.f32.mxu0 0.0
    %1914 = vmatmul.mubr.f32.gmra.mrb[0].mxu0 %v1821
    %v1915 = vpop.f32.mrb[0].mxu0
    %v1916 = vadd.f32 0.0, %v1915
    %v1917 = vpop.f32.mrb[0].mxu0
    %1918 = vmatprep.mubr.f32.mxu0 0.0
    %1919 = vmatmul.mubr.f32.gmra.mrb[0].mxu0 %v1822
    %v1920 = vpop.f32.mrb[0].mxu0
    %v1921 = vadd.f32 0.0, %v1920
    %v1922 = vpop.f32.mrb[0].mxu0
    %1923 = vmatprep.mubr.f32.mxu0 0.0
    %1924 = vmatmul.mubr.f32.gmra.mrb[0].mxu0 %v1823
    %v1925 = vpop.f32.mrb[0].mxu0
    %v1926 = vadd.f32 0.0, %v1925
    %v1927 = vpop.f32.mrb[0].mxu0
    %1928 = vdwg.mxu0
    %v1929 = vld [vmem:[#allocation15] sm:$0xff]
    %v1930 = vld [vmem:[#allocation15 + $0x8] sm:$0xff]
    %v1931 = vld [vmem:[#allocation15 + $0x10] sm:$0xff]
    %v1932 = vld [vmem:[#allocation15 + $0x18] sm:$0xff]
    %v1933 = vld [vmem:[#allocation15 + $0x20] sm:$0xff]
    %v1934 = vld [vmem:[#allocation15 + $0x28] sm:$0xff]
    %v1935 = vld [vmem:[#allocation15 + $0x30] sm:$0xff]
    %v1936 = vld [vmem:[#allocation15 + $0x38] sm:$0xff]
    %1937 = vmatprep.subr.mxu0 0.0
    %1938 = vmatpush1.msra.mxu0 %v1800
    %1939 = vmatprep.subr.mxu0 0.0
    %1940 = vmatpush1.msra.mxu0 %v1801
    %1941 = vmatprep.subr.mxu0 0.0
    %1942 = vmatpush1.msra.mxu0 %v1802
    %1943 = vmatprep.subr.mxu0 0.0
    %1944 = vmatpush1.msra.mxu0 %v1803
    %1945 = vmatprep.subr.mxu0 0.0
    %1946 = vmatpush1.msra.mxu0 %v1804
    %1947 = vmatprep.subr.mxu0 0.0
    %1948 = vmatpush1.msra.mxu0 %v1805
    %1949 = vmatprep.subr.mxu0 0.0
    %1950 = vmatpush1.msra.mxu0 %v1806
    %1951 = vmatprep.subr.mxu0 0.0
    %1952 = vmatpush1.msra.mxu0 %v1807
    %1953 = vmatprep.subr.mxu0 0.0
    %1954 = vmatpush1.msra.mxu0 %v1808
    %1955 = vmatprep.subr.mxu0 0.0
    %1956 = vmatpush1.msra.mxu0 %v1809
    %1957 = vmatprep.subr.mxu0 0.0
    %1958 = vmatpush1.msra.mxu0 %v1810
    %1959 = vmatprep.subr.mxu0 0.0
    %1960 = vmatpush1.msra.mxu0 %v1811
    %1961 = vmatprep.subr.mxu0 0.0
    %1962 = vmatpush1.msra.mxu0 %v1812
    %1963 = vmatprep.subr.mxu0 0.0
    %1964 = vmatpush1.msra.mxu0 %v1813
    %1965 = vmatprep.subr.mxu0 0.0
    %1966 = vmatpush1.msra.mxu0 %v1814
    %1967 = vmatprep.subr.mxu0 0.0
    %1968 = vmatpush1.msra.mxu0 %v1815
    %1969 = vmatprep.subr.mxu0 0.0
    %1970 = vmatpush1.msra.mxu0 0.0
    %1971 = vmatprep.subr.mxu0 0.0
    %1972 = vmatpush1.msra.mxu0 0.0
    %1973 = vmatprep.subr.mxu0 0.0
    %1974 = vmatpush1.msra.mxu0 0.0
    %1975 = vmatprep.subr.mxu0 0.0
    %1976 = vmatpush1.msra.mxu0 0.0
    %1977 = vmatprep.subr.mxu0 0.0
    %1978 = vmatpush1.msra.mxu0 0.0
    %1979 = vmatprep.subr.mxu0 0.0
    %1980 = vmatpush1.msra.mxu0 0.0
    %1981 = vmatprep.subr.mxu0 0.0
    %1982 = vmatpush1.msra.mxu0 0.0
    %1983 = vmatprep.subr.mxu0 0.0
    %1984 = vmatpush1.msra.mxu0 0.0
    %1985 = vmatprep.subr.mxu0 0.0
    %1986 = vmatpush1.msra.mxu0 0.0
    %1987 = vmatprep.subr.mxu0 0.0
    %1988 = vmatpush1.msra.mxu0 0.0
    %1989 = vmatprep.subr.mxu0 0.0
    %1990 = vmatpush1.msra.mxu0 0.0
    %1991 = vmatprep.subr.mxu0 0.0
    %1992 = vmatpush1.msra.mxu0 0.0
    %1993 = vmatprep.subr.mxu0 0.0
    %1994 = vmatpush1.msra.mxu0 0.0
    %1995 = vmatprep.subr.mxu0 0.0
    %1996 = vmatpush1.msra.mxu0 0.0
    %1997 = vmatprep.subr.mxu0 0.0
    %1998 = vmatpush1.msra.mxu0 0.0
    %1999 = vmatprep.subr.mxu0 0.0
    %2000 = vmatpush1.msra.mxu0 0.0
    %2001 = vmatprep.mubr.f32.mxu0 0.0
    %2002 = vmatmul.mubr.f32.gmra.mrb[0].mxu0 %v1929
    %v2003 = vpop.f32.mrb[0].mxu0
    %v2004 = vadd.f32 0.0, %v2003
    %v2005 = vpop.f32.mrb[0].mxu0
    %2006 = vmatprep.mubr.f32.mxu0 0.0
    %2007 = vmatmul.mubr.f32.gmra.mrb[0].mxu0 %v1930
    %v2008 = vpop.f32.mrb[0].mxu0
    %v2009 = vadd.f32 0.0, %v2008
    %v2010 = vpop.f32.mrb[0].mxu0
    %2011 = vmatprep.mubr.f32.mxu0 0.0
    %2012 = vmatmul.mubr.f32.gmra.mrb[0].mxu0 %v1931
    %v2013 = vpop.f32.mrb[0].mxu0
    %v2014 = vadd.f32 0.0, %v2013
    %v2015 = vpop.f32.mrb[0].mxu0
    %2016 = vmatprep.mubr.f32.mxu0 0.0
    %2017 = vmatmul.mubr.f32.gmra.mrb[0].mxu0 %v1932
    %v2018 = vpop.f32.mrb[0].mxu0
    %v2019 = vadd.f32 0.0, %v2018
    %v2020 = vpop.f32.mrb[0].mxu0
    %2021 = vmatprep.mubr.f32.mxu0 0.0
    %2022 = vmatmul.mubr.f32.gmra.mrb[0].mxu0 %v1933
    %v2023 = vpop.f32.mrb[0].mxu0
    %v2024 = vadd.f32 0.0, %v2023
    %v2025 = vpop.f32.mrb[0].mxu0
    %2026 = vmatprep.mubr.f32.mxu0 0.0
    %2027 = vmatmul.mubr.f32.gmra.mrb[0].mxu0 %v1934
    %v2028 = vpop.f32.mrb[0].mxu0
    %v2029 = vadd.f32 0.0, %v2028
    %v2030 = vpop.f32.mrb[0].mxu0
    %2031 = vmatprep.mubr.f32.mxu0 0.0
    %2032 = vmatmul.mubr.f32.gmra.mrb[0].mxu0 %v1935
    %v2033 = vpop.f32.mrb[0].mxu0
    %v2034 = vadd.f32 0.0, %v2033
    %v2035 = vpop.f32.mrb[0].mxu0
    %2036 = vmatprep.mubr.f32.mxu0 0.0
    %2037 = vmatmul.mubr.f32.gmra.mrb[0].mxu0 %v1936
    %v2038 = vpop.f32.mrb[0].mxu0
    %v2039 = vadd.f32 0.0, %v2038
    %v2040 = vpop.f32.mrb[0].mxu0
    %2041 = vdwg.mxu0
    %v2042 = vld [vmem:[#allocation16] sm:$0xff]
    %v2043 = vld [vmem:[#allocation16 + $0x8] sm:$0xff]
    %v2044 = vld [vmem:[#allocation16 + $0x10] sm:$0xff]
    %v2045 = vld [vmem:[#allocation16 + $0x18] sm:$0xff]
    %v2046 = vld [vmem:[#allocation16 + $0x20] sm:$0xff]
    %v2047 = vld [vmem:[#allocation16 + $0x28] sm:$0xff]
    %v2048 = vld [vmem:[#allocation16 + $0x30] sm:$0xff]
    %v2049 = vld [vmem:[#allocation16 + $0x38] sm:$0xff]
    %2050 = vmatprep.subr.mxu0 0.0
    %2051 = vmatpush1.msra.mxu0 %v1800
    %2052 = vmatprep.subr.mxu0 0.0
    %2053 = vmatpush1.msra.mxu0 %v1801
    %2054 = vmatprep.subr.mxu0 0.0
    %2055 = vmatpush1.msra.mxu0 %v1802
    %2056 = vmatprep.subr.mxu0 0.0
    %2057 = vmatpush1.msra.mxu0 %v1803
    %2058 = vmatprep.subr.mxu0 0.0
    %2059 = vmatpush1.msra.mxu0 %v1804
    %2060 = vmatprep.subr.mxu0 0.0
    %2061 = vmatpush1.msra.mxu0 %v1805
    %2062 = vmatprep.subr.mxu0 0.0
    %2063 = vmatpush1.msra.mxu0 %v1806
    %2064 = vmatprep.subr.mxu0 0.0
    %2065 = vmatpush1.msra.mxu0 %v1807
    %2066 = vmatprep.subr.mxu0 0.0
    %2067 = vmatpush1.msra.mxu0 %v1808
    %2068 = vmatprep.subr.mxu0 0.0
    %2069 = vmatpush1.msra.mxu0 %v1809
    %2070 = vmatprep.subr.mxu0 0.0
    %2071 = vmatpush1.msra.mxu0 %v1810
    %2072 = vmatprep.subr.mxu0 0.0
    %2073 = vmatpush1.msra.mxu0 %v1811
    %2074 = vmatprep.subr.mxu0 0.0
    %2075 = vmatpush1.msra.mxu0 %v1812
    %2076 = vmatprep.subr.mxu0 0.0
    %2077 = vmatpush1.msra.mxu0 %v1813
    %2078 = vmatprep.subr.mxu0 0.0
    %2079 = vmatpush1.msra.mxu0 %v1814
    %2080 = vmatprep.subr.mxu0 0.0
    %2081 = vmatpush1.msra.mxu0 %v1815
    %2082 = vmatprep.subr.mxu0 0.0
    %2083 = vmatpush1.msra.mxu0 0.0
    %2084 = vmatprep.subr.mxu0 0.0
    %2085 = vmatpush1.msra.mxu0 0.0
    %2086 = vmatprep.subr.mxu0 0.0
    %2087 = vmatpush1.msra.mxu0 0.0
    %2088 = vmatprep.subr.mxu0 0.0
    %2089 = vmatpush1.msra.mxu0 0.0
    %2090 = vmatprep.subr.mxu0 0.0
    %2091 = vmatpush1.msra.mxu0 0.0
    %2092 = vmatprep.subr.mxu0 0.0
    %2093 = vmatpush1.msra.mxu0 0.0
    %2094 = vmatprep.subr.mxu0 0.0
    %2095 = vmatpush1.msra.mxu0 0.0
    %2096 = vmatprep.subr.mxu0 0.0
    %2097 = vmatpush1.msra.mxu0 0.0
    %2098 = vmatprep.subr.mxu0 0.0
    %2099 = vmatpush1.msra.mxu0 0.0
    %2100 = vmatprep.subr.mxu0 0.0
    %2101 = vmatpush1.msra.mxu0 0.0
    %2102 = vmatprep.subr.mxu0 0.0
    %2103 = vmatpush1.msra.mxu0 0.0
    %2104 = vmatprep.subr.mxu0 0.0
    %2105 = vmatpush1.msra.mxu0 0.0
    %2106 = vmatprep.subr.mxu0 0.0
    %2107 = vmatpush1.msra.mxu0 0.0
    %2108 = vmatprep.subr.mxu0 0.0
    %2109 = vmatpush1.msra.mxu0 0.0
    %2110 = vmatprep.subr.mxu0 0.0
    %2111 = vmatpush1.msra.mxu0 0.0
    %2112 = vmatprep.subr.mxu0 0.0
    %2113 = vmatpush1.msra.mxu0 0.0
    %2114 = vmatprep.mubr.f32.mxu0 0.0
    %2115 = vmatmul.mubr.f32.gmra.mrb[0].mxu0 %v2042
    %v2116 = vpop.f32.mrb[0].mxu0
    %v2117 = vadd.f32 0.0, %v2116
    %v2118 = vpop.f32.mrb[0].mxu0
    %2119 = vmatprep.mubr.f32.mxu0 0.0
    %2120 = vmatmul.mubr.f32.gmra.mrb[0].mxu0 %v2043
    %v2121 = vpop.f32.mrb[0].mxu0
    %v2122 = vadd.f32 0.0, %v2121
    %v2123 = vpop.f32.mrb[0].mxu0
    %2124 = vmatprep.mubr.f32.mxu0 0.0
    %2125 = vmatmul.mubr.f32.gmra.mrb[0].mxu0 %v2044
    %v2126 = vpop.f32.mrb[0].mxu0
    %v2127 = vadd.f32 0.0, %v2126
    %v2128 = vpop.f32.mrb[0].mxu0
    %2129 = vmatprep.mubr.f32.mxu0 0.0
    %2130 = vmatmul.mubr.f32.gmra.mrb[0].mxu0 %v2045
    %v2131 = vpop.f32.mrb[0].mxu0
    %v2132 = vadd.f32 0.0, %v2131
    %v2133 = vpop.f32.mrb[0].mxu0
    %2134 = vmatprep.mubr.f32.mxu0 0.0
    %2135 = vmatmul.mubr.f32.gmra.mrb[0].mxu0 %v2046
    %v2136 = vpop.f32.mrb[0].mxu0
    %v2137 = vadd.f32 0.0, %v2136
    %v2138 = vpop.f32.mrb[0].mxu0
    %2139 = vmatprep.mubr.f32.mxu0 0.0
    %2140 = vmatmul.mubr.f32.gmra.mrb[0].mxu0 %v2047
    %v2141 = vpop.f32.mrb[0].mxu0
    %v2142 = vadd.f32 0.0, %v2141
    %v2143 = vpop.f32.mrb[0].mxu0
    %2144 = vmatprep.mubr.f32.mxu0 0.0
    %2145 = vmatmul.mubr.f32.gmra.mrb[0].mxu0 %v2048
    %v2146 = vpop.f32.mrb[0].mxu0
    %v2147 = vadd.f32 0.0, %v2146
    %v2148 = vpop.f32.mrb[0].mxu0
    %2149 = vmatprep.mubr.f32.mxu0 0.0
    %2150 = vmatmul.mubr.f32.gmra.mrb[0].mxu0 %v2049
    %v2151 = vpop.f32.mrb[0].mxu0
    %v2152 = vadd.f32 0.0, %v2151
    %v2153 = vpop.f32.mrb[0].mxu0
    %2154 = vdwg.mxu0
    %2163 = vrot.lane.b32.xlu0 %v2004, 64
    %v2164 = vpop.permute.xlu0 %2163
    %2165 = vrot.lane.b32.xlu0 %v2009, 64
    %v2166 = vpop.permute.xlu0 %2165
    %2167 = vrot.lane.b32.xlu0 %v2014, 64
    %v2168 = vpop.permute.xlu0 %2167
    %2169 = vrot.lane.b32.xlu0 %v2019, 64
    %v2170 = vpop.permute.xlu0 %2169
    %2171 = vrot.lane.b32.xlu0 %v2024, 64
    %v2172 = vpop.permute.xlu0 %2171
    %2173 = vrot.lane.b32.xlu0 %v2029, 64
    %v2174 = vpop.permute.xlu0 %2173
    %2175 = vrot.lane.b32.xlu0 %v2034, 64
    %v2176 = vpop.permute.xlu0 %2175
    %2177 = vrot.lane.b32.xlu0 %v2039, 64
    %v2178 = vpop.permute.xlu0 %2177
    %v2187 = vsel %vm995, %v1891, %v2164
    %v2188 = vsel %vm995, %v1896, %v2166
    %v2189 = vsel %vm995, %v1901, %v2168
    %v2190 = vsel %vm995, %v1906, %v2170
    %v2191 = vsel %vm995, %v1911, %v2172
    %v2192 = vsel %vm995, %v1916, %v2174
    %v2193 = vsel %vm995, %v1921, %v2176
    %v2194 = vsel %vm995, %v1926, %v2178
    %v2195 = vpack.c.bf16 %v2188, %v2187
    %v2196 = vpack.c.bf16 %v2122, %v2117
    %v2197 = vpack.c.bf16 %v2190, %v2189
    %v2198 = vpack.c.bf16 %v2132, %v2127
    %v2199 = vpack.c.bf16 %v2192, %v2191
    %v2200 = vpack.c.bf16 %v2142, %v2137
    %v2201 = vpack.c.bf16 %v2194, %v2193
    %v2202 = vpack.c.bf16 %v2152, %v2147
    %v2203 = vld [vmem:[#allocation18] sm:$0xf]
    %v2204 = vld [vmem:[#allocation18 + $0x4] sm:$0xf]
    %v2205 = vld [vmem:[#allocation18 + $0x8] sm:$0xf]
    %v2206 = vld [vmem:[#allocation18 + $0xc] sm:$0xf]
    %v2207 = vld [vmem:[#allocation18 + $0x10] sm:$0xf]
    %v2208 = vld [vmem:[#allocation18 + $0x14] sm:$0xf]
    %v2209 = vld [vmem:[#allocation18 + $0x18] sm:$0xf]
    %v2210 = vld [vmem:[#allocation18 + $0x1c] sm:$0xf]
    %v2211 = vld [vmem:[#allocation18 + $0x20] sm:$0xf]
    %v2212 = vld [vmem:[#allocation18 + $0x24] sm:$0xf]
    %v2213 = vld [vmem:[#allocation18 + $0x28] sm:$0xf]
    %v2214 = vld [vmem:[#allocation18 + $0x2c] sm:$0xf]
    %v2215 = vld [vmem:[#allocation18 + $0x30] sm:$0xf]
    %v2216 = vld [vmem:[#allocation18 + $0x34] sm:$0xf]
    %v2217 = vld [vmem:[#allocation18 + $0x38] sm:$0xf]
    %v2218 = vld [vmem:[#allocation18 + $0x3c] sm:$0xf]
    %v2219 = vld [vmem:[#allocation18 + $0x40] sm:$0xf]
    %v2220 = vld [vmem:[#allocation18 + $0x44] sm:$0xf]
    %v2221 = vld [vmem:[#allocation18 + $0x48] sm:$0xf]
    %v2222 = vld [vmem:[#allocation18 + $0x4c] sm:$0xf]
    %v2223 = vld [vmem:[#allocation18 + $0x50] sm:$0xf]
    %v2224 = vld [vmem:[#allocation18 + $0x54] sm:$0xf]
    %v2225 = vld [vmem:[#allocation18 + $0x58] sm:$0xf]
    %v2226 = vld [vmem:[#allocation18 + $0x5c] sm:$0xf]
    %v2227 = vld [vmem:[#allocation19] sm:$0x1]
    %v2229 = vlaneseq
    %v2230 = vshrl.u32 %v2229, 7
    %v2231 = vsub.s32 0, %v2230
    %v2232 = vrot.slane %v2227, %v2231
    %v2258 = vunpack.c.l.b16 %v2203
    %v2259 = vunpack.c.l.b16 %v2204
    %v2260 = vunpack.c.l.b16 %v2205
    %v2261 = vunpack.c.l.b16 %v2206
    %v2262 = vunpack.c.l.b16 %v2207
    %v2263 = vunpack.c.l.b16 %v2208
    %v2264 = vunpack.c.l.b16 %v2209
    %v2265 = vunpack.c.l.b16 %v2210
    %v2266 = vunpack.c.l.b16 %v2211
    %v2267 = vunpack.c.l.b16 %v2212
    %v2268 = vunpack.c.l.b16 %v2213
    %v2269 = vunpack.c.l.b16 %v2214
    %v2270 = vunpack.c.l.b16 %v2215
    %v2271 = vunpack.c.l.b16 %v2216
    %v2272 = vunpack.c.l.b16 %v2217
    %v2273 = vunpack.c.l.b16 %v2218
    %v2274 = vunpack.c.l.b16 %v2219
    %v2275 = vunpack.c.l.b16 %v2220
    %v2276 = vunpack.c.l.b16 %v2221
    %v2277 = vunpack.c.l.b16 %v2222
    %v2278 = vunpack.c.l.b16 %v2223
    %v2279 = vunpack.c.l.b16 %v2224
    %v2280 = vunpack.c.l.b16 %v2225
    %v2281 = vunpack.c.l.b16 %v2226
    %v2282 = vpack.c.b16 %v2259, %v2258
    %v2283 = vpack.c.b16 %v2261, %v2260
    %v2284 = vpack.c.b16 %v2263, %v2262
    %v2285 = vpack.c.b16 %v2265, %v2264
    %v2286 = vpack.c.b16 %v2267, %v2266
    %v2287 = vpack.c.b16 %v2269, %v2268
    %v2288 = vpack.c.b16 %v2271, %v2270
    %v2289 = vpack.c.b16 %v2273, %v2272
    %v2290 = vpack.c.b16 %v2275, %v2274
    %v2291 = vpack.c.b16 %v2277, %v2276
    %v2292 = vpack.c.b16 %v2279, %v2278
    %v2293 = vpack.c.b16 %v2281, %v2280
    %v2307 = vsel %vm995, %v2196, 0
    %v2310 = vsel %vm995, %v2198, 0
    %v2313 = vsel %vm995, %v2200, 0
    %v2316 = vsel %vm995, %v2202, 0
    %2318 = vmatprep.subr.bf16.mxu0 0
    %2319 = vmatpush1.bf16.msra.mxu0 %v2282
    %2320 = vmatprep.subr.bf16.mxu0 0
    %2321 = vmatpush1.bf16.msra.mxu0 %v2283
    %2322 = vmatprep.subr.bf16.mxu0 0
    %2323 = vmatpush1.bf16.msra.mxu0 %v2284
    %2324 = vmatprep.subr.bf16.mxu0 0
    %2325 = vmatpush1.bf16.msra.mxu0 %v2285
    %2326 = vmatprep.subr.bf16.mxu0 0
    %2327 = vmatpush1.bf16.msra.mxu0 %v2286
    %2328 = vmatprep.subr.bf16.mxu0 0
    %2329 = vmatpush1.bf16.msra.mxu0 %v2287
    %2330 = vmatprep.subr.bf16.mxu0 0
    %2331 = vmatpush1.bf16.msra.mxu0 %v2288
    %2332 = vmatprep.subr.bf16.mxu0 0
    %2333 = vmatpush1.bf16.msra.mxu0 %v2289
    %2334 = vmatprep.subr.bf16.mxu0 0
    %2335 = vmatpush1.bf16.msra.mxu0 %v2290
    %2336 = vmatprep.subr.bf16.mxu0 0
    %2337 = vmatpush1.bf16.msra.mxu0 %v2291
    %2338 = vmatprep.subr.bf16.mxu0 0
    %2339 = vmatpush1.bf16.msra.mxu0 %v2292
    %2340 = vmatprep.subr.bf16.mxu0 0
    %2341 = vmatpush1.bf16.msra.mxu0 %v2293
    %2342 = vmatprep.subr.bf16.mxu0 0
    %2343 = vmatpush1.bf16.msra.mxu0 0
    %2344 = vmatprep.subr.bf16.mxu0 0
    %2345 = vmatpush1.bf16.msra.mxu0 0
    %2346 = vmatprep.subr.bf16.mxu0 0
    %2347 = vmatpush1.bf16.msra.mxu0 0
    %2348 = vmatprep.subr.bf16.mxu0 0
    %2349 = vmatpush1.bf16.msra.mxu0 0
    %2350 = vmatprep.mubr.bf16.mxu0 %v2307
    %2351 = vmatmul.mubr.bf16.gmra.mrb[0].mxu0 %v2195
    %v2352 = vpop.f32.mrb[0].mxu0
    %v2353 = vadd.f32 %v2232, %v2352
    %v2354 = vpop.f32.mrb[0].mxu0
    %v2355 = vpop.f32.mrb[0].mxu0
    %v2356 = vadd.f32 %v2232, %v2355
    %v2357 = vpop.f32.mrb[0].mxu0
    %2358 = vmatprep.mubr.bf16.mxu0 %v2310
    %2359 = vmatmul.mubr.bf16.gmra.mrb[0].mxu0 %v2197
    %v2360 = vpop.f32.mrb[0].mxu0
    %v2361 = vadd.f32 %v2232, %v2360
    %v2362 = vpop.f32.mrb[0].mxu0
    %v2363 = vpop.f32.mrb[0].mxu0
    %v2364 = vadd.f32 %v2232, %v2363
    %v2365 = vpop.f32.mrb[0].mxu0
    %2366 = vmatprep.mubr.bf16.mxu0 %v2313
    %2367 = vmatmul.mubr.bf16.gmra.mrb[0].mxu0 %v2199
    %v2368 = vpop.f32.mrb[0].mxu0
    %v2369 = vadd.f32 %v2232, %v2368
    %v2370 = vpop.f32.mrb[0].mxu0
    %v2371 = vpop.f32.mrb[0].mxu0
    %v2372 = vadd.f32 %v2232, %v2371
    %v2373 = vpop.f32.mrb[0].mxu0
    %2374 = vmatprep.mubr.bf16.mxu0 %v2316
    %2375 = vmatmul.mubr.bf16.gmra.mrb[0].mxu0 %v2201
    %v2376 = vpop.f32.mrb[0].mxu0
    %v2377 = vadd.f32 %v2232, %v2376
    %v2378 = vpop.f32.mrb[0].mxu0
    %v2379 = vpop.f32.mrb[0].mxu0
    %v2380 = vadd.f32 %v2232, %v2379
    %v2381 = vpop.f32.mrb[0].mxu0
    %2382 = vdwg.mxu0
    %v2383 = vmax.f32 %v2353, 0.0
    %v2384 = vmax.f32 %v2356, 0.0
    %v2385 = vmax.f32 %v2361, 0.0
    %v2386 = vmax.f32 %v2364, 0.0
    %v2387 = vmax.f32 %v2369, 0.0
    %v2388 = vmax.f32 %v2372, 0.0
    %v2389 = vmax.f32 %v2377, 0.0
    %v2390 = vmax.f32 %v2380, 0.0
    %2391 = vst [vmem:[#allocation4 + $0x7] sm:$0x1] 0.0
    %2392 = vst [vmem:[#allocation4 + $0x37] sm:$0x1] 0.0
    %2393 = vst [vmem:[#allocation4 + $0x28] sm:$0x1] 0.0
    %2394 = vst [vmem:[#allocation4 + $0x58] sm:$0x1] 0.0
    %2395 = vst [vmem:[#allocation4 + $0x8] sm:$0xff] %v2383
    %2396 = vst [vmem:[#allocation4 + $0x10] sm:$0xff] %v2384
    %2397 = vst [vmem:[#allocation4 + $0x18] sm:$0xff] %v2385
    %2398 = vst [vmem:[#allocation4 + $0x20] sm:$0xff] %v2386
    %2399 = vst [vmem:[#allocation4 + $0x38] sm:$0xff] %v2387
    %2400 = vst [vmem:[#allocation4 + $0x40] sm:$0xff] %v2388
    %2401 = vst [vmem:[#allocation4 + $0x48] sm:$0xff] %v2389
    %2402 = vst [vmem:[#allocation4 + $0x50] sm:$0xff] %v2390
    %v2403 = vld [vmem:[#allocation4 + $0x7] sm:$0xff]
    %v2404 = vld [vmem:[#allocation4 + $0xf] sm:$0xff]
    %v2405 = vld [vmem:[#allocation4 + $0x17] sm:$0xff]
    %v2406 = vld [vmem:[#allocation4 + $0x1f] sm:$0xff]
    %v2407 = vld [vmem:[#allocation4 + $0x37] sm:$0xff]
    %v2408 = vld [vmem:[#allocation4 + $0x3f] sm:$0xff]
    %v2409 = vld [vmem:[#allocation4 + $0x47] sm:$0xff]
    %v2410 = vld [vmem:[#allocation4 + $0x4f] sm:$0xff]
    %v2411 = vld [vmem:[#allocation4 + $0x8] sm:$0xff]
    %v2412 = vld [vmem:[#allocation4 + $0x10] sm:$0xff]
    %v2413 = vld [vmem:[#allocation4 + $0x18] sm:$0xff]
    %v2414 = vld [vmem:[#allocation4 + $0x20] sm:$0xff]
    %v2415 = vld [vmem:[#allocation4 + $0x38] sm:$0xff]
    %v2416 = vld [vmem:[#allocation4 + $0x40] sm:$0xff]
    %v2417 = vld [vmem:[#allocation4 + $0x48] sm:$0xff]
    %v2418 = vld [vmem:[#allocation4 + $0x50] sm:$0xff]
    %v2419 = vld [vmem:[#allocation4 + $0x9] sm:$0xff]
    %v2420 = vld [vmem:[#allocation4 + $0x11] sm:$0xff]
    %v2421 = vld [vmem:[#allocation4 + $0x19] sm:$0xff]
    %v2422 = vld [vmem:[#allocation4 + $0x21] sm:$0xff]
    %v2423 = vld [vmem:[#allocation4 + $0x39] sm:$0xff]
    %v2424 = vld [vmem:[#allocation4 + $0x41] sm:$0xff]
    %v2425 = vld [vmem:[#allocation4 + $0x49] sm:$0xff]
    %v2426 = vld [vmem:[#allocation4 + $0x51] sm:$0xff]
    %v2427 = vpack.c.bf16 %v2404, %v2403
    %v2428 = vpack.c.bf16 %v2412, %v2411
    %v2429 = vpack.c.bf16 %v2420, %v2419
    %v2430 = vpack.c.bf16 %v2406, %v2405
    %v2431 = vpack.c.bf16 %v2414, %v2413
    %v2432 = vpack.c.bf16 %v2422, %v2421
    %v2433 = vpack.c.bf16 %v2408, %v2407
    %v2434 = vpack.c.bf16 %v2416, %v2415
    %v2435 = vpack.c.bf16 %v2424, %v2423
    %v2436 = vpack.c.bf16 %v2410, %v2409
    %v2437 = vpack.c.bf16 %v2418, %v2417
    %v2438 = vpack.c.bf16 %v2426, %v2425
    %v2439 = vld [vmem:[#allocation21] sm:$0xf]
    %v2440 = vld [vmem:[#allocation21 + $0x4] sm:$0xf]
    %v2441 = vld [vmem:[#allocation21 + $0x8] sm:$0xf]
    %v2442 = vld [vmem:[#allocation21 + $0xc] sm:$0xf]
    %v2443 = vld [vmem:[#allocation21 + $0x10] sm:$0xf]
    %v2444 = vld [vmem:[#allocation21 + $0x14] sm:$0xf]
    %v2445 = vld [vmem:[#allocation21 + $0x18] sm:$0xf]
    %v2446 = vld [vmem:[#allocation21 + $0x1c] sm:$0xf]
    %v2447 = vld [vmem:[#allocation21 + $0x20] sm:$0xf]
    %v2448 = vld [vmem:[#allocation21 + $0x24] sm:$0xf]
    %v2449 = vld [vmem:[#allocation21 + $0x28] sm:$0xf]
    %v2450 = vld [vmem:[#allocation21 + $0x2c] sm:$0xf]
    %v2451 = vld [vmem:[#allocation21 + $0x30] sm:$0xf]
    %v2452 = vld [vmem:[#allocation21 + $0x34] sm:$0xf]
    %v2453 = vld [vmem:[#allocation21 + $0x38] sm:$0xf]
    %v2454 = vld [vmem:[#allocation21 + $0x3c] sm:$0xf]
    %v2455 = vld [vmem:[#allocation21 + $0x40] sm:$0xf]
    %v2456 = vld [vmem:[#allocation21 + $0x44] sm:$0xf]
    %v2457 = vld [vmem:[#allocation21 + $0x48] sm:$0xf]
    %v2458 = vld [vmem:[#allocation21 + $0x4c] sm:$0xf]
    %v2459 = vld [vmem:[#allocation21 + $0x50] sm:$0xf]
    %v2460 = vld [vmem:[#allocation21 + $0x54] sm:$0xf]
    %v2461 = vld [vmem:[#allocation21 + $0x58] sm:$0xf]
    %v2462 = vld [vmem:[#allocation21 + $0x5c] sm:$0xf]
    %v2463 = vld [vmem:[#allocation21 + $0x60] sm:$0xf]
    %v2464 = vld [vmem:[#allocation21 + $0x64] sm:$0xf]
    %v2465 = vld [vmem:[#allocation21 + $0x68] sm:$0xf]
    %v2466 = vld [vmem:[#allocation21 + $0x6c] sm:$0xf]
    %v2467 = vld [vmem:[#allocation21 + $0x70] sm:$0xf]
    %v2468 = vld [vmem:[#allocation21 + $0x74] sm:$0xf]
    %v2469 = vld [vmem:[#allocation21 + $0x78] sm:$0xf]
    %v2470 = vld [vmem:[#allocation21 + $0x7c] sm:$0xf]
    %v2471 = vld [vmem:[#allocation21 + $0x80] sm:$0xf]
    %v2472 = vld [vmem:[#allocation21 + $0x84] sm:$0xf]
    %v2473 = vld [vmem:[#allocation21 + $0x88] sm:$0xf]
    %v2474 = vld [vmem:[#allocation21 + $0x8c] sm:$0xf]
    %v2475 = vld [vmem:[#allocation21 + $0x90] sm:$0xf]
    %v2476 = vld [vmem:[#allocation21 + $0x94] sm:$0xf]
    %v2477 = vld [vmem:[#allocation21 + $0x98] sm:$0xf]
    %v2478 = vld [vmem:[#allocation21 + $0x9c] sm:$0xf]
    %v2479 = vld [vmem:[#allocation21 + $0xa0] sm:$0xf]
    %v2480 = vld [vmem:[#allocation21 + $0xa4] sm:$0xf]
    %v2481 = vld [vmem:[#allocation21 + $0xa8] sm:$0xf]
    %v2482 = vld [vmem:[#allocation21 + $0xac] sm:$0xf]
    %v2483 = vld [vmem:[#allocation21 + $0xb0] sm:$0xf]
    %v2484 = vld [vmem:[#allocation21 + $0xb4] sm:$0xf]
    %v2485 = vld [vmem:[#allocation21 + $0xb8] sm:$0xf]
    %v2486 = vld [vmem:[#allocation21 + $0xbc] sm:$0xf]
    %v2487 = vld [vmem:[#allocation22] sm:$0x1]
    %v2489 = vlaneseq
    %v2490 = vshrl.u32 %v2489, 7
    %v2491 = vsub.s32 0, %v2490
    %v2492 = vrot.slane %v2487, %v2491
    %v2542 = vunpack.c.l.b16 %v2439
    %v2543 = vunpack.c.l.b16 %v2440
    %v2544 = vunpack.c.l.b16 %v2441
    %v2545 = vunpack.c.l.b16 %v2442
    %v2546 = vunpack.c.l.b16 %v2443
    %v2547 = vunpack.c.l.b16 %v2444
    %v2548 = vunpack.c.l.b16 %v2445
    %v2549 = vunpack.c.l.b16 %v2446
    %v2550 = vunpack.c.l.b16 %v2447
    %v2551 = vunpack.c.l.b16 %v2448
    %v2552 = vunpack.c.l.b16 %v2449
    %v2553 = vunpack.c.l.b16 %v2450
    %v2554 = vunpack.c.l.b16 %v2451
    %v2555 = vunpack.c.l.b16 %v2452
    %v2556 = vunpack.c.l.b16 %v2453
    %v2557 = vunpack.c.l.b16 %v2454
    %v2558 = vunpack.c.l.b16 %v2455
    %v2559 = vunpack.c.l.b16 %v2456
    %v2560 = vunpack.c.l.b16 %v2457
    %v2561 = vunpack.c.l.b16 %v2458
    %v2562 = vunpack.c.l.b16 %v2459
    %v2563 = vunpack.c.l.b16 %v2460
    %v2564 = vunpack.c.l.b16 %v2461
    %v2565 = vunpack.c.l.b16 %v2462
    %v2566 = vunpack.c.l.b16 %v2463
    %v2567 = vunpack.c.l.b16 %v2464
    %v2568 = vunpack.c.l.b16 %v2465
    %v2569 = vunpack.c.l.b16 %v2466
    %v2570 = vunpack.c.l.b16 %v2467
    %v2571 = vunpack.c.l.b16 %v2468
    %v2572 = vunpack.c.l.b16 %v2469
    %v2573 = vunpack.c.l.b16 %v2470
    %v2574 = vunpack.c.l.b16 %v2471
    %v2575 = vunpack.c.l.b16 %v2472
    %v2576 = vunpack.c.l.b16 %v2473
    %v2577 = vunpack.c.l.b16 %v2474
    %v2578 = vunpack.c.l.b16 %v2475
    %v2579 = vunpack.c.l.b16 %v2476
    %v2580 = vunpack.c.l.b16 %v2477
    %v2581 = vunpack.c.l.b16 %v2478
    %v2582 = vunpack.c.l.b16 %v2479
    %v2583 = vunpack.c.l.b16 %v2480
    %v2584 = vunpack.c.l.b16 %v2481
    %v2585 = vunpack.c.l.b16 %v2482
    %v2586 = vunpack.c.l.b16 %v2483
    %v2587 = vunpack.c.l.b16 %v2484
    %v2588 = vunpack.c.l.b16 %v2485
    %v2589 = vunpack.c.l.b16 %v2486
    %v2590 = vpack.c.b16 %v2543, %v2542
    %v2591 = vpack.c.b16 %v2545, %v2544
    %v2592 = vpack.c.b16 %v2547, %v2546
    %v2593 = vpack.c.b16 %v2549, %v2548
    %v2594 = vpack.c.b16 %v2551, %v2550
    %v2595 = vpack.c.b16 %v2553, %v2552
    %v2596 = vpack.c.b16 %v2555, %v2554
    %v2597 = vpack.c.b16 %v2557, %v2556
    %v2598 = vpack.c.b16 %v2559, %v2558
    %v2599 = vpack.c.b16 %v2561, %v2560
    %v2600 = vpack.c.b16 %v2563, %v2562
    %v2601 = vpack.c.b16 %v2565, %v2564
    %v2602 = vpack.c.b16 %v2567, %v2566
    %v2603 = vpack.c.b16 %v2569, %v2568
    %v2604 = vpack.c.b16 %v2571, %v2570
    %v2605 = vpack.c.b16 %v2573, %v2572
    %v2606 = vpack.c.b16 %v2575, %v2574
    %v2607 = vpack.c.b16 %v2577, %v2576
    %v2608 = vpack.c.b16 %v2579, %v2578
    %v2609 = vpack.c.b16 %v2581, %v2580
    %v2610 = vpack.c.b16 %v2583, %v2582
    %v2611 = vpack.c.b16 %v2585, %v2584
    %v2612 = vpack.c.b16 %v2587, %v2586
    %v2613 = vpack.c.b16 %v2589, %v2588
    %2638 = vmatprep.subr.bf16.mxu0 0
    %2639 = vmatpush1.bf16.msra.mxu0 %v2590
    %2640 = vmatprep.subr.bf16.mxu0 0
    %2641 = vmatpush1.bf16.msra.mxu0 %v2591
    %2642 = vmatprep.subr.bf16.mxu0 0
    %2643 = vmatpush1.bf16.msra.mxu0 %v2592
    %2644 = vmatprep.subr.bf16.mxu0 0
    %2645 = vmatpush1.bf16.msra.mxu0 %v2593
    %2646 = vmatprep.subr.bf16.mxu0 0
    %2647 = vmatpush1.bf16.msra.mxu0 %v2594
    %2648 = vmatprep.subr.bf16.mxu0 0
    %2649 = vmatpush1.bf16.msra.mxu0 %v2595
    %2650 = vmatprep.subr.bf16.mxu0 0
    %2651 = vmatpush1.bf16.msra.mxu0 %v2596
    %2652 = vmatprep.subr.bf16.mxu0 0
    %2653 = vmatpush1.bf16.msra.mxu0 %v2597
    %2654 = vmatprep.subr.bf16.mxu0 0
    %2655 = vmatpush1.bf16.msra.mxu0 %v2598
    %2656 = vmatprep.subr.bf16.mxu0 0
    %2657 = vmatpush1.bf16.msra.mxu0 %v2599
    %2658 = vmatprep.subr.bf16.mxu0 0
    %2659 = vmatpush1.bf16.msra.mxu0 %v2600
    %2660 = vmatprep.subr.bf16.mxu0 0
    %2661 = vmatpush1.bf16.msra.mxu0 %v2601
    %2662 = vmatprep.subr.bf16.mxu0 0
    %2663 = vmatpush1.bf16.msra.mxu0 %v2602
    %2664 = vmatprep.subr.bf16.mxu0 0
    %2665 = vmatpush1.bf16.msra.mxu0 %v2603
    %2666 = vmatprep.subr.bf16.mxu0 0
    %2667 = vmatpush1.bf16.msra.mxu0 %v2604
    %2668 = vmatprep.subr.bf16.mxu0 0
    %2669 = vmatpush1.bf16.msra.mxu0 %v2605
    %2670 = vmatprep.mubr.bf16.mxu0 %v2428
    %2671 = vmatmul.mubr.bf16.gmra.mrb[0].mxu0 %v2427
    %v2672 = vpop.f32.mrb[0].mxu0
    %v2673 = vadd.f32 %v2492, %v2672
    %v2674 = vpop.f32.mrb[0].mxu0
    %v2675 = vpop.f32.mrb[0].mxu0
    %v2676 = vadd.f32 %v2492, %v2675
    %v2677 = vpop.f32.mrb[0].mxu0
    %2678 = vmatprep.mubr.bf16.mxu0 %v2431
    %2679 = vmatmul.mubr.bf16.gmra.mrb[0].mxu0 %v2430
    %v2680 = vpop.f32.mrb[0].mxu0
    %v2681 = vadd.f32 %v2492, %v2680
    %v2682 = vpop.f32.mrb[0].mxu0
    %v2683 = vpop.f32.mrb[0].mxu0
    %v2684 = vadd.f32 %v2492, %v2683
    %v2685 = vpop.f32.mrb[0].mxu0
    %2686 = vmatprep.mubr.bf16.mxu0 %v2434
    %2687 = vmatmul.mubr.bf16.gmra.mrb[0].mxu0 %v2433
    %v2688 = vpop.f32.mrb[0].mxu0
    %v2689 = vadd.f32 %v2492, %v2688
    %v2690 = vpop.f32.mrb[0].mxu0
    %v2691 = vpop.f32.mrb[0].mxu0
    %v2692 = vadd.f32 %v2492, %v2691
    %v2693 = vpop.f32.mrb[0].mxu0
    %2694 = vmatprep.mubr.bf16.mxu0 %v2437
    %2695 = vmatmul.mubr.bf16.gmra.mrb[0].mxu0 %v2436
    %v2696 = vpop.f32.mrb[0].mxu0
    %v2697 = vadd.f32 %v2492, %v2696
    %v2698 = vpop.f32.mrb[0].mxu0
    %v2699 = vpop.f32.mrb[0].mxu0
    %v2700 = vadd.f32 %v2492, %v2699
    %v2701 = vpop.f32.mrb[0].mxu0
    %2702 = vdwg.mxu0
    %2703 = vmatprep.subr.bf16.mxu0 0
    %2704 = vmatpush1.bf16.msra.mxu0 %v2606
    %2705 = vmatprep.subr.bf16.mxu0 0
    %2706 = vmatpush1.bf16.msra.mxu0 %v2607
    %2707 = vmatprep.subr.bf16.mxu0 0
    %2708 = vmatpush1.bf16.msra.mxu0 %v2608
    %2709 = vmatprep.subr.bf16.mxu0 0
    %2710 = vmatpush1.bf16.msra.mxu0 %v2609
    %2711 = vmatprep.subr.bf16.mxu0 0
    %2712 = vmatpush1.bf16.msra.mxu0 %v2610
    %2713 = vmatprep.subr.bf16.mxu0 0
    %2714 = vmatpush1.bf16.msra.mxu0 %v2611
    %2715 = vmatprep.subr.bf16.mxu0 0
    %2716 = vmatpush1.bf16.msra.mxu0 %v2612
    %2717 = vmatprep.subr.bf16.mxu0 0
    %2718 = vmatpush1.bf16.msra.mxu0 %v2613
    %2719 = vmatprep.subr.bf16.mxu0 0
    %2720 = vmatpush1.bf16.msra.mxu0 0
    %2721 = vmatprep.subr.bf16.mxu0 0
    %2722 = vmatpush1.bf16.msra.mxu0 0
    %2723 = vmatprep.subr.bf16.mxu0 0
    %2724 = vmatpush1.bf16.msra.mxu0 0
    %2725 = vmatprep.subr.bf16.mxu0 0
    %2726 = vmatpush1.bf16.msra.mxu0 0
    %2727 = vmatprep.subr.bf16.mxu0 0
    %2728 = vmatpush1.bf16.msra.mxu0 0
    %2729 = vmatprep.subr.bf16.mxu0 0
    %2730 = vmatpush1.bf16.msra.mxu0 0
    %2731 = vmatprep.subr.bf16.mxu0 0
    %2732 = vmatpush1.bf16.msra.mxu0 0
    %2733 = vmatprep.subr.bf16.mxu0 0
    %2734 = vmatpush1.bf16.msra.mxu0 0
    %2735 = vmatprep.mubr.bf16.mxu0 0
    %2736 = vmatmul.mubr.bf16.gmra.mrb[0].mxu0 %v2429
    %v2737 = vpop.f32.mrb[0].mxu0
    %v2738 = vadd.f32 %v2673, %v2737
    %v2739 = vpop.f32.mrb[0].mxu0
    %v2740 = vpop.f32.mrb[0].mxu0
    %v2741 = vadd.f32 %v2676, %v2740
    %v2742 = vpop.f32.mrb[0].mxu0
    %2743 = vmatprep.mubr.bf16.mxu0 0
    %2744 = vmatmul.mubr.bf16.gmra.mrb[0].mxu0 %v2432
    %v2745 = vpop.f32.mrb[0].mxu0
    %v2746 = vadd.f32 %v2681, %v2745
    %v2747 = vpop.f32.mrb[0].mxu0
    %v2748 = vpop.f32.mrb[0].mxu0
    %v2749 = vadd.f32 %v2684, %v2748
    %v2750 = vpop.f32.mrb[0].mxu0
    %2751 = vmatprep.mubr.bf16.mxu0 0
    %2752 = vmatmul.mubr.bf16.gmra.mrb[0].mxu0 %v2435
    %v2753 = vpop.f32.mrb[0].mxu0
    %v2754 = vadd.f32 %v2689, %v2753
    %v2755 = vpop.f32.mrb[0].mxu0
    %v2756 = vpop.f32.mrb[0].mxu0
    %v2757 = vadd.f32 %v2692, %v2756
    %v2758 = vpop.f32.mrb[0].mxu0
    %2759 = vmatprep.mubr.bf16.mxu0 0
    %2760 = vmatmul.mubr.bf16.gmra.mrb[0].mxu0 %v2438
    %v2761 = vpop.f32.mrb[0].mxu0
    %v2762 = vadd.f32 %v2697, %v2761
    %v2763 = vpop.f32.mrb[0].mxu0
    %v2764 = vpop.f32.mrb[0].mxu0
    %v2765 = vadd.f32 %v2700, %v2764
    %v2766 = vpop.f32.mrb[0].mxu0
    %2767 = vdwg.mxu0
    %v2768 = vpack.c.bf16 %v2009, %v2004
    %v2769 = vpack.c.bf16 %v2019, %v2014
    %v2770 = vpack.c.bf16 %v2029, %v2024
    %v2771 = vpack.c.bf16 %v2039, %v2034
    %v2772 = vld [vmem:[#allocation24] sm:$0xf]
    %v2773 = vld [vmem:[#allocation24 + $0x4] sm:$0xf]
    %v2774 = vld [vmem:[#allocation24 + $0x8] sm:$0xf]
    %v2775 = vld [vmem:[#allocation24 + $0xc] sm:$0xf]
    %v2776 = vld [vmem:[#allocation24 + $0x10] sm:$0xf]
    %v2777 = vld [vmem:[#allocation24 + $0x14] sm:$0xf]
    %v2778 = vld [vmem:[#allocation24 + $0x18] sm:$0xf]
    %v2779 = vld [vmem:[#allocation24 + $0x1c] sm:$0xf]
    %v2780 = vld [vmem:[#allocation25] sm:$0x1]
    %v2782 = vlaneseq
    %v2783 = vshrl.u32 %v2782, 7
    %v2784 = vsub.s32 0, %v2783
    %v2785 = vrot.slane %v2780, %v2784
    %v2795 = vunpack.c.l.b16 %v2772
    %v2796 = vunpack.c.l.b16 %v2773
    %v2797 = vunpack.c.l.b16 %v2774
    %v2798 = vunpack.c.l.b16 %v2775
    %v2799 = vunpack.c.l.b16 %v2776
    %v2800 = vunpack.c.l.b16 %v2777
    %v2801 = vunpack.c.l.b16 %v2778
    %v2802 = vunpack.c.l.b16 %v2779
    %v2803 = vpack.c.b16 %v2796, %v2795
    %v2804 = vpack.c.b16 %v2798, %v2797
    %v2805 = vpack.c.b16 %v2800, %v2799
    %v2806 = vpack.c.b16 %v2802, %v2801
    %v2812 = vsel %vm995, %v2768, 0
    %v2815 = vsel %vm995, %v2769, 0
    %v2818 = vsel %vm995, %v2770, 0
    %v2821 = vsel %vm995, %v2771, 0
    %2823 = vmatprep.subr.bf16.mxu0 0
    %2824 = vmatpush1.bf16.msra.mxu0 %v2803
    %2825 = vmatprep.subr.bf16.mxu0 0
    %2826 = vmatpush1.bf16.msra.mxu0 %v2804
    %2827 = vmatprep.subr.bf16.mxu0 0
    %2828 = vmatpush1.bf16.msra.mxu0 %v2805
    %2829 = vmatprep.subr.bf16.mxu0 0
    %2830 = vmatpush1.bf16.msra.mxu0 %v2806
    %2831 = vmatprep.subr.bf16.mxu0 0
    %2832 = vmatpush1.bf16.msra.mxu0 0
    %2833 = vmatprep.subr.bf16.mxu0 0
    %2834 = vmatpush1.bf16.msra.mxu0 0
    %2835 = vmatprep.subr.bf16.mxu0 0
    %2836 = vmatpush1.bf16.msra.mxu0 0
    %2837 = vmatprep.subr.bf16.mxu0 0
    %2838 = vmatpush1.bf16.msra.mxu0 0
    %2839 = vmatprep.subr.bf16.mxu0 0
    %2840 = vmatpush1.bf16.msra.mxu0 0
    %2841 = vmatprep.subr.bf16.mxu0 0
    %2842 = vmatpush1.bf16.msra.mxu0 0
    %2843 = vmatprep.subr.bf16.mxu0 0
    %2844 = vmatpush1.bf16.msra.mxu0 0
    %2845 = vmatprep.subr.bf16.mxu0 0
    %2846 = vmatpush1.bf16.msra.mxu0 0
    %2847 = vmatprep.subr.bf16.mxu0 0
    %2848 = vmatpush1.bf16.msra.mxu0 0
    %2849 = vmatprep.subr.bf16.mxu0 0
    %2850 = vmatpush1.bf16.msra.mxu0 0
    %2851 = vmatprep.subr.bf16.mxu0 0
    %2852 = vmatpush1.bf16.msra.mxu0 0
    %2853 = vmatprep.subr.bf16.mxu0 0
    %2854 = vmatpush1.bf16.msra.mxu0 0
    %2855 = vmatprep.mubr.bf16.mxu0 0
    %2856 = vmatmul.mubr.bf16.gmra.mrb[0].mxu0 %v2812
    %v2857 = vpop.f32.mrb[0].mxu0
    %v2858 = vadd.f32 %v2785, %v2857
    %v2859 = vpop.f32.mrb[0].mxu0
    %v2860 = vpop.f32.mrb[0].mxu0
    %v2861 = vadd.f32 %v2785, %v2860
    %v2862 = vpop.f32.mrb[0].mxu0
    %2863 = vmatprep.mubr.bf16.mxu0 0
    %2864 = vmatmul.mubr.bf16.gmra.mrb[0].mxu0 %v2815
    %v2865 = vpop.f32.mrb[0].mxu0
    %v2866 = vadd.f32 %v2785, %v2865
    %v2867 = vpop.f32.mrb[0].mxu0
    %v2868 = vpop.f32.mrb[0].mxu0
    %v2869 = vadd.f32 %v2785, %v2868
    %v2870 = vpop.f32.mrb[0].mxu0
    %2871 = vmatprep.mubr.bf16.mxu0 0
    %2872 = vmatmul.mubr.bf16.gmra.mrb[0].mxu0 %v2818
    %v2873 = vpop.f32.mrb[0].mxu0
    %v2874 = vadd.f32 %v2785, %v2873
    %v2875 = vpop.f32.mrb[0].mxu0
    %v2876 = vpop.f32.mrb[0].mxu0
    %v2877 = vadd.f32 %v2785, %v2876
    %v2878 = vpop.f32.mrb[0].mxu0
    %2879 = vmatprep.mubr.bf16.mxu0 0
    %2880 = vmatmul.mubr.bf16.gmra.mrb[0].mxu0 %v2821
    %v2881 = vpop.f32.mrb[0].mxu0
    %v2882 = vadd.f32 %v2785, %v2881
    %v2883 = vpop.f32.mrb[0].mxu0
    %v2884 = vpop.f32.mrb[0].mxu0
    %v2885 = vadd.f32 %v2785, %v2884
    %v2886 = vpop.f32.mrb[0].mxu0
    %2887 = vdwg.mxu0
    %v2888 = vadd.f32 %v2738, %v2858
    %v2889 = vadd.f32 %v2741, %v2861
    %v2890 = vadd.f32 %v2746, %v2866
    %v2891 = vadd.f32 %v2749, %v2869
    %v2892 = vadd.f32 %v2754, %v2874
    %v2893 = vadd.f32 %v2757, %v2877
    %v2894 = vadd.f32 %v2762, %v2882
    %v2895 = vadd.f32 %v2765, %v2885
    %v2896 = vmax.f32 %v2888, 0.0
    %v2897 = vmax.f32 %v2889, 0.0
    %v2898 = vmax.f32 %v2890, 0.0
    %v2899 = vmax.f32 %v2891, 0.0
    %v2900 = vmax.f32 %v2892, 0.0
    %v2901 = vmax.f32 %v2893, 0.0
    %v2902 = vmax.f32 %v2894, 0.0
    %v2903 = vmax.f32 %v2895, 0.0
    %v2904 = vld [vmem:[#allocation27] sm:$0xff]
    %v2905 = vld [vmem:[#allocation27 + $0x8] sm:$0xff]
    %v2906 = vld [vmem:[#allocation27 + $0x10] sm:$0xff]
    %v2907 = vld [vmem:[#allocation27 + $0x18] sm:$0xff]
    %v2909 = vsel %vm995, %v2904, 0
    %v2912 = vsel %vm995, %v2905, 0
    %v2915 = vsel %vm995, %v2906, 0
    %v2918 = vsel %vm995, %v2907, 0
    %2920 = vmatprep.subr.mxu0 0.0
    %2921 = vmatpush1.msra.mxu0 %v2896
    %2922 = vmatprep.subr.mxu0 0.0
    %2923 = vmatpush1.msra.mxu0 %v2897
    %2924 = vmatprep.subr.mxu0 0.0
    %2925 = vmatpush1.msra.mxu0 %v2898
    %2926 = vmatprep.subr.mxu0 0.0
    %2927 = vmatpush1.msra.mxu0 %v2899
    %2928 = vmatprep.subr.mxu0 0.0
    %2929 = vmatpush1.msra.mxu0 %v2900
    %2930 = vmatprep.subr.mxu0 0.0
    %2931 = vmatpush1.msra.mxu0 %v2901
    %2932 = vmatprep.subr.mxu0 0.0
    %2933 = vmatpush1.msra.mxu0 %v2902
    %2934 = vmatprep.subr.mxu0 0.0
    %2935 = vmatpush1.msra.mxu0 %v2903
    %2936 = vmatprep.subr.mxu0 0.0
    %2937 = vmatpush1.msra.mxu0 0.0
    %2938 = vmatprep.subr.mxu0 0.0
    %2939 = vmatpush1.msra.mxu0 0.0
    %2940 = vmatprep.subr.mxu0 0.0
    %2941 = vmatpush1.msra.mxu0 0.0
    %2942 = vmatprep.subr.mxu0 0.0
    %2943 = vmatpush1.msra.mxu0 0.0
    %2944 = vmatprep.subr.mxu0 0.0
    %2945 = vmatpush1.msra.mxu0 0.0
    %2946 = vmatprep.subr.mxu0 0.0
    %2947 = vmatpush1.msra.mxu0 0.0
    %2948 = vmatprep.subr.mxu0 0.0
    %2949 = vmatpush1.msra.mxu0 0.0
    %2950 = vmatprep.subr.mxu0 0.0
    %2951 = vmatpush1.msra.mxu0 0.0
    %2952 = vmatprep.subr.mxu0 0.0
    %2953 = vmatpush1.msra.mxu0 0.0
    %2954 = vmatprep.subr.mxu0 0.0
    %2955 = vmatpush1.msra.mxu0 0.0
    %2956 = vmatprep.subr.mxu0 0.0
    %2957 = vmatpush1.msra.mxu0 0.0
    %2958 = vmatprep.subr.mxu0 0.0
    %2959 = vmatpush1.msra.mxu0 0.0
    %2960 = vmatprep.subr.mxu0 0.0
    %2961 = vmatpush1.msra.mxu0 0.0
    %2962 = vmatprep.subr.mxu0 0.0
    %2963 = vmatpush1.msra.mxu0 0.0
    %2964 = vmatprep.subr.mxu0 0.0
    %2965 = vmatpush1.msra.mxu0 0.0
    %2966 = vmatprep.subr.mxu0 0.0
    %2967 = vmatpush1.msra.mxu0 0.0
    %2968 = vmatprep.subr.mxu0 0.0
    %2969 = vmatpush1.msra.mxu0 0.0
    %2970 = vmatprep.subr.mxu0 0.0
    %2971 = vmatpush1.msra.mxu0 0.0
    %2972 = vmatprep.subr.mxu0 0.0
    %2973 = vmatpush1.msra.mxu0 0.0
    %2974 = vmatprep.subr.mxu0 0.0
    %2975 = vmatpush1.msra.mxu0 0.0
    %2976 = vmatprep.subr.mxu0 0.0
    %2977 = vmatpush1.msra.mxu0 0.0
    %2978 = vmatprep.subr.mxu0 0.0
    %2979 = vmatpush1.msra.mxu0 0.0
    %2980 = vmatprep.subr.mxu0 0.0
    %2981 = vmatpush1.msra.mxu0 0.0
    %2982 = vmatprep.subr.mxu0 0.0
    %2983 = vmatpush1.msra.mxu0 0.0
    %2984 = vmatprep.mubr.f32.mxu0 0.0
    %2985 = vmatmul.mubr.f32.gmra.mrb[0].mxu0 %v2909
    %v2986 = vpop.f32.mrb[0].mxu0
    %v2987 = vadd.f32 0.0, %v2986
    %v2988 = vpop.f32.mrb[0].mxu0
    %2989 = vmatprep.mubr.f32.mxu0 0.0
    %2990 = vmatmul.mubr.f32.gmra.mrb[0].mxu0 %v2912
    %v2991 = vpop.f32.mrb[0].mxu0
    %v2992 = vadd.f32 0.0, %v2991
    %v2993 = vpop.f32.mrb[0].mxu0
    %2994 = vmatprep.mubr.f32.mxu0 0.0
    %2995 = vmatmul.mubr.f32.gmra.mrb[0].mxu0 %v2915
    %v2996 = vpop.f32.mrb[0].mxu0
    %v2997 = vadd.f32 0.0, %v2996
    %v2998 = vpop.f32.mrb[0].mxu0
    %2999 = vmatprep.mubr.f32.mxu0 0.0
    %3000 = vmatmul.mubr.f32.gmra.mrb[0].mxu0 %v2918
    %v3001 = vpop.f32.mrb[0].mxu0
    %v3002 = vadd.f32 0.0, %v3001
    %v3003 = vpop.f32.mrb[0].mxu0
    %3004 = vdwg.mxu0
    %v3005 = vld [vmem:[#allocation28] sm:$0xff]
    %v3006 = vld [vmem:[#allocation28 + $0x8] sm:$0xff]
    %v3007 = vld [vmem:[#allocation28 + $0x10] sm:$0xff]
    %v3008 = vld [vmem:[#allocation28 + $0x18] sm:$0xff]
    %v3010 = vsel %vm995, %v3005, 0
    %v3013 = vsel %vm995, %v3006, 0
    %v3016 = vsel %vm995, %v3007, 0
    %v3019 = vsel %vm995, %v3008, 0
    %3021 = vmatprep.subr.mxu0 0.0
    %3022 = vmatpush1.msra.mxu0 %v2896
    %3023 = vmatprep.subr.mxu0 0.0
    %3024 = vmatpush1.msra.mxu0 %v2897
    %3025 = vmatprep.subr.mxu0 0.0
    %3026 = vmatpush1.msra.mxu0 %v2898
    %3027 = vmatprep.subr.mxu0 0.0
    %3028 = vmatpush1.msra.mxu0 %v2899
    %3029 = vmatprep.subr.mxu0 0.0
    %3030 = vmatpush1.msra.mxu0 %v2900
    %3031 = vmatprep.subr.mxu0 0.0
    %3032 = vmatpush1.msra.mxu0 %v2901
    %3033 = vmatprep.subr.mxu0 0.0
    %3034 = vmatpush1.msra.mxu0 %v2902
    %3035 = vmatprep.subr.mxu0 0.0
    %3036 = vmatpush1.msra.mxu0 %v2903
    %3037 = vmatprep.subr.mxu0 0.0
    %3038 = vmatpush1.msra.mxu0 0.0
    %3039 = vmatprep.subr.mxu0 0.0
    %3040 = vmatpush1.msra.mxu0 0.0
    %3041 = vmatprep.subr.mxu0 0.0
    %3042 = vmatpush1.msra.mxu0 0.0
    %3043 = vmatprep.subr.mxu0 0.0
    %3044 = vmatpush1.msra.mxu0 0.0
    %3045 = vmatprep.subr.mxu0 0.0
    %3046 = vmatpush1.msra.mxu0 0.0
    %3047 = vmatprep.subr.mxu0 0.0
    %3048 = vmatpush1.msra.mxu0 0.0
    %3049 = vmatprep.subr.mxu0 0.0
    %3050 = vmatpush1.msra.mxu0 0.0
    %3051 = vmatprep.subr.mxu0 0.0
    %3052 = vmatpush1.msra.mxu0 0.0
    %3053 = vmatprep.subr.mxu0 0.0
    %3054 = vmatpush1.msra.mxu0 0.0
    %3055 = vmatprep.subr.mxu0 0.0
    %3056 = vmatpush1.msra.mxu0 0.0
    %3057 = vmatprep.subr.mxu0 0.0
    %3058 = vmatpush1.msra.mxu0 0.0
    %3059 = vmatprep.subr.mxu0 0.0
    %3060 = vmatpush1.msra.mxu0 0.0
    %3061 = vmatprep.subr.mxu0 0.0
    %3062 = vmatpush1.msra.mxu0 0.0
    %3063 = vmatprep.subr.mxu0 0.0
    %3064 = vmatpush1.msra.mxu0 0.0
    %3065 = vmatprep.subr.mxu0 0.0
    %3066 = vmatpush1.msra.mxu0 0.0
    %3067 = vmatprep.subr.mxu0 0.0
    %3068 = vmatpush1.msra.mxu0 0.0
    %3069 = vmatprep.subr.mxu0 0.0
    %3070 = vmatpush1.msra.mxu0 0.0
    %3071 = vmatprep.subr.mxu0 0.0
    %3072 = vmatpush1.msra.mxu0 0.0
    %3073 = vmatprep.subr.mxu0 0.0
    %3074 = vmatpush1.msra.mxu0 0.0
    %3075 = vmatprep.subr.mxu0 0.0
    %3076 = vmatpush1.msra.mxu0 0.0
    %3077 = vmatprep.subr.mxu0 0.0
    %3078 = vmatpush1.msra.mxu0 0.0
    %3079 = vmatprep.subr.mxu0 0.0
    %3080 = vmatpush1.msra.mxu0 0.0
    %3081 = vmatprep.subr.mxu0 0.0
    %3082 = vmatpush1.msra.mxu0 0.0
    %3083 = vmatprep.subr.mxu0 0.0
    %3084 = vmatpush1.msra.mxu0 0.0
    %3085 = vmatprep.mubr.f32.mxu0 0.0
    %3086 = vmatmul.mubr.f32.gmra.mrb[0].mxu0 %v3010
    %v3087 = vpop.f32.mrb[0].mxu0
    %v3088 = vadd.f32 0.0, %v3087
    %v3089 = vpop.f32.mrb[0].mxu0
    %3090 = vmatprep.mubr.f32.mxu0 0.0
    %3091 = vmatmul.mubr.f32.gmra.mrb[0].mxu0 %v3013
    %v3092 = vpop.f32.mrb[0].mxu0
    %v3093 = vadd.f32 0.0, %v3092
    %v3094 = vpop.f32.mrb[0].mxu0
    %3095 = vmatprep.mubr.f32.mxu0 0.0
    %3096 = vmatmul.mubr.f32.gmra.mrb[0].mxu0 %v3016
    %v3097 = vpop.f32.mrb[0].mxu0
    %v3098 = vadd.f32 0.0, %v3097
    %v3099 = vpop.f32.mrb[0].mxu0
    %3100 = vmatprep.mubr.f32.mxu0 0.0
    %3101 = vmatmul.mubr.f32.gmra.mrb[0].mxu0 %v3019
    %v3102 = vpop.f32.mrb[0].mxu0
    %v3103 = vadd.f32 0.0, %v3102
    %v3104 = vpop.f32.mrb[0].mxu0
    %3105 = vdwg.mxu0
    %v3106 = vld [vmem:[#allocation30] sm:$0xff]
    %v3107 = vld [vmem:[#allocation30 + $0x8] sm:$0xff]
    %v3108 = vld [vmem:[#allocation30 + $0x10] sm:$0xff]
    %v3109 = vld [vmem:[#allocation30 + $0x18] sm:$0xff]
    %v3111 = vsel %vm995, %v3106, 0
    %v3114 = vsel %vm995, %v3107, 0
    %v3117 = vsel %vm995, %v3108, 0
    %v3120 = vsel %vm995, %v3109, 0
    %3122 = vmatprep.subr.mxu0 0.0
    %3123 = vmatpush1.msra.mxu0 %v2896
    %3124 = vmatprep.subr.mxu0 0.0
    %3125 = vmatpush1.msra.mxu0 %v2897
    %3126 = vmatprep.subr.mxu0 0.0
    %3127 = vmatpush1.msra.mxu0 %v2898
    %3128 = vmatprep.subr.mxu0 0.0
    %3129 = vmatpush1.msra.mxu0 %v2899
    %3130 = vmatprep.subr.mxu0 0.0
    %3131 = vmatpush1.msra.mxu0 %v2900
    %3132 = vmatprep.subr.mxu0 0.0
    %3133 = vmatpush1.msra.mxu0 %v2901
    %3134 = vmatprep.subr.mxu0 0.0
    %3135 = vmatpush1.msra.mxu0 %v2902
    %3136 = vmatprep.subr.mxu0 0.0
    %3137 = vmatpush1.msra.mxu0 %v2903
    %3138 = vmatprep.subr.mxu0 0.0
    %3139 = vmatpush1.msra.mxu0 0.0
    %3140 = vmatprep.subr.mxu0 0.0
    %3141 = vmatpush1.msra.mxu0 0.0
    %3142 = vmatprep.subr.mxu0 0.0
    %3143 = vmatpush1.msra.mxu0 0.0
    %3144 = vmatprep.subr.mxu0 0.0
    %3145 = vmatpush1.msra.mxu0 0.0
    %3146 = vmatprep.subr.mxu0 0.0
    %3147 = vmatpush1.msra.mxu0 0.0
    %3148 = vmatprep.subr.mxu0 0.0
    %3149 = vmatpush1.msra.mxu0 0.0
    %3150 = vmatprep.subr.mxu0 0.0
    %3151 = vmatpush1.msra.mxu0 0.0
    %3152 = vmatprep.subr.mxu0 0.0
    %3153 = vmatpush1.msra.mxu0 0.0
    %3154 = vmatprep.subr.mxu0 0.0
    %3155 = vmatpush1.msra.mxu0 0.0
    %3156 = vmatprep.subr.mxu0 0.0
    %3157 = vmatpush1.msra.mxu0 0.0
    %3158 = vmatprep.subr.mxu0 0.0
    %3159 = vmatpush1.msra.mxu0 0.0
    %3160 = vmatprep.subr.mxu0 0.0
    %3161 = vmatpush1.msra.mxu0 0.0
    %3162 = vmatprep.subr.mxu0 0.0
    %3163 = vmatpush1.msra.mxu0 0.0
    %3164 = vmatprep.subr.mxu0 0.0
    %3165 = vmatpush1.msra.mxu0 0.0
    %3166 = vmatprep.subr.mxu0 0.0
    %3167 = vmatpush1.msra.mxu0 0.0
    %3168 = vmatprep.subr.mxu0 0.0
    %3169 = vmatpush1.msra.mxu0 0.0
    %3170 = vmatprep.subr.mxu0 0.0
    %3171 = vmatpush1.msra.mxu0 0.0
    %3172 = vmatprep.subr.mxu0 0.0
    %3173 = vmatpush1.msra.mxu0 0.0
    %3174 = vmatprep.subr.mxu0 0.0
    %3175 = vmatpush1.msra.mxu0 0.0
    %3176 = vmatprep.subr.mxu0 0.0
    %3177 = vmatpush1.msra.mxu0 0.0
    %3178 = vmatprep.subr.mxu0 0.0
    %3179 = vmatpush1.msra.mxu0 0.0
    %3180 = vmatprep.subr.mxu0 0.0
    %3181 = vmatpush1.msra.mxu0 0.0
    %3182 = vmatprep.subr.mxu0 0.0
    %3183 = vmatpush1.msra.mxu0 0.0
    %3184 = vmatprep.subr.mxu0 0.0
    %3185 = vmatpush1.msra.mxu0 0.0
    %3186 = vmatprep.mubr.f32.mxu0 0.0
    %3187 = vmatmul.mubr.f32.gmra.mrb[0].mxu0 %v3111
    %v3188 = vpop.f32.mrb[0].mxu0
    %v3189 = vadd.f32 0.0, %v3188
    %v3190 = vpop.f32.mrb[0].mxu0
    %3191 = vmatprep.mubr.f32.mxu0 0.0
    %3192 = vmatmul.mubr.f32.gmra.mrb[0].mxu0 %v3114
    %v3193 = vpop.f32.mrb[0].mxu0
    %v3194 = vadd.f32 0.0, %v3193
    %v3195 = vpop.f32.mrb[0].mxu0
    %3196 = vmatprep.mubr.f32.mxu0 0.0
    %3197 = vmatmul.mubr.f32.gmra.mrb[0].mxu0 %v3117
    %v3198 = vpop.f32.mrb[0].mxu0
    %v3199 = vadd.f32 0.0, %v3198
    %v3200 = vpop.f32.mrb[0].mxu0
    %3201 = vmatprep.mubr.f32.mxu0 0.0
    %3202 = vmatmul.mubr.f32.gmra.mrb[0].mxu0 %v3120
    %v3203 = vpop.f32.mrb[0].mxu0
    %v3204 = vadd.f32 0.0, %v3203
    %v3205 = vpop.f32.mrb[0].mxu0
    %3206 = vdwg.mxu0
    %v3207 = vpack.c.bf16 %v2992, %v2987
    %v3208 = vpack.c.bf16 %v3093, %v3088
    %v3209 = vpack.c.bf16 %v3194, %v3189
    %v3210 = vpack.c.bf16 %v3002, %v2997
    %v3211 = vpack.c.bf16 %v3103, %v3098
    %v3212 = vpack.c.bf16 %v3204, %v3199
    %v3213 = vld [vmem:[#allocation31] sm:$0xff]
    %v3214 = vld [vmem:[#allocation31 + $0x8] sm:$0xff]
    %v3215 = vld [vmem:[#allocation31 + $0x10] sm:$0xff]
    %v3216 = vld [vmem:[#allocation31 + $0x18] sm:$0xff]
    %v3217 = vld [vmem:[#allocation31 + $0x20] sm:$0xff]
    %v3218 = vld [vmem:[#allocation31 + $0x28] sm:$0xff]
    %v3219 = vld [vmem:[#allocation31 + $0x30] sm:$0xff]
    %v3220 = vld [vmem:[#allocation31 + $0x38] sm:$0xff]
    %v3221 = vld [vmem:[#allocation31 + $0x40] sm:$0xff]
    %v3222 = vld [vmem:[#allocation31 + $0x48] sm:$0xff]
    %v3223 = vld [vmem:[#allocation31 + $0x50] sm:$0xff]
    %v3224 = vld [vmem:[#allocation31 + $0x58] sm:$0xff]
    %v3225 = vld [vmem:[#allocation31 + $0x60] sm:$0xff]
    %v3226 = vld [vmem:[#allocation31 + $0x68] sm:$0xff]
    %v3227 = vld [vmem:[#allocation31 + $0x70] sm:$0xff]
    %v3228 = vld [vmem:[#allocation31 + $0x78] sm:$0xff]
    %v3229 = vld [vmem:[#allocation31 + $0x80] sm:$0xff]
    %v3230 = vld [vmem:[#allocation31 + $0x88] sm:$0xff]
    %v3231 = vld [vmem:[#allocation31 + $0x90] sm:$0xff]
    %v3232 = vld [vmem:[#allocation31 + $0x98] sm:$0xff]
    %v3233 = vld [vmem:[#allocation31 + $0xa0] sm:$0xff]
    %v3234 = vld [vmem:[#allocation31 + $0xa8] sm:$0xff]
    %v3235 = vld [vmem:[#allocation31 + $0xb0] sm:$0xff]
    %v3236 = vld [vmem:[#allocation31 + $0xb8] sm:$0xff]
    %v3237 = vld [vmem:[#allocation31 + $0xc0] sm:$0xff]
    %v3238 = vld [vmem:[#allocation31 + $0xc8] sm:$0xff]
    %v3239 = vld [vmem:[#allocation31 + $0xd0] sm:$0xff]
    %v3240 = vld [vmem:[#allocation31 + $0xd8] sm:$0xff]
    %v3241 = vld [vmem:[#allocation31 + $0xe0] sm:$0xff]
    %v3242 = vld [vmem:[#allocation31 + $0xe8] sm:$0xff]
    %v3243 = vld [vmem:[#allocation31 + $0xf0] sm:$0xff]
    %v3244 = vld [vmem:[#allocation31 + $0xf8] sm:$0xff]
    %v3245 = vld [vmem:[#allocation31 + $0x100] sm:$0xff]
    %v3246 = vld [vmem:[#allocation31 + $0x108] sm:$0xff]
    %v3247 = vld [vmem:[#allocation31 + $0x110] sm:$0xff]
    %v3248 = vld [vmem:[#allocation31 + $0x118] sm:$0xff]
    %v3249 = vld [vmem:[#allocation31 + $0x120] sm:$0xff]
    %v3250 = vld [vmem:[#allocation31 + $0x128] sm:$0xff]
    %v3251 = vld [vmem:[#allocation31 + $0x130] sm:$0xff]
    %v3252 = vld [vmem:[#allocation31 + $0x138] sm:$0xff]
    %v3253 = vld [vmem:[#allocation31 + $0x140] sm:$0xff]
    %v3254 = vld [vmem:[#allocation31 + $0x148] sm:$0xff]
    %v3255 = vld [vmem:[#allocation31 + $0x150] sm:$0xff]
    %v3256 = vld [vmem:[#allocation31 + $0x158] sm:$0xff]
    %v3257 = vld [vmem:[#allocation31 + $0x160] sm:$0xff]
    %v3258 = vld [vmem:[#allocation31 + $0x168] sm:$0xff]
    %v3259 = vld [vmem:[#allocation31 + $0x170] sm:$0xff]
    %v3260 = vld [vmem:[#allocation31 + $0x178] sm:$0xff]
    %v3261 = vld [vmem:[#allocation33] sm:$0x3]
    %v3263 = vlaneseq
    %v3264 = vshrl.u32 %v3263, 7
    %v3265 = vsub.s32 0, %v3264
    %v3266 = vrot.slane %v3261, %v3265
    %v3267 = vlaneseq
    %v3268 = vshrl.u32 %v3267, 7
    %v3269 = vsub.s32 1, %v3268
    %v3270 = vrot.slane %v3261, %v3269
    %v3321 = vunpack.c.l.b16 %v3213
    %v3322 = vunpack.c.h.b16 %v3213
    %v3323 = vunpack.c.l.b16 %v3214
    %v3324 = vunpack.c.h.b16 %v3214
    %v3325 = vunpack.c.l.b16 %v3215
    %v3326 = vunpack.c.h.b16 %v3215
    %v3327 = vunpack.c.l.b16 %v3216
    %v3328 = vunpack.c.h.b16 %v3216
    %v3329 = vunpack.c.l.b16 %v3217
    %v3330 = vunpack.c.h.b16 %v3217
    %v3331 = vunpack.c.l.b16 %v3218
    %v3332 = vunpack.c.h.b16 %v3218
    %v3333 = vunpack.c.l.b16 %v3219
    %v3334 = vunpack.c.h.b16 %v3219
    %v3335 = vunpack.c.l.b16 %v3220
    %v3336 = vunpack.c.h.b16 %v3220
    %v3337 = vunpack.c.l.b16 %v3221
    %v3338 = vunpack.c.h.b16 %v3221
    %v3339 = vunpack.c.l.b16 %v3222
    %v3340 = vunpack.c.h.b16 %v3222
    %v3341 = vunpack.c.l.b16 %v3223
    %v3342 = vunpack.c.h.b16 %v3223
    %v3343 = vunpack.c.l.b16 %v3224
    %v3344 = vunpack.c.h.b16 %v3224
    %v3345 = vunpack.c.l.b16 %v3225
    %v3346 = vunpack.c.h.b16 %v3225
    %v3347 = vunpack.c.l.b16 %v3226
    %v3348 = vunpack.c.h.b16 %v3226
    %v3349 = vunpack.c.l.b16 %v3227
    %v3350 = vunpack.c.h.b16 %v3227
    %v3351 = vunpack.c.l.b16 %v3228
    %v3352 = vunpack.c.h.b16 %v3228
    %v3353 = vunpack.c.l.b16 %v3229
    %v3354 = vunpack.c.h.b16 %v3229
    %v3355 = vunpack.c.l.b16 %v3230
    %v3356 = vunpack.c.h.b16 %v3230
    %v3357 = vunpack.c.l.b16 %v3231
    %v3358 = vunpack.c.h.b16 %v3231
    %v3359 = vunpack.c.l.b16 %v3232
    %v3360 = vunpack.c.h.b16 %v3232
    %v3361 = vunpack.c.l.b16 %v3233
    %v3362 = vunpack.c.h.b16 %v3233
    %v3363 = vunpack.c.l.b16 %v3234
    %v3364 = vunpack.c.h.b16 %v3234
    %v3365 = vunpack.c.l.b16 %v3235
    %v3366 = vunpack.c.h.b16 %v3235
    %v3367 = vunpack.c.l.b16 %v3236
    %v3368 = vunpack.c.h.b16 %v3236
    %v3369 = vunpack.c.l.b16 %v3237
    %v3370 = vunpack.c.h.b16 %v3237
    %v3371 = vunpack.c.l.b16 %v3238
    %v3372 = vunpack.c.h.b16 %v3238
    %v3373 = vunpack.c.l.b16 %v3239
    %v3374 = vunpack.c.h.b16 %v3239
    %v3375 = vunpack.c.l.b16 %v3240
    %v3376 = vunpack.c.h.b16 %v3240
    %v3377 = vunpack.c.l.b16 %v3241
    %v3378 = vunpack.c.h.b16 %v3241
    %v3379 = vunpack.c.l.b16 %v3242
    %v3380 = vunpack.c.h.b16 %v3242
    %v3381 = vunpack.c.l.b16 %v3243
    %v3382 = vunpack.c.h.b16 %v3243
    %v3383 = vunpack.c.l.b16 %v3244
    %v3384 = vunpack.c.h.b16 %v3244
    %v3385 = vunpack.c.l.b16 %v3245
    %v3386 = vunpack.c.h.b16 %v3245
    %v3387 = vunpack.c.l.b16 %v3246
    %v3388 = vunpack.c.h.b16 %v3246
    %v3389 = vunpack.c.l.b16 %v3247
    %v3390 = vunpack.c.h.b16 %v3247
    %v3391 = vunpack.c.l.b16 %v3248
    %v3392 = vunpack.c.h.b16 %v3248
    %v3393 = vunpack.c.l.b16 %v3249
    %v3394 = vunpack.c.h.b16 %v3249
    %v3395 = vunpack.c.l.b16 %v3250
    %v3396 = vunpack.c.h.b16 %v3250
    %v3397 = vunpack.c.l.b16 %v3251
    %v3398 = vunpack.c.h.b16 %v3251
    %v3399 = vunpack.c.l.b16 %v3252
    %v3400 = vunpack.c.h.b16 %v3252
    %v3401 = vunpack.c.l.b16 %v3253
    %v3402 = vunpack.c.h.b16 %v3253
    %v3403 = vunpack.c.l.b16 %v3254
    %v3404 = vunpack.c.h.b16 %v3254
    %v3405 = vunpack.c.l.b16 %v3255
    %v3406 = vunpack.c.h.b16 %v3255
    %v3407 = vunpack.c.l.b16 %v3256
    %v3408 = vunpack.c.h.b16 %v3256
    %v3409 = vunpack.c.l.b16 %v3257
    %v3410 = vunpack.c.h.b16 %v3257
    %v3411 = vunpack.c.l.b16 %v3258
    %v3412 = vunpack.c.h.b16 %v3258
    %v3413 = vunpack.c.l.b16 %v3259
    %v3414 = vunpack.c.h.b16 %v3259
    %v3415 = vunpack.c.l.b16 %v3260
    %v3416 = vunpack.c.h.b16 %v3260
    %v3417 = vpack.c.b16 %v3323, %v3321
    %v3418 = vpack.c.b16 %v3324, %v3322
    %v3419 = vpack.c.b16 %v3327, %v3325
    %v3420 = vpack.c.b16 %v3328, %v3326
    %v3421 = vpack.c.b16 %v3331, %v3329
    %v3422 = vpack.c.b16 %v3332, %v3330
    %v3423 = vpack.c.b16 %v3335, %v3333
    %v3424 = vpack.c.b16 %v3336, %v3334
    %v3425 = vpack.c.b16 %v3339, %v3337
    %v3426 = vpack.c.b16 %v3340, %v3338
    %v3427 = vpack.c.b16 %v3343, %v3341
    %v3428 = vpack.c.b16 %v3344, %v3342
    %v3429 = vpack.c.b16 %v3347, %v3345
    %v3430 = vpack.c.b16 %v3348, %v3346
    %v3431 = vpack.c.b16 %v3351, %v3349
    %v3432 = vpack.c.b16 %v3352, %v3350
    %v3433 = vpack.c.b16 %v3355, %v3353
    %v3434 = vpack.c.b16 %v3356, %v3354
    %v3435 = vpack.c.b16 %v3359, %v3357
    %v3436 = vpack.c.b16 %v3360, %v3358
    %v3437 = vpack.c.b16 %v3363, %v3361
    %v3438 = vpack.c.b16 %v3364, %v3362
    %v3439 = vpack.c.b16 %v3367, %v3365
    %v3440 = vpack.c.b16 %v3368, %v3366
    %v3441 = vpack.c.b16 %v3371, %v3369
    %v3442 = vpack.c.b16 %v3372, %v3370
    %v3443 = vpack.c.b16 %v3375, %v3373
    %v3444 = vpack.c.b16 %v3376, %v3374
    %v3445 = vpack.c.b16 %v3379, %v3377
    %v3446 = vpack.c.b16 %v3380, %v3378
    %v3447 = vpack.c.b16 %v3383, %v3381
    %v3448 = vpack.c.b16 %v3384, %v3382
    %v3449 = vpack.c.b16 %v3387, %v3385
    %v3450 = vpack.c.b16 %v3388, %v3386
    %v3451 = vpack.c.b16 %v3391, %v3389
    %v3452 = vpack.c.b16 %v3392, %v3390
    %v3453 = vpack.c.b16 %v3395, %v3393
    %v3454 = vpack.c.b16 %v3396, %v3394
    %v3455 = vpack.c.b16 %v3399, %v3397
    %v3456 = vpack.c.b16 %v3400, %v3398
    %v3457 = vpack.c.b16 %v3403, %v3401
    %v3458 = vpack.c.b16 %v3404, %v3402
    %v3459 = vpack.c.b16 %v3407, %v3405
    %v3460 = vpack.c.b16 %v3408, %v3406
    %v3461 = vpack.c.b16 %v3411, %v3409
    %v3462 = vpack.c.b16 %v3412, %v3410
    %v3463 = vpack.c.b16 %v3415, %v3413
    %v3464 = vpack.c.b16 %v3416, %v3414
    %3513 = vmatprep.subr.bf16.mxu0 %v3418
    %3514 = vmatpush1.bf16.msra.mxu0 %v3417
    %3515 = vmatprep.subr.bf16.mxu0 %v3420
    %3516 = vmatpush1.bf16.msra.mxu0 %v3419
    %3517 = vmatprep.subr.bf16.mxu0 %v3422
    %3518 = vmatpush1.bf16.msra.mxu0 %v3421
    %3519 = vmatprep.subr.bf16.mxu0 %v3424
    %3520 = vmatpush1.bf16.msra.mxu0 %v3423
    %3521 = vmatprep.subr.bf16.mxu0 %v3426
    %3522 = vmatpush1.bf16.msra.mxu0 %v3425
    %3523 = vmatprep.subr.bf16.mxu0 %v3428
    %3524 = vmatpush1.bf16.msra.mxu0 %v3427
    %3525 = vmatprep.subr.bf16.mxu0 %v3430
    %3526 = vmatpush1.bf16.msra.mxu0 %v3429
    %3527 = vmatprep.subr.bf16.mxu0 %v3432
    %3528 = vmatpush1.bf16.msra.mxu0 %v3431
    %3529 = vmatprep.subr.bf16.mxu0 %v3434
    %3530 = vmatpush1.bf16.msra.mxu0 %v3433
    %3531 = vmatprep.subr.bf16.mxu0 %v3436
    %3532 = vmatpush1.bf16.msra.mxu0 %v3435
    %3533 = vmatprep.subr.bf16.mxu0 %v3438
    %3534 = vmatpush1.bf16.msra.mxu0 %v3437
    %3535 = vmatprep.subr.bf16.mxu0 %v3440
    %3536 = vmatpush1.bf16.msra.mxu0 %v3439
    %3537 = vmatprep.subr.bf16.mxu0 %v3442
    %3538 = vmatpush1.bf16.msra.mxu0 %v3441
    %3539 = vmatprep.subr.bf16.mxu0 %v3444
    %3540 = vmatpush1.bf16.msra.mxu0 %v3443
    %3541 = vmatprep.subr.bf16.mxu0 %v3446
    %3542 = vmatpush1.bf16.msra.mxu0 %v3445
    %3543 = vmatprep.subr.bf16.mxu0 %v3448
    %3544 = vmatpush1.bf16.msra.mxu0 %v3447
    %3545 = vmatprep.mubr.bf16.mxu0 %v3208
    %3546 = vmatmul.mubr.bf16.gmra.mrb[0].mxu0 %v3207
    %v3547 = vpop.f32.mrb[0].mxu0
    %v3548 = vadd.f32 %v3266, %v3547
    %v3549 = vpop.f32.mrb[0].mxu0
    %v3550 = vadd.f32 %v3270, %v3549
    %v3551 = vpop.f32.mrb[0].mxu0
    %v3552 = vadd.f32 %v3266, %v3551
    %v3553 = vpop.f32.mrb[0].mxu0
    %v3554 = vadd.f32 %v3270, %v3553
    %3555 = vmatprep.mubr.bf16.mxu0 %v3211
    %3556 = vmatmul.mubr.bf16.gmra.mrb[0].mxu0 %v3210
    %v3557 = vpop.f32.mrb[0].mxu0
    %v3558 = vadd.f32 %v3266, %v3557
    %v3559 = vpop.f32.mrb[0].mxu0
    %v3560 = vadd.f32 %v3270, %v3559
    %v3561 = vpop.f32.mrb[0].mxu0
    %v3562 = vadd.f32 %v3266, %v3561
    %v3563 = vpop.f32.mrb[0].mxu0
    %v3564 = vadd.f32 %v3270, %v3563
    %3565 = vdwg.mxu0
    %3566 = vmatprep.subr.bf16.mxu0 %v3450
    %3567 = vmatpush1.bf16.msra.mxu0 %v3449
    %3568 = vmatprep.subr.bf16.mxu0 %v3452
    %3569 = vmatpush1.bf16.msra.mxu0 %v3451
    %3570 = vmatprep.subr.bf16.mxu0 %v3454
    %3571 = vmatpush1.bf16.msra.mxu0 %v3453
    %3572 = vmatprep.subr.bf16.mxu0 %v3456
    %3573 = vmatpush1.bf16.msra.mxu0 %v3455
    %3574 = vmatprep.subr.bf16.mxu0 %v3458
    %3575 = vmatpush1.bf16.msra.mxu0 %v3457
    %3576 = vmatprep.subr.bf16.mxu0 %v3460
    %3577 = vmatpush1.bf16.msra.mxu0 %v3459
    %3578 = vmatprep.subr.bf16.mxu0 %v3462
    %3579 = vmatpush1.bf16.msra.mxu0 %v3461
    %3580 = vmatprep.subr.bf16.mxu0 %v3464
    %3581 = vmatpush1.bf16.msra.mxu0 %v3463
    %3582 = vmatprep.subr.bf16.mxu0 0
    %3583 = vmatpush1.bf16.msra.mxu0 0
    %3584 = vmatprep.subr.bf16.mxu0 0
    %3585 = vmatpush1.bf16.msra.mxu0 0
    %3586 = vmatprep.subr.bf16.mxu0 0
    %3587 = vmatpush1.bf16.msra.mxu0 0
    %3588 = vmatprep.subr.bf16.mxu0 0
    %3589 = vmatpush1.bf16.msra.mxu0 0
    %3590 = vmatprep.subr.bf16.mxu0 0
    %3591 = vmatpush1.bf16.msra.mxu0 0
    %3592 = vmatprep.subr.bf16.mxu0 0
    %3593 = vmatpush1.bf16.msra.mxu0 0
    %3594 = vmatprep.subr.bf16.mxu0 0
    %3595 = vmatpush1.bf16.msra.mxu0 0
    %3596 = vmatprep.subr.bf16.mxu0 0
    %3597 = vmatpush1.bf16.msra.mxu0 0
    %3598 = vmatprep.mubr.bf16.mxu0 0
    %3599 = vmatmul.mubr.bf16.gmra.mrb[0].mxu0 %v3209
    %v3600 = vpop.f32.mrb[0].mxu0
    %v3601 = vadd.f32 %v3548, %v3600
    %v3602 = vpop.f32.mrb[0].mxu0
    %v3603 = vadd.f32 %v3550, %v3602
    %v3604 = vpop.f32.mrb[0].mxu0
    %v3605 = vadd.f32 %v3552, %v3604
    %v3606 = vpop.f32.mrb[0].mxu0
    %v3607 = vadd.f32 %v3554, %v3606
    %3608 = vmatprep.mubr.bf16.mxu0 0
    %3609 = vmatmul.mubr.bf16.gmra.mrb[0].mxu0 %v3212
    %v3610 = vpop.f32.mrb[0].mxu0
    %v3611 = vadd.f32 %v3558, %v3610
    %v3612 = vpop.f32.mrb[0].mxu0
    %v3613 = vadd.f32 %v3560, %v3612
    %v3614 = vpop.f32.mrb[0].mxu0
    %v3615 = vadd.f32 %v3562, %v3614
    %v3616 = vpop.f32.mrb[0].mxu0
    %v3617 = vadd.f32 %v3564, %v3616
    %3618 = vdwg.mxu0
    %v3619 = vmax.f32 %v3601, 0.0
    %v3620 = vmax.f32 %v3603, 0.0
    %v3621 = vmax.f32 %v3605, 0.0
    %v3622 = vmax.f32 %v3607, 0.0
    %v3623 = vmax.f32 %v3611, 0.0
    %v3624 = vmax.f32 %v3613, 0.0
    %v3625 = vmax.f32 %v3615, 0.0
    %v3626 = vmax.f32 %v3617, 0.0
    %v3627 = vlaneseq
    %vm3628 = vcmp.ge.s32.totalorder %v3627, 0
    %vm3629 = vcmp.lt.s32.totalorder %v3627, 256
    %vm3630 = vmand %vm3628, %vm3629
    %s3631 = scalar_lea.vmem [#allocation5], 7
    %3632 = vst.msk [vmem:[%s3631] ss:$8 sm:$0x3] %vm3630, 0.0
    %3633 = vst.msk [vmem:[%s3631] ss:$8 sm:$0x0] %vm3630, 0.0
    %s3634 = scalar_lea.vmem [#allocation5], 71
    %3635 = vst.msk [vmem:[%s3634] ss:$8 sm:$0x3] %vm3630, 0.0
    %3636 = vst.msk [vmem:[%s3634] ss:$8 sm:$0x0] %vm3630, 0.0
    %s3637 = scalar_lea.vmem [#allocation5], 48
    %3638 = vst.msk [vmem:[%s3637] ss:$8 sm:$0x3] %vm3630, 0.0
    %3639 = vst.msk [vmem:[%s3637] ss:$8 sm:$0x0] %vm3630, 0.0
    %s3640 = scalar_lea.vmem [#allocation5], 112
    %3641 = vst.msk [vmem:[%s3640] ss:$8 sm:$0x3] %vm3630, 0.0
    %3642 = vst.msk [vmem:[%s3640] ss:$8 sm:$0x0] %vm3630, 0.0
    %3643 = vst [vmem:[#allocation5 + $0x10] sm:$0xff] %v3619
    %3644 = vst [vmem:[#allocation5 + $0x18] sm:$0xff] %v3620
    %3645 = vst [vmem:[#allocation5 + $0x20] sm:$0xff] %v3621
    %3646 = vst [vmem:[#allocation5 + $0x28] sm:$0xff] %v3622
    %3647 = vst [vmem:[#allocation5 + $0x50] sm:$0xff] %v3623
    %3648 = vst [vmem:[#allocation5 + $0x58] sm:$0xff] %v3624
    %3649 = vst [vmem:[#allocation5 + $0x60] sm:$0xff] %v3625
    %3650 = vst [vmem:[#allocation5 + $0x68] sm:$0xff] %v3626
    %v3651 = vld [vmem:[#allocation5] sm:$0x80]
    %v3652 = vld [vmem:[#allocation5 + $0x8] sm:$0x80]
    %v3653 = vld [vmem:[#allocation5 + $0x10] sm:$0xff]
    %v3654 = vld [vmem:[#allocation5 + $0x18] sm:$0xff]
    %v3655 = vld [vmem:[#allocation5 + $0x20] sm:$0x7f]
    %v3656 = vld [vmem:[#allocation5 + $0x28] sm:$0x7f]
    %v3657 = vld [vmem:[#allocation5 + $0x40] sm:$0x80]
    %v3658 = vld [vmem:[#allocation5 + $0x48] sm:$0x80]
    %v3659 = vld [vmem:[#allocation5 + $0x50] sm:$0xff]
    %v3660 = vld [vmem:[#allocation5 + $0x58] sm:$0xff]
    %v3661 = vld [vmem:[#allocation5 + $0x60] sm:$0x7f]
    %v3662 = vld [vmem:[#allocation5 + $0x68] sm:$0x7f]
    %v3663 = vld [vmem:[#allocation5 + $0x20] sm:$0xff]
    %v3664 = vld [vmem:[#allocation5 + $0x28] sm:$0xff]
    %v3665 = vld [vmem:[#allocation5 + $0x60] sm:$0xff]
    %v3666 = vld [vmem:[#allocation5 + $0x68] sm:$0xff]
    %v3667 = vld [vmem:[#allocation5 + $0x10] sm:$0xfe]
    %v3668 = vld [vmem:[#allocation5 + $0x18] sm:$0xfe]
    %v3669 = vld [vmem:[#allocation5 + $0x20] sm:$0xff]
    %v3670 = vld [vmem:[#allocation5 + $0x28] sm:$0xff]
    %v3671 = vld [vmem:[#allocation5 + $0x30] sm:$0x1]
    %v3672 = vld [vmem:[#allocation5 + $0x38] sm:$0x1]
    %v3673 = vld [vmem:[#allocation5 + $0x50] sm:$0xfe]
    %v3674 = vld [vmem:[#allocation5 + $0x58] sm:$0xfe]
    %v3675 = vld [vmem:[#allocation5 + $0x60] sm:$0xff]
    %v3676 = vld [vmem:[#allocation5 + $0x68] sm:$0xff]
    %v3677 = vld [vmem:[#allocation5 + $0x70] sm:$0x1]
    %v3678 = vld [vmem:[#allocation5 + $0x78] sm:$0x1]
    %vm3687 = vcmask 1046528
    %v3688 = vrot.slane %v3653, 1
    %v3689 = vrot.slane %v3654, 1
    %v3690 = vrot.slane %v3663, 1
    %v3691 = vsel %vm3687, %v3688, %v3690
    %v3692 = vrot.slane %v3664, 1
    %v3693 = vsel %vm3687, %v3689, %v3692
    %v3694 = vrot.slane %v3659, 1
    %v3695 = vrot.slane %v3660, 1
    %v3696 = vrot.slane %v3665, 1
    %v3697 = vsel %vm3687, %v3694, %v3696
    %v3698 = vrot.slane %v3666, 1
    %v3699 = vsel %vm3687, %v3695, %v3698
    %vm3712 = vcmask 1045504
    %v3713 = vrot.slane %v3667, 2
    %v3714 = vrot.slane %v3668, 2
    %v3715 = vrot.slane %v3669, 2
    %v3716 = vsel %vm3712, %v3713, %v3715
    %v3717 = vrot.slane %v3670, 2
    %v3718 = vsel %vm3712, %v3714, %v3717
    %v3719 = vrot.slane %v3671, 2
    %v3720 = vsel %vm3712, %v3715, %v3719
    %v3721 = vrot.slane %v3672, 2
    %v3722 = vsel %vm3712, %v3717, %v3721
    %v3723 = vrot.slane %v3673, 2
    %v3724 = vrot.slane %v3674, 2
    %v3725 = vrot.slane %v3675, 2
    %v3726 = vsel %vm3712, %v3723, %v3725
    %v3727 = vrot.slane %v3676, 2
    %v3728 = vsel %vm3712, %v3724, %v3727
    %v3729 = vrot.slane %v3677, 2
    %v3730 = vsel %vm3712, %v3725, %v3729
    %v3731 = vrot.slane %v3678, 2
    %v3732 = vsel %vm3712, %v3727, %v3731
    %vm3741 = vcmask 1040384
    %v3742 = vrot.slane %v3651, 7
    %v3743 = vrot.slane %v3653, 7
    %v3744 = vsel %vm3741, %v3742, %v3743
    %v3745 = vrot.slane %v3652, 7
    %v3746 = vrot.slane %v3654, 7
    %v3747 = vsel %vm3741, %v3745, %v3746
    %v3748 = vrot.slane %v3688, 7
    %v3749 = vrot.slane %v3691, 7
    %v3750 = vsel %vm3741, %v3748, %v3749
    %v3751 = vrot.slane %v3689, 7
    %v3752 = vrot.slane %v3693, 7
    %v3753 = vsel %vm3741, %v3751, %v3752
    %v3754 = vrot.slane %v3713, 7
    %v3755 = vrot.slane %v3716, 7
    %v3756 = vsel %vm3741, %v3754, %v3755
    %v3757 = vrot.slane %v3714, 7
    %v3758 = vrot.slane %v3718, 7
    %v3759 = vsel %vm3741, %v3757, %v3758
    %v3760 = vrot.slane %v3655, 7
    %v3761 = vsel %vm3741, %v3743, %v3760
    %v3762 = vrot.slane %v3656, 7
    %v3763 = vsel %vm3741, %v3746, %v3762
    %v3764 = vrot.slane %v3690, 7
    %v3765 = vsel %vm3741, %v3749, %v3764
    %v3766 = vrot.slane %v3692, 7
    %v3767 = vsel %vm3741, %v3752, %v3766
    %v3768 = vrot.slane %v3720, 7
    %v3769 = vsel %vm3741, %v3755, %v3768
    %v3770 = vrot.slane %v3722, 7
    %v3771 = vsel %vm3741, %v3758, %v3770
    %v3772 = vrot.slane %v3657, 7
    %v3773 = vrot.slane %v3659, 7
    %v3774 = vsel %vm3741, %v3772, %v3773
    %v3775 = vrot.slane %v3658, 7
    %v3776 = vrot.slane %v3660, 7
    %v3777 = vsel %vm3741, %v3775, %v3776
    %v3778 = vrot.slane %v3694, 7
    %v3779 = vrot.slane %v3697, 7
    %v3780 = vsel %vm3741, %v3778, %v3779
    %v3781 = vrot.slane %v3695, 7
    %v3782 = vrot.slane %v3699, 7
    %v3783 = vsel %vm3741, %v3781, %v3782
    %v3784 = vrot.slane %v3723, 7
    %v3785 = vrot.slane %v3726, 7
    %v3786 = vsel %vm3741, %v3784, %v3785
    %v3787 = vrot.slane %v3724, 7
    %v3788 = vrot.slane %v3728, 7
    %v3789 = vsel %vm3741, %v3787, %v3788
    %v3790 = vrot.slane %v3661, 7
    %v3791 = vsel %vm3741, %v3773, %v3790
    %v3792 = vrot.slane %v3662, 7
    %v3793 = vsel %vm3741, %v3776, %v3792
    %v3794 = vrot.slane %v3696, 7
    %v3795 = vsel %vm3741, %v3779, %v3794
    %v3796 = vrot.slane %v3698, 7
    %v3797 = vsel %vm3741, %v3782, %v3796
    %v3798 = vrot.slane %v3730, 7
    %v3799 = vsel %vm3741, %v3785, %v3798
    %v3800 = vrot.slane %v3732, 7
    %v3801 = vsel %vm3741, %v3788, %v3800
    %v3826 = vpack.c.bf16 %v3761, %v3744
    %v3827 = vpack.c.bf16 %v3763, %v3747
    %v3828 = vpack.c.bf16 %v3765, %v3750
    %v3829 = vpack.c.bf16 %v3767, %v3753
    %v3830 = vpack.c.bf16 %v3769, %v3756
    %v3831 = vpack.c.bf16 %v3771, %v3759
    %v3832 = vpack.c.bf16 %v3791, %v3774
    %v3833 = vpack.c.bf16 %v3793, %v3777
    %v3834 = vpack.c.bf16 %v3795, %v3780
    %v3835 = vpack.c.bf16 %v3797, %v3783
    %v3836 = vpack.c.bf16 %v3799, %v3786
    %v3837 = vpack.c.bf16 %v3801, %v3789
    %v3838 = vld [vmem:[#allocation34] sm:$0xff]
    %v3839 = vld [vmem:[#allocation34 + $0x8] sm:$0xff]
    %v3840 = vld [vmem:[#allocation34 + $0x10] sm:$0xff]
    %v3841 = vld [vmem:[#allocation34 + $0x18] sm:$0xff]
    %v3842 = vld [vmem:[#allocation34 + $0x20] sm:$0xff]
    %v3843 = vld [vmem:[#allocation34 + $0x28] sm:$0xff]
    %v3844 = vld [vmem:[#allocation34 + $0x30] sm:$0xff]
    %v3845 = vld [vmem:[#allocation34 + $0x38] sm:$0xff]
    %v3846 = vld [vmem:[#allocation34 + $0x40] sm:$0xff]
    %v3847 = vld [vmem:[#allocation34 + $0x48] sm:$0xff]
    %v3848 = vld [vmem:[#allocation34 + $0x50] sm:$0xff]
    %v3849 = vld [vmem:[#allocation34 + $0x58] sm:$0xff]
    %v3850 = vld [vmem:[#allocation34 + $0x60] sm:$0xff]
    %v3851 = vld [vmem:[#allocation34 + $0x68] sm:$0xff]
    %v3852 = vld [vmem:[#allocation34 + $0x70] sm:$0xff]
    %v3853 = vld [vmem:[#allocation34 + $0x78] sm:$0xff]
    %v3854 = vld [vmem:[#allocation34 + $0x80] sm:$0xff]
    %v3855 = vld [vmem:[#allocation34 + $0x88] sm:$0xff]
    %v3856 = vld [vmem:[#allocation34 + $0x90] sm:$0xff]
    %v3857 = vld [vmem:[#allocation34 + $0x98] sm:$0xff]
    %v3858 = vld [vmem:[#allocation34 + $0xa0] sm:$0xff]
    %v3859 = vld [vmem:[#allocation34 + $0xa8] sm:$0xff]
    %v3860 = vld [vmem:[#allocation34 + $0xb0] sm:$0xff]
    %v3861 = vld [vmem:[#allocation34 + $0xb8] sm:$0xff]
    %v3862 = vld [vmem:[#allocation34 + $0xc0] sm:$0xff]
    %v3863 = vld [vmem:[#allocation34 + $0xc8] sm:$0xff]
    %v3864 = vld [vmem:[#allocation34 + $0xd0] sm:$0xff]
    %v3865 = vld [vmem:[#allocation34 + $0xd8] sm:$0xff]
    %v3866 = vld [vmem:[#allocation34 + $0xe0] sm:$0xff]
    %v3867 = vld [vmem:[#allocation34 + $0xe8] sm:$0xff]
    %v3868 = vld [vmem:[#allocation34 + $0xf0] sm:$0xff]
    %v3869 = vld [vmem:[#allocation34 + $0xf8] sm:$0xff]
    %v3870 = vld [vmem:[#allocation34 + $0x100] sm:$0xff]
    %v3871 = vld [vmem:[#allocation34 + $0x108] sm:$0xff]
    %v3872 = vld [vmem:[#allocation34 + $0x110] sm:$0xff]
    %v3873 = vld [vmem:[#allocation34 + $0x118] sm:$0xff]
    %v3874 = vld [vmem:[#allocation34 + $0x120] sm:$0xff]
    %v3875 = vld [vmem:[#allocation34 + $0x128] sm:$0xff]
    %v3876 = vld [vmem:[#allocation34 + $0x130] sm:$0xff]
    %v3877 = vld [vmem:[#allocation34 + $0x138] sm:$0xff]
    %v3878 = vld [vmem:[#allocation34 + $0x140] sm:$0xff]
    %v3879 = vld [vmem:[#allocation34 + $0x148] sm:$0xff]
    %v3880 = vld [vmem:[#allocation34 + $0x150] sm:$0xff]
    %v3881 = vld [vmem:[#allocation34 + $0x158] sm:$0xff]
    %v3882 = vld [vmem:[#allocation34 + $0x160] sm:$0xff]
    %v3883 = vld [vmem:[#allocation34 + $0x168] sm:$0xff]
    %v3884 = vld [vmem:[#allocation34 + $0x170] sm:$0xff]
    %v3885 = vld [vmem:[#allocation34 + $0x178] sm:$0xff]
    %v3886 = vld [vmem:[#allocation34 + $0x180] sm:$0xff]
    %v3887 = vld [vmem:[#allocation34 + $0x188] sm:$0xff]
    %v3888 = vld [vmem:[#allocation34 + $0x190] sm:$0xff]
    %v3889 = vld [vmem:[#allocation34 + $0x198] sm:$0xff]
    %v3890 = vld [vmem:[#allocation34 + $0x1a0] sm:$0xff]
    %v3891 = vld [vmem:[#allocation34 + $0x1a8] sm:$0xff]
    %v3892 = vld [vmem:[#allocation34 + $0x1b0] sm:$0xff]
    %v3893 = vld [vmem:[#allocation34 + $0x1b8] sm:$0xff]
    %v3894 = vld [vmem:[#allocation34 + $0x1c0] sm:$0xff]
    %v3895 = vld [vmem:[#allocation34 + $0x1c8] sm:$0xff]
    %v3896 = vld [vmem:[#allocation34 + $0x1d0] sm:$0xff]
    %v3897 = vld [vmem:[#allocation34 + $0x1d8] sm:$0xff]
    %v3898 = vld [vmem:[#allocation34 + $0x1e0] sm:$0xff]
    %v3899 = vld [vmem:[#allocation34 + $0x1e8] sm:$0xff]
    %v3900 = vld [vmem:[#allocation34 + $0x1f0] sm:$0xff]
    %v3901 = vld [vmem:[#allocation34 + $0x1f8] sm:$0xff]
    %v3902 = vld [vmem:[#allocation34 + $0x200] sm:$0xff]
    %v3903 = vld [vmem:[#allocation34 + $0x208] sm:$0xff]
    %v3904 = vld [vmem:[#allocation34 + $0x210] sm:$0xff]
    %v3905 = vld [vmem:[#allocation34 + $0x218] sm:$0xff]
    %v3906 = vld [vmem:[#allocation34 + $0x220] sm:$0xff]
    %v3907 = vld [vmem:[#allocation34 + $0x228] sm:$0xff]
    %v3908 = vld [vmem:[#allocation34 + $0x230] sm:$0xff]
    %v3909 = vld [vmem:[#allocation34 + $0x238] sm:$0xff]
    %v3910 = vld [vmem:[#allocation34 + $0x240] sm:$0xff]
    %v3911 = vld [vmem:[#allocation34 + $0x248] sm:$0xff]
    %v3912 = vld [vmem:[#allocation34 + $0x250] sm:$0xff]
    %v3913 = vld [vmem:[#allocation34 + $0x258] sm:$0xff]
    %v3914 = vld [vmem:[#allocation34 + $0x260] sm:$0xff]
    %v3915 = vld [vmem:[#allocation34 + $0x268] sm:$0xff]
    %v3916 = vld [vmem:[#allocation34 + $0x270] sm:$0xff]
    %v3917 = vld [vmem:[#allocation34 + $0x278] sm:$0xff]
    %v3918 = vld [vmem:[#allocation34 + $0x280] sm:$0xff]
    %v3919 = vld [vmem:[#allocation34 + $0x288] sm:$0xff]
    %v3920 = vld [vmem:[#allocation34 + $0x290] sm:$0xff]
    %v3921 = vld [vmem:[#allocation34 + $0x298] sm:$0xff]
    %v3922 = vld [vmem:[#allocation34 + $0x2a0] sm:$0xff]
    %v3923 = vld [vmem:[#allocation34 + $0x2a8] sm:$0xff]
    %v3924 = vld [vmem:[#allocation34 + $0x2b0] sm:$0xff]
    %v3925 = vld [vmem:[#allocation34 + $0x2b8] sm:$0xff]
    %v3926 = vld [vmem:[#allocation34 + $0x2c0] sm:$0xff]
    %v3927 = vld [vmem:[#allocation34 + $0x2c8] sm:$0xff]
    %v3928 = vld [vmem:[#allocation34 + $0x2d0] sm:$0xff]
    %v3929 = vld [vmem:[#allocation34 + $0x2d8] sm:$0xff]
    %v3930 = vld [vmem:[#allocation34 + $0x2e0] sm:$0xff]
    %v3931 = vld [vmem:[#allocation34 + $0x2e8] sm:$0xff]
    %v3932 = vld [vmem:[#allocation34 + $0x2f0] sm:$0xff]
    %v3933 = vld [vmem:[#allocation34 + $0x2f8] sm:$0xff]
    %v3934 = vld [vmem:[#allocation36] sm:$0x3]
    %v3936 = vlaneseq
    %v3937 = vshrl.u32 %v3936, 7
    %v3938 = vsub.s32 0, %v3937
    %v3939 = vrot.slane %v3934, %v3938
    %v3940 = vlaneseq
    %v3941 = vshrl.u32 %v3940, 7
    %v3942 = vsub.s32 1, %v3941
    %v3943 = vrot.slane %v3934, %v3942
    %v4042 = vunpack.c.l.b16 %v3838
    %v4043 = vunpack.c.h.b16 %v3838
    %v4044 = vunpack.c.l.b16 %v3839
    %v4045 = vunpack.c.h.b16 %v3839
    %v4046 = vunpack.c.l.b16 %v3840
    %v4047 = vunpack.c.h.b16 %v3840
    %v4048 = vunpack.c.l.b16 %v3841
    %v4049 = vunpack.c.h.b16 %v3841
    %v4050 = vunpack.c.l.b16 %v3842
    %v4051 = vunpack.c.h.b16 %v3842
    %v4052 = vunpack.c.l.b16 %v3843
    %v4053 = vunpack.c.h.b16 %v3843
    %v4054 = vunpack.c.l.b16 %v3844
    %v4055 = vunpack.c.h.b16 %v3844
    %v4056 = vunpack.c.l.b16 %v3845
    %v4057 = vunpack.c.h.b16 %v3845
    %v4058 = vunpack.c.l.b16 %v3846
    %v4059 = vunpack.c.h.b16 %v3846
    %v4060 = vunpack.c.l.b16 %v3847
    %v4061 = vunpack.c.h.b16 %v3847
    %v4062 = vunpack.c.l.b16 %v3848
    %v4063 = vunpack.c.h.b16 %v3848
    %v4064 = vunpack.c.l.b16 %v3849
    %v4065 = vunpack.c.h.b16 %v3849
    %v4066 = vunpack.c.l.b16 %v3850
    %v4067 = vunpack.c.h.b16 %v3850
    %v4068 = vunpack.c.l.b16 %v3851
    %v4069 = vunpack.c.h.b16 %v3851
    %v4070 = vunpack.c.l.b16 %v3852
    %v4071 = vunpack.c.h.b16 %v3852
    %v4072 = vunpack.c.l.b16 %v3853
    %v4073 = vunpack.c.h.b16 %v3853
    %v4074 = vunpack.c.l.b16 %v3854
    %v4075 = vunpack.c.h.b16 %v3854
    %v4076 = vunpack.c.l.b16 %v3855
    %v4077 = vunpack.c.h.b16 %v3855
    %v4078 = vunpack.c.l.b16 %v3856
    %v4079 = vunpack.c.h.b16 %v3856
    %v4080 = vunpack.c.l.b16 %v3857
    %v4081 = vunpack.c.h.b16 %v3857
    %v4082 = vunpack.c.l.b16 %v3858
    %v4083 = vunpack.c.h.b16 %v3858
    %v4084 = vunpack.c.l.b16 %v3859
    %v4085 = vunpack.c.h.b16 %v3859
    %v4086 = vunpack.c.l.b16 %v3860
    %v4087 = vunpack.c.h.b16 %v3860
    %v4088 = vunpack.c.l.b16 %v3861
    %v4089 = vunpack.c.h.b16 %v3861
    %v4090 = vunpack.c.l.b16 %v3862
    %v4091 = vunpack.c.h.b16 %v3862
    %v4092 = vunpack.c.l.b16 %v3863
    %v4093 = vunpack.c.h.b16 %v3863
    %v4094 = vunpack.c.l.b16 %v3864
    %v4095 = vunpack.c.h.b16 %v3864
    %v4096 = vunpack.c.l.b16 %v3865
    %v4097 = vunpack.c.h.b16 %v3865
    %v4098 = vunpack.c.l.b16 %v3866
    %v4099 = vunpack.c.h.b16 %v3866
    %v4100 = vunpack.c.l.b16 %v3867
    %v4101 = vunpack.c.h.b16 %v3867
    %v4102 = vunpack.c.l.b16 %v3868
    %v4103 = vunpack.c.h.b16 %v3868
    %v4104 = vunpack.c.l.b16 %v3869
    %v4105 = vunpack.c.h.b16 %v3869
    %v4106 = vunpack.c.l.b16 %v3870
    %v4107 = vunpack.c.h.b16 %v3870
    %v4108 = vunpack.c.l.b16 %v3871
    %v4109 = vunpack.c.h.b16 %v3871
    %v4110 = vunpack.c.l.b16 %v3872
    %v4111 = vunpack.c.h.b16 %v3872
    %v4112 = vunpack.c.l.b16 %v3873
    %v4113 = vunpack.c.h.b16 %v3873
    %v4114 = vunpack.c.l.b16 %v3874
    %v4115 = vunpack.c.h.b16 %v3874
    %v4116 = vunpack.c.l.b16 %v3875
    %v4117 = vunpack.c.h.b16 %v3875
    %v4118 = vunpack.c.l.b16 %v3876
    %v4119 = vunpack.c.h.b16 %v3876
    %v4120 = vunpack.c.l.b16 %v3877
    %v4121 = vunpack.c.h.b16 %v3877
    %v4122 = vunpack.c.l.b16 %v3878
    %v4123 = vunpack.c.h.b16 %v3878
    %v4124 = vunpack.c.l.b16 %v3879
    %v4125 = vunpack.c.h.b16 %v3879
    %v4126 = vunpack.c.l.b16 %v3880
    %v4127 = vunpack.c.h.b16 %v3880
    %v4128 = vunpack.c.l.b16 %v3881
    %v4129 = vunpack.c.h.b16 %v3881
    %v4130 = vunpack.c.l.b16 %v3882
    %v4131 = vunpack.c.h.b16 %v3882
    %v4132 = vunpack.c.l.b16 %v3883
    %v4133 = vunpack.c.h.b16 %v3883
    %v4134 = vunpack.c.l.b16 %v3884
    %v4135 = vunpack.c.h.b16 %v3884
    %v4136 = vunpack.c.l.b16 %v3885
    %v4137 = vunpack.c.h.b16 %v3885
    %v4138 = vunpack.c.l.b16 %v3886
    %v4139 = vunpack.c.h.b16 %v3886
    %v4140 = vunpack.c.l.b16 %v3887
    %v4141 = vunpack.c.h.b16 %v3887
    %v4142 = vunpack.c.l.b16 %v3888
    %v4143 = vunpack.c.h.b16 %v3888
    %v4144 = vunpack.c.l.b16 %v3889
    %v4145 = vunpack.c.h.b16 %v3889
    %v4146 = vunpack.c.l.b16 %v3890
    %v4147 = vunpack.c.h.b16 %v3890
    %v4148 = vunpack.c.l.b16 %v3891
    %v4149 = vunpack.c.h.b16 %v3891
    %v4150 = vunpack.c.l.b16 %v3892
    %v4151 = vunpack.c.h.b16 %v3892
    %v4152 = vunpack.c.l.b16 %v3893
    %v4153 = vunpack.c.h.b16 %v3893
    %v4154 = vunpack.c.l.b16 %v3894
    %v4155 = vunpack.c.h.b16 %v3894
    %v4156 = vunpack.c.l.b16 %v3895
    %v4157 = vunpack.c.h.b16 %v3895
    %v4158 = vunpack.c.l.b16 %v3896
    %v4159 = vunpack.c.h.b16 %v3896
    %v4160 = vunpack.c.l.b16 %v3897
    %v4161 = vunpack.c.h.b16 %v3897
    %v4162 = vunpack.c.l.b16 %v3898
    %v4163 = vunpack.c.h.b16 %v3898
    %v4164 = vunpack.c.l.b16 %v3899
    %v4165 = vunpack.c.h.b16 %v3899
    %v4166 = vunpack.c.l.b16 %v3900
    %v4167 = vunpack.c.h.b16 %v3900
    %v4168 = vunpack.c.l.b16 %v3901
    %v4169 = vunpack.c.h.b16 %v3901
    %v4170 = vunpack.c.l.b16 %v3902
    %v4171 = vunpack.c.h.b16 %v3902
    %v4172 = vunpack.c.l.b16 %v3903
    %v4173 = vunpack.c.h.b16 %v3903
    %v4174 = vunpack.c.l.b16 %v3904
    %v4175 = vunpack.c.h.b16 %v3904
    %v4176 = vunpack.c.l.b16 %v3905
    %v4177 = vunpack.c.h.b16 %v3905
    %v4178 = vunpack.c.l.b16 %v3906
    %v4179 = vunpack.c.h.b16 %v3906
    %v4180 = vunpack.c.l.b16 %v3907
    %v4181 = vunpack.c.h.b16 %v3907
    %v4182 = vunpack.c.l.b16 %v3908
    %v4183 = vunpack.c.h.b16 %v3908
    %v4184 = vunpack.c.l.b16 %v3909
    %v4185 = vunpack.c.h.b16 %v3909
    %v4186 = vunpack.c.l.b16 %v3910
    %v4187 = vunpack.c.h.b16 %v3910
    %v4188 = vunpack.c.l.b16 %v3911
    %v4189 = vunpack.c.h.b16 %v3911
    %v4190 = vunpack.c.l.b16 %v3912
    %v4191 = vunpack.c.h.b16 %v3912
    %v4192 = vunpack.c.l.b16 %v3913
    %v4193 = vunpack.c.h.b16 %v3913
    %v4194 = vunpack.c.l.b16 %v3914
    %v4195 = vunpack.c.h.b16 %v3914
    %v4196 = vunpack.c.l.b16 %v3915
    %v4197 = vunpack.c.h.b16 %v3915
    %v4198 = vunpack.c.l.b16 %v3916
    %v4199 = vunpack.c.h.b16 %v3916
    %v4200 = vunpack.c.l.b16 %v3917
    %v4201 = vunpack.c.h.b16 %v3917
    %v4202 = vunpack.c.l.b16 %v3918
    %v4203 = vunpack.c.h.b16 %v3918
    %v4204 = vunpack.c.l.b16 %v3919
    %v4205 = vunpack.c.h.b16 %v3919
    %v4206 = vunpack.c.l.b16 %v3920
    %v4207 = vunpack.c.h.b16 %v3920
    %v4208 = vunpack.c.l.b16 %v3921
    %v4209 = vunpack.c.h.b16 %v3921
    %v4210 = vunpack.c.l.b16 %v3922
    %v4211 = vunpack.c.h.b16 %v3922
    %v4212 = vunpack.c.l.b16 %v3923
    %v4213 = vunpack.c.h.b16 %v3923
    %v4214 = vunpack.c.l.b16 %v3924
    %v4215 = vunpack.c.h.b16 %v3924
    %v4216 = vunpack.c.l.b16 %v3925
    %v4217 = vunpack.c.h.b16 %v3925
    %v4218 = vunpack.c.l.b16 %v3926
    %v4219 = vunpack.c.h.b16 %v3926
    %v4220 = vunpack.c.l.b16 %v3927
    %v4221 = vunpack.c.h.b16 %v3927
    %v4222 = vunpack.c.l.b16 %v3928
    %v4223 = vunpack.c.h.b16 %v3928
    %v4224 = vunpack.c.l.b16 %v3929
    %v4225 = vunpack.c.h.b16 %v3929
    %v4226 = vunpack.c.l.b16 %v3930
    %v4227 = vunpack.c.h.b16 %v3930
    %v4228 = vunpack.c.l.b16 %v3931
    %v4229 = vunpack.c.h.b16 %v3931
    %v4230 = vunpack.c.l.b16 %v3932
    %v4231 = vunpack.c.h.b16 %v3932
    %v4232 = vunpack.c.l.b16 %v3933
    %v4233 = vunpack.c.h.b16 %v3933
    %v4234 = vpack.c.b16 %v4044, %v4042
    %v4235 = vpack.c.b16 %v4045, %v4043
    %v4236 = vpack.c.b16 %v4048, %v4046
    %v4237 = vpack.c.b16 %v4049, %v4047
    %v4238 = vpack.c.b16 %v4052, %v4050
    %v4239 = vpack.c.b16 %v4053, %v4051
    %v4240 = vpack.c.b16 %v4056, %v4054
    %v4241 = vpack.c.b16 %v4057, %v4055
    %v4242 = vpack.c.b16 %v4060, %v4058
    %v4243 = vpack.c.b16 %v4061, %v4059
    %v4244 = vpack.c.b16 %v4064, %v4062
    %v4245 = vpack.c.b16 %v4065, %v4063
    %v4246 = vpack.c.b16 %v4068, %v4066
    %v4247 = vpack.c.b16 %v4069, %v4067
    %v4248 = vpack.c.b16 %v4072, %v4070
    %v4249 = vpack.c.b16 %v4073, %v4071
    %v4250 = vpack.c.b16 %v4076, %v4074
    %v4251 = vpack.c.b16 %v4077, %v4075
    %v4252 = vpack.c.b16 %v4080, %v4078
    %v4253 = vpack.c.b16 %v4081, %v4079
    %v4254 = vpack.c.b16 %v4084, %v4082
    %v4255 = vpack.c.b16 %v4085, %v4083
    %v4256 = vpack.c.b16 %v4088, %v4086
    %v4257 = vpack.c.b16 %v4089, %v4087
    %v4258 = vpack.c.b16 %v4092, %v4090
    %v4259 = vpack.c.b16 %v4093, %v4091
    %v4260 = vpack.c.b16 %v4096, %v4094
    %v4261 = vpack.c.b16 %v4097, %v4095
    %v4262 = vpack.c.b16 %v4100, %v4098
    %v4263 = vpack.c.b16 %v4101, %v4099
    %v4264 = vpack.c.b16 %v4104, %v4102
    %v4265 = vpack.c.b16 %v4105, %v4103
    %v4266 = vpack.c.b16 %v4108, %v4106
    %v4267 = vpack.c.b16 %v4109, %v4107
    %v4268 = vpack.c.b16 %v4112, %v4110
    %v4269 = vpack.c.b16 %v4113, %v4111
    %v4270 = vpack.c.b16 %v4116, %v4114
    %v4271 = vpack.c.b16 %v4117, %v4115
    %v4272 = vpack.c.b16 %v4120, %v4118
    %v4273 = vpack.c.b16 %v4121, %v4119
    %v4274 = vpack.c.b16 %v4124, %v4122
    %v4275 = vpack.c.b16 %v4125, %v4123
    %v4276 = vpack.c.b16 %v4128, %v4126
    %v4277 = vpack.c.b16 %v4129, %v4127
    %v4278 = vpack.c.b16 %v4132, %v4130
    %v4279 = vpack.c.b16 %v4133, %v4131
    %v4280 = vpack.c.b16 %v4136, %v4134
    %v4281 = vpack.c.b16 %v4137, %v4135
    %v4282 = vpack.c.b16 %v4140, %v4138
    %v4283 = vpack.c.b16 %v4141, %v4139
    %v4284 = vpack.c.b16 %v4144, %v4142
    %v4285 = vpack.c.b16 %v4145, %v4143
    %v4286 = vpack.c.b16 %v4148, %v4146
    %v4287 = vpack.c.b16 %v4149, %v4147
    %v4288 = vpack.c.b16 %v4152, %v4150
    %v4289 = vpack.c.b16 %v4153, %v4151
    %v4290 = vpack.c.b16 %v4156, %v4154
    %v4291 = vpack.c.b16 %v4157, %v4155
    %v4292 = vpack.c.b16 %v4160, %v4158
    %v4293 = vpack.c.b16 %v4161, %v4159
    %v4294 = vpack.c.b16 %v4164, %v4162
    %v4295 = vpack.c.b16 %v4165, %v4163
    %v4296 = vpack.c.b16 %v4168, %v4166
    %v4297 = vpack.c.b16 %v4169, %v4167
    %v4298 = vpack.c.b16 %v4172, %v4170
    %v4299 = vpack.c.b16 %v4173, %v4171
    %v4300 = vpack.c.b16 %v4176, %v4174
    %v4301 = vpack.c.b16 %v4177, %v4175
    %v4302 = vpack.c.b16 %v4180, %v4178
    %v4303 = vpack.c.b16 %v4181, %v4179
    %v4304 = vpack.c.b16 %v4184, %v4182
    %v4305 = vpack.c.b16 %v4185, %v4183
    %v4306 = vpack.c.b16 %v4188, %v4186
    %v4307 = vpack.c.b16 %v4189, %v4187
    %v4308 = vpack.c.b16 %v4192, %v4190
    %v4309 = vpack.c.b16 %v4193, %v4191
    %v4310 = vpack.c.b16 %v4196, %v4194
    %v4311 = vpack.c.b16 %v4197, %v4195
    %v4312 = vpack.c.b16 %v4200, %v4198
    %v4313 = vpack.c.b16 %v4201, %v4199
    %v4314 = vpack.c.b16 %v4204, %v4202
    %v4315 = vpack.c.b16 %v4205, %v4203
    %v4316 = vpack.c.b16 %v4208, %v4206
    %v4317 = vpack.c.b16 %v4209, %v4207
    %v4318 = vpack.c.b16 %v4212, %v4210
    %v4319 = vpack.c.b16 %v4213, %v4211
    %v4320 = vpack.c.b16 %v4216, %v4214
    %v4321 = vpack.c.b16 %v4217, %v4215
    %v4322 = vpack.c.b16 %v4220, %v4218
    %v4323 = vpack.c.b16 %v4221, %v4219
    %v4324 = vpack.c.b16 %v4224, %v4222
    %v4325 = vpack.c.b16 %v4225, %v4223
    %v4326 = vpack.c.b16 %v4228, %v4226
    %v4327 = vpack.c.b16 %v4229, %v4227
    %v4328 = vpack.c.b16 %v4232, %v4230
    %v4329 = vpack.c.b16 %v4233, %v4231
    %4426 = vmatprep.subr.bf16.mxu0 %v4235
    %4427 = vmatpush1.bf16.msra.mxu0 %v4234
    %4428 = vmatprep.subr.bf16.mxu0 %v4237
    %4429 = vmatpush1.bf16.msra.mxu0 %v4236
    %4430 = vmatprep.subr.bf16.mxu0 %v4239
    %4431 = vmatpush1.bf16.msra.mxu0 %v4238
    %4432 = vmatprep.subr.bf16.mxu0 %v4241
    %4433 = vmatpush1.bf16.msra.mxu0 %v4240
    %4434 = vmatprep.subr.bf16.mxu0 %v4243
    %4435 = vmatpush1.bf16.msra.mxu0 %v4242
    %4436 = vmatprep.subr.bf16.mxu0 %v4245
    %4437 = vmatpush1.bf16.msra.mxu0 %v4244
    %4438 = vmatprep.subr.bf16.mxu0 %v4247
    %4439 = vmatpush1.bf16.msra.mxu0 %v4246
    %4440 = vmatprep.subr.bf16.mxu0 %v4249
    %4441 = vmatpush1.bf16.msra.mxu0 %v4248
    %4442 = vmatprep.subr.bf16.mxu0 %v4251
    %4443 = vmatpush1.bf16.msra.mxu0 %v4250
    %4444 = vmatprep.subr.bf16.mxu0 %v4253
    %4445 = vmatpush1.bf16.msra.mxu0 %v4252
    %4446 = vmatprep.subr.bf16.mxu0 %v4255
    %4447 = vmatpush1.bf16.msra.mxu0 %v4254
    %4448 = vmatprep.subr.bf16.mxu0 %v4257
    %4449 = vmatpush1.bf16.msra.mxu0 %v4256
    %4450 = vmatprep.subr.bf16.mxu0 %v4259
    %4451 = vmatpush1.bf16.msra.mxu0 %v4258
    %4452 = vmatprep.subr.bf16.mxu0 %v4261
    %4453 = vmatpush1.bf16.msra.mxu0 %v4260
    %4454 = vmatprep.subr.bf16.mxu0 %v4263
    %4455 = vmatpush1.bf16.msra.mxu0 %v4262
    %4456 = vmatprep.subr.bf16.mxu0 %v4265
    %4457 = vmatpush1.bf16.msra.mxu0 %v4264
    %4458 = vmatprep.mubr.bf16.mxu0 %v3827
    %4459 = vmatmul.mubr.bf16.gmra.mrb[0].mxu0 %v3826
    %v4460 = vpop.f32.mrb[0].mxu0
    %v4461 = vadd.f32 %v3939, %v4460
    %v4462 = vpop.f32.mrb[0].mxu0
    %v4463 = vadd.f32 %v3943, %v4462
    %v4464 = vpop.f32.mrb[0].mxu0
    %v4465 = vadd.f32 %v3939, %v4464
    %v4466 = vpop.f32.mrb[0].mxu0
    %v4467 = vadd.f32 %v3943, %v4466
    %4468 = vmatprep.mubr.bf16.mxu0 %v3833
    %4469 = vmatmul.mubr.bf16.gmra.mrb[0].mxu0 %v3832
    %v4470 = vpop.f32.mrb[0].mxu0
    %v4471 = vadd.f32 %v3939, %v4470
    %v4472 = vpop.f32.mrb[0].mxu0
    %v4473 = vadd.f32 %v3943, %v4472
    %v4474 = vpop.f32.mrb[0].mxu0
    %v4475 = vadd.f32 %v3939, %v4474
    %v4476 = vpop.f32.mrb[0].mxu0
    %v4477 = vadd.f32 %v3943, %v4476
    %4478 = vdwg.mxu0
    %4479 = vmatprep.subr.bf16.mxu0 %v4267
    %4480 = vmatpush1.bf16.msra.mxu0 %v4266
    %4481 = vmatprep.subr.bf16.mxu0 %v4269
    %4482 = vmatpush1.bf16.msra.mxu0 %v4268
    %4483 = vmatprep.subr.bf16.mxu0 %v4271
    %4484 = vmatpush1.bf16.msra.mxu0 %v4270
    %4485 = vmatprep.subr.bf16.mxu0 %v4273
    %4486 = vmatpush1.bf16.msra.mxu0 %v4272
    %4487 = vmatprep.subr.bf16.mxu0 %v4275
    %4488 = vmatpush1.bf16.msra.mxu0 %v4274
    %4489 = vmatprep.subr.bf16.mxu0 %v4277
    %4490 = vmatpush1.bf16.msra.mxu0 %v4276
    %4491 = vmatprep.subr.bf16.mxu0 %v4279
    %4492 = vmatpush1.bf16.msra.mxu0 %v4278
    %4493 = vmatprep.subr.bf16.mxu0 %v4281
    %4494 = vmatpush1.bf16.msra.mxu0 %v4280
    %4495 = vmatprep.subr.bf16.mxu0 %v4283
    %4496 = vmatpush1.bf16.msra.mxu0 %v4282
    %4497 = vmatprep.subr.bf16.mxu0 %v4285
    %4498 = vmatpush1.bf16.msra.mxu0 %v4284
    %4499 = vmatprep.subr.bf16.mxu0 %v4287
    %4500 = vmatpush1.bf16.msra.mxu0 %v4286
    %4501 = vmatprep.subr.bf16.mxu0 %v4289
    %4502 = vmatpush1.bf16.msra.mxu0 %v4288
    %4503 = vmatprep.subr.bf16.mxu0 %v4291
    %4504 = vmatpush1.bf16.msra.mxu0 %v4290
    %4505 = vmatprep.subr.bf16.mxu0 %v4293
    %4506 = vmatpush1.bf16.msra.mxu0 %v4292
    %4507 = vmatprep.subr.bf16.mxu0 %v4295
    %4508 = vmatpush1.bf16.msra.mxu0 %v4294
    %4509 = vmatprep.subr.bf16.mxu0 %v4297
    %4510 = vmatpush1.bf16.msra.mxu0 %v4296
    %4511 = vmatprep.mubr.bf16.mxu0 %v3829
    %4512 = vmatmul.mubr.bf16.gmra.mrb[0].mxu0 %v3828
    %v4513 = vpop.f32.mrb[0].mxu0
    %v4514 = vadd.f32 %v4461, %v4513
    %v4515 = vpop.f32.mrb[0].mxu0
    %v4516 = vadd.f32 %v4463, %v4515
    %v4517 = vpop.f32.mrb[0].mxu0
    %v4518 = vadd.f32 %v4465, %v4517
    %v4519 = vpop.f32.mrb[0].mxu0
    %v4520 = vadd.f32 %v4467, %v4519
    %4521 = vmatprep.mubr.bf16.mxu0 %v3835
    %4522 = vmatmul.mubr.bf16.gmra.mrb[0].mxu0 %v3834
    %v4523 = vpop.f32.mrb[0].mxu0
    %v4524 = vadd.f32 %v4471, %v4523
    %v4525 = vpop.f32.mrb[0].mxu0
    %v4526 = vadd.f32 %v4473, %v4525
    %v4527 = vpop.f32.mrb[0].mxu0
    %v4528 = vadd.f32 %v4475, %v4527
    %v4529 = vpop.f32.mrb[0].mxu0
    %v4530 = vadd.f32 %v4477, %v4529
    %4531 = vdwg.mxu0
    %4532 = vmatprep.subr.bf16.mxu0 %v4299
    %4533 = vmatpush1.bf16.msra.mxu0 %v4298
    %4534 = vmatprep.subr.bf16.mxu0 %v4301
    %4535 = vmatpush1.bf16.msra.mxu0 %v4300
    %4536 = vmatprep.subr.bf16.mxu0 %v4303
    %4537 = vmatpush1.bf16.msra.mxu0 %v4302
    %4538 = vmatprep.subr.bf16.mxu0 %v4305
    %4539 = vmatpush1.bf16.msra.mxu0 %v4304
    %4540 = vmatprep.subr.bf16.mxu0 %v4307
    %4541 = vmatpush1.bf16.msra.mxu0 %v4306
    %4542 = vmatprep.subr.bf16.mxu0 %v4309
    %4543 = vmatpush1.bf16.msra.mxu0 %v4308
    %4544 = vmatprep.subr.bf16.mxu0 %v4311
    %4545 = vmatpush1.bf16.msra.mxu0 %v4310
    %4546 = vmatprep.subr.bf16.mxu0 %v4313
    %4547 = vmatpush1.bf16.msra.mxu0 %v4312
    %4548 = vmatprep.subr.bf16.mxu0 %v4315
    %4549 = vmatpush1.bf16.msra.mxu0 %v4314
    %4550 = vmatprep.subr.bf16.mxu0 %v4317
    %4551 = vmatpush1.bf16.msra.mxu0 %v4316
    %4552 = vmatprep.subr.bf16.mxu0 %v4319
    %4553 = vmatpush1.bf16.msra.mxu0 %v4318
    %4554 = vmatprep.subr.bf16.mxu0 %v4321
    %4555 = vmatpush1.bf16.msra.mxu0 %v4320
    %4556 = vmatprep.subr.bf16.mxu0 %v4323
    %4557 = vmatpush1.bf16.msra.mxu0 %v4322
    %4558 = vmatprep.subr.bf16.mxu0 %v4325
    %4559 = vmatpush1.bf16.msra.mxu0 %v4324
    %4560 = vmatprep.subr.bf16.mxu0 %v4327
    %4561 = vmatpush1.bf16.msra.mxu0 %v4326
    %4562 = vmatprep.subr.bf16.mxu0 %v4329
    %4563 = vmatpush1.bf16.msra.mxu0 %v4328
    %4564 = vmatprep.mubr.bf16.mxu0 %v3831
    %4565 = vmatmul.mubr.bf16.gmra.mrb[0].mxu0 %v3830
    %v4566 = vpop.f32.mrb[0].mxu0
    %v4567 = vadd.f32 %v4514, %v4566
    %v4568 = vpop.f32.mrb[0].mxu0
    %v4569 = vadd.f32 %v4516, %v4568
    %v4570 = vpop.f32.mrb[0].mxu0
    %v4571 = vadd.f32 %v4518, %v4570
    %v4572 = vpop.f32.mrb[0].mxu0
    %v4573 = vadd.f32 %v4520, %v4572
    %4574 = vmatprep.mubr.bf16.mxu0 %v3837
    %4575 = vmatmul.mubr.bf16.gmra.mrb[0].mxu0 %v3836
    %v4576 = vpop.f32.mrb[0].mxu0
    %v4577 = vadd.f32 %v4524, %v4576
    %v4578 = vpop.f32.mrb[0].mxu0
    %v4579 = vadd.f32 %v4526, %v4578
    %v4580 = vpop.f32.mrb[0].mxu0
    %v4581 = vadd.f32 %v4528, %v4580
    %v4582 = vpop.f32.mrb[0].mxu0
    %v4583 = vadd.f32 %v4530, %v4582
    %4584 = vdwg.mxu0
    %v4585 = vld [vmem:[#allocation37] sm:$0xff]
    %v4586 = vld [vmem:[#allocation37 + $0x8] sm:$0xff]
    %v4587 = vld [vmem:[#allocation37 + $0x10] sm:$0xff]
    %v4588 = vld [vmem:[#allocation37 + $0x18] sm:$0xff]
    %v4589 = vld [vmem:[#allocation37 + $0x20] sm:$0xff]
    %v4590 = vld [vmem:[#allocation37 + $0x28] sm:$0xff]
    %v4591 = vld [vmem:[#allocation37 + $0x30] sm:$0xff]
    %v4592 = vld [vmem:[#allocation37 + $0x38] sm:$0xff]
    %v4593 = vld [vmem:[#allocation37 + $0x40] sm:$0xff]
    %v4594 = vld [vmem:[#allocation37 + $0x48] sm:$0xff]
    %v4595 = vld [vmem:[#allocation37 + $0x50] sm:$0xff]
    %v4596 = vld [vmem:[#allocation37 + $0x58] sm:$0xff]
    %v4597 = vld [vmem:[#allocation37 + $0x60] sm:$0xff]
    %v4598 = vld [vmem:[#allocation37 + $0x68] sm:$0xff]
    %v4599 = vld [vmem:[#allocation37 + $0x70] sm:$0xff]
    %v4600 = vld [vmem:[#allocation37 + $0x78] sm:$0xff]
    %v4601 = vld [vmem:[#allocation39] sm:$0x3]
    %v4603 = vlaneseq
    %v4604 = vshrl.u32 %v4603, 7
    %v4605 = vsub.s32 0, %v4604
    %v4606 = vrot.slane %v4601, %v4605
    %v4607 = vlaneseq
    %v4608 = vshrl.u32 %v4607, 7
    %v4609 = vsub.s32 1, %v4608
    %v4610 = vrot.slane %v4601, %v4609
    %v4629 = vunpack.c.l.b16 %v4585
    %v4630 = vunpack.c.h.b16 %v4585
    %v4631 = vunpack.c.l.b16 %v4586
    %v4632 = vunpack.c.h.b16 %v4586
    %v4633 = vunpack.c.l.b16 %v4587
    %v4634 = vunpack.c.h.b16 %v4587
    %v4635 = vunpack.c.l.b16 %v4588
    %v4636 = vunpack.c.h.b16 %v4588
    %v4637 = vunpack.c.l.b16 %v4589
    %v4638 = vunpack.c.h.b16 %v4589
    %v4639 = vunpack.c.l.b16 %v4590
    %v4640 = vunpack.c.h.b16 %v4590
    %v4641 = vunpack.c.l.b16 %v4591
    %v4642 = vunpack.c.h.b16 %v4591
    %v4643 = vunpack.c.l.b16 %v4592
    %v4644 = vunpack.c.h.b16 %v4592
    %v4645 = vunpack.c.l.b16 %v4593
    %v4646 = vunpack.c.h.b16 %v4593
    %v4647 = vunpack.c.l.b16 %v4594
    %v4648 = vunpack.c.h.b16 %v4594
    %v4649 = vunpack.c.l.b16 %v4595
    %v4650 = vunpack.c.h.b16 %v4595
    %v4651 = vunpack.c.l.b16 %v4596
    %v4652 = vunpack.c.h.b16 %v4596
    %v4653 = vunpack.c.l.b16 %v4597
    %v4654 = vunpack.c.h.b16 %v4597
    %v4655 = vunpack.c.l.b16 %v4598
    %v4656 = vunpack.c.h.b16 %v4598
    %v4657 = vunpack.c.l.b16 %v4599
    %v4658 = vunpack.c.h.b16 %v4599
    %v4659 = vunpack.c.l.b16 %v4600
    %v4660 = vunpack.c.h.b16 %v4600
    %v4661 = vpack.c.b16 %v4631, %v4629
    %v4662 = vpack.c.b16 %v4632, %v4630
    %v4663 = vpack.c.b16 %v4635, %v4633
    %v4664 = vpack.c.b16 %v4636, %v4634
    %v4665 = vpack.c.b16 %v4639, %v4637
    %v4666 = vpack.c.b16 %v4640, %v4638
    %v4667 = vpack.c.b16 %v4643, %v4641
    %v4668 = vpack.c.b16 %v4644, %v4642
    %v4669 = vpack.c.b16 %v4647, %v4645
    %v4670 = vpack.c.b16 %v4648, %v4646
    %v4671 = vpack.c.b16 %v4651, %v4649
    %v4672 = vpack.c.b16 %v4652, %v4650
    %v4673 = vpack.c.b16 %v4655, %v4653
    %v4674 = vpack.c.b16 %v4656, %v4654
    %v4675 = vpack.c.b16 %v4659, %v4657
    %v4676 = vpack.c.b16 %v4660, %v4658
    %4693 = vmatprep.subr.bf16.mxu0 %v4662
    %4694 = vmatpush1.bf16.msra.mxu0 %v4661
    %4695 = vmatprep.subr.bf16.mxu0 %v4664
    %4696 = vmatpush1.bf16.msra.mxu0 %v4663
    %4697 = vmatprep.subr.bf16.mxu0 %v4666
    %4698 = vmatpush1.bf16.msra.mxu0 %v4665
    %4699 = vmatprep.subr.bf16.mxu0 %v4668
    %4700 = vmatpush1.bf16.msra.mxu0 %v4667
    %4701 = vmatprep.subr.bf16.mxu0 %v4670
    %4702 = vmatpush1.bf16.msra.mxu0 %v4669
    %4703 = vmatprep.subr.bf16.mxu0 %v4672
    %4704 = vmatpush1.bf16.msra.mxu0 %v4671
    %4705 = vmatprep.subr.bf16.mxu0 %v4674
    %4706 = vmatpush1.bf16.msra.mxu0 %v4673
    %4707 = vmatprep.subr.bf16.mxu0 %v4676
    %4708 = vmatpush1.bf16.msra.mxu0 %v4675
    %4709 = vmatprep.subr.bf16.mxu0 0
    %4710 = vmatpush1.bf16.msra.mxu0 0
    %4711 = vmatprep.subr.bf16.mxu0 0
    %4712 = vmatpush1.bf16.msra.mxu0 0
    %4713 = vmatprep.subr.bf16.mxu0 0
    %4714 = vmatpush1.bf16.msra.mxu0 0
    %4715 = vmatprep.subr.bf16.mxu0 0
    %4716 = vmatpush1.bf16.msra.mxu0 0
    %4717 = vmatprep.subr.bf16.mxu0 0
    %4718 = vmatpush1.bf16.msra.mxu0 0
    %4719 = vmatprep.subr.bf16.mxu0 0
    %4720 = vmatpush1.bf16.msra.mxu0 0
    %4721 = vmatprep.subr.bf16.mxu0 0
    %4722 = vmatpush1.bf16.msra.mxu0 0
    %4723 = vmatprep.subr.bf16.mxu0 0
    %4724 = vmatpush1.bf16.msra.mxu0 0
    %4725 = vmatprep.mubr.bf16.mxu0 0
    %4726 = vmatmul.mubr.bf16.gmra.mrb[0].mxu0 %v3208
    %v4727 = vpop.f32.mrb[0].mxu0
    %v4728 = vadd.f32 %v4606, %v4727
    %v4729 = vpop.f32.mrb[0].mxu0
    %v4730 = vadd.f32 %v4610, %v4729
    %v4731 = vpop.f32.mrb[0].mxu0
    %v4732 = vadd.f32 %v4606, %v4731
    %v4733 = vpop.f32.mrb[0].mxu0
    %v4734 = vadd.f32 %v4610, %v4733
    %4735 = vmatprep.mubr.bf16.mxu0 0
    %4736 = vmatmul.mubr.bf16.gmra.mrb[0].mxu0 %v3211
    %v4737 = vpop.f32.mrb[0].mxu0
    %v4738 = vadd.f32 %v4606, %v4737
    %v4739 = vpop.f32.mrb[0].mxu0
    %v4740 = vadd.f32 %v4610, %v4739
    %v4741 = vpop.f32.mrb[0].mxu0
    %v4742 = vadd.f32 %v4606, %v4741
    %v4743 = vpop.f32.mrb[0].mxu0
    %v4744 = vadd.f32 %v4610, %v4743
    %4745 = vdwg.mxu0
    %v4746 = vadd.f32 %v4567, %v4728
    %v4747 = vadd.f32 %v4569, %v4730
    %v4748 = vadd.f32 %v4571, %v4732
    %v4749 = vadd.f32 %v4573, %v4734
    %v4750 = vadd.f32 %v4577, %v4738
    %v4751 = vadd.f32 %v4579, %v4740
    %v4752 = vadd.f32 %v4581, %v4742
    %v4753 = vadd.f32 %v4583, %v4744
    %v4754 = vmax.f32 %v4746, 0.0
    %v4755 = vmax.f32 %v4747, 0.0
    %v4756 = vmax.f32 %v4748, 0.0
    %v4757 = vmax.f32 %v4749, 0.0
    %v4758 = vmax.f32 %v4750, 0.0
    %v4759 = vmax.f32 %v4751, 0.0
    %v4760 = vmax.f32 %v4752, 0.0
    %v4761 = vmax.f32 %v4753, 0.0
    %v4762 = vld [vmem:[#allocation40] sm:$0xff]
    %v4763 = vld [vmem:[#allocation40 + $0x8] sm:$0xff]
    %vm4764 = vcmask 261120
    %v4766 = vsel %vm4764, %v4762, 0
    %v4769 = vsel %vm4764, %v4763, 0
    %4771 = vmatprep.subr.mxu0 %v4755
    %4772 = vmatpush1.msra.mxu0 %v4754
    %4773 = vmatprep.subr.mxu0 %v4757
    %4774 = vmatpush1.msra.mxu0 %v4756
    %4775 = vmatprep.subr.mxu0 %v4759
    %4776 = vmatpush1.msra.mxu0 %v4758
    %4777 = vmatprep.subr.mxu0 %v4761
    %4778 = vmatpush1.msra.mxu0 %v4760
    %4779 = vmatprep.subr.mxu0 0.0
    %4780 = vmatpush1.msra.mxu0 0.0
    %4781 = vmatprep.subr.mxu0 0.0
    %4782 = vmatpush1.msra.mxu0 0.0
    %4783 = vmatprep.subr.mxu0 0.0
    %4784 = vmatpush1.msra.mxu0 0.0
    %4785 = vmatprep.subr.mxu0 0.0
    %4786 = vmatpush1.msra.mxu0 0.0
    %4787 = vmatprep.subr.mxu0 0.0
    %4788 = vmatpush1.msra.mxu0 0.0
    %4789 = vmatprep.subr.mxu0 0.0
    %4790 = vmatpush1.msra.mxu0 0.0
    %4791 = vmatprep.subr.mxu0 0.0
    %4792 = vmatpush1.msra.mxu0 0.0
    %4793 = vmatprep.subr.mxu0 0.0
    %4794 = vmatpush1.msra.mxu0 0.0
    %4795 = vmatprep.subr.mxu0 0.0
    %4796 = vmatpush1.msra.mxu0 0.0
    %4797 = vmatprep.subr.mxu0 0.0
    %4798 = vmatpush1.msra.mxu0 0.0
    %4799 = vmatprep.subr.mxu0 0.0
    %4800 = vmatpush1.msra.mxu0 0.0
    %4801 = vmatprep.subr.mxu0 0.0
    %4802 = vmatpush1.msra.mxu0 0.0
    %4803 = vmatprep.subr.mxu0 0.0
    %4804 = vmatpush1.msra.mxu0 0.0
    %4805 = vmatprep.subr.mxu0 0.0
    %4806 = vmatpush1.msra.mxu0 0.0
    %4807 = vmatprep.subr.mxu0 0.0
    %4808 = vmatpush1.msra.mxu0 0.0
    %4809 = vmatprep.subr.mxu0 0.0
    %4810 = vmatpush1.msra.mxu0 0.0
    %4811 = vmatprep.subr.mxu0 0.0
    %4812 = vmatpush1.msra.mxu0 0.0
    %4813 = vmatprep.subr.mxu0 0.0
    %4814 = vmatpush1.msra.mxu0 0.0
    %4815 = vmatprep.subr.mxu0 0.0
    %4816 = vmatpush1.msra.mxu0 0.0
    %4817 = vmatprep.subr.mxu0 0.0
    %4818 = vmatpush1.msra.mxu0 0.0
    %4819 = vmatprep.subr.mxu0 0.0
    %4820 = vmatpush1.msra.mxu0 0.0
    %4821 = vmatprep.subr.mxu0 0.0
    %4822 = vmatpush1.msra.mxu0 0.0
    %4823 = vmatprep.subr.mxu0 0.0
    %4824 = vmatpush1.msra.mxu0 0.0
    %4825 = vmatprep.subr.mxu0 0.0
    %4826 = vmatpush1.msra.mxu0 0.0
    %4827 = vmatprep.subr.mxu0 0.0
    %4828 = vmatpush1.msra.mxu0 0.0
    %4829 = vmatprep.subr.mxu0 0.0
    %4830 = vmatpush1.msra.mxu0 0.0
    %4831 = vmatprep.subr.mxu0 0.0
    %4832 = vmatpush1.msra.mxu0 0.0
    %4833 = vmatprep.subr.mxu0 0.0
    %4834 = vmatpush1.msra.mxu0 0.0
    %4835 = vmatprep.mubr.f32.mxu0 0.0
    %4836 = vmatmul.mubr.f32.gmra.mrb[0].mxu0 %v4766
    %v4837 = vpop.f32.mrb[0].mxu0
    %v4838 = vadd.f32 0.0, %v4837
    %v4839 = vpop.f32.mrb[0].mxu0
    %v4840 = vadd.f32 0.0, %v4839
    %4841 = vmatprep.mubr.f32.mxu0 0.0
    %4842 = vmatmul.mubr.f32.gmra.mrb[0].mxu0 %v4769
    %v4843 = vpop.f32.mrb[0].mxu0
    %v4844 = vadd.f32 0.0, %v4843
    %v4845 = vpop.f32.mrb[0].mxu0
    %v4846 = vadd.f32 0.0, %v4845
    %4847 = vdwg.mxu0
    %v4848 = vld [vmem:[#allocation42] sm:$0xff]
    %v4849 = vld [vmem:[#allocation42 + $0x8] sm:$0xff]
    %v4851 = vsel %vm4764, %v4848, 0
    %v4854 = vsel %vm4764, %v4849, 0
    %4856 = vmatprep.subr.mxu0 %v4755
    %4857 = vmatpush1.msra.mxu0 %v4754
    %4858 = vmatprep.subr.mxu0 %v4757
    %4859 = vmatpush1.msra.mxu0 %v4756
    %4860 = vmatprep.subr.mxu0 %v4759
    %4861 = vmatpush1.msra.mxu0 %v4758
    %4862 = vmatprep.subr.mxu0 %v4761
    %4863 = vmatpush1.msra.mxu0 %v4760
    %4864 = vmatprep.subr.mxu0 0.0
    %4865 = vmatpush1.msra.mxu0 0.0
    %4866 = vmatprep.subr.mxu0 0.0
    %4867 = vmatpush1.msra.mxu0 0.0
    %4868 = vmatprep.subr.mxu0 0.0
    %4869 = vmatpush1.msra.mxu0 0.0
    %4870 = vmatprep.subr.mxu0 0.0
    %4871 = vmatpush1.msra.mxu0 0.0
    %4872 = vmatprep.subr.mxu0 0.0
    %4873 = vmatpush1.msra.mxu0 0.0
    %4874 = vmatprep.subr.mxu0 0.0
    %4875 = vmatpush1.msra.mxu0 0.0
    %4876 = vmatprep.subr.mxu0 0.0
    %4877 = vmatpush1.msra.mxu0 0.0
    %4878 = vmatprep.subr.mxu0 0.0
    %4879 = vmatpush1.msra.mxu0 0.0
    %4880 = vmatprep.subr.mxu0 0.0
    %4881 = vmatpush1.msra.mxu0 0.0
    %4882 = vmatprep.subr.mxu0 0.0
    %4883 = vmatpush1.msra.mxu0 0.0
    %4884 = vmatprep.subr.mxu0 0.0
    %4885 = vmatpush1.msra.mxu0 0.0
    %4886 = vmatprep.subr.mxu0 0.0
    %4887 = vmatpush1.msra.mxu0 0.0
    %4888 = vmatprep.subr.mxu0 0.0
    %4889 = vmatpush1.msra.mxu0 0.0
    %4890 = vmatprep.subr.mxu0 0.0
    %4891 = vmatpush1.msra.mxu0 0.0
    %4892 = vmatprep.subr.mxu0 0.0
    %4893 = vmatpush1.msra.mxu0 0.0
    %4894 = vmatprep.subr.mxu0 0.0
    %4895 = vmatpush1.msra.mxu0 0.0
    %4896 = vmatprep.subr.mxu0 0.0
    %4897 = vmatpush1.msra.mxu0 0.0
    %4898 = vmatprep.subr.mxu0 0.0
    %4899 = vmatpush1.msra.mxu0 0.0
    %4900 = vmatprep.subr.mxu0 0.0
    %4901 = vmatpush1.msra.mxu0 0.0
    %4902 = vmatprep.subr.mxu0 0.0
    %4903 = vmatpush1.msra.mxu0 0.0
    %4904 = vmatprep.subr.mxu0 0.0
    %4905 = vmatpush1.msra.mxu0 0.0
    %4906 = vmatprep.subr.mxu0 0.0
    %4907 = vmatpush1.msra.mxu0 0.0
    %4908 = vmatprep.subr.mxu0 0.0
    %4909 = vmatpush1.msra.mxu0 0.0
    %4910 = vmatprep.subr.mxu0 0.0
    %4911 = vmatpush1.msra.mxu0 0.0
    %4912 = vmatprep.subr.mxu0 0.0
    %4913 = vmatpush1.msra.mxu0 0.0
    %4914 = vmatprep.subr.mxu0 0.0
    %4915 = vmatpush1.msra.mxu0 0.0
    %4916 = vmatprep.subr.mxu0 0.0
    %4917 = vmatpush1.msra.mxu0 0.0
    %4918 = vmatprep.subr.mxu0 0.0
    %4919 = vmatpush1.msra.mxu0 0.0
    %4920 = vmatprep.mubr.f32.mxu0 0.0
    %4921 = vmatmul.mubr.f32.gmra.mrb[0].mxu0 %v4851
    %v4922 = vpop.f32.mrb[0].mxu0
    %v4923 = vadd.f32 0.0, %v4922
    %v4924 = vpop.f32.mrb[0].mxu0
    %v4925 = vadd.f32 0.0, %v4924
    %4926 = vmatprep.mubr.f32.mxu0 0.0
    %4927 = vmatmul.mubr.f32.gmra.mrb[0].mxu0 %v4854
    %v4928 = vpop.f32.mrb[0].mxu0
    %v4929 = vadd.f32 0.0, %v4928
    %v4930 = vpop.f32.mrb[0].mxu0
    %v4931 = vadd.f32 0.0, %v4930
    %4932 = vdwg.mxu0
    %v4933 = vld [vmem:[#allocation43] sm:$0xff]
    %v4934 = vld [vmem:[#allocation43 + $0x8] sm:$0xff]
    %v4936 = vsel %vm4764, %v4933, 0
    %v4939 = vsel %vm4764, %v4934, 0
    %4941 = vmatprep.subr.mxu0 %v4755
    %4942 = vmatpush1.msra.mxu0 %v4754
    %4943 = vmatprep.subr.mxu0 %v4757
    %4944 = vmatpush1.msra.mxu0 %v4756
    %4945 = vmatprep.subr.mxu0 %v4759
    %4946 = vmatpush1.msra.mxu0 %v4758
    %4947 = vmatprep.subr.mxu0 %v4761
    %4948 = vmatpush1.msra.mxu0 %v4760
    %4949 = vmatprep.subr.mxu0 0.0
    %4950 = vmatpush1.msra.mxu0 0.0
    %4951 = vmatprep.subr.mxu0 0.0
    %4952 = vmatpush1.msra.mxu0 0.0
    %4953 = vmatprep.subr.mxu0 0.0
    %4954 = vmatpush1.msra.mxu0 0.0
    %4955 = vmatprep.subr.mxu0 0.0
    %4956 = vmatpush1.msra.mxu0 0.0
    %4957 = vmatprep.subr.mxu0 0.0
    %4958 = vmatpush1.msra.mxu0 0.0
    %4959 = vmatprep.subr.mxu0 0.0
    %4960 = vmatpush1.msra.mxu0 0.0
    %4961 = vmatprep.subr.mxu0 0.0
    %4962 = vmatpush1.msra.mxu0 0.0
    %4963 = vmatprep.subr.mxu0 0.0
    %4964 = vmatpush1.msra.mxu0 0.0
    %4965 = vmatprep.subr.mxu0 0.0
    %4966 = vmatpush1.msra.mxu0 0.0
    %4967 = vmatprep.subr.mxu0 0.0
    %4968 = vmatpush1.msra.mxu0 0.0
    %4969 = vmatprep.subr.mxu0 0.0
    %4970 = vmatpush1.msra.mxu0 0.0
    %4971 = vmatprep.subr.mxu0 0.0
    %4972 = vmatpush1.msra.mxu0 0.0
    %4973 = vmatprep.subr.mxu0 0.0
    %4974 = vmatpush1.msra.mxu0 0.0
    %4975 = vmatprep.subr.mxu0 0.0
    %4976 = vmatpush1.msra.mxu0 0.0
    %4977 = vmatprep.subr.mxu0 0.0
    %4978 = vmatpush1.msra.mxu0 0.0
    %4979 = vmatprep.subr.mxu0 0.0
    %4980 = vmatpush1.msra.mxu0 0.0
    %4981 = vmatprep.subr.mxu0 0.0
    %4982 = vmatpush1.msra.mxu0 0.0
    %4983 = vmatprep.subr.mxu0 0.0
    %4984 = vmatpush1.msra.mxu0 0.0
    %4985 = vmatprep.subr.mxu0 0.0
    %4986 = vmatpush1.msra.mxu0 0.0
    %4987 = vmatprep.subr.mxu0 0.0
    %4988 = vmatpush1.msra.mxu0 0.0
    %4989 = vmatprep.subr.mxu0 0.0
    %4990 = vmatpush1.msra.mxu0 0.0
    %4991 = vmatprep.subr.mxu0 0.0
    %4992 = vmatpush1.msra.mxu0 0.0
    %4993 = vmatprep.subr.mxu0 0.0
    %4994 = vmatpush1.msra.mxu0 0.0
    %4995 = vmatprep.subr.mxu0 0.0
    %4996 = vmatpush1.msra.mxu0 0.0
    %4997 = vmatprep.subr.mxu0 0.0
    %4998 = vmatpush1.msra.mxu0 0.0
    %4999 = vmatprep.subr.mxu0 0.0
    %5000 = vmatpush1.msra.mxu0 0.0
    %5001 = vmatprep.subr.mxu0 0.0
    %5002 = vmatpush1.msra.mxu0 0.0
    %5003 = vmatprep.subr.mxu0 0.0
    %5004 = vmatpush1.msra.mxu0 0.0
    %5005 = vmatprep.mubr.f32.mxu0 0.0
    %5006 = vmatmul.mubr.f32.gmra.mrb[0].mxu0 %v4936
    %v5007 = vpop.f32.mrb[0].mxu0
    %v5008 = vadd.f32 0.0, %v5007
    %v5009 = vpop.f32.mrb[0].mxu0
    %v5010 = vadd.f32 0.0, %v5009
    %5011 = vmatprep.mubr.f32.mxu0 0.0
    %5012 = vmatmul.mubr.f32.gmra.mrb[0].mxu0 %v4939
    %v5013 = vpop.f32.mrb[0].mxu0
    %v5014 = vadd.f32 0.0, %v5013
    %v5015 = vpop.f32.mrb[0].mxu0
    %v5016 = vadd.f32 0.0, %v5015
    %5017 = vdwg.mxu0
    %v5018 = vpack.c.bf16 %v4844, %v4838
    %v5019 = vpack.c.bf16 %v4846, %v4840
    %v5020 = vpack.c.bf16 %v4929, %v4923
    %v5021 = vpack.c.bf16 %v4931, %v4925
    %v5022 = vpack.c.bf16 %v5014, %v5008
    %v5023 = vpack.c.bf16 %v5016, %v5010
    %v5024 = vld [vmem:[#allocation45] sm:$0xff]
    %v5025 = vld [vmem:[#allocation45 + $0x8] sm:$0xff]
    %v5026 = vld [vmem:[#allocation45 + $0x10] sm:$0xff]
    %v5027 = vld [vmem:[#allocation45 + $0x18] sm:$0xff]
    %v5028 = vld [vmem:[#allocation45 + $0x20] sm:$0xff]
    %v5029 = vld [vmem:[#allocation45 + $0x28] sm:$0xff]
    %v5030 = vld [vmem:[#allocation45 + $0x30] sm:$0xff]
    %v5031 = vld [vmem:[#allocation45 + $0x38] sm:$0xff]
    %v5032 = vld [vmem:[#allocation45 + $0x40] sm:$0xff]
    %v5033 = vld [vmem:[#allocation45 + $0x48] sm:$0xff]
    %v5034 = vld [vmem:[#allocation45 + $0x50] sm:$0xff]
    %v5035 = vld [vmem:[#allocation45 + $0x58] sm:$0xff]
    %v5036 = vld [vmem:[#allocation45 + $0x60] sm:$0xff]
    %v5037 = vld [vmem:[#allocation45 + $0x68] sm:$0xff]
    %v5038 = vld [vmem:[#allocation45 + $0x70] sm:$0xff]
    %v5039 = vld [vmem:[#allocation45 + $0x78] sm:$0xff]
    %v5040 = vld [vmem:[#allocation45 + $0x80] sm:$0xff]
    %v5041 = vld [vmem:[#allocation45 + $0x88] sm:$0xff]
    %v5042 = vld [vmem:[#allocation45 + $0x90] sm:$0xff]
    %v5043 = vld [vmem:[#allocation45 + $0x98] sm:$0xff]
    %v5044 = vld [vmem:[#allocation45 + $0xa0] sm:$0xff]
    %v5045 = vld [vmem:[#allocation45 + $0xa8] sm:$0xff]
    %v5046 = vld [vmem:[#allocation45 + $0xb0] sm:$0xff]
    %v5047 = vld [vmem:[#allocation45 + $0xb8] sm:$0xff]
    %v5048 = vld [vmem:[#allocation45 + $0xc0] sm:$0xff]
    %v5049 = vld [vmem:[#allocation45 + $0xc8] sm:$0xff]
    %v5050 = vld [vmem:[#allocation45 + $0xd0] sm:$0xff]
    %v5051 = vld [vmem:[#allocation45 + $0xd8] sm:$0xff]
    %v5052 = vld [vmem:[#allocation45 + $0xe0] sm:$0xff]
    %v5053 = vld [vmem:[#allocation45 + $0xe8] sm:$0xff]
    %v5054 = vld [vmem:[#allocation45 + $0xf0] sm:$0xff]
    %v5055 = vld [vmem:[#allocation45 + $0xf8] sm:$0xff]
    %v5056 = vld [vmem:[#allocation45 + $0x100] sm:$0xff]
    %v5057 = vld [vmem:[#allocation45 + $0x108] sm:$0xff]
    %v5058 = vld [vmem:[#allocation45 + $0x110] sm:$0xff]
    %v5059 = vld [vmem:[#allocation45 + $0x118] sm:$0xff]
    %v5060 = vld [vmem:[#allocation45 + $0x120] sm:$0xff]
    %v5061 = vld [vmem:[#allocation45 + $0x128] sm:$0xff]
    %v5062 = vld [vmem:[#allocation45 + $0x130] sm:$0xff]
    %v5063 = vld [vmem:[#allocation45 + $0x138] sm:$0xff]
    %v5064 = vld [vmem:[#allocation45 + $0x140] sm:$0xff]
    %v5065 = vld [vmem:[#allocation45 + $0x148] sm:$0xff]
    %v5066 = vld [vmem:[#allocation45 + $0x150] sm:$0xff]
    %v5067 = vld [vmem:[#allocation45 + $0x158] sm:$0xff]
    %v5068 = vld [vmem:[#allocation45 + $0x160] sm:$0xff]
    %v5069 = vld [vmem:[#allocation45 + $0x168] sm:$0xff]
    %v5070 = vld [vmem:[#allocation45 + $0x170] sm:$0xff]
    %v5071 = vld [vmem:[#allocation45 + $0x178] sm:$0xff]
    %v5072 = vld [vmem:[#allocation45 + $0x180] sm:$0xff]
    %v5073 = vld [vmem:[#allocation45 + $0x188] sm:$0xff]
    %v5074 = vld [vmem:[#allocation45 + $0x190] sm:$0xff]
    %v5075 = vld [vmem:[#allocation45 + $0x198] sm:$0xff]
    %v5076 = vld [vmem:[#allocation45 + $0x1a0] sm:$0xff]
    %v5077 = vld [vmem:[#allocation45 + $0x1a8] sm:$0xff]
    %v5078 = vld [vmem:[#allocation45 + $0x1b0] sm:$0xff]
    %v5079 = vld [vmem:[#allocation45 + $0x1b8] sm:$0xff]
    %v5080 = vld [vmem:[#allocation45 + $0x1c0] sm:$0xff]
    %v5081 = vld [vmem:[#allocation45 + $0x1c8] sm:$0xff]
    %v5082 = vld [vmem:[#allocation45 + $0x1d0] sm:$0xff]
    %v5083 = vld [vmem:[#allocation45 + $0x1d8] sm:$0xff]
    %v5084 = vld [vmem:[#allocation45 + $0x1e0] sm:$0xff]
    %v5085 = vld [vmem:[#allocation45 + $0x1e8] sm:$0xff]
    %v5086 = vld [vmem:[#allocation45 + $0x1f0] sm:$0xff]
    %v5087 = vld [vmem:[#allocation45 + $0x1f8] sm:$0xff]
    %v5088 = vld [vmem:[#allocation45 + $0x200] sm:$0xff]
    %v5089 = vld [vmem:[#allocation45 + $0x208] sm:$0xff]
    %v5090 = vld [vmem:[#allocation45 + $0x210] sm:$0xff]
    %v5091 = vld [vmem:[#allocation45 + $0x218] sm:$0xff]
    %v5092 = vld [vmem:[#allocation45 + $0x220] sm:$0xff]
    %v5093 = vld [vmem:[#allocation45 + $0x228] sm:$0xff]
    %v5094 = vld [vmem:[#allocation45 + $0x230] sm:$0xff]
    %v5095 = vld [vmem:[#allocation45 + $0x238] sm:$0xff]
    %v5096 = vld [vmem:[#allocation45 + $0x240] sm:$0xff]
    %v5097 = vld [vmem:[#allocation45 + $0x248] sm:$0xff]
    %v5098 = vld [vmem:[#allocation45 + $0x250] sm:$0xff]
    %v5099 = vld [vmem:[#allocation45 + $0x258] sm:$0xff]
    %v5100 = vld [vmem:[#allocation45 + $0x260] sm:$0xff]
    %v5101 = vld [vmem:[#allocation45 + $0x268] sm:$0xff]
    %v5102 = vld [vmem:[#allocation45 + $0x270] sm:$0xff]
    %v5103 = vld [vmem:[#allocation45 + $0x278] sm:$0xff]
    %v5104 = vld [vmem:[#allocation45 + $0x280] sm:$0xff]
    %v5105 = vld [vmem:[#allocation45 + $0x288] sm:$0xff]
    %v5106 = vld [vmem:[#allocation45 + $0x290] sm:$0xff]
    %v5107 = vld [vmem:[#allocation45 + $0x298] sm:$0xff]
    %v5108 = vld [vmem:[#allocation45 + $0x2a0] sm:$0xff]
    %v5109 = vld [vmem:[#allocation45 + $0x2a8] sm:$0xff]
    %v5110 = vld [vmem:[#allocation45 + $0x2b0] sm:$0xff]
    %v5111 = vld [vmem:[#allocation45 + $0x2b8] sm:$0xff]
    %v5112 = vld [vmem:[#allocation45 + $0x2c0] sm:$0xff]
    %v5113 = vld [vmem:[#allocation45 + $0x2c8] sm:$0xff]
    %v5114 = vld [vmem:[#allocation45 + $0x2d0] sm:$0xff]
    %v5115 = vld [vmem:[#allocation45 + $0x2d8] sm:$0xff]
    %v5116 = vld [vmem:[#allocation45 + $0x2e0] sm:$0xff]
    %v5117 = vld [vmem:[#allocation45 + $0x2e8] sm:$0xff]
    %v5118 = vld [vmem:[#allocation45 + $0x2f0] sm:$0xff]
    %v5119 = vld [vmem:[#allocation45 + $0x2f8] sm:$0xff]
    %v5120 = vld [vmem:[#allocation45 + $0x300] sm:$0xff]
    %v5121 = vld [vmem:[#allocation45 + $0x308] sm:$0xff]
    %v5122 = vld [vmem:[#allocation45 + $0x310] sm:$0xff]
    %v5123 = vld [vmem:[#allocation45 + $0x318] sm:$0xff]
    %v5124 = vld [vmem:[#allocation45 + $0x320] sm:$0xff]
    %v5125 = vld [vmem:[#allocation45 + $0x328] sm:$0xff]
    %v5126 = vld [vmem:[#allocation45 + $0x330] sm:$0xff]
    %v5127 = vld [vmem:[#allocation45 + $0x338] sm:$0xff]
    %v5128 = vld [vmem:[#allocation45 + $0x340] sm:$0xff]
    %v5129 = vld [vmem:[#allocation45 + $0x348] sm:$0xff]
    %v5130 = vld [vmem:[#allocation45 + $0x350] sm:$0xff]
    %v5131 = vld [vmem:[#allocation45 + $0x358] sm:$0xff]
    %v5132 = vld [vmem:[#allocation45 + $0x360] sm:$0xff]
    %v5133 = vld [vmem:[#allocation45 + $0x368] sm:$0xff]
    %v5134 = vld [vmem:[#allocation45 + $0x370] sm:$0xff]
    %v5135 = vld [vmem:[#allocation45 + $0x378] sm:$0xff]
    %v5136 = vld [vmem:[#allocation45 + $0x380] sm:$0xff]
    %v5137 = vld [vmem:[#allocation45 + $0x388] sm:$0xff]
    %v5138 = vld [vmem:[#allocation45 + $0x390] sm:$0xff]
    %v5139 = vld [vmem:[#allocation45 + $0x398] sm:$0xff]
    %v5140 = vld [vmem:[#allocation45 + $0x3a0] sm:$0xff]
    %v5141 = vld [vmem:[#allocation45 + $0x3a8] sm:$0xff]
    %v5142 = vld [vmem:[#allocation45 + $0x3b0] sm:$0xff]
    %v5143 = vld [vmem:[#allocation45 + $0x3b8] sm:$0xff]
    %v5144 = vld [vmem:[#allocation45 + $0x3c0] sm:$0xff]
    %v5145 = vld [vmem:[#allocation45 + $0x3c8] sm:$0xff]
    %v5146 = vld [vmem:[#allocation45 + $0x3d0] sm:$0xff]
    %v5147 = vld [vmem:[#allocation45 + $0x3d8] sm:$0xff]
    %v5148 = vld [vmem:[#allocation45 + $0x3e0] sm:$0xff]
    %v5149 = vld [vmem:[#allocation45 + $0x3e8] sm:$0xff]
    %v5150 = vld [vmem:[#allocation45 + $0x3f0] sm:$0xff]
    %v5151 = vld [vmem:[#allocation45 + $0x3f8] sm:$0xff]
    %v5152 = vld [vmem:[#allocation45 + $0x400] sm:$0xff]
    %v5153 = vld [vmem:[#allocation45 + $0x408] sm:$0xff]
    %v5154 = vld [vmem:[#allocation45 + $0x410] sm:$0xff]
    %v5155 = vld [vmem:[#allocation45 + $0x418] sm:$0xff]
    %v5156 = vld [vmem:[#allocation45 + $0x420] sm:$0xff]
    %v5157 = vld [vmem:[#allocation45 + $0x428] sm:$0xff]
    %v5158 = vld [vmem:[#allocation45 + $0x430] sm:$0xff]
    %v5159 = vld [vmem:[#allocation45 + $0x438] sm:$0xff]
    %v5160 = vld [vmem:[#allocation45 + $0x440] sm:$0xff]
    %v5161 = vld [vmem:[#allocation45 + $0x448] sm:$0xff]
    %v5162 = vld [vmem:[#allocation45 + $0x450] sm:$0xff]
    %v5163 = vld [vmem:[#allocation45 + $0x458] sm:$0xff]
    %v5164 = vld [vmem:[#allocation45 + $0x460] sm:$0xff]
    %v5165 = vld [vmem:[#allocation45 + $0x468] sm:$0xff]
    %v5166 = vld [vmem:[#allocation45 + $0x470] sm:$0xff]
    %v5167 = vld [vmem:[#allocation45 + $0x478] sm:$0xff]
    %v5168 = vld [vmem:[#allocation45 + $0x480] sm:$0xff]
    %v5169 = vld [vmem:[#allocation45 + $0x488] sm:$0xff]
    %v5170 = vld [vmem:[#allocation45 + $0x490] sm:$0xff]
    %v5171 = vld [vmem:[#allocation45 + $0x498] sm:$0xff]
    %v5172 = vld [vmem:[#allocation45 + $0x4a0] sm:$0xff]
    %v5173 = vld [vmem:[#allocation45 + $0x4a8] sm:$0xff]
    %v5174 = vld [vmem:[#allocation45 + $0x4b0] sm:$0xff]
    %v5175 = vld [vmem:[#allocation45 + $0x4b8] sm:$0xff]
    %v5176 = vld [vmem:[#allocation45 + $0x4c0] sm:$0xff]
    %v5177 = vld [vmem:[#allocation45 + $0x4c8] sm:$0xff]
    %v5178 = vld [vmem:[#allocation45 + $0x4d0] sm:$0xff]
    %v5179 = vld [vmem:[#allocation45 + $0x4d8] sm:$0xff]
    %v5180 = vld [vmem:[#allocation45 + $0x4e0] sm:$0xff]
    %v5181 = vld [vmem:[#allocation45 + $0x4e8] sm:$0xff]
    %v5182 = vld [vmem:[#allocation45 + $0x4f0] sm:$0xff]
    %v5183 = vld [vmem:[#allocation45 + $0x4f8] sm:$0xff]
    %v5184 = vld [vmem:[#allocation45 + $0x500] sm:$0xff]
    %v5185 = vld [vmem:[#allocation45 + $0x508] sm:$0xff]
    %v5186 = vld [vmem:[#allocation45 + $0x510] sm:$0xff]
    %v5187 = vld [vmem:[#allocation45 + $0x518] sm:$0xff]
    %v5188 = vld [vmem:[#allocation45 + $0x520] sm:$0xff]
    %v5189 = vld [vmem:[#allocation45 + $0x528] sm:$0xff]
    %v5190 = vld [vmem:[#allocation45 + $0x530] sm:$0xff]
    %v5191 = vld [vmem:[#allocation45 + $0x538] sm:$0xff]
    %v5192 = vld [vmem:[#allocation45 + $0x540] sm:$0xff]
    %v5193 = vld [vmem:[#allocation45 + $0x548] sm:$0xff]
    %v5194 = vld [vmem:[#allocation45 + $0x550] sm:$0xff]
    %v5195 = vld [vmem:[#allocation45 + $0x558] sm:$0xff]
    %v5196 = vld [vmem:[#allocation45 + $0x560] sm:$0xff]
    %v5197 = vld [vmem:[#allocation45 + $0x568] sm:$0xff]
    %v5198 = vld [vmem:[#allocation45 + $0x570] sm:$0xff]
    %v5199 = vld [vmem:[#allocation45 + $0x578] sm:$0xff]
    %v5200 = vld [vmem:[#allocation45 + $0x580] sm:$0xff]
    %v5201 = vld [vmem:[#allocation45 + $0x588] sm:$0xff]
    %v5202 = vld [vmem:[#allocation45 + $0x590] sm:$0xff]
    %v5203 = vld [vmem:[#allocation45 + $0x598] sm:$0xff]
    %v5204 = vld [vmem:[#allocation45 + $0x5a0] sm:$0xff]
    %v5205 = vld [vmem:[#allocation45 + $0x5a8] sm:$0xff]
    %v5206 = vld [vmem:[#allocation45 + $0x5b0] sm:$0xff]
    %v5207 = vld [vmem:[#allocation45 + $0x5b8] sm:$0xff]
    %v5208 = vld [vmem:[#allocation45 + $0x5c0] sm:$0xff]
    %v5209 = vld [vmem:[#allocation45 + $0x5c8] sm:$0xff]
    %v5210 = vld [vmem:[#allocation45 + $0x5d0] sm:$0xff]
    %v5211 = vld [vmem:[#allocation45 + $0x5d8] sm:$0xff]
    %v5212 = vld [vmem:[#allocation45 + $0x5e0] sm:$0xff]
    %v5213 = vld [vmem:[#allocation45 + $0x5e8] sm:$0xff]
    %v5214 = vld [vmem:[#allocation45 + $0x5f0] sm:$0xff]
    %v5215 = vld [vmem:[#allocation45 + $0x5f8] sm:$0xff]
    %v5216 = vld [vmem:[#allocation46] sm:$0xf]
    %v5218 = vlaneseq
    %v5219 = vshrl.u32 %v5218, 7
    %v5220 = vsub.s32 0, %v5219
    %v5221 = vrot.slane %v5216, %v5220
    %v5222 = vlaneseq
    %v5223 = vshrl.u32 %v5222, 7
    %v5224 = vsub.s32 1, %v5223
    %v5225 = vrot.slane %v5216, %v5224
    %v5226 = vlaneseq
    %v5227 = vshrl.u32 %v5226, 7
    %v5228 = vsub.s32 2, %v5227
    %v5229 = vrot.slane %v5216, %v5228
    %v5230 = vlaneseq
    %v5231 = vshrl.u32 %v5230, 7
    %v5232 = vsub.s32 3, %v5231
    %v5233 = vrot.slane %v5216, %v5232
    %v5430 = vunpack.c.l.b16 %v5024
    %v5431 = vunpack.c.h.b16 %v5024
    %v5432 = vunpack.c.l.b16 %v5025
    %v5433 = vunpack.c.h.b16 %v5025
    %v5434 = vunpack.c.l.b16 %v5026
    %v5435 = vunpack.c.h.b16 %v5026
    %v5436 = vunpack.c.l.b16 %v5027
    %v5437 = vunpack.c.h.b16 %v5027
    %v5438 = vunpack.c.l.b16 %v5028
    %v5439 = vunpack.c.h.b16 %v5028
    %v5440 = vunpack.c.l.b16 %v5029
    %v5441 = vunpack.c.h.b16 %v5029
    %v5442 = vunpack.c.l.b16 %v5030
    %v5443 = vunpack.c.h.b16 %v5030
    %v5444 = vunpack.c.l.b16 %v5031
    %v5445 = vunpack.c.h.b16 %v5031
    %v5446 = vunpack.c.l.b16 %v5032
    %v5447 = vunpack.c.h.b16 %v5032
    %v5448 = vunpack.c.l.b16 %v5033
    %v5449 = vunpack.c.h.b16 %v5033
    %v5450 = vunpack.c.l.b16 %v5034
    %v5451 = vunpack.c.h.b16 %v5034
    %v5452 = vunpack.c.l.b16 %v5035
    %v5453 = vunpack.c.h.b16 %v5035
    %v5454 = vunpack.c.l.b16 %v5036
    %v5455 = vunpack.c.h.b16 %v5036
    %v5456 = vunpack.c.l.b16 %v5037
    %v5457 = vunpack.c.h.b16 %v5037
    %v5458 = vunpack.c.l.b16 %v5038
    %v5459 = vunpack.c.h.b16 %v5038
    %v5460 = vunpack.c.l.b16 %v5039
    %v5461 = vunpack.c.h.b16 %v5039
    %v5462 = vunpack.c.l.b16 %v5040
    %v5463 = vunpack.c.h.b16 %v5040
    %v5464 = vunpack.c.l.b16 %v5041
    %v5465 = vunpack.c.h.b16 %v5041
    %v5466 = vunpack.c.l.b16 %v5042
    %v5467 = vunpack.c.h.b16 %v5042
    %v5468 = vunpack.c.l.b16 %v5043
    %v5469 = vunpack.c.h.b16 %v5043
    %v5470 = vunpack.c.l.b16 %v5044
    %v5471 = vunpack.c.h.b16 %v5044
    %v5472 = vunpack.c.l.b16 %v5045
    %v5473 = vunpack.c.h.b16 %v5045
    %v5474 = vunpack.c.l.b16 %v5046
    %v5475 = vunpack.c.h.b16 %v5046
    %v5476 = vunpack.c.l.b16 %v5047
    %v5477 = vunpack.c.h.b16 %v5047
    %v5478 = vunpack.c.l.b16 %v5048
    %v5479 = vunpack.c.h.b16 %v5048
    %v5480 = vunpack.c.l.b16 %v5049
    %v5481 = vunpack.c.h.b16 %v5049
    %v5482 = vunpack.c.l.b16 %v5050
    %v5483 = vunpack.c.h.b16 %v5050
    %v5484 = vunpack.c.l.b16 %v5051
    %v5485 = vunpack.c.h.b16 %v5051
    %v5486 = vunpack.c.l.b16 %v5052
    %v5487 = vunpack.c.h.b16 %v5052
    %v5488 = vunpack.c.l.b16 %v5053
    %v5489 = vunpack.c.h.b16 %v5053
    %v5490 = vunpack.c.l.b16 %v5054
    %v5491 = vunpack.c.h.b16 %v5054
    %v5492 = vunpack.c.l.b16 %v5055
    %v5493 = vunpack.c.h.b16 %v5055
    %v5494 = vunpack.c.l.b16 %v5056
    %v5495 = vunpack.c.h.b16 %v5056
    %v5496 = vunpack.c.l.b16 %v5057
    %v5497 = vunpack.c.h.b16 %v5057
    %v5498 = vunpack.c.l.b16 %v5058
    %v5499 = vunpack.c.h.b16 %v5058
    %v5500 = vunpack.c.l.b16 %v5059
    %v5501 = vunpack.c.h.b16 %v5059
    %v5502 = vunpack.c.l.b16 %v5060
    %v5503 = vunpack.c.h.b16 %v5060
    %v5504 = vunpack.c.l.b16 %v5061
    %v5505 = vunpack.c.h.b16 %v5061
    %v5506 = vunpack.c.l.b16 %v5062
    %v5507 = vunpack.c.h.b16 %v5062
    %v5508 = vunpack.c.l.b16 %v5063
    %v5509 = vunpack.c.h.b16 %v5063
    %v5510 = vunpack.c.l.b16 %v5064
    %v5511 = vunpack.c.h.b16 %v5064
    %v5512 = vunpack.c.l.b16 %v5065
    %v5513 = vunpack.c.h.b16 %v5065
    %v5514 = vunpack.c.l.b16 %v5066
    %v5515 = vunpack.c.h.b16 %v5066
    %v5516 = vunpack.c.l.b16 %v5067
    %v5517 = vunpack.c.h.b16 %v5067
    %v5518 = vunpack.c.l.b16 %v5068
    %v5519 = vunpack.c.h.b16 %v5068
    %v5520 = vunpack.c.l.b16 %v5069
    %v5521 = vunpack.c.h.b16 %v5069
    %v5522 = vunpack.c.l.b16 %v5070
    %v5523 = vunpack.c.h.b16 %v5070
    %v5524 = vunpack.c.l.b16 %v5071
    %v5525 = vunpack.c.h.b16 %v5071
    %v5526 = vunpack.c.l.b16 %v5072
    %v5527 = vunpack.c.h.b16 %v5072
    %v5528 = vunpack.c.l.b16 %v5073
    %v5529 = vunpack.c.h.b16 %v5073
    %v5530 = vunpack.c.l.b16 %v5074
    %v5531 = vunpack.c.h.b16 %v5074
    %v5532 = vunpack.c.l.b16 %v5075
    %v5533 = vunpack.c.h.b16 %v5075
    %v5534 = vunpack.c.l.b16 %v5076
    %v5535 = vunpack.c.h.b16 %v5076
    %v5536 = vunpack.c.l.b16 %v5077
    %v5537 = vunpack.c.h.b16 %v5077
    %v5538 = vunpack.c.l.b16 %v5078
    %v5539 = vunpack.c.h.b16 %v5078
    %v5540 = vunpack.c.l.b16 %v5079
    %v5541 = vunpack.c.h.b16 %v5079
    %v5542 = vunpack.c.l.b16 %v5080
    %v5543 = vunpack.c.h.b16 %v5080
    %v5544 = vunpack.c.l.b16 %v5081
    %v5545 = vunpack.c.h.b16 %v5081
    %v5546 = vunpack.c.l.b16 %v5082
    %v5547 = vunpack.c.h.b16 %v5082
    %v5548 = vunpack.c.l.b16 %v5083
    %v5549 = vunpack.c.h.b16 %v5083
    %v5550 = vunpack.c.l.b16 %v5084
    %v5551 = vunpack.c.h.b16 %v5084
    %v5552 = vunpack.c.l.b16 %v5085
    %v5553 = vunpack.c.h.b16 %v5085
    %v5554 = vunpack.c.l.b16 %v5086
    %v5555 = vunpack.c.h.b16 %v5086
    %v5556 = vunpack.c.l.b16 %v5087
    %v5557 = vunpack.c.h.b16 %v5087
    %v5558 = vunpack.c.l.b16 %v5088
    %v5559 = vunpack.c.h.b16 %v5088
    %v5560 = vunpack.c.l.b16 %v5089
    %v5561 = vunpack.c.h.b16 %v5089
    %v5562 = vunpack.c.l.b16 %v5090
    %v5563 = vunpack.c.h.b16 %v5090
    %v5564 = vunpack.c.l.b16 %v5091
    %v5565 = vunpack.c.h.b16 %v5091
    %v5566 = vunpack.c.l.b16 %v5092
    %v5567 = vunpack.c.h.b16 %v5092
    %v5568 = vunpack.c.l.b16 %v5093
    %v5569 = vunpack.c.h.b16 %v5093
    %v5570 = vunpack.c.l.b16 %v5094
    %v5571 = vunpack.c.h.b16 %v5094
    %v5572 = vunpack.c.l.b16 %v5095
    %v5573 = vunpack.c.h.b16 %v5095
    %v5574 = vunpack.c.l.b16 %v5096
    %v5575 = vunpack.c.h.b16 %v5096
    %v5576 = vunpack.c.l.b16 %v5097
    %v5577 = vunpack.c.h.b16 %v5097
    %v5578 = vunpack.c.l.b16 %v5098
    %v5579 = vunpack.c.h.b16 %v5098
    %v5580 = vunpack.c.l.b16 %v5099
    %v5581 = vunpack.c.h.b16 %v5099
    %v5582 = vunpack.c.l.b16 %v5100
    %v5583 = vunpack.c.h.b16 %v5100
    %v5584 = vunpack.c.l.b16 %v5101
    %v5585 = vunpack.c.h.b16 %v5101
    %v5586 = vunpack.c.l.b16 %v5102
    %v5587 = vunpack.c.h.b16 %v5102
    %v5588 = vunpack.c.l.b16 %v5103
    %v5589 = vunpack.c.h.b16 %v5103
    %v5590 = vunpack.c.l.b16 %v5104
    %v5591 = vunpack.c.h.b16 %v5104
    %v5592 = vunpack.c.l.b16 %v5105
    %v5593 = vunpack.c.h.b16 %v5105
    %v5594 = vunpack.c.l.b16 %v5106
    %v5595 = vunpack.c.h.b16 %v5106
    %v5596 = vunpack.c.l.b16 %v5107
    %v5597 = vunpack.c.h.b16 %v5107
    %v5598 = vunpack.c.l.b16 %v5108
    %v5599 = vunpack.c.h.b16 %v5108
    %v5600 = vunpack.c.l.b16 %v5109
    %v5601 = vunpack.c.h.b16 %v5109
    %v5602 = vunpack.c.l.b16 %v5110
    %v5603 = vunpack.c.h.b16 %v5110
    %v5604 = vunpack.c.l.b16 %v5111
    %v5605 = vunpack.c.h.b16 %v5111
    %v5606 = vunpack.c.l.b16 %v5112
    %v5607 = vunpack.c.h.b16 %v5112
    %v5608 = vunpack.c.l.b16 %v5113
    %v5609 = vunpack.c.h.b16 %v5113
    %v5610 = vunpack.c.l.b16 %v5114
    %v5611 = vunpack.c.h.b16 %v5114
    %v5612 = vunpack.c.l.b16 %v5115
    %v5613 = vunpack.c.h.b16 %v5115
    %v5614 = vunpack.c.l.b16 %v5116
    %v5615 = vunpack.c.h.b16 %v5116
    %v5616 = vunpack.c.l.b16 %v5117
    %v5617 = vunpack.c.h.b16 %v5117
    %v5618 = vunpack.c.l.b16 %v5118
    %v5619 = vunpack.c.h.b16 %v5118
    %v5620 = vunpack.c.l.b16 %v5119
    %v5621 = vunpack.c.h.b16 %v5119
    %v5622 = vunpack.c.l.b16 %v5120
    %v5623 = vunpack.c.h.b16 %v5120
    %v5624 = vunpack.c.l.b16 %v5121
    %v5625 = vunpack.c.h.b16 %v5121
    %v5626 = vunpack.c.l.b16 %v5122
    %v5627 = vunpack.c.h.b16 %v5122
    %v5628 = vunpack.c.l.b16 %v5123
    %v5629 = vunpack.c.h.b16 %v5123
    %v5630 = vunpack.c.l.b16 %v5124
    %v5631 = vunpack.c.h.b16 %v5124
    %v5632 = vunpack.c.l.b16 %v5125
    %v5633 = vunpack.c.h.b16 %v5125
    %v5634 = vunpack.c.l.b16 %v5126
    %v5635 = vunpack.c.h.b16 %v5126
    %v5636 = vunpack.c.l.b16 %v5127
    %v5637 = vunpack.c.h.b16 %v5127
    %v5638 = vunpack.c.l.b16 %v5128
    %v5639 = vunpack.c.h.b16 %v5128
    %v5640 = vunpack.c.l.b16 %v5129
    %v5641 = vunpack.c.h.b16 %v5129
    %v5642 = vunpack.c.l.b16 %v5130
    %v5643 = vunpack.c.h.b16 %v5130
    %v5644 = vunpack.c.l.b16 %v5131
    %v5645 = vunpack.c.h.b16 %v5131
    %v5646 = vunpack.c.l.b16 %v5132
    %v5647 = vunpack.c.h.b16 %v5132
    %v5648 = vunpack.c.l.b16 %v5133
    %v5649 = vunpack.c.h.b16 %v5133
    %v5650 = vunpack.c.l.b16 %v5134
    %v5651 = vunpack.c.h.b16 %v5134
    %v5652 = vunpack.c.l.b16 %v5135
    %v5653 = vunpack.c.h.b16 %v5135
    %v5654 = vunpack.c.l.b16 %v5136
    %v5655 = vunpack.c.h.b16 %v5136
    %v5656 = vunpack.c.l.b16 %v5137
    %v5657 = vunpack.c.h.b16 %v5137
    %v5658 = vunpack.c.l.b16 %v5138
    %v5659 = vunpack.c.h.b16 %v5138
    %v5660 = vunpack.c.l.b16 %v5139
    %v5661 = vunpack.c.h.b16 %v5139
    %v5662 = vunpack.c.l.b16 %v5140
    %v5663 = vunpack.c.h.b16 %v5140
    %v5664 = vunpack.c.l.b16 %v5141
    %v5665 = vunpack.c.h.b16 %v5141
    %v5666 = vunpack.c.l.b16 %v5142
    %v5667 = vunpack.c.h.b16 %v5142
    %v5668 = vunpack.c.l.b16 %v5143
    %v5669 = vunpack.c.h.b16 %v5143
    %v5670 = vunpack.c.l.b16 %v5144
    %v5671 = vunpack.c.h.b16 %v5144
    %v5672 = vunpack.c.l.b16 %v5145
    %v5673 = vunpack.c.h.b16 %v5145
    %v5674 = vunpack.c.l.b16 %v5146
    %v5675 = vunpack.c.h.b16 %v5146
    %v5676 = vunpack.c.l.b16 %v5147
    %v5677 = vunpack.c.h.b16 %v5147
    %v5678 = vunpack.c.l.b16 %v5148
    %v5679 = vunpack.c.h.b16 %v5148
    %v5680 = vunpack.c.l.b16 %v5149
    %v5681 = vunpack.c.h.b16 %v5149
    %v5682 = vunpack.c.l.b16 %v5150
    %v5683 = vunpack.c.h.b16 %v5150
    %v5684 = vunpack.c.l.b16 %v5151
    %v5685 = vunpack.c.h.b16 %v5151
    %v5686 = vunpack.c.l.b16 %v5152
    %v5687 = vunpack.c.h.b16 %v5152
    %v5688 = vunpack.c.l.b16 %v5153
    %v5689 = vunpack.c.h.b16 %v5153
    %v5690 = vunpack.c.l.b16 %v5154
    %v5691 = vunpack.c.h.b16 %v5154
    %v5692 = vunpack.c.l.b16 %v5155
    %v5693 = vunpack.c.h.b16 %v5155
    %v5694 = vunpack.c.l.b16 %v5156
    %v5695 = vunpack.c.h.b16 %v5156
    %v5696 = vunpack.c.l.b16 %v5157
    %v5697 = vunpack.c.h.b16 %v5157
    %v5698 = vunpack.c.l.b16 %v5158
    %v5699 = vunpack.c.h.b16 %v5158
    %v5700 = vunpack.c.l.b16 %v5159
    %v5701 = vunpack.c.h.b16 %v5159
    %v5702 = vunpack.c.l.b16 %v5160
    %v5703 = vunpack.c.h.b16 %v5160
    %v5704 = vunpack.c.l.b16 %v5161
    %v5705 = vunpack.c.h.b16 %v5161
    %v5706 = vunpack.c.l.b16 %v5162
    %v5707 = vunpack.c.h.b16 %v5162
    %v5708 = vunpack.c.l.b16 %v5163
    %v5709 = vunpack.c.h.b16 %v5163
    %v5710 = vunpack.c.l.b16 %v5164
    %v5711 = vunpack.c.h.b16 %v5164
    %v5712 = vunpack.c.l.b16 %v5165
    %v5713 = vunpack.c.h.b16 %v5165
    %v5714 = vunpack.c.l.b16 %v5166
    %v5715 = vunpack.c.h.b16 %v5166
    %v5716 = vunpack.c.l.b16 %v5167
    %v5717 = vunpack.c.h.b16 %v5167
    %v5718 = vunpack.c.l.b16 %v5168
    %v5719 = vunpack.c.h.b16 %v5168
    %v5720 = vunpack.c.l.b16 %v5169
    %v5721 = vunpack.c.h.b16 %v5169
    %v5722 = vunpack.c.l.b16 %v5170
    %v5723 = vunpack.c.h.b16 %v5170
    %v5724 = vunpack.c.l.b16 %v5171
    %v5725 = vunpack.c.h.b16 %v5171
    %v5726 = vunpack.c.l.b16 %v5172
    %v5727 = vunpack.c.h.b16 %v5172
    %v5728 = vunpack.c.l.b16 %v5173
    %v5729 = vunpack.c.h.b16 %v5173
    %v5730 = vunpack.c.l.b16 %v5174
    %v5731 = vunpack.c.h.b16 %v5174
    %v5732 = vunpack.c.l.b16 %v5175
    %v5733 = vunpack.c.h.b16 %v5175
    %v5734 = vunpack.c.l.b16 %v5176
    %v5735 = vunpack.c.h.b16 %v5176
    %v5736 = vunpack.c.l.b16 %v5177
    %v5737 = vunpack.c.h.b16 %v5177
    %v5738 = vunpack.c.l.b16 %v5178
    %v5739 = vunpack.c.h.b16 %v5178
    %v5740 = vunpack.c.l.b16 %v5179
    %v5741 = vunpack.c.h.b16 %v5179
    %v5742 = vunpack.c.l.b16 %v5180
    %v5743 = vunpack.c.h.b16 %v5180
    %v5744 = vunpack.c.l.b16 %v5181
    %v5745 = vunpack.c.h.b16 %v5181
    %v5746 = vunpack.c.l.b16 %v5182
    %v5747 = vunpack.c.h.b16 %v5182
    %v5748 = vunpack.c.l.b16 %v5183
    %v5749 = vunpack.c.h.b16 %v5183
    %v5750 = vunpack.c.l.b16 %v5184
    %v5751 = vunpack.c.h.b16 %v5184
    %v5752 = vunpack.c.l.b16 %v5185
    %v5753 = vunpack.c.h.b16 %v5185
    %v5754 = vunpack.c.l.b16 %v5186
    %v5755 = vunpack.c.h.b16 %v5186
    %v5756 = vunpack.c.l.b16 %v5187
    %v5757 = vunpack.c.h.b16 %v5187
    %v5758 = vunpack.c.l.b16 %v5188
    %v5759 = vunpack.c.h.b16 %v5188
    %v5760 = vunpack.c.l.b16 %v5189
    %v5761 = vunpack.c.h.b16 %v5189
    %v5762 = vunpack.c.l.b16 %v5190
    %v5763 = vunpack.c.h.b16 %v5190
    %v5764 = vunpack.c.l.b16 %v5191
    %v5765 = vunpack.c.h.b16 %v5191
    %v5766 = vunpack.c.l.b16 %v5192
    %v5767 = vunpack.c.h.b16 %v5192
    %v5768 = vunpack.c.l.b16 %v5193
    %v5769 = vunpack.c.h.b16 %v5193
    %v5770 = vunpack.c.l.b16 %v5194
    %v5771 = vunpack.c.h.b16 %v5194
    %v5772 = vunpack.c.l.b16 %v5195
    %v5773 = vunpack.c.h.b16 %v5195
    %v5774 = vunpack.c.l.b16 %v5196
    %v5775 = vunpack.c.h.b16 %v5196
    %v5776 = vunpack.c.l.b16 %v5197
    %v5777 = vunpack.c.h.b16 %v5197
    %v5778 = vunpack.c.l.b16 %v5198
    %v5779 = vunpack.c.h.b16 %v5198
    %v5780 = vunpack.c.l.b16 %v5199
    %v5781 = vunpack.c.h.b16 %v5199
    %v5782 = vunpack.c.l.b16 %v5200
    %v5783 = vunpack.c.h.b16 %v5200
    %v5784 = vunpack.c.l.b16 %v5201
    %v5785 = vunpack.c.h.b16 %v5201
    %v5786 = vunpack.c.l.b16 %v5202
    %v5787 = vunpack.c.h.b16 %v5202
    %v5788 = vunpack.c.l.b16 %v5203
    %v5789 = vunpack.c.h.b16 %v5203
    %v5790 = vunpack.c.l.b16 %v5204
    %v5791 = vunpack.c.h.b16 %v5204
    %v5792 = vunpack.c.l.b16 %v5205
    %v5793 = vunpack.c.h.b16 %v5205
    %v5794 = vunpack.c.l.b16 %v5206
    %v5795 = vunpack.c.h.b16 %v5206
    %v5796 = vunpack.c.l.b16 %v5207
    %v5797 = vunpack.c.h.b16 %v5207
    %v5798 = vunpack.c.l.b16 %v5208
    %v5799 = vunpack.c.h.b16 %v5208
    %v5800 = vunpack.c.l.b16 %v5209
    %v5801 = vunpack.c.h.b16 %v5209
    %v5802 = vunpack.c.l.b16 %v5210
    %v5803 = vunpack.c.h.b16 %v5210
    %v5804 = vunpack.c.l.b16 %v5211
    %v5805 = vunpack.c.h.b16 %v5211
    %v5806 = vunpack.c.l.b16 %v5212
    %v5807 = vunpack.c.h.b16 %v5212
    %v5808 = vunpack.c.l.b16 %v5213
    %v5809 = vunpack.c.h.b16 %v5213
    %v5810 = vunpack.c.l.b16 %v5214
    %v5811 = vunpack.c.h.b16 %v5214
    %v5812 = vunpack.c.l.b16 %v5215
    %v5813 = vunpack.c.h.b16 %v5215
    %v5814 = vpack.c.b16 %v5434, %v5430
    %v5815 = vpack.c.b16 %v5435, %v5431
    %v5816 = vpack.c.b16 %v5436, %v5432
    %v5817 = vpack.c.b16 %v5437, %v5433
    %v5818 = vpack.c.b16 %v5442, %v5438
    %v5819 = vpack.c.b16 %v5443, %v5439
    %v5820 = vpack.c.b16 %v5444, %v5440
    %v5821 = vpack.c.b16 %v5445, %v5441
    %v5822 = vpack.c.b16 %v5450, %v5446
    %v5823 = vpack.c.b16 %v5451, %v5447
    %v5824 = vpack.c.b16 %v5452, %v5448
    %v5825 = vpack.c.b16 %v5453, %v5449
    %v5826 = vpack.c.b16 %v5458, %v5454
    %v5827 = vpack.c.b16 %v5459, %v5455
    %v5828 = vpack.c.b16 %v5460, %v5456
    %v5829 = vpack.c.b16 %v5461, %v5457
    %v5830 = vpack.c.b16 %v5466, %v5462
    %v5831 = vpack.c.b16 %v5467, %v5463
    %v5832 = vpack.c.b16 %v5468, %v5464
    %v5833 = vpack.c.b16 %v5469, %v5465
    %v5834 = vpack.c.b16 %v5474, %v5470
    %v5835 = vpack.c.b16 %v5475, %v5471
    %v5836 = vpack.c.b16 %v5476, %v5472
    %v5837 = vpack.c.b16 %v5477, %v5473
    %v5838 = vpack.c.b16 %v5482, %v5478
    %v5839 = vpack.c.b16 %v5483, %v5479
    %v5840 = vpack.c.b16 %v5484, %v5480
    %v5841 = vpack.c.b16 %v5485, %v5481
    %v5842 = vpack.c.b16 %v5490, %v5486
    %v5843 = vpack.c.b16 %v5491, %v5487
    %v5844 = vpack.c.b16 %v5492, %v5488
    %v5845 = vpack.c.b16 %v5493, %v5489
    %v5846 = vpack.c.b16 %v5498, %v5494
    %v5847 = vpack.c.b16 %v5499, %v5495
    %v5848 = vpack.c.b16 %v5500, %v5496
    %v5849 = vpack.c.b16 %v5501, %v5497
    %v5850 = vpack.c.b16 %v5506, %v5502
    %v5851 = vpack.c.b16 %v5507, %v5503
    %v5852 = vpack.c.b16 %v5508, %v5504
    %v5853 = vpack.c.b16 %v5509, %v5505
    %v5854 = vpack.c.b16 %v5514, %v5510
    %v5855 = vpack.c.b16 %v5515, %v5511
    %v5856 = vpack.c.b16 %v5516, %v5512
    %v5857 = vpack.c.b16 %v5517, %v5513
    %v5858 = vpack.c.b16 %v5522, %v5518
    %v5859 = vpack.c.b16 %v5523, %v5519
    %v5860 = vpack.c.b16 %v5524, %v5520
    %v5861 = vpack.c.b16 %v5525, %v5521
    %v5862 = vpack.c.b16 %v5530, %v5526
    %v5863 = vpack.c.b16 %v5531, %v5527
    %v5864 = vpack.c.b16 %v5532, %v5528
    %v5865 = vpack.c.b16 %v5533, %v5529
    %v5866 = vpack.c.b16 %v5538, %v5534
    %v5867 = vpack.c.b16 %v5539, %v5535
    %v5868 = vpack.c.b16 %v5540, %v5536
    %v5869 = vpack.c.b16 %v5541, %v5537
    %v5870 = vpack.c.b16 %v5546, %v5542
    %v5871 = vpack.c.b16 %v5547, %v5543
    %v5872 = vpack.c.b16 %v5548, %v5544
    %v5873 = vpack.c.b16 %v5549, %v5545
    %v5874 = vpack.c.b16 %v5554, %v5550
    %v5875 = vpack.c.b16 %v5555, %v5551
    %v5876 = vpack.c.b16 %v5556, %v5552
    %v5877 = vpack.c.b16 %v5557, %v5553
    %v5878 = vpack.c.b16 %v5562, %v5558
    %v5879 = vpack.c.b16 %v5563, %v5559
    %v5880 = vpack.c.b16 %v5564, %v5560
    %v5881 = vpack.c.b16 %v5565, %v5561
    %v5882 = vpack.c.b16 %v5570, %v5566
    %v5883 = vpack.c.b16 %v5571, %v5567
    %v5884 = vpack.c.b16 %v5572, %v5568
    %v5885 = vpack.c.b16 %v5573, %v5569
    %v5886 = vpack.c.b16 %v5578, %v5574
    %v5887 = vpack.c.b16 %v5579, %v5575
    %v5888 = vpack.c.b16 %v5580, %v5576
    %v5889 = vpack.c.b16 %v5581, %v5577
    %v5890 = vpack.c.b16 %v5586, %v5582
    %v5891 = vpack.c.b16 %v5587, %v5583
    %v5892 = vpack.c.b16 %v5588, %v5584
    %v5893 = vpack.c.b16 %v5589, %v5585
    %v5894 = vpack.c.b16 %v5594, %v5590
    %v5895 = vpack.c.b16 %v5595, %v5591
    %v5896 = vpack.c.b16 %v5596, %v5592
    %v5897 = vpack.c.b16 %v5597, %v5593
    %v5898 = vpack.c.b16 %v5602, %v5598
    %v5899 = vpack.c.b16 %v5603, %v5599
    %v5900 = vpack.c.b16 %v5604, %v5600
    %v5901 = vpack.c.b16 %v5605, %v5601
    %v5902 = vpack.c.b16 %v5610, %v5606
    %v5903 = vpack.c.b16 %v5611, %v5607
    %v5904 = vpack.c.b16 %v5612, %v5608
    %v5905 = vpack.c.b16 %v5613, %v5609
    %v5906 = vpack.c.b16 %v5618, %v5614
    %v5907 = vpack.c.b16 %v5619, %v5615
    %v5908 = vpack.c.b16 %v5620, %v5616
    %v5909 = vpack.c.b16 %v5621, %v5617
    %v5910 = vpack.c.b16 %v5626, %v5622
    %v5911 = vpack.c.b16 %v5627, %v5623
    %v5912 = vpack.c.b16 %v5628, %v5624
    %v5913 = vpack.c.b16 %v5629, %v5625
    %v5914 = vpack.c.b16 %v5634, %v5630
    %v5915 = vpack.c.b16 %v5635, %v5631
    %v5916 = vpack.c.b16 %v5636, %v5632
    %v5917 = vpack.c.b16 %v5637, %v5633
    %v5918 = vpack.c.b16 %v5642, %v5638
    %v5919 = vpack.c.b16 %v5643, %v5639
    %v5920 = vpack.c.b16 %v5644, %v5640
    %v5921 = vpack.c.b16 %v5645, %v5641
    %v5922 = vpack.c.b16 %v5650, %v5646
    %v5923 = vpack.c.b16 %v5651, %v5647
    %v5924 = vpack.c.b16 %v5652, %v5648
    %v5925 = vpack.c.b16 %v5653, %v5649
    %v5926 = vpack.c.b16 %v5658, %v5654
    %v5927 = vpack.c.b16 %v5659, %v5655
    %v5928 = vpack.c.b16 %v5660, %v5656
    %v5929 = vpack.c.b16 %v5661, %v5657
    %v5930 = vpack.c.b16 %v5666, %v5662
    %v5931 = vpack.c.b16 %v5667, %v5663
    %v5932 = vpack.c.b16 %v5668, %v5664
    %v5933 = vpack.c.b16 %v5669, %v5665
    %v5934 = vpack.c.b16 %v5674, %v5670
    %v5935 = vpack.c.b16 %v5675, %v5671
    %v5936 = vpack.c.b16 %v5676, %v5672
    %v5937 = vpack.c.b16 %v5677, %v5673
    %v5938 = vpack.c.b16 %v5682, %v5678
    %v5939 = vpack.c.b16 %v5683, %v5679
    %v5940 = vpack.c.b16 %v5684, %v5680
    %v5941 = vpack.c.b16 %v5685, %v5681
    %v5942 = vpack.c.b16 %v5690, %v5686
    %v5943 = vpack.c.b16 %v5691, %v5687
    %v5944 = vpack.c.b16 %v5692, %v5688
    %v5945 = vpack.c.b16 %v5693, %v5689
    %v5946 = vpack.c.b16 %v5698, %v5694
    %v5947 = vpack.c.b16 %v5699, %v5695
    %v5948 = vpack.c.b16 %v5700, %v5696
    %v5949 = vpack.c.b16 %v5701, %v5697
    %v5950 = vpack.c.b16 %v5706, %v5702
    %v5951 = vpack.c.b16 %v5707, %v5703
    %v5952 = vpack.c.b16 %v5708, %v5704
    %v5953 = vpack.c.b16 %v5709, %v5705
    %v5954 = vpack.c.b16 %v5714, %v5710
    %v5955 = vpack.c.b16 %v5715, %v5711
    %v5956 = vpack.c.b16 %v5716, %v5712
    %v5957 = vpack.c.b16 %v5717, %v5713
    %v5958 = vpack.c.b16 %v5722, %v5718
    %v5959 = vpack.c.b16 %v5723, %v5719
    %v5960 = vpack.c.b16 %v5724, %v5720
    %v5961 = vpack.c.b16 %v5725, %v5721
    %v5962 = vpack.c.b16 %v5730, %v5726
    %v5963 = vpack.c.b16 %v5731, %v5727
    %v5964 = vpack.c.b16 %v5732, %v5728
    %v5965 = vpack.c.b16 %v5733, %v5729
    %v5966 = vpack.c.b16 %v5738, %v5734
    %v5967 = vpack.c.b16 %v5739, %v5735
    %v5968 = vpack.c.b16 %v5740, %v5736
    %v5969 = vpack.c.b16 %v5741, %v5737
    %v5970 = vpack.c.b16 %v5746, %v5742
    %v5971 = vpack.c.b16 %v5747, %v5743
    %v5972 = vpack.c.b16 %v5748, %v5744
    %v5973 = vpack.c.b16 %v5749, %v5745
    %v5974 = vpack.c.b16 %v5754, %v5750
    %v5975 = vpack.c.b16 %v5755, %v5751
    %v5976 = vpack.c.b16 %v5756, %v5752
    %v5977 = vpack.c.b16 %v5757, %v5753
    %v5978 = vpack.c.b16 %v5762, %v5758
    %v5979 = vpack.c.b16 %v5763, %v5759
    %v5980 = vpack.c.b16 %v5764, %v5760
    %v5981 = vpack.c.b16 %v5765, %v5761
    %v5982 = vpack.c.b16 %v5770, %v5766
    %v5983 = vpack.c.b16 %v5771, %v5767
    %v5984 = vpack.c.b16 %v5772, %v5768
    %v5985 = vpack.c.b16 %v5773, %v5769
    %v5986 = vpack.c.b16 %v5778, %v5774
    %v5987 = vpack.c.b16 %v5779, %v5775
    %v5988 = vpack.c.b16 %v5780, %v5776
    %v5989 = vpack.c.b16 %v5781, %v5777
    %v5990 = vpack.c.b16 %v5786, %v5782
    %v5991 = vpack.c.b16 %v5787, %v5783
    %v5992 = vpack.c.b16 %v5788, %v5784
    %v5993 = vpack.c.b16 %v5789, %v5785
    %v5994 = vpack.c.b16 %v5794, %v5790
    %v5995 = vpack.c.b16 %v5795, %v5791
    %v5996 = vpack.c.b16 %v5796, %v5792
    %v5997 = vpack.c.b16 %v5797, %v5793
    %v5998 = vpack.c.b16 %v5802, %v5798
    %v5999 = vpack.c.b16 %v5803, %v5799
    %v6000 = vpack.c.b16 %v5804, %v5800
    %v6001 = vpack.c.b16 %v5805, %v5801
    %v6002 = vpack.c.b16 %v5810, %v5806
    %v6003 = vpack.c.b16 %v5811, %v5807
    %v6004 = vpack.c.b16 %v5812, %v5808
    %v6005 = vpack.c.b16 %v5813, %v5809
    %6198 = vmatprep.subr.bf16.mxu0 %v5815
    %6199 = vmatpush1.bf16.msra.mxu0 %v5814
    %6200 = vmatprep.subr.bf16.mxu0 %v5819
    %6201 = vmatpush1.bf16.msra.mxu0 %v5818
    %6202 = vmatprep.subr.bf16.mxu0 %v5823
    %6203 = vmatpush1.bf16.msra.mxu0 %v5822
    %6204 = vmatprep.subr.bf16.mxu0 %v5827
    %6205 = vmatpush1.bf16.msra.mxu0 %v5826
    %6206 = vmatprep.subr.bf16.mxu0 %v5831
    %6207 = vmatpush1.bf16.msra.mxu0 %v5830
    %6208 = vmatprep.subr.bf16.mxu0 %v5835
    %6209 = vmatpush1.bf16.msra.mxu0 %v5834
    %6210 = vmatprep.subr.bf16.mxu0 %v5839
    %6211 = vmatpush1.bf16.msra.mxu0 %v5838
    %6212 = vmatprep.subr.bf16.mxu0 %v5843
    %6213 = vmatpush1.bf16.msra.mxu0 %v5842
    %6214 = vmatprep.subr.bf16.mxu0 %v5847
    %6215 = vmatpush1.bf16.msra.mxu0 %v5846
    %6216 = vmatprep.subr.bf16.mxu0 %v5851
    %6217 = vmatpush1.bf16.msra.mxu0 %v5850
    %6218 = vmatprep.subr.bf16.mxu0 %v5855
    %6219 = vmatpush1.bf16.msra.mxu0 %v5854
    %6220 = vmatprep.subr.bf16.mxu0 %v5859
    %6221 = vmatpush1.bf16.msra.mxu0 %v5858
    %6222 = vmatprep.subr.bf16.mxu0 %v5863
    %6223 = vmatpush1.bf16.msra.mxu0 %v5862
    %6224 = vmatprep.subr.bf16.mxu0 %v5867
    %6225 = vmatpush1.bf16.msra.mxu0 %v5866
    %6226 = vmatprep.subr.bf16.mxu0 %v5871
    %6227 = vmatpush1.bf16.msra.mxu0 %v5870
    %6228 = vmatprep.subr.bf16.mxu0 %v5875
    %6229 = vmatpush1.bf16.msra.mxu0 %v5874
    %6230 = vmatprep.mubr.bf16.mxu0 %v5019
    %6231 = vmatmul.mubr.bf16.gmra.mrb[0].mxu0 %v5018
    %v6232 = vpop.f32.mrb[0].mxu0
    %v6233 = vadd.f32 %v5221, %v6232
    %v6234 = vpop.f32.mrb[0].mxu0
    %v6235 = vadd.f32 %v5225, %v6234
    %v6236 = vpop.f32.mrb[0].mxu0
    %v6237 = vadd.f32 %v5221, %v6236
    %v6238 = vpop.f32.mrb[0].mxu0
    %v6239 = vadd.f32 %v5225, %v6238
    %6240 = vdwg.mxu0
    %6241 = vmatprep.subr.bf16.mxu0 %v5879
    %6242 = vmatpush1.bf16.msra.mxu0 %v5878
    %6243 = vmatprep.subr.bf16.mxu0 %v5883
    %6244 = vmatpush1.bf16.msra.mxu0 %v5882
    %6245 = vmatprep.subr.bf16.mxu0 %v5887
    %6246 = vmatpush1.bf16.msra.mxu0 %v5886
    %6247 = vmatprep.subr.bf16.mxu0 %v5891
    %6248 = vmatpush1.bf16.msra.mxu0 %v5890
    %6249 = vmatprep.subr.bf16.mxu0 %v5895
    %6250 = vmatpush1.bf16.msra.mxu0 %v5894
    %6251 = vmatprep.subr.bf16.mxu0 %v5899
    %6252 = vmatpush1.bf16.msra.mxu0 %v5898
    %6253 = vmatprep.subr.bf16.mxu0 %v5903
    %6254 = vmatpush1.bf16.msra.mxu0 %v5902
    %6255 = vmatprep.subr.bf16.mxu0 %v5907
    %6256 = vmatpush1.bf16.msra.mxu0 %v5906
    %6257 = vmatprep.subr.bf16.mxu0 %v5911
    %6258 = vmatpush1.bf16.msra.mxu0 %v5910
    %6259 = vmatprep.subr.bf16.mxu0 %v5915
    %6260 = vmatpush1.bf16.msra.mxu0 %v5914
    %6261 = vmatprep.subr.bf16.mxu0 %v5919
    %6262 = vmatpush1.bf16.msra.mxu0 %v5918
    %6263 = vmatprep.subr.bf16.mxu0 %v5923
    %6264 = vmatpush1.bf16.msra.mxu0 %v5922
    %6265 = vmatprep.subr.bf16.mxu0 %v5927
    %6266 = vmatpush1.bf16.msra.mxu0 %v5926
    %6267 = vmatprep.subr.bf16.mxu0 %v5931
    %6268 = vmatpush1.bf16.msra.mxu0 %v5930
    %6269 = vmatprep.subr.bf16.mxu0 %v5935
    %6270 = vmatpush1.bf16.msra.mxu0 %v5934
    %6271 = vmatprep.subr.bf16.mxu0 %v5939
    %6272 = vmatpush1.bf16.msra.mxu0 %v5938
    %6273 = vmatprep.mubr.bf16.mxu0 %v5021
    %6274 = vmatmul.mubr.bf16.gmra.mrb[0].mxu0 %v5020
    %v6275 = vpop.f32.mrb[0].mxu0
    %v6276 = vadd.f32 %v6233, %v6275
    %v6277 = vpop.f32.mrb[0].mxu0
    %v6278 = vadd.f32 %v6235, %v6277
    %v6279 = vpop.f32.mrb[0].mxu0
    %v6280 = vadd.f32 %v6237, %v6279
    %v6281 = vpop.f32.mrb[0].mxu0
    %v6282 = vadd.f32 %v6239, %v6281
    %6283 = vdwg.mxu0
    %6284 = vmatprep.subr.bf16.mxu0 %v5943
    %6285 = vmatpush1.bf16.msra.mxu0 %v5942
    %6286 = vmatprep.subr.bf16.mxu0 %v5947
    %6287 = vmatpush1.bf16.msra.mxu0 %v5946
    %6288 = vmatprep.subr.bf16.mxu0 %v5951
    %6289 = vmatpush1.bf16.msra.mxu0 %v5950
    %6290 = vmatprep.subr.bf16.mxu0 %v5955
    %6291 = vmatpush1.bf16.msra.mxu0 %v5954
    %6292 = vmatprep.subr.bf16.mxu0 %v5959
    %6293 = vmatpush1.bf16.msra.mxu0 %v5958
    %6294 = vmatprep.subr.bf16.mxu0 %v5963
    %6295 = vmatpush1.bf16.msra.mxu0 %v5962
    %6296 = vmatprep.subr.bf16.mxu0 %v5967
    %6297 = vmatpush1.bf16.msra.mxu0 %v5966
    %6298 = vmatprep.subr.bf16.mxu0 %v5971
    %6299 = vmatpush1.bf16.msra.mxu0 %v5970
    %6300 = vmatprep.subr.bf16.mxu0 %v5975
    %6301 = vmatpush1.bf16.msra.mxu0 %v5974
    %6302 = vmatprep.subr.bf16.mxu0 %v5979
    %6303 = vmatpush1.bf16.msra.mxu0 %v5978
    %6304 = vmatprep.subr.bf16.mxu0 %v5983
    %6305 = vmatpush1.bf16.msra.mxu0 %v5982
    %6306 = vmatprep.subr.bf16.mxu0 %v5987
    %6307 = vmatpush1.bf16.msra.mxu0 %v5986
    %6308 = vmatprep.subr.bf16.mxu0 %v5991
    %6309 = vmatpush1.bf16.msra.mxu0 %v5990
    %6310 = vmatprep.subr.bf16.mxu0 %v5995
    %6311 = vmatpush1.bf16.msra.mxu0 %v5994
    %6312 = vmatprep.subr.bf16.mxu0 %v5999
    %6313 = vmatpush1.bf16.msra.mxu0 %v5998
    %6314 = vmatprep.subr.bf16.mxu0 %v6003
    %6315 = vmatpush1.bf16.msra.mxu0 %v6002
    %6316 = vmatprep.mubr.bf16.mxu0 %v5023
    %6317 = vmatmul.mubr.bf16.gmra.mrb[0].mxu0 %v5022
    %v6318 = vpop.f32.mrb[0].mxu0
    %v6319 = vadd.f32 %v6276, %v6318
    %v6320 = vpop.f32.mrb[0].mxu0
    %v6321 = vadd.f32 %v6278, %v6320
    %v6322 = vpop.f32.mrb[0].mxu0
    %v6323 = vadd.f32 %v6280, %v6322
    %v6324 = vpop.f32.mrb[0].mxu0
    %v6325 = vadd.f32 %v6282, %v6324
    %6326 = vdwg.mxu0
    %6327 = vmatprep.subr.bf16.mxu0 %v5817
    %6328 = vmatpush1.bf16.msra.mxu0 %v5816
    %6329 = vmatprep.subr.bf16.mxu0 %v5821
    %6330 = vmatpush1.bf16.msra.mxu0 %v5820
    %6331 = vmatprep.subr.bf16.mxu0 %v5825
    %6332 = vmatpush1.bf16.msra.mxu0 %v5824
    %6333 = vmatprep.subr.bf16.mxu0 %v5829
    %6334 = vmatpush1.bf16.msra.mxu0 %v5828
    %6335 = vmatprep.subr.bf16.mxu0 %v5833
    %6336 = vmatpush1.bf16.msra.mxu0 %v5832
    %6337 = vmatprep.subr.bf16.mxu0 %v5837
    %6338 = vmatpush1.bf16.msra.mxu0 %v5836
    %6339 = vmatprep.subr.bf16.mxu0 %v5841
    %6340 = vmatpush1.bf16.msra.mxu0 %v5840
    %6341 = vmatprep.subr.bf16.mxu0 %v5845
    %6342 = vmatpush1.bf16.msra.mxu0 %v5844
    %6343 = vmatprep.subr.bf16.mxu0 %v5849
    %6344 = vmatpush1.bf16.msra.mxu0 %v5848
    %6345 = vmatprep.subr.bf16.mxu0 %v5853
    %6346 = vmatpush1.bf16.msra.mxu0 %v5852
    %6347 = vmatprep.subr.bf16.mxu0 %v5857
    %6348 = vmatpush1.bf16.msra.mxu0 %v5856
    %6349 = vmatprep.subr.bf16.mxu0 %v5861
    %6350 = vmatpush1.bf16.msra.mxu0 %v5860
    %6351 = vmatprep.subr.bf16.mxu0 %v5865
    %6352 = vmatpush1.bf16.msra.mxu0 %v5864
    %6353 = vmatprep.subr.bf16.mxu0 %v5869
    %6354 = vmatpush1.bf16.msra.mxu0 %v5868
    %6355 = vmatprep.subr.bf16.mxu0 %v5873
    %6356 = vmatpush1.bf16.msra.mxu0 %v5872
    %6357 = vmatprep.subr.bf16.mxu0 %v5877
    %6358 = vmatpush1.bf16.msra.mxu0 %v5876
    %6359 = vmatprep.mubr.bf16.mxu0 %v5019
    %6360 = vmatmul.mubr.bf16.gmra.mrb[0].mxu0 %v5018
    %v6361 = vpop.f32.mrb[0].mxu0
    %v6362 = vadd.f32 %v5229, %v6361
    %v6363 = vpop.f32.mrb[0].mxu0
    %v6364 = vadd.f32 %v5233, %v6363
    %v6365 = vpop.f32.mrb[0].mxu0
    %v6366 = vadd.f32 %v5229, %v6365
    %v6367 = vpop.f32.mrb[0].mxu0
    %v6368 = vadd.f32 %v5233, %v6367
    %6369 = vdwg.mxu0
    %6370 = vmatprep.subr.bf16.mxu0 %v5881
    %6371 = vmatpush1.bf16.msra.mxu0 %v5880
    %6372 = vmatprep.subr.bf16.mxu0 %v5885
    %6373 = vmatpush1.bf16.msra.mxu0 %v5884
    %6374 = vmatprep.subr.bf16.mxu0 %v5889
    %6375 = vmatpush1.bf16.msra.mxu0 %v5888
    %6376 = vmatprep.subr.bf16.mxu0 %v5893
    %6377 = vmatpush1.bf16.msra.mxu0 %v5892
    %6378 = vmatprep.subr.bf16.mxu0 %v5897
    %6379 = vmatpush1.bf16.msra.mxu0 %v5896
    %6380 = vmatprep.subr.bf16.mxu0 %v5901
    %6381 = vmatpush1.bf16.msra.mxu0 %v5900
    %6382 = vmatprep.subr.bf16.mxu0 %v5905
    %6383 = vmatpush1.bf16.msra.mxu0 %v5904
    %6384 = vmatprep.subr.bf16.mxu0 %v5909
    %6385 = vmatpush1.bf16.msra.mxu0 %v5908
    %6386 = vmatprep.subr.bf16.mxu0 %v5913
    %6387 = vmatpush1.bf16.msra.mxu0 %v5912
    %6388 = vmatprep.subr.bf16.mxu0 %v5917
    %6389 = vmatpush1.bf16.msra.mxu0 %v5916
    %6390 = vmatprep.subr.bf16.mxu0 %v5921
    %6391 = vmatpush1.bf16.msra.mxu0 %v5920
    %6392 = vmatprep.subr.bf16.mxu0 %v5925
    %6393 = vmatpush1.bf16.msra.mxu0 %v5924
    %6394 = vmatprep.subr.bf16.mxu0 %v5929
    %6395 = vmatpush1.bf16.msra.mxu0 %v5928
    %6396 = vmatprep.subr.bf16.mxu0 %v5933
    %6397 = vmatpush1.bf16.msra.mxu0 %v5932
    %6398 = vmatprep.subr.bf16.mxu0 %v5937
    %6399 = vmatpush1.bf16.msra.mxu0 %v5936
    %6400 = vmatprep.subr.bf16.mxu0 %v5941
    %6401 = vmatpush1.bf16.msra.mxu0 %v5940
    %6402 = vmatprep.mubr.bf16.mxu0 %v5021
    %6403 = vmatmul.mubr.bf16.gmra.mrb[0].mxu0 %v5020
    %v6404 = vpop.f32.mrb[0].mxu0
    %v6405 = vadd.f32 %v6362, %v6404
    %v6406 = vpop.f32.mrb[0].mxu0
    %v6407 = vadd.f32 %v6364, %v6406
    %v6408 = vpop.f32.mrb[0].mxu0
    %v6409 = vadd.f32 %v6366, %v6408
    %v6410 = vpop.f32.mrb[0].mxu0
    %v6411 = vadd.f32 %v6368, %v6410
    %6412 = vdwg.mxu0
    %6413 = vmatprep.subr.bf16.mxu0 %v5945
    %6414 = vmatpush1.bf16.msra.mxu0 %v5944
    %6415 = vmatprep.subr.bf16.mxu0 %v5949
    %6416 = vmatpush1.bf16.msra.mxu0 %v5948
    %6417 = vmatprep.subr.bf16.mxu0 %v5953
    %6418 = vmatpush1.bf16.msra.mxu0 %v5952
    %6419 = vmatprep.subr.bf16.mxu0 %v5957
    %6420 = vmatpush1.bf16.msra.mxu0 %v5956
    %6421 = vmatprep.subr.bf16.mxu0 %v5961
    %6422 = vmatpush1.bf16.msra.mxu0 %v5960
    %6423 = vmatprep.subr.bf16.mxu0 %v5965
    %6424 = vmatpush1.bf16.msra.mxu0 %v5964
    %6425 = vmatprep.subr.bf16.mxu0 %v5969
    %6426 = vmatpush1.bf16.msra.mxu0 %v5968
    %6427 = vmatprep.subr.bf16.mxu0 %v5973
    %6428 = vmatpush1.bf16.msra.mxu0 %v5972
    %6429 = vmatprep.subr.bf16.mxu0 %v5977
    %6430 = vmatpush1.bf16.msra.mxu0 %v5976
    %6431 = vmatprep.subr.bf16.mxu0 %v5981
    %6432 = vmatpush1.bf16.msra.mxu0 %v5980
    %6433 = vmatprep.subr.bf16.mxu0 %v5985
    %6434 = vmatpush1.bf16.msra.mxu0 %v5984
    %6435 = vmatprep.subr.bf16.mxu0 %v5989
    %6436 = vmatpush1.bf16.msra.mxu0 %v5988
    %6437 = vmatprep.subr.bf16.mxu0 %v5993
    %6438 = vmatpush1.bf16.msra.mxu0 %v5992
    %6439 = vmatprep.subr.bf16.mxu0 %v5997
    %6440 = vmatpush1.bf16.msra.mxu0 %v5996
    %6441 = vmatprep.subr.bf16.mxu0 %v6001
    %6442 = vmatpush1.bf16.msra.mxu0 %v6000
    %6443 = vmatprep.subr.bf16.mxu0 %v6005
    %6444 = vmatpush1.bf16.msra.mxu0 %v6004
    %6445 = vmatprep.mubr.bf16.mxu0 %v5023
    %6446 = vmatmul.mubr.bf16.gmra.mrb[0].mxu0 %v5022
    %v6447 = vpop.f32.mrb[0].mxu0
    %v6448 = vadd.f32 %v6405, %v6447
    %v6449 = vpop.f32.mrb[0].mxu0
    %v6450 = vadd.f32 %v6407, %v6449
    %v6451 = vpop.f32.mrb[0].mxu0
    %v6452 = vadd.f32 %v6409, %v6451
    %v6453 = vpop.f32.mrb[0].mxu0
    %v6454 = vadd.f32 %v6411, %v6453
    %6455 = vdwg.mxu0
    %v6456 = vmax.f32 %v6319, 0.0
    %v6457 = vmax.f32 %v6321, 0.0
    %v6458 = vmax.f32 %v6448, 0.0
    %v6459 = vmax.f32 %v6450, 0.0
    %v6460 = vmax.f32 %v6323, 0.0
    %v6461 = vmax.f32 %v6325, 0.0
    %v6462 = vmax.f32 %v6452, 0.0
    %v6463 = vmax.f32 %v6454, 0.0
    %vm6464 = vcmp.lt.s32.totalorder %v3627, 512
    %vm6465 = vmand %vm3628, %vm6464
    %s6466 = scalar_lea.vmem [#allocation6], 7
    %6467 = vst.msk [vmem:[%s6466] ss:$8 sm:$0xf] %vm6465, 0.0
    %6468 = vst.msk [vmem:[%s6466] ss:$8 sm:$0x0] %vm6465, 0.0
    %s6469 = scalar_lea.vmem [#allocation6], 103
    %6470 = vst.msk [vmem:[%s6469] ss:$8 sm:$0xf] %vm6465, 0.0
    %6471 = vst.msk [vmem:[%s6469] ss:$8 sm:$0x0] %vm6465, 0.0
    %s6472 = scalar_lea.vmem [#allocation6], 64
    %6473 = vst.msk [vmem:[%s6472] ss:$8 sm:$0xf] %vm6465, 0.0
    %6474 = vst.msk [vmem:[%s6472] ss:$8 sm:$0x0] %vm6465, 0.0
    %s6475 = scalar_lea.vmem [#allocation6], 160
    %6476 = vst.msk [vmem:[%s6475] ss:$8 sm:$0xf] %vm6465, 0.0
    %6477 = vst.msk [vmem:[%s6475] ss:$8 sm:$0x0] %vm6465, 0.0
    %6478 = vst [vmem:[#allocation6 + $0x20] sm:$0xff] %v6456
    %6479 = vst [vmem:[#allocation6 + $0x28] sm:$0xff] %v6457
    %6480 = vst [vmem:[#allocation6 + $0x30] sm:$0xff] %v6458
    %6481 = vst [vmem:[#allocation6 + $0x38] sm:$0xff] %v6459
    %6482 = vst [vmem:[#allocation6 + $0x80] sm:$0xff] %v6460
    %6483 = vst [vmem:[#allocation6 + $0x88] sm:$0xff] %v6461
    %6484 = vst [vmem:[#allocation6 + $0x90] sm:$0xff] %v6462
    %6485 = vst [vmem:[#allocation6 + $0x98] sm:$0xff] %v6463
    %v6486 = vld [vmem:[#allocation6] sm:$0x80]
    %v6487 = vld [vmem:[#allocation6 + $0x8] sm:$0x80]
    %v6488 = vld [vmem:[#allocation6 + $0x10] sm:$0x80]
    %v6489 = vld [vmem:[#allocation6 + $0x18] sm:$0x80]
    %v6490 = vld [vmem:[#allocation6 + $0x20] sm:$0x7f]
    %v6491 = vld [vmem:[#allocation6 + $0x28] sm:$0x7f]
    %v6492 = vld [vmem:[#allocation6 + $0x30] sm:$0x7f]
    %v6493 = vld [vmem:[#allocation6 + $0x38] sm:$0x7f]
    %v6494 = vld [vmem:[#allocation6 + $0x60] sm:$0x80]
    %v6495 = vld [vmem:[#allocation6 + $0x68] sm:$0x80]
    %v6496 = vld [vmem:[#allocation6 + $0x70] sm:$0x80]
    %v6497 = vld [vmem:[#allocation6 + $0x78] sm:$0x80]
    %v6498 = vld [vmem:[#allocation6 + $0x80] sm:$0x7f]
    %v6499 = vld [vmem:[#allocation6 + $0x88] sm:$0x7f]
    %v6500 = vld [vmem:[#allocation6 + $0x90] sm:$0x7f]
    %v6501 = vld [vmem:[#allocation6 + $0x98] sm:$0x7f]
    %v6502 = vld [vmem:[#allocation6 + $0x20] sm:$0xff]
    %v6503 = vld [vmem:[#allocation6 + $0x28] sm:$0xff]
    %v6504 = vld [vmem:[#allocation6 + $0x30] sm:$0xff]
    %v6505 = vld [vmem:[#allocation6 + $0x38] sm:$0xff]
    %v6506 = vld [vmem:[#allocation6 + $0x80] sm:$0xff]
    %v6507 = vld [vmem:[#allocation6 + $0x88] sm:$0xff]
    %v6508 = vld [vmem:[#allocation6 + $0x90] sm:$0xff]
    %v6509 = vld [vmem:[#allocation6 + $0x98] sm:$0xff]
    %v6510 = vld [vmem:[#allocation6 + $0x20] sm:$0xfe]
    %v6511 = vld [vmem:[#allocation6 + $0x28] sm:$0xfe]
    %v6512 = vld [vmem:[#allocation6 + $0x30] sm:$0xfe]
    %v6513 = vld [vmem:[#allocation6 + $0x38] sm:$0xfe]
    %v6514 = vld [vmem:[#allocation6 + $0x40] sm:$0x1]
    %v6515 = vld [vmem:[#allocation6 + $0x48] sm:$0x1]
    %v6516 = vld [vmem:[#allocation6 + $0x50] sm:$0x1]
    %v6517 = vld [vmem:[#allocation6 + $0x58] sm:$0x1]
    %v6518 = vld [vmem:[#allocation6 + $0x80] sm:$0xfe]
    %v6519 = vld [vmem:[#allocation6 + $0x88] sm:$0xfe]
    %v6520 = vld [vmem:[#allocation6 + $0x90] sm:$0xfe]
    %v6521 = vld [vmem:[#allocation6 + $0x98] sm:$0xfe]
    %v6522 = vld [vmem:[#allocation6 + $0xa0] sm:$0x1]
    %v6523 = vld [vmem:[#allocation6 + $0xa8] sm:$0x1]
    %v6524 = vld [vmem:[#allocation6 + $0xb0] sm:$0x1]
    %v6525 = vld [vmem:[#allocation6 + $0xb8] sm:$0x1]
    %v6534 = vrot.slane %v6502, 1
    %v6535 = vrot.slane %v6503, 1
    %v6536 = vrot.slane %v6504, 1
    %v6537 = vrot.slane %v6505, 1
    %v6538 = vrot.slane %v6506, 1
    %v6539 = vrot.slane %v6507, 1
    %v6540 = vrot.slane %v6508, 1
    %v6541 = vrot.slane %v6509, 1
    %v6558 = vrot.slane %v6510, 2
    %v6559 = vrot.slane %v6511, 2
    %v6560 = vrot.slane %v6512, 2
    %v6561 = vrot.slane %v6513, 2
    %v6562 = vrot.slane %v6514, 2
    %v6563 = vsel %vm3712, %v6558, %v6562
    %v6564 = vrot.slane %v6515, 2
    %v6565 = vsel %vm3712, %v6559, %v6564
    %v6566 = vrot.slane %v6516, 2
    %v6567 = vsel %vm3712, %v6560, %v6566
    %v6568 = vrot.slane %v6517, 2
    %v6569 = vsel %vm3712, %v6561, %v6568
    %v6570 = vrot.slane %v6518, 2
    %v6571 = vrot.slane %v6519, 2
    %v6572 = vrot.slane %v6520, 2
    %v6573 = vrot.slane %v6521, 2
    %v6574 = vrot.slane %v6522, 2
    %v6575 = vsel %vm3712, %v6570, %v6574
    %v6576 = vrot.slane %v6523, 2
    %v6577 = vsel %vm3712, %v6571, %v6576
    %v6578 = vrot.slane %v6524, 2
    %v6579 = vsel %vm3712, %v6572, %v6578
    %v6580 = vrot.slane %v6525, 2
    %v6581 = vsel %vm3712, %v6573, %v6580
    %v6598 = vrot.slane %v6486, 7
    %v6599 = vrot.slane %v6490, 7
    %v6600 = vsel %vm3741, %v6598, %v6599
    %v6601 = vrot.slane %v6487, 7
    %v6602 = vrot.slane %v6491, 7
    %v6603 = vsel %vm3741, %v6601, %v6602
    %v6604 = vrot.slane %v6488, 7
    %v6605 = vrot.slane %v6492, 7
    %v6606 = vsel %vm3741, %v6604, %v6605
    %v6607 = vrot.slane %v6489, 7
    %v6608 = vrot.slane %v6493, 7
    %v6609 = vsel %vm3741, %v6607, %v6608
    %v6610 = vrot.slane %v6534, 7
    %v6611 = vsel %vm3741, %v6610, %v6610
    %v6612 = vrot.slane %v6535, 7
    %v6613 = vsel %vm3741, %v6612, %v6612
    %v6614 = vrot.slane %v6536, 7
    %v6615 = vsel %vm3741, %v6614, %v6614
    %v6616 = vrot.slane %v6537, 7
    %v6617 = vsel %vm3741, %v6616, %v6616
    %v6618 = vrot.slane %v6558, 7
    %v6619 = vrot.slane %v6563, 7
    %v6620 = vsel %vm3741, %v6618, %v6619
    %v6621 = vrot.slane %v6559, 7
    %v6622 = vrot.slane %v6565, 7
    %v6623 = vsel %vm3741, %v6621, %v6622
    %v6624 = vrot.slane %v6560, 7
    %v6625 = vrot.slane %v6567, 7
    %v6626 = vsel %vm3741, %v6624, %v6625
    %v6627 = vrot.slane %v6561, 7
    %v6628 = vrot.slane %v6569, 7
    %v6629 = vsel %vm3741, %v6627, %v6628
    %v6630 = vrot.slane %v6494, 7
    %v6631 = vrot.slane %v6498, 7
    %v6632 = vsel %vm3741, %v6630, %v6631
    %v6633 = vrot.slane %v6495, 7
    %v6634 = vrot.slane %v6499, 7
    %v6635 = vsel %vm3741, %v6633, %v6634
    %v6636 = vrot.slane %v6496, 7
    %v6637 = vrot.slane %v6500, 7
    %v6638 = vsel %vm3741, %v6636, %v6637
    %v6639 = vrot.slane %v6497, 7
    %v6640 = vrot.slane %v6501, 7
    %v6641 = vsel %vm3741, %v6639, %v6640
    %v6642 = vrot.slane %v6538, 7
    %v6643 = vsel %vm3741, %v6642, %v6642
    %v6644 = vrot.slane %v6539, 7
    %v6645 = vsel %vm3741, %v6644, %v6644
    %v6646 = vrot.slane %v6540, 7
    %v6647 = vsel %vm3741, %v6646, %v6646
    %v6648 = vrot.slane %v6541, 7
    %v6649 = vsel %vm3741, %v6648, %v6648
    %v6650 = vrot.slane %v6570, 7
    %v6651 = vrot.slane %v6575, 7
    %v6652 = vsel %vm3741, %v6650, %v6651
    %v6653 = vrot.slane %v6571, 7
    %v6654 = vrot.slane %v6577, 7
    %v6655 = vsel %vm3741, %v6653, %v6654
    %v6656 = vrot.slane %v6572, 7
    %v6657 = vrot.slane %v6579, 7
    %v6658 = vsel %vm3741, %v6656, %v6657
    %v6659 = vrot.slane %v6573, 7
    %v6660 = vrot.slane %v6581, 7
    %v6661 = vsel %vm3741, %v6659, %v6660
    %v6686 = vpack.c.bf16 %v6632, %v6600
    %v6687 = vpack.c.bf16 %v6635, %v6603
    %v6688 = vpack.c.bf16 %v6638, %v6606
    %v6689 = vpack.c.bf16 %v6641, %v6609
    %v6690 = vpack.c.bf16 %v6643, %v6611
    %v6691 = vpack.c.bf16 %v6645, %v6613
    %v6692 = vpack.c.bf16 %v6647, %v6615
    %v6693 = vpack.c.bf16 %v6649, %v6617
    %v6694 = vpack.c.bf16 %v6652, %v6620
    %v6695 = vpack.c.bf16 %v6655, %v6623
    %v6696 = vpack.c.bf16 %v6658, %v6626
    %v6697 = vpack.c.bf16 %v6661, %v6629
    %v6698 = vld [vmem:[#allocation48] sm:$0xff]
    %v6699 = vld [vmem:[#allocation48 + $0x8] sm:$0xff]
    %v6700 = vld [vmem:[#allocation48 + $0x10] sm:$0xff]
    %v6701 = vld [vmem:[#allocation48 + $0x18] sm:$0xff]
    %v6702 = vld [vmem:[#allocation48 + $0x20] sm:$0xff]
    %v6703 = vld [vmem:[#allocation48 + $0x28] sm:$0xff]
    %v6704 = vld [vmem:[#allocation48 + $0x30] sm:$0xff]
    %v6705 = vld [vmem:[#allocation48 + $0x38] sm:$0xff]
    %v6706 = vld [vmem:[#allocation48 + $0x40] sm:$0xff]
    %v6707 = vld [vmem:[#allocation48 + $0x48] sm:$0xff]
    %v6708 = vld [vmem:[#allocation48 + $0x50] sm:$0xff]
    %v6709 = vld [vmem:[#allocation48 + $0x58] sm:$0xff]
    %v6710 = vld [vmem:[#allocation48 + $0x60] sm:$0xff]
    %v6711 = vld [vmem:[#allocation48 + $0x68] sm:$0xff]
    %v6712 = vld [vmem:[#allocation48 + $0x70] sm:$0xff]
    %v6713 = vld [vmem:[#allocation48 + $0x78] sm:$0xff]
    %v6714 = vld [vmem:[#allocation48 + $0x80] sm:$0xff]
    %v6715 = vld [vmem:[#allocation48 + $0x88] sm:$0xff]
    %v6716 = vld [vmem:[#allocation48 + $0x90] sm:$0xff]
    %v6717 = vld [vmem:[#allocation48 + $0x98] sm:$0xff]
    %v6718 = vld [vmem:[#allocation48 + $0xa0] sm:$0xff]
    %v6719 = vld [vmem:[#allocation48 + $0xa8] sm:$0xff]
    %v6720 = vld [vmem:[#allocation48 + $0xb0] sm:$0xff]
    %v6721 = vld [vmem:[#allocation48 + $0xb8] sm:$0xff]
    %v6722 = vld [vmem:[#allocation48 + $0xc0] sm:$0xff]
    %v6723 = vld [vmem:[#allocation48 + $0xc8] sm:$0xff]
    %v6724 = vld [vmem:[#allocation48 + $0xd0] sm:$0xff]
    %v6725 = vld [vmem:[#allocation48 + $0xd8] sm:$0xff]
    %v6726 = vld [vmem:[#allocation48 + $0xe0] sm:$0xff]
    %v6727 = vld [vmem:[#allocation48 + $0xe8] sm:$0xff]
    %v6728 = vld [vmem:[#allocation48 + $0xf0] sm:$0xff]
    %v6729 = vld [vmem:[#allocation48 + $0xf8] sm:$0xff]
    %v6730 = vld [vmem:[#allocation48 + $0x100] sm:$0xff]
    %v6731 = vld [vmem:[#allocation48 + $0x108] sm:$0xff]
    %v6732 = vld [vmem:[#allocation48 + $0x110] sm:$0xff]
    %v6733 = vld [vmem:[#allocation48 + $0x118] sm:$0xff]
    %v6734 = vld [vmem:[#allocation48 + $0x120] sm:$0xff]
    %v6735 = vld [vmem:[#allocation48 + $0x128] sm:$0xff]
    %v6736 = vld [vmem:[#allocation48 + $0x130] sm:$0xff]
    %v6737 = vld [vmem:[#allocation48 + $0x138] sm:$0xff]
    %v6738 = vld [vmem:[#allocation48 + $0x140] sm:$0xff]
    %v6739 = vld [vmem:[#allocation48 + $0x148] sm:$0xff]
    %v6740 = vld [vmem:[#allocation48 + $0x150] sm:$0xff]
    %v6741 = vld [vmem:[#allocation48 + $0x158] sm:$0xff]
    %v6742 = vld [vmem:[#allocation48 + $0x160] sm:$0xff]
    %v6743 = vld [vmem:[#allocation48 + $0x168] sm:$0xff]
    %v6744 = vld [vmem:[#allocation48 + $0x170] sm:$0xff]
    %v6745 = vld [vmem:[#allocation48 + $0x178] sm:$0xff]
    %v6746 = vld [vmem:[#allocation48 + $0x180] sm:$0xff]
    %v6747 = vld [vmem:[#allocation48 + $0x188] sm:$0xff]
    %v6748 = vld [vmem:[#allocation48 + $0x190] sm:$0xff]
    %v6749 = vld [vmem:[#allocation48 + $0x198] sm:$0xff]
    %v6750 = vld [vmem:[#allocation48 + $0x1a0] sm:$0xff]
    %v6751 = vld [vmem:[#allocation48 + $0x1a8] sm:$0xff]
    %v6752 = vld [vmem:[#allocation48 + $0x1b0] sm:$0xff]
    %v6753 = vld [vmem:[#allocation48 + $0x1b8] sm:$0xff]
    %v6754 = vld [vmem:[#allocation48 + $0x1c0] sm:$0xff]
    %v6755 = vld [vmem:[#allocation48 + $0x1c8] sm:$0xff]
    %v6756 = vld [vmem:[#allocation48 + $0x1d0] sm:$0xff]
    %v6757 = vld [vmem:[#allocation48 + $0x1d8] sm:$0xff]
    %v6758 = vld [vmem:[#allocation48 + $0x1e0] sm:$0xff]
    %v6759 = vld [vmem:[#allocation48 + $0x1e8] sm:$0xff]
    %v6760 = vld [vmem:[#allocation48 + $0x1f0] sm:$0xff]
    %v6761 = vld [vmem:[#allocation48 + $0x1f8] sm:$0xff]
    %v6762 = vld [vmem:[#allocation48 + $0x200] sm:$0xff]
    %v6763 = vld [vmem:[#allocation48 + $0x208] sm:$0xff]
    %v6764 = vld [vmem:[#allocation48 + $0x210] sm:$0xff]
    %v6765 = vld [vmem:[#allocation48 + $0x218] sm:$0xff]
    %v6766 = vld [vmem:[#allocation48 + $0x220] sm:$0xff]
    %v6767 = vld [vmem:[#allocation48 + $0x228] sm:$0xff]
    %v6768 = vld [vmem:[#allocation48 + $0x230] sm:$0xff]
    %v6769 = vld [vmem:[#allocation48 + $0x238] sm:$0xff]
    %v6770 = vld [vmem:[#allocation48 + $0x240] sm:$0xff]
    %v6771 = vld [vmem:[#allocation48 + $0x248] sm:$0xff]
    %v6772 = vld [vmem:[#allocation48 + $0x250] sm:$0xff]
    %v6773 = vld [vmem:[#allocation48 + $0x258] sm:$0xff]
    %v6774 = vld [vmem:[#allocation48 + $0x260] sm:$0xff]
    %v6775 = vld [vmem:[#allocation48 + $0x268] sm:$0xff]
    %v6776 = vld [vmem:[#allocation48 + $0x270] sm:$0xff]
    %v6777 = vld [vmem:[#allocation48 + $0x278] sm:$0xff]
    %v6778 = vld [vmem:[#allocation48 + $0x280] sm:$0xff]
    %v6779 = vld [vmem:[#allocation48 + $0x288] sm:$0xff]
    %v6780 = vld [vmem:[#allocation48 + $0x290] sm:$0xff]
    %v6781 = vld [vmem:[#allocation48 + $0x298] sm:$0xff]
    %v6782 = vld [vmem:[#allocation48 + $0x2a0] sm:$0xff]
    %v6783 = vld [vmem:[#allocation48 + $0x2a8] sm:$0xff]
    %v6784 = vld [vmem:[#allocation48 + $0x2b0] sm:$0xff]
    %v6785 = vld [vmem:[#allocation48 + $0x2b8] sm:$0xff]
    %v6786 = vld [vmem:[#allocation48 + $0x2c0] sm:$0xff]
    %v6787 = vld [vmem:[#allocation48 + $0x2c8] sm:$0xff]
    %v6788 = vld [vmem:[#allocation48 + $0x2d0] sm:$0xff]
    %v6789 = vld [vmem:[#allocation48 + $0x2d8] sm:$0xff]
    %v6790 = vld [vmem:[#allocation48 + $0x2e0] sm:$0xff]
    %v6791 = vld [vmem:[#allocation48 + $0x2e8] sm:$0xff]
    %v6792 = vld [vmem:[#allocation48 + $0x2f0] sm:$0xff]
    %v6793 = vld [vmem:[#allocation48 + $0x2f8] sm:$0xff]
    %v6794 = vld [vmem:[#allocation48 + $0x300] sm:$0xff]
    %v6795 = vld [vmem:[#allocation48 + $0x308] sm:$0xff]
    %v6796 = vld [vmem:[#allocation48 + $0x310] sm:$0xff]
    %v6797 = vld [vmem:[#allocation48 + $0x318] sm:$0xff]
    %v6798 = vld [vmem:[#allocation48 + $0x320] sm:$0xff]
    %v6799 = vld [vmem:[#allocation48 + $0x328] sm:$0xff]
    %v6800 = vld [vmem:[#allocation48 + $0x330] sm:$0xff]
    %v6801 = vld [vmem:[#allocation48 + $0x338] sm:$0xff]
    %v6802 = vld [vmem:[#allocation48 + $0x340] sm:$0xff]
    %v6803 = vld [vmem:[#allocation48 + $0x348] sm:$0xff]
    %v6804 = vld [vmem:[#allocation48 + $0x350] sm:$0xff]
    %v6805 = vld [vmem:[#allocation48 + $0x358] sm:$0xff]
    %v6806 = vld [vmem:[#allocation48 + $0x360] sm:$0xff]
    %v6807 = vld [vmem:[#allocation48 + $0x368] sm:$0xff]
    %v6808 = vld [vmem:[#allocation48 + $0x370] sm:$0xff]
    %v6809 = vld [vmem:[#allocation48 + $0x378] sm:$0xff]
    %v6810 = vld [vmem:[#allocation48 + $0x380] sm:$0xff]
    %v6811 = vld [vmem:[#allocation48 + $0x388] sm:$0xff]
    %v6812 = vld [vmem:[#allocation48 + $0x390] sm:$0xff]
    %v6813 = vld [vmem:[#allocation48 + $0x398] sm:$0xff]
    %v6814 = vld [vmem:[#allocation48 + $0x3a0] sm:$0xff]
    %v6815 = vld [vmem:[#allocation48 + $0x3a8] sm:$0xff]
    %v6816 = vld [vmem:[#allocation48 + $0x3b0] sm:$0xff]
    %v6817 = vld [vmem:[#allocation48 + $0x3b8] sm:$0xff]
    %v6818 = vld [vmem:[#allocation48 + $0x3c0] sm:$0xff]
    %v6819 = vld [vmem:[#allocation48 + $0x3c8] sm:$0xff]
    %v6820 = vld [vmem:[#allocation48 + $0x3d0] sm:$0xff]
    %v6821 = vld [vmem:[#allocation48 + $0x3d8] sm:$0xff]
    %v6822 = vld [vmem:[#allocation48 + $0x3e0] sm:$0xff]
    %v6823 = vld [vmem:[#allocation48 + $0x3e8] sm:$0xff]
    %v6824 = vld [vmem:[#allocation48 + $0x3f0] sm:$0xff]
    %v6825 = vld [vmem:[#allocation48 + $0x3f8] sm:$0xff]
    %v6826 = vld [vmem:[#allocation48 + $0x400] sm:$0xff]
    %v6827 = vld [vmem:[#allocation48 + $0x408] sm:$0xff]
    %v6828 = vld [vmem:[#allocation48 + $0x410] sm:$0xff]
    %v6829 = vld [vmem:[#allocation48 + $0x418] sm:$0xff]
    %v6830 = vld [vmem:[#allocation48 + $0x420] sm:$0xff]
    %v6831 = vld [vmem:[#allocation48 + $0x428] sm:$0xff]
    %v6832 = vld [vmem:[#allocation48 + $0x430] sm:$0xff]
    %v6833 = vld [vmem:[#allocation48 + $0x438] sm:$0xff]
    %v6834 = vld [vmem:[#allocation48 + $0x440] sm:$0xff]
    %v6835 = vld [vmem:[#allocation48 + $0x448] sm:$0xff]
    %v6836 = vld [vmem:[#allocation48 + $0x450] sm:$0xff]
    %v6837 = vld [vmem:[#allocation48 + $0x458] sm:$0xff]
    %v6838 = vld [vmem:[#allocation48 + $0x460] sm:$0xff]
    %v6839 = vld [vmem:[#allocation48 + $0x468] sm:$0xff]
    %v6840 = vld [vmem:[#allocation48 + $0x470] sm:$0xff]
    %v6841 = vld [vmem:[#allocation48 + $0x478] sm:$0xff]
    %v6842 = vld [vmem:[#allocation48 + $0x480] sm:$0xff]
    %v6843 = vld [vmem:[#allocation48 + $0x488] sm:$0xff]
    %v6844 = vld [vmem:[#allocation48 + $0x490] sm:$0xff]
    %v6845 = vld [vmem:[#allocation48 + $0x498] sm:$0xff]
    %v6846 = vld [vmem:[#allocation48 + $0x4a0] sm:$0xff]
    %v6847 = vld [vmem:[#allocation48 + $0x4a8] sm:$0xff]
    %v6848 = vld [vmem:[#allocation48 + $0x4b0] sm:$0xff]
    %v6849 = vld [vmem:[#allocation48 + $0x4b8] sm:$0xff]
    %v6850 = vld [vmem:[#allocation48 + $0x4c0] sm:$0xff]
    %v6851 = vld [vmem:[#allocation48 + $0x4c8] sm:$0xff]
    %v6852 = vld [vmem:[#allocation48 + $0x4d0] sm:$0xff]
    %v6853 = vld [vmem:[#allocation48 + $0x4d8] sm:$0xff]
    %v6854 = vld [vmem:[#allocation48 + $0x4e0] sm:$0xff]
    %v6855 = vld [vmem:[#allocation48 + $0x4e8] sm:$0xff]
    %v6856 = vld [vmem:[#allocation48 + $0x4f0] sm:$0xff]
    %v6857 = vld [vmem:[#allocation48 + $0x4f8] sm:$0xff]
    %v6858 = vld [vmem:[#allocation48 + $0x500] sm:$0xff]
    %v6859 = vld [vmem:[#allocation48 + $0x508] sm:$0xff]
    %v6860 = vld [vmem:[#allocation48 + $0x510] sm:$0xff]
    %v6861 = vld [vmem:[#allocation48 + $0x518] sm:$0xff]
    %v6862 = vld [vmem:[#allocation48 + $0x520] sm:$0xff]
    %v6863 = vld [vmem:[#allocation48 + $0x528] sm:$0xff]
    %v6864 = vld [vmem:[#allocation48 + $0x530] sm:$0xff]
    %v6865 = vld [vmem:[#allocation48 + $0x538] sm:$0xff]
    %v6866 = vld [vmem:[#allocation48 + $0x540] sm:$0xff]
    %v6867 = vld [vmem:[#allocation48 + $0x548] sm:$0xff]
    %v6868 = vld [vmem:[#allocation48 + $0x550] sm:$0xff]
    %v6869 = vld [vmem:[#allocation48 + $0x558] sm:$0xff]
    %v6870 = vld [vmem:[#allocation48 + $0x560] sm:$0xff]
    %v6871 = vld [vmem:[#allocation48 + $0x568] sm:$0xff]
    %v6872 = vld [vmem:[#allocation48 + $0x570] sm:$0xff]
    %v6873 = vld [vmem:[#allocation48 + $0x578] sm:$0xff]
    %v6874 = vld [vmem:[#allocation48 + $0x580] sm:$0xff]
    %v6875 = vld [vmem:[#allocation48 + $0x588] sm:$0xff]
    %v6876 = vld [vmem:[#allocation48 + $0x590] sm:$0xff]
    %v6877 = vld [vmem:[#allocation48 + $0x598] sm:$0xff]
    %v6878 = vld [vmem:[#allocation48 + $0x5a0] sm:$0xff]
    %v6879 = vld [vmem:[#allocation48 + $0x5a8] sm:$0xff]
    %v6880 = vld [vmem:[#allocation48 + $0x5b0] sm:$0xff]
    %v6881 = vld [vmem:[#allocation48 + $0x5b8] sm:$0xff]
    %v6882 = vld [vmem:[#allocation48 + $0x5c0] sm:$0xff]
    %v6883 = vld [vmem:[#allocation48 + $0x5c8] sm:$0xff]
    %v6884 = vld [vmem:[#allocation48 + $0x5d0] sm:$0xff]
    %v6885 = vld [vmem:[#allocation48 + $0x5d8] sm:$0xff]
    %v6886 = vld [vmem:[#allocation48 + $0x5e0] sm:$0xff]
    %v6887 = vld [vmem:[#allocation48 + $0x5e8] sm:$0xff]
    %v6888 = vld [vmem:[#allocation48 + $0x5f0] sm:$0xff]
    %v6889 = vld [vmem:[#allocation48 + $0x5f8] sm:$0xff]
    %v6890 = vld [vmem:[#allocation48 + $0x600] sm:$0xff]
    %v6891 = vld [vmem:[#allocation48 + $0x608] sm:$0xff]
    %v6892 = vld [vmem:[#allocation48 + $0x610] sm:$0xff]
    %v6893 = vld [vmem:[#allocation48 + $0x618] sm:$0xff]
    %v6894 = vld [vmem:[#allocation48 + $0x620] sm:$0xff]
    %v6895 = vld [vmem:[#allocation48 + $0x628] sm:$0xff]
    %v6896 = vld [vmem:[#allocation48 + $0x630] sm:$0xff]
    %v6897 = vld [vmem:[#allocation48 + $0x638] sm:$0xff]
    %v6898 = vld [vmem:[#allocation48 + $0x640] sm:$0xff]
    %v6899 = vld [vmem:[#allocation48 + $0x648] sm:$0xff]
    %v6900 = vld [vmem:[#allocation48 + $0x650] sm:$0xff]
    %v6901 = vld [vmem:[#allocation48 + $0x658] sm:$0xff]
    %v6902 = vld [vmem:[#allocation48 + $0x660] sm:$0xff]
    %v6903 = vld [vmem:[#allocation48 + $0x668] sm:$0xff]
    %v6904 = vld [vmem:[#allocation48 + $0x670] sm:$0xff]
    %v6905 = vld [vmem:[#allocation48 + $0x678] sm:$0xff]
    %v6906 = vld [vmem:[#allocation48 + $0x680] sm:$0xff]
    %v6907 = vld [vmem:[#allocation48 + $0x688] sm:$0xff]
    %v6908 = vld [vmem:[#allocation48 + $0x690] sm:$0xff]
    %v6909 = vld [vmem:[#allocation48 + $0x698] sm:$0xff]
    %v6910 = vld [vmem:[#allocation48 + $0x6a0] sm:$0xff]
    %v6911 = vld [vmem:[#allocation48 + $0x6a8] sm:$0xff]
    %v6912 = vld [vmem:[#allocation48 + $0x6b0] sm:$0xff]
    %v6913 = vld [vmem:[#allocation48 + $0x6b8] sm:$0xff]
    %v6914 = vld [vmem:[#allocation48 + $0x6c0] sm:$0xff]
    %v6915 = vld [vmem:[#allocation48 + $0x6c8] sm:$0xff]
    %v6916 = vld [vmem:[#allocation48 + $0x6d0] sm:$0xff]
    %v6917 = vld [vmem:[#allocation48 + $0x6d8] sm:$0xff]
    %v6918 = vld [vmem:[#allocation48 + $0x6e0] sm:$0xff]
    %v6919 = vld [vmem:[#allocation48 + $0x6e8] sm:$0xff]
    %v6920 = vld [vmem:[#allocation48 + $0x6f0] sm:$0xff]
    %v6921 = vld [vmem:[#allocation48 + $0x6f8] sm:$0xff]
    %v6922 = vld [vmem:[#allocation48 + $0x700] sm:$0xff]
    %v6923 = vld [vmem:[#allocation48 + $0x708] sm:$0xff]
    %v6924 = vld [vmem:[#allocation48 + $0x710] sm:$0xff]
    %v6925 = vld [vmem:[#allocation48 + $0x718] sm:$0xff]
    %v6926 = vld [vmem:[#allocation48 + $0x720] sm:$0xff]
    %v6927 = vld [vmem:[#allocation48 + $0x728] sm:$0xff]
    %v6928 = vld [vmem:[#allocation48 + $0x730] sm:$0xff]
    %v6929 = vld [vmem:[#allocation48 + $0x738] sm:$0xff]
    %v6930 = vld [vmem:[#allocation48 + $0x740] sm:$0xff]
    %v6931 = vld [vmem:[#allocation48 + $0x748] sm:$0xff]
    %v6932 = vld [vmem:[#allocation48 + $0x750] sm:$0xff]
    %v6933 = vld [vmem:[#allocation48 + $0x758] sm:$0xff]
    %v6934 = vld [vmem:[#allocation48 + $0x760] sm:$0xff]
    %v6935 = vld [vmem:[#allocation48 + $0x768] sm:$0xff]
    %v6936 = vld [vmem:[#allocation48 + $0x770] sm:$0xff]
    %v6937 = vld [vmem:[#allocation48 + $0x778] sm:$0xff]
    %v6938 = vld [vmem:[#allocation48 + $0x780] sm:$0xff]
    %v6939 = vld [vmem:[#allocation48 + $0x788] sm:$0xff]
    %v6940 = vld [vmem:[#allocation48 + $0x790] sm:$0xff]
    %v6941 = vld [vmem:[#allocation48 + $0x798] sm:$0xff]
    %v6942 = vld [vmem:[#allocation48 + $0x7a0] sm:$0xff]
    %v6943 = vld [vmem:[#allocation48 + $0x7a8] sm:$0xff]
    %v6944 = vld [vmem:[#allocation48 + $0x7b0] sm:$0xff]
    %v6945 = vld [vmem:[#allocation48 + $0x7b8] sm:$0xff]
    %v6946 = vld [vmem:[#allocation48 + $0x7c0] sm:$0xff]
    %v6947 = vld [vmem:[#allocation48 + $0x7c8] sm:$0xff]
    %v6948 = vld [vmem:[#allocation48 + $0x7d0] sm:$0xff]
    %v6949 = vld [vmem:[#allocation48 + $0x7d8] sm:$0xff]
    %v6950 = vld [vmem:[#allocation48 + $0x7e0] sm:$0xff]
    %v6951 = vld [vmem:[#allocation48 + $0x7e8] sm:$0xff]
    %v6952 = vld [vmem:[#allocation48 + $0x7f0] sm:$0xff]
    %v6953 = vld [vmem:[#allocation48 + $0x7f8] sm:$0xff]
    %v6954 = vld [vmem:[#allocation48 + $0x800] sm:$0xff]
    %v6955 = vld [vmem:[#allocation48 + $0x808] sm:$0xff]
    %v6956 = vld [vmem:[#allocation48 + $0x810] sm:$0xff]
    %v6957 = vld [vmem:[#allocation48 + $0x818] sm:$0xff]
    %v6958 = vld [vmem:[#allocation48 + $0x820] sm:$0xff]
    %v6959 = vld [vmem:[#allocation48 + $0x828] sm:$0xff]
    %v6960 = vld [vmem:[#allocation48 + $0x830] sm:$0xff]
    %v6961 = vld [vmem:[#allocation48 + $0x838] sm:$0xff]
    %v6962 = vld [vmem:[#allocation48 + $0x840] sm:$0xff]
    %v6963 = vld [vmem:[#allocation48 + $0x848] sm:$0xff]
    %v6964 = vld [vmem:[#allocation48 + $0x850] sm:$0xff]
    %v6965 = vld [vmem:[#allocation48 + $0x858] sm:$0xff]
    %v6966 = vld [vmem:[#allocation48 + $0x860] sm:$0xff]
    %v6967 = vld [vmem:[#allocation48 + $0x868] sm:$0xff]
    %v6968 = vld [vmem:[#allocation48 + $0x870] sm:$0xff]
    %v6969 = vld [vmem:[#allocation48 + $0x878] sm:$0xff]
    %v6970 = vld [vmem:[#allocation48 + $0x880] sm:$0xff]
    %v6971 = vld [vmem:[#allocation48 + $0x888] sm:$0xff]
    %v6972 = vld [vmem:[#allocation48 + $0x890] sm:$0xff]
    %v6973 = vld [vmem:[#allocation48 + $0x898] sm:$0xff]
    %v6974 = vld [vmem:[#allocation48 + $0x8a0] sm:$0xff]
    %v6975 = vld [vmem:[#allocation48 + $0x8a8] sm:$0xff]
    %v6976 = vld [vmem:[#allocation48 + $0x8b0] sm:$0xff]
    %v6977 = vld [vmem:[#allocation48 + $0x8b8] sm:$0xff]
    %v6978 = vld [vmem:[#allocation48 + $0x8c0] sm:$0xff]
    %v6979 = vld [vmem:[#allocation48 + $0x8c8] sm:$0xff]
    %v6980 = vld [vmem:[#allocation48 + $0x8d0] sm:$0xff]
    %v6981 = vld [vmem:[#allocation48 + $0x8d8] sm:$0xff]
    %v6982 = vld [vmem:[#allocation48 + $0x8e0] sm:$0xff]
    %v6983 = vld [vmem:[#allocation48 + $0x8e8] sm:$0xff]
    %v6984 = vld [vmem:[#allocation48 + $0x8f0] sm:$0xff]
    %v6985 = vld [vmem:[#allocation48 + $0x8f8] sm:$0xff]
    %v6986 = vld [vmem:[#allocation48 + $0x900] sm:$0xff]
    %v6987 = vld [vmem:[#allocation48 + $0x908] sm:$0xff]
    %v6988 = vld [vmem:[#allocation48 + $0x910] sm:$0xff]
    %v6989 = vld [vmem:[#allocation48 + $0x918] sm:$0xff]
    %v6990 = vld [vmem:[#allocation48 + $0x920] sm:$0xff]
    %v6991 = vld [vmem:[#allocation48 + $0x928] sm:$0xff]
    %v6992 = vld [vmem:[#allocation48 + $0x930] sm:$0xff]
    %v6993 = vld [vmem:[#allocation48 + $0x938] sm:$0xff]
    %v6994 = vld [vmem:[#allocation48 + $0x940] sm:$0xff]
    %v6995 = vld [vmem:[#allocation48 + $0x948] sm:$0xff]
    %v6996 = vld [vmem:[#allocation48 + $0x950] sm:$0xff]
    %v6997 = vld [vmem:[#allocation48 + $0x958] sm:$0xff]
    %v6998 = vld [vmem:[#allocation48 + $0x960] sm:$0xff]
    %v6999 = vld [vmem:[#allocation48 + $0x968] sm:$0xff]
    %v7000 = vld [vmem:[#allocation48 + $0x970] sm:$0xff]
    %v7001 = vld [vmem:[#allocation48 + $0x978] sm:$0xff]
    %v7002 = vld [vmem:[#allocation48 + $0x980] sm:$0xff]
    %v7003 = vld [vmem:[#allocation48 + $0x988] sm:$0xff]
    %v7004 = vld [vmem:[#allocation48 + $0x990] sm:$0xff]
    %v7005 = vld [vmem:[#allocation48 + $0x998] sm:$0xff]
    %v7006 = vld [vmem:[#allocation48 + $0x9a0] sm:$0xff]
    %v7007 = vld [vmem:[#allocation48 + $0x9a8] sm:$0xff]
    %v7008 = vld [vmem:[#allocation48 + $0x9b0] sm:$0xff]
    %v7009 = vld [vmem:[#allocation48 + $0x9b8] sm:$0xff]
    %v7010 = vld [vmem:[#allocation48 + $0x9c0] sm:$0xff]
    %v7011 = vld [vmem:[#allocation48 + $0x9c8] sm:$0xff]
    %v7012 = vld [vmem:[#allocation48 + $0x9d0] sm:$0xff]
    %v7013 = vld [vmem:[#allocation48 + $0x9d8] sm:$0xff]
    %v7014 = vld [vmem:[#allocation48 + $0x9e0] sm:$0xff]
    %v7015 = vld [vmem:[#allocation48 + $0x9e8] sm:$0xff]
    %v7016 = vld [vmem:[#allocation48 + $0x9f0] sm:$0xff]
    %v7017 = vld [vmem:[#allocation48 + $0x9f8] sm:$0xff]
    %v7018 = vld [vmem:[#allocation48 + $0xa00] sm:$0xff]
    %v7019 = vld [vmem:[#allocation48 + $0xa08] sm:$0xff]
    %v7020 = vld [vmem:[#allocation48 + $0xa10] sm:$0xff]
    %v7021 = vld [vmem:[#allocation48 + $0xa18] sm:$0xff]
    %v7022 = vld [vmem:[#allocation48 + $0xa20] sm:$0xff]
    %v7023 = vld [vmem:[#allocation48 + $0xa28] sm:$0xff]
    %v7024 = vld [vmem:[#allocation48 + $0xa30] sm:$0xff]
    %v7025 = vld [vmem:[#allocation48 + $0xa38] sm:$0xff]
    %v7026 = vld [vmem:[#allocation48 + $0xa40] sm:$0xff]
    %v7027 = vld [vmem:[#allocation48 + $0xa48] sm:$0xff]
    %v7028 = vld [vmem:[#allocation48 + $0xa50] sm:$0xff]
    %v7029 = vld [vmem:[#allocation48 + $0xa58] sm:$0xff]
    %v7030 = vld [vmem:[#allocation48 + $0xa60] sm:$0xff]
    %v7031 = vld [vmem:[#allocation48 + $0xa68] sm:$0xff]
    %v7032 = vld [vmem:[#allocation48 + $0xa70] sm:$0xff]
    %v7033 = vld [vmem:[#allocation48 + $0xa78] sm:$0xff]
    %v7034 = vld [vmem:[#allocation48 + $0xa80] sm:$0xff]
    %v7035 = vld [vmem:[#allocation48 + $0xa88] sm:$0xff]
    %v7036 = vld [vmem:[#allocation48 + $0xa90] sm:$0xff]
    %v7037 = vld [vmem:[#allocation48 + $0xa98] sm:$0xff]
    %v7038 = vld [vmem:[#allocation48 + $0xaa0] sm:$0xff]
    %v7039 = vld [vmem:[#allocation48 + $0xaa8] sm:$0xff]
    %v7040 = vld [vmem:[#allocation48 + $0xab0] sm:$0xff]
    %v7041 = vld [vmem:[#allocation48 + $0xab8] sm:$0xff]
    %v7042 = vld [vmem:[#allocation48 + $0xac0] sm:$0xff]
    %v7043 = vld [vmem:[#allocation48 + $0xac8] sm:$0xff]
    %v7044 = vld [vmem:[#allocation48 + $0xad0] sm:$0xff]
    %v7045 = vld [vmem:[#allocation48 + $0xad8] sm:$0xff]
    %v7046 = vld [vmem:[#allocation48 + $0xae0] sm:$0xff]
    %v7047 = vld [vmem:[#allocation48 + $0xae8] sm:$0xff]
    %v7048 = vld [vmem:[#allocation48 + $0xaf0] sm:$0xff]
    %v7049 = vld [vmem:[#allocation48 + $0xaf8] sm:$0xff]
    %v7050 = vld [vmem:[#allocation48 + $0xb00] sm:$0xff]
    %v7051 = vld [vmem:[#allocation48 + $0xb08] sm:$0xff]
    %v7052 = vld [vmem:[#allocation48 + $0xb10] sm:$0xff]
    %v7053 = vld [vmem:[#allocation48 + $0xb18] sm:$0xff]
    %v7054 = vld [vmem:[#allocation48 + $0xb20] sm:$0xff]
    %v7055 = vld [vmem:[#allocation48 + $0xb28] sm:$0xff]
    %v7056 = vld [vmem:[#allocation48 + $0xb30] sm:$0xff]
    %v7057 = vld [vmem:[#allocation48 + $0xb38] sm:$0xff]
    %v7058 = vld [vmem:[#allocation48 + $0xb40] sm:$0xff]
    %v7059 = vld [vmem:[#allocation48 + $0xb48] sm:$0xff]
    %v7060 = vld [vmem:[#allocation48 + $0xb50] sm:$0xff]
    %v7061 = vld [vmem:[#allocation48 + $0xb58] sm:$0xff]
    %v7062 = vld [vmem:[#allocation48 + $0xb60] sm:$0xff]
    %v7063 = vld [vmem:[#allocation48 + $0xb68] sm:$0xff]
    %v7064 = vld [vmem:[#allocation48 + $0xb70] sm:$0xff]
    %v7065 = vld [vmem:[#allocation48 + $0xb78] sm:$0xff]
    %v7066 = vld [vmem:[#allocation48 + $0xb80] sm:$0xff]
    %v7067 = vld [vmem:[#allocation48 + $0xb88] sm:$0xff]
    %v7068 = vld [vmem:[#allocation48 + $0xb90] sm:$0xff]
    %v7069 = vld [vmem:[#allocation48 + $0xb98] sm:$0xff]
    %v7070 = vld [vmem:[#allocation48 + $0xba0] sm:$0xff]
    %v7071 = vld [vmem:[#allocation48 + $0xba8] sm:$0xff]
    %v7072 = vld [vmem:[#allocation48 + $0xbb0] sm:$0xff]
    %v7073 = vld [vmem:[#allocation48 + $0xbb8] sm:$0xff]
    %v7074 = vld [vmem:[#allocation48 + $0xbc0] sm:$0xff]
    %v7075 = vld [vmem:[#allocation48 + $0xbc8] sm:$0xff]
    %v7076 = vld [vmem:[#allocation48 + $0xbd0] sm:$0xff]
    %v7077 = vld [vmem:[#allocation48 + $0xbd8] sm:$0xff]
    %v7078 = vld [vmem:[#allocation48 + $0xbe0] sm:$0xff]
    %v7079 = vld [vmem:[#allocation48 + $0xbe8] sm:$0xff]
    %v7080 = vld [vmem:[#allocation48 + $0xbf0] sm:$0xff]
    %v7081 = vld [vmem:[#allocation48 + $0xbf8] sm:$0xff]
    %v7082 = vld [vmem:[#allocation49] sm:$0xf]
    %v7084 = vlaneseq
    %v7085 = vshrl.u32 %v7084, 7
    %v7086 = vsub.s32 0, %v7085
    %v7087 = vrot.slane %v7082, %v7086
    %v7088 = vlaneseq
    %v7089 = vshrl.u32 %v7088, 7
    %v7090 = vsub.s32 1, %v7089
    %v7091 = vrot.slane %v7082, %v7090
    %v7092 = vlaneseq
    %v7093 = vshrl.u32 %v7092, 7
    %v7094 = vsub.s32 2, %v7093
    %v7095 = vrot.slane %v7082, %v7094
    %v7096 = vlaneseq
    %v7097 = vshrl.u32 %v7096, 7
    %v7098 = vsub.s32 3, %v7097
    %v7099 = vrot.slane %v7082, %v7098
    %v7488 = vunpack.c.l.b16 %v6698
    %v7489 = vunpack.c.h.b16 %v6698
    %v7490 = vunpack.c.l.b16 %v6699
    %v7491 = vunpack.c.h.b16 %v6699
    %v7492 = vunpack.c.l.b16 %v6700
    %v7493 = vunpack.c.h.b16 %v6700
    %v7494 = vunpack.c.l.b16 %v6701
    %v7495 = vunpack.c.h.b16 %v6701
    %v7496 = vunpack.c.l.b16 %v6702
    %v7497 = vunpack.c.h.b16 %v6702
    %v7498 = vunpack.c.l.b16 %v6703
    %v7499 = vunpack.c.h.b16 %v6703
    %v7500 = vunpack.c.l.b16 %v6704
    %v7501 = vunpack.c.h.b16 %v6704
    %v7502 = vunpack.c.l.b16 %v6705
    %v7503 = vunpack.c.h.b16 %v6705
    %v7504 = vunpack.c.l.b16 %v6706
    %v7505 = vunpack.c.h.b16 %v6706
    %v7506 = vunpack.c.l.b16 %v6707
    %v7507 = vunpack.c.h.b16 %v6707
    %v7508 = vunpack.c.l.b16 %v6708
    %v7509 = vunpack.c.h.b16 %v6708
    %v7510 = vunpack.c.l.b16 %v6709
    %v7511 = vunpack.c.h.b16 %v6709
    %v7512 = vunpack.c.l.b16 %v6710
    %v7513 = vunpack.c.h.b16 %v6710
    %v7514 = vunpack.c.l.b16 %v6711
    %v7515 = vunpack.c.h.b16 %v6711
    %v7516 = vunpack.c.l.b16 %v6712
    %v7517 = vunpack.c.h.b16 %v6712
    %v7518 = vunpack.c.l.b16 %v6713
    %v7519 = vunpack.c.h.b16 %v6713
    %v7520 = vunpack.c.l.b16 %v6714
    %v7521 = vunpack.c.h.b16 %v6714
    %v7522 = vunpack.c.l.b16 %v6715
    %v7523 = vunpack.c.h.b16 %v6715
    %v7524 = vunpack.c.l.b16 %v6716
    %v7525 = vunpack.c.h.b16 %v6716
    %v7526 = vunpack.c.l.b16 %v6717
    %v7527 = vunpack.c.h.b16 %v6717
    %v7528 = vunpack.c.l.b16 %v6718
    %v7529 = vunpack.c.h.b16 %v6718
    %v7530 = vunpack.c.l.b16 %v6719
    %v7531 = vunpack.c.h.b16 %v6719
    %v7532 = vunpack.c.l.b16 %v6720
    %v7533 = vunpack.c.h.b16 %v6720
    %v7534 = vunpack.c.l.b16 %v6721
    %v7535 = vunpack.c.h.b16 %v6721
    %v7536 = vunpack.c.l.b16 %v6722
    %v7537 = vunpack.c.h.b16 %v6722
    %v7538 = vunpack.c.l.b16 %v6723
    %v7539 = vunpack.c.h.b16 %v6723
    %v7540 = vunpack.c.l.b16 %v6724
    %v7541 = vunpack.c.h.b16 %v6724
    %v7542 = vunpack.c.l.b16 %v6725
    %v7543 = vunpack.c.h.b16 %v6725
    %v7544 = vunpack.c.l.b16 %v6726
    %v7545 = vunpack.c.h.b16 %v6726
    %v7546 = vunpack.c.l.b16 %v6727
    %v7547 = vunpack.c.h.b16 %v6727
    %v7548 = vunpack.c.l.b16 %v6728
    %v7549 = vunpack.c.h.b16 %v6728
    %v7550 = vunpack.c.l.b16 %v6729
    %v7551 = vunpack.c.h.b16 %v6729
    %v7552 = vunpack.c.l.b16 %v6730
    %v7553 = vunpack.c.h.b16 %v6730
    %v7554 = vunpack.c.l.b16 %v6731
    %v7555 = vunpack.c.h.b16 %v6731
    %v7556 = vunpack.c.l.b16 %v6732
    %v7557 = vunpack.c.h.b16 %v6732
    %v7558 = vunpack.c.l.b16 %v6733
    %v7559 = vunpack.c.h.b16 %v6733
    %v7560 = vunpack.c.l.b16 %v6734
    %v7561 = vunpack.c.h.b16 %v6734
    %v7562 = vunpack.c.l.b16 %v6735
    %v7563 = vunpack.c.h.b16 %v6735
    %v7564 = vunpack.c.l.b16 %v6736
    %v7565 = vunpack.c.h.b16 %v6736
    %v7566 = vunpack.c.l.b16 %v6737
    %v7567 = vunpack.c.h.b16 %v6737
    %v7568 = vunpack.c.l.b16 %v6738
    %v7569 = vunpack.c.h.b16 %v6738
    %v7570 = vunpack.c.l.b16 %v6739
    %v7571 = vunpack.c.h.b16 %v6739
    %v7572 = vunpack.c.l.b16 %v6740
    %v7573 = vunpack.c.h.b16 %v6740
    %v7574 = vunpack.c.l.b16 %v6741
    %v7575 = vunpack.c.h.b16 %v6741
    %v7576 = vunpack.c.l.b16 %v6742
    %v7577 = vunpack.c.h.b16 %v6742
    %v7578 = vunpack.c.l.b16 %v6743
    %v7579 = vunpack.c.h.b16 %v6743
    %v7580 = vunpack.c.l.b16 %v6744
    %v7581 = vunpack.c.h.b16 %v6744
    %v7582 = vunpack.c.l.b16 %v6745
    %v7583 = vunpack.c.h.b16 %v6745
    %v7584 = vunpack.c.l.b16 %v6746
    %v7585 = vunpack.c.h.b16 %v6746
    %v7586 = vunpack.c.l.b16 %v6747
    %v7587 = vunpack.c.h.b16 %v6747
    %v7588 = vunpack.c.l.b16 %v6748
    %v7589 = vunpack.c.h.b16 %v6748
    %v7590 = vunpack.c.l.b16 %v6749
    %v7591 = vunpack.c.h.b16 %v6749
    %v7592 = vunpack.c.l.b16 %v6750
    %v7593 = vunpack.c.h.b16 %v6750
    %v7594 = vunpack.c.l.b16 %v6751
    %v7595 = vunpack.c.h.b16 %v6751
    %v7596 = vunpack.c.l.b16 %v6752
    %v7597 = vunpack.c.h.b16 %v6752
    %v7598 = vunpack.c.l.b16 %v6753
    %v7599 = vunpack.c.h.b16 %v6753
    %v7600 = vunpack.c.l.b16 %v6754
    %v7601 = vunpack.c.h.b16 %v6754
    %v7602 = vunpack.c.l.b16 %v6755
    %v7603 = vunpack.c.h.b16 %v6755
    %v7604 = vunpack.c.l.b16 %v6756
    %v7605 = vunpack.c.h.b16 %v6756
    %v7606 = vunpack.c.l.b16 %v6757
    %v7607 = vunpack.c.h.b16 %v6757
    %v7608 = vunpack.c.l.b16 %v6758
    %v7609 = vunpack.c.h.b16 %v6758
    %v7610 = vunpack.c.l.b16 %v6759
    %v7611 = vunpack.c.h.b16 %v6759
    %v7612 = vunpack.c.l.b16 %v6760
    %v7613 = vunpack.c.h.b16 %v6760
    %v7614 = vunpack.c.l.b16 %v6761
    %v7615 = vunpack.c.h.b16 %v6761
    %v7616 = vunpack.c.l.b16 %v6762
    %v7617 = vunpack.c.h.b16 %v6762
    %v7618 = vunpack.c.l.b16 %v6763
    %v7619 = vunpack.c.h.b16 %v6763
    %v7620 = vunpack.c.l.b16 %v6764
    %v7621 = vunpack.c.h.b16 %v6764
    %v7622 = vunpack.c.l.b16 %v6765
    %v7623 = vunpack.c.h.b16 %v6765
    %v7624 = vunpack.c.l.b16 %v6766
    %v7625 = vunpack.c.h.b16 %v6766
    %v7626 = vunpack.c.l.b16 %v6767
    %v7627 = vunpack.c.h.b16 %v6767
    %v7628 = vunpack.c.l.b16 %v6768
    %v7629 = vunpack.c.h.b16 %v6768
    %v7630 = vunpack.c.l.b16 %v6769
    %v7631 = vunpack.c.h.b16 %v6769
    %v7632 = vunpack.c.l.b16 %v6770
    %v7633 = vunpack.c.h.b16 %v6770
    %v7634 = vunpack.c.l.b16 %v6771
    %v7635 = vunpack.c.h.b16 %v6771
    %v7636 = vunpack.c.l.b16 %v6772
    %v7637 = vunpack.c.h.b16 %v6772
    %v7638 = vunpack.c.l.b16 %v6773
    %v7639 = vunpack.c.h.b16 %v6773
    %v7640 = vunpack.c.l.b16 %v6774
    %v7641 = vunpack.c.h.b16 %v6774
    %v7642 = vunpack.c.l.b16 %v6775
    %v7643 = vunpack.c.h.b16 %v6775
    %v7644 = vunpack.c.l.b16 %v6776
    %v7645 = vunpack.c.h.b16 %v6776
    %v7646 = vunpack.c.l.b16 %v6777
    %v7647 = vunpack.c.h.b16 %v6777
    %v7648 = vunpack.c.l.b16 %v6778
    %v7649 = vunpack.c.h.b16 %v6778
    %v7650 = vunpack.c.l.b16 %v6779
    %v7651 = vunpack.c.h.b16 %v6779
    %v7652 = vunpack.c.l.b16 %v6780
    %v7653 = vunpack.c.h.b16 %v6780
    %v7654 = vunpack.c.l.b16 %v6781
    %v7655 = vunpack.c.h.b16 %v6781
    %v7656 = vunpack.c.l.b16 %v6782
    %v7657 = vunpack.c.h.b16 %v6782
    %v7658 = vunpack.c.l.b16 %v6783
    %v7659 = vunpack.c.h.b16 %v6783
    %v7660 = vunpack.c.l.b16 %v6784
    %v7661 = vunpack.c.h.b16 %v6784
    %v7662 = vunpack.c.l.b16 %v6785
    %v7663 = vunpack.c.h.b16 %v6785
    %v7664 = vunpack.c.l.b16 %v6786
    %v7665 = vunpack.c.h.b16 %v6786
    %v7666 = vunpack.c.l.b16 %v6787
    %v7667 = vunpack.c.h.b16 %v6787
    %v7668 = vunpack.c.l.b16 %v6788
    %v7669 = vunpack.c.h.b16 %v6788
    %v7670 = vunpack.c.l.b16 %v6789
    %v7671 = vunpack.c.h.b16 %v6789
    %v7672 = vunpack.c.l.b16 %v6790
    %v7673 = vunpack.c.h.b16 %v6790
    %v7674 = vunpack.c.l.b16 %v6791
    %v7675 = vunpack.c.h.b16 %v6791
    %v7676 = vunpack.c.l.b16 %v6792
    %v7677 = vunpack.c.h.b16 %v6792
    %v7678 = vunpack.c.l.b16 %v6793
    %v7679 = vunpack.c.h.b16 %v6793
    %v7680 = vunpack.c.l.b16 %v6794
    %v7681 = vunpack.c.h.b16 %v6794
    %v7682 = vunpack.c.l.b16 %v6795
    %v7683 = vunpack.c.h.b16 %v6795
    %v7684 = vunpack.c.l.b16 %v6796
    %v7685 = vunpack.c.h.b16 %v6796
    %v7686 = vunpack.c.l.b16 %v6797
    %v7687 = vunpack.c.h.b16 %v6797
    %v7688 = vunpack.c.l.b16 %v6798
    %v7689 = vunpack.c.h.b16 %v6798
    %v7690 = vunpack.c.l.b16 %v6799
    %v7691 = vunpack.c.h.b16 %v6799
    %v7692 = vunpack.c.l.b16 %v6800
    %v7693 = vunpack.c.h.b16 %v6800
    %v7694 = vunpack.c.l.b16 %v6801
    %v7695 = vunpack.c.h.b16 %v6801
    %v7696 = vunpack.c.l.b16 %v6802
    %v7697 = vunpack.c.h.b16 %v6802
    %v7698 = vunpack.c.l.b16 %v6803
    %v7699 = vunpack.c.h.b16 %v6803
    %v7700 = vunpack.c.l.b16 %v6804
    %v7701 = vunpack.c.h.b16 %v6804
    %v7702 = vunpack.c.l.b16 %v6805
    %v7703 = vunpack.c.h.b16 %v6805
    %v7704 = vunpack.c.l.b16 %v6806
    %v7705 = vunpack.c.h.b16 %v6806
    %v7706 = vunpack.c.l.b16 %v6807
    %v7707 = vunpack.c.h.b16 %v6807
    %v7708 = vunpack.c.l.b16 %v6808
    %v7709 = vunpack.c.h.b16 %v6808
    %v7710 = vunpack.c.l.b16 %v6809
    %v7711 = vunpack.c.h.b16 %v6809
    %v7712 = vunpack.c.l.b16 %v6810
    %v7713 = vunpack.c.h.b16 %v6810
    %v7714 = vunpack.c.l.b16 %v6811
    %v7715 = vunpack.c.h.b16 %v6811
    %v7716 = vunpack.c.l.b16 %v6812
    %v7717 = vunpack.c.h.b16 %v6812
    %v7718 = vunpack.c.l.b16 %v6813
    %v7719 = vunpack.c.h.b16 %v6813
    %v7720 = vunpack.c.l.b16 %v6814
    %v7721 = vunpack.c.h.b16 %v6814
    %v7722 = vunpack.c.l.b16 %v6815
    %v7723 = vunpack.c.h.b16 %v6815
    %v7724 = vunpack.c.l.b16 %v6816
    %v7725 = vunpack.c.h.b16 %v6816
    %v7726 = vunpack.c.l.b16 %v6817
    %v7727 = vunpack.c.h.b16 %v6817
    %v7728 = vunpack.c.l.b16 %v6818
    %v7729 = vunpack.c.h.b16 %v6818
    %v7730 = vunpack.c.l.b16 %v6819
    %v7731 = vunpack.c.h.b16 %v6819
    %v7732 = vunpack.c.l.b16 %v6820
    %v7733 = vunpack.c.h.b16 %v6820
    %v7734 = vunpack.c.l.b16 %v6821
    %v7735 = vunpack.c.h.b16 %v6821
    %v7736 = vunpack.c.l.b16 %v6822
    %v7737 = vunpack.c.h.b16 %v6822
    %v7738 = vunpack.c.l.b16 %v6823
    %v7739 = vunpack.c.h.b16 %v6823
    %v7740 = vunpack.c.l.b16 %v6824
    %v7741 = vunpack.c.h.b16 %v6824
    %v7742 = vunpack.c.l.b16 %v6825
    %v7743 = vunpack.c.h.b16 %v6825
    %v7744 = vunpack.c.l.b16 %v6826
    %v7745 = vunpack.c.h.b16 %v6826
    %v7746 = vunpack.c.l.b16 %v6827
    %v7747 = vunpack.c.h.b16 %v6827
    %v7748 = vunpack.c.l.b16 %v6828
    %v7749 = vunpack.c.h.b16 %v6828
    %v7750 = vunpack.c.l.b16 %v6829
    %v7751 = vunpack.c.h.b16 %v6829
    %v7752 = vunpack.c.l.b16 %v6830
    %v7753 = vunpack.c.h.b16 %v6830
    %v7754 = vunpack.c.l.b16 %v6831
    %v7755 = vunpack.c.h.b16 %v6831
    %v7756 = vunpack.c.l.b16 %v6832
    %v7757 = vunpack.c.h.b16 %v6832
    %v7758 = vunpack.c.l.b16 %v6833
    %v7759 = vunpack.c.h.b16 %v6833
    %v7760 = vunpack.c.l.b16 %v6834
    %v7761 = vunpack.c.h.b16 %v6834
    %v7762 = vunpack.c.l.b16 %v6835
    %v7763 = vunpack.c.h.b16 %v6835
    %v7764 = vunpack.c.l.b16 %v6836
    %v7765 = vunpack.c.h.b16 %v6836
    %v7766 = vunpack.c.l.b16 %v6837
    %v7767 = vunpack.c.h.b16 %v6837
    %v7768 = vunpack.c.l.b16 %v6838
    %v7769 = vunpack.c.h.b16 %v6838
    %v7770 = vunpack.c.l.b16 %v6839
    %v7771 = vunpack.c.h.b16 %v6839
    %v7772 = vunpack.c.l.b16 %v6840
    %v7773 = vunpack.c.h.b16 %v6840
    %v7774 = vunpack.c.l.b16 %v6841
    %v7775 = vunpack.c.h.b16 %v6841
    %v7776 = vunpack.c.l.b16 %v6842
    %v7777 = vunpack.c.h.b16 %v6842
    %v7778 = vunpack.c.l.b16 %v6843
    %v7779 = vunpack.c.h.b16 %v6843
    %v7780 = vunpack.c.l.b16 %v6844
    %v7781 = vunpack.c.h.b16 %v6844
    %v7782 = vunpack.c.l.b16 %v6845
    %v7783 = vunpack.c.h.b16 %v6845
    %v7784 = vunpack.c.l.b16 %v6846
    %v7785 = vunpack.c.h.b16 %v6846
    %v7786 = vunpack.c.l.b16 %v6847
    %v7787 = vunpack.c.h.b16 %v6847
    %v7788 = vunpack.c.l.b16 %v6848
    %v7789 = vunpack.c.h.b16 %v6848
    %v7790 = vunpack.c.l.b16 %v6849
    %v7791 = vunpack.c.h.b16 %v6849
    %v7792 = vunpack.c.l.b16 %v6850
    %v7793 = vunpack.c.h.b16 %v6850
    %v7794 = vunpack.c.l.b16 %v6851
    %v7795 = vunpack.c.h.b16 %v6851
    %v7796 = vunpack.c.l.b16 %v6852
    %v7797 = vunpack.c.h.b16 %v6852
    %v7798 = vunpack.c.l.b16 %v6853
    %v7799 = vunpack.c.h.b16 %v6853
    %v7800 = vunpack.c.l.b16 %v6854
    %v7801 = vunpack.c.h.b16 %v6854
    %v7802 = vunpack.c.l.b16 %v6855
    %v7803 = vunpack.c.h.b16 %v6855
    %v7804 = vunpack.c.l.b16 %v6856
    %v7805 = vunpack.c.h.b16 %v6856
    %v7806 = vunpack.c.l.b16 %v6857
    %v7807 = vunpack.c.h.b16 %v6857
    %v7808 = vunpack.c.l.b16 %v6858
    %v7809 = vunpack.c.h.b16 %v6858
    %v7810 = vunpack.c.l.b16 %v6859
    %v7811 = vunpack.c.h.b16 %v6859
    %v7812 = vunpack.c.l.b16 %v6860
    %v7813 = vunpack.c.h.b16 %v6860
    %v7814 = vunpack.c.l.b16 %v6861
    %v7815 = vunpack.c.h.b16 %v6861
    %v7816 = vunpack.c.l.b16 %v6862
    %v7817 = vunpack.c.h.b16 %v6862
    %v7818 = vunpack.c.l.b16 %v6863
    %v7819 = vunpack.c.h.b16 %v6863
    %v7820 = vunpack.c.l.b16 %v6864
    %v7821 = vunpack.c.h.b16 %v6864
    %v7822 = vunpack.c.l.b16 %v6865
    %v7823 = vunpack.c.h.b16 %v6865
    %v7824 = vunpack.c.l.b16 %v6866
    %v7825 = vunpack.c.h.b16 %v6866
    %v7826 = vunpack.c.l.b16 %v6867
    %v7827 = vunpack.c.h.b16 %v6867
    %v7828 = vunpack.c.l.b16 %v6868
    %v7829 = vunpack.c.h.b16 %v6868
    %v7830 = vunpack.c.l.b16 %v6869
    %v7831 = vunpack.c.h.b16 %v6869
    %v7832 = vunpack.c.l.b16 %v6870
    %v7833 = vunpack.c.h.b16 %v6870
    %v7834 = vunpack.c.l.b16 %v6871
    %v7835 = vunpack.c.h.b16 %v6871
    %v7836 = vunpack.c.l.b16 %v6872
    %v7837 = vunpack.c.h.b16 %v6872
    %v7838 = vunpack.c.l.b16 %v6873
    %v7839 = vunpack.c.h.b16 %v6873
    %v7840 = vunpack.c.l.b16 %v6874
    %v7841 = vunpack.c.h.b16 %v6874
    %v7842 = vunpack.c.l.b16 %v6875
    %v7843 = vunpack.c.h.b16 %v6875
    %v7844 = vunpack.c.l.b16 %v6876
    %v7845 = vunpack.c.h.b16 %v6876
    %v7846 = vunpack.c.l.b16 %v6877
    %v7847 = vunpack.c.h.b16 %v6877
    %v7848 = vunpack.c.l.b16 %v6878
    %v7849 = vunpack.c.h.b16 %v6878
    %v7850 = vunpack.c.l.b16 %v6879
    %v7851 = vunpack.c.h.b16 %v6879
    %v7852 = vunpack.c.l.b16 %v6880
    %v7853 = vunpack.c.h.b16 %v6880
    %v7854 = vunpack.c.l.b16 %v6881
    %v7855 = vunpack.c.h.b16 %v6881
    %v7856 = vunpack.c.l.b16 %v6882
    %v7857 = vunpack.c.h.b16 %v6882
    %v7858 = vunpack.c.l.b16 %v6883
    %v7859 = vunpack.c.h.b16 %v6883
    %v7860 = vunpack.c.l.b16 %v6884
    %v7861 = vunpack.c.h.b16 %v6884
    %v7862 = vunpack.c.l.b16 %v6885
    %v7863 = vunpack.c.h.b16 %v6885
    %v7864 = vunpack.c.l.b16 %v6886
    %v7865 = vunpack.c.h.b16 %v6886
    %v7866 = vunpack.c.l.b16 %v6887
    %v7867 = vunpack.c.h.b16 %v6887
    %v7868 = vunpack.c.l.b16 %v6888
    %v7869 = vunpack.c.h.b16 %v6888
    %v7870 = vunpack.c.l.b16 %v6889
    %v7871 = vunpack.c.h.b16 %v6889
    %v7872 = vunpack.c.l.b16 %v6890
    %v7873 = vunpack.c.h.b16 %v6890
    %v7874 = vunpack.c.l.b16 %v6891
    %v7875 = vunpack.c.h.b16 %v6891
    %v7876 = vunpack.c.l.b16 %v6892
    %v7877 = vunpack.c.h.b16 %v6892
    %v7878 = vunpack.c.l.b16 %v6893
    %v7879 = vunpack.c.h.b16 %v6893
    %v7880 = vunpack.c.l.b16 %v6894
    %v7881 = vunpack.c.h.b16 %v6894
    %v7882 = vunpack.c.l.b16 %v6895
    %v7883 = vunpack.c.h.b16 %v6895
    %v7884 = vunpack.c.l.b16 %v6896
    %v7885 = vunpack.c.h.b16 %v6896
    %v7886 = vunpack.c.l.b16 %v6897
    %v7887 = vunpack.c.h.b16 %v6897
    %v7888 = vunpack.c.l.b16 %v6898
    %v7889 = vunpack.c.h.b16 %v6898
    %v7890 = vunpack.c.l.b16 %v6899
    %v7891 = vunpack.c.h.b16 %v6899
    %v7892 = vunpack.c.l.b16 %v6900
    %v7893 = vunpack.c.h.b16 %v6900
    %v7894 = vunpack.c.l.b16 %v6901
    %v7895 = vunpack.c.h.b16 %v6901
    %v7896 = vunpack.c.l.b16 %v6902
    %v7897 = vunpack.c.h.b16 %v6902
    %v7898 = vunpack.c.l.b16 %v6903
    %v7899 = vunpack.c.h.b16 %v6903
    %v7900 = vunpack.c.l.b16 %v6904
    %v7901 = vunpack.c.h.b16 %v6904
    %v7902 = vunpack.c.l.b16 %v6905
    %v7903 = vunpack.c.h.b16 %v6905
    %v7904 = vunpack.c.l.b16 %v6906
    %v7905 = vunpack.c.h.b16 %v6906
    %v7906 = vunpack.c.l.b16 %v6907
    %v7907 = vunpack.c.h.b16 %v6907
    %v7908 = vunpack.c.l.b16 %v6908
    %v7909 = vunpack.c.h.b16 %v6908
    %v7910 = vunpack.c.l.b16 %v6909
    %v7911 = vunpack.c.h.b16 %v6909
    %v7912 = vunpack.c.l.b16 %v6910
    %v7913 = vunpack.c.h.b16 %v6910
    %v7914 = vunpack.c.l.b16 %v6911
    %v7915 = vunpack.c.h.b16 %v6911
    %v7916 = vunpack.c.l.b16 %v6912
    %v7917 = vunpack.c.h.b16 %v6912
    %v7918 = vunpack.c.l.b16 %v6913
    %v7919 = vunpack.c.h.b16 %v6913
    %v7920 = vunpack.c.l.b16 %v6914
    %v7921 = vunpack.c.h.b16 %v6914
    %v7922 = vunpack.c.l.b16 %v6915
    %v7923 = vunpack.c.h.b16 %v6915
    %v7924 = vunpack.c.l.b16 %v6916
    %v7925 = vunpack.c.h.b16 %v6916
    %v7926 = vunpack.c.l.b16 %v6917
    %v7927 = vunpack.c.h.b16 %v6917
    %v7928 = vunpack.c.l.b16 %v6918
    %v7929 = vunpack.c.h.b16 %v6918
    %v7930 = vunpack.c.l.b16 %v6919
    %v7931 = vunpack.c.h.b16 %v6919
    %v7932 = vunpack.c.l.b16 %v6920
    %v7933 = vunpack.c.h.b16 %v6920
    %v7934 = vunpack.c.l.b16 %v6921
    %v7935 = vunpack.c.h.b16 %v6921
    %v7936 = vunpack.c.l.b16 %v6922
    %v7937 = vunpack.c.h.b16 %v6922
    %v7938 = vunpack.c.l.b16 %v6923
    %v7939 = vunpack.c.h.b16 %v6923
    %v7940 = vunpack.c.l.b16 %v6924
    %v7941 = vunpack.c.h.b16 %v6924
    %v7942 = vunpack.c.l.b16 %v6925
    %v7943 = vunpack.c.h.b16 %v6925
    %v7944 = vunpack.c.l.b16 %v6926
    %v7945 = vunpack.c.h.b16 %v6926
    %v7946 = vunpack.c.l.b16 %v6927
    %v7947 = vunpack.c.h.b16 %v6927
    %v7948 = vunpack.c.l.b16 %v6928
    %v7949 = vunpack.c.h.b16 %v6928
    %v7950 = vunpack.c.l.b16 %v6929
    %v7951 = vunpack.c.h.b16 %v6929
    %v7952 = vunpack.c.l.b16 %v6930
    %v7953 = vunpack.c.h.b16 %v6930
    %v7954 = vunpack.c.l.b16 %v6931
    %v7955 = vunpack.c.h.b16 %v6931
    %v7956 = vunpack.c.l.b16 %v6932
    %v7957 = vunpack.c.h.b16 %v6932
    %v7958 = vunpack.c.l.b16 %v6933
    %v7959 = vunpack.c.h.b16 %v6933
    %v7960 = vunpack.c.l.b16 %v6934
    %v7961 = vunpack.c.h.b16 %v6934
    %v7962 = vunpack.c.l.b16 %v6935
    %v7963 = vunpack.c.h.b16 %v6935
    %v7964 = vunpack.c.l.b16 %v6936
    %v7965 = vunpack.c.h.b16 %v6936
    %v7966 = vunpack.c.l.b16 %v6937
    %v7967 = vunpack.c.h.b16 %v6937
    %v7968 = vunpack.c.l.b16 %v6938
    %v7969 = vunpack.c.h.b16 %v6938
    %v7970 = vunpack.c.l.b16 %v6939
    %v7971 = vunpack.c.h.b16 %v6939
    %v7972 = vunpack.c.l.b16 %v6940
    %v7973 = vunpack.c.h.b16 %v6940
    %v7974 = vunpack.c.l.b16 %v6941
    %v7975 = vunpack.c.h.b16 %v6941
    %v7976 = vunpack.c.l.b16 %v6942
    %v7977 = vunpack.c.h.b16 %v6942
    %v7978 = vunpack.c.l.b16 %v6943
    %v7979 = vunpack.c.h.b16 %v6943
    %v7980 = vunpack.c.l.b16 %v6944
    %v7981 = vunpack.c.h.b16 %v6944
    %v7982 = vunpack.c.l.b16 %v6945
    %v7983 = vunpack.c.h.b16 %v6945
    %v7984 = vunpack.c.l.b16 %v6946
    %v7985 = vunpack.c.h.b16 %v6946
    %v7986 = vunpack.c.l.b16 %v6947
    %v7987 = vunpack.c.h.b16 %v6947
    %v7988 = vunpack.c.l.b16 %v6948
    %v7989 = vunpack.c.h.b16 %v6948
    %v7990 = vunpack.c.l.b16 %v6949
    %v7991 = vunpack.c.h.b16 %v6949
    %v7992 = vunpack.c.l.b16 %v6950
    %v7993 = vunpack.c.h.b16 %v6950
    %v7994 = vunpack.c.l.b16 %v6951
    %v7995 = vunpack.c.h.b16 %v6951
    %v7996 = vunpack.c.l.b16 %v6952
    %v7997 = vunpack.c.h.b16 %v6952
    %v7998 = vunpack.c.l.b16 %v6953
    %v7999 = vunpack.c.h.b16 %v6953
    %v8000 = vunpack.c.l.b16 %v6954
    %v8001 = vunpack.c.h.b16 %v6954
    %v8002 = vunpack.c.l.b16 %v6955
    %v8003 = vunpack.c.h.b16 %v6955
    %v8004 = vunpack.c.l.b16 %v6956
    %v8005 = vunpack.c.h.b16 %v6956
    %v8006 = vunpack.c.l.b16 %v6957
    %v8007 = vunpack.c.h.b16 %v6957
    %v8008 = vunpack.c.l.b16 %v6958
    %v8009 = vunpack.c.h.b16 %v6958
    %v8010 = vunpack.c.l.b16 %v6959
    %v8011 = vunpack.c.h.b16 %v6959
    %v8012 = vunpack.c.l.b16 %v6960
    %v8013 = vunpack.c.h.b16 %v6960
    %v8014 = vunpack.c.l.b16 %v6961
    %v8015 = vunpack.c.h.b16 %v6961
    %v8016 = vunpack.c.l.b16 %v6962
    %v8017 = vunpack.c.h.b16 %v6962
    %v8018 = vunpack.c.l.b16 %v6963
    %v8019 = vunpack.c.h.b16 %v6963
    %v8020 = vunpack.c.l.b16 %v6964
    %v8021 = vunpack.c.h.b16 %v6964
    %v8022 = vunpack.c.l.b16 %v6965
    %v8023 = vunpack.c.h.b16 %v6965
    %v8024 = vunpack.c.l.b16 %v6966
    %v8025 = vunpack.c.h.b16 %v6966
    %v8026 = vunpack.c.l.b16 %v6967
    %v8027 = vunpack.c.h.b16 %v6967
    %v8028 = vunpack.c.l.b16 %v6968
    %v8029 = vunpack.c.h.b16 %v6968
    %v8030 = vunpack.c.l.b16 %v6969
    %v8031 = vunpack.c.h.b16 %v6969
    %v8032 = vunpack.c.l.b16 %v6970
    %v8033 = vunpack.c.h.b16 %v6970
    %v8034 = vunpack.c.l.b16 %v6971
    %v8035 = vunpack.c.h.b16 %v6971
    %v8036 = vunpack.c.l.b16 %v6972
    %v8037 = vunpack.c.h.b16 %v6972
    %v8038 = vunpack.c.l.b16 %v6973
    %v8039 = vunpack.c.h.b16 %v6973
    %v8040 = vunpack.c.l.b16 %v6974
    %v8041 = vunpack.c.h.b16 %v6974
    %v8042 = vunpack.c.l.b16 %v6975
    %v8043 = vunpack.c.h.b16 %v6975
    %v8044 = vunpack.c.l.b16 %v6976
    %v8045 = vunpack.c.h.b16 %v6976
    %v8046 = vunpack.c.l.b16 %v6977
    %v8047 = vunpack.c.h.b16 %v6977
    %v8048 = vunpack.c.l.b16 %v6978
    %v8049 = vunpack.c.h.b16 %v6978
    %v8050 = vunpack.c.l.b16 %v6979
    %v8051 = vunpack.c.h.b16 %v6979
    %v8052 = vunpack.c.l.b16 %v6980
    %v8053 = vunpack.c.h.b16 %v6980
    %v8054 = vunpack.c.l.b16 %v6981
    %v8055 = vunpack.c.h.b16 %v6981
    %v8056 = vunpack.c.l.b16 %v6982
    %v8057 = vunpack.c.h.b16 %v6982
    %v8058 = vunpack.c.l.b16 %v6983
    %v8059 = vunpack.c.h.b16 %v6983
    %v8060 = vunpack.c.l.b16 %v6984
    %v8061 = vunpack.c.h.b16 %v6984
    %v8062 = vunpack.c.l.b16 %v6985
    %v8063 = vunpack.c.h.b16 %v6985
    %v8064 = vunpack.c.l.b16 %v6986
    %v8065 = vunpack.c.h.b16 %v6986
    %v8066 = vunpack.c.l.b16 %v6987
    %v8067 = vunpack.c.h.b16 %v6987
    %v8068 = vunpack.c.l.b16 %v6988
    %v8069 = vunpack.c.h.b16 %v6988
    %v8070 = vunpack.c.l.b16 %v6989
    %v8071 = vunpack.c.h.b16 %v6989
    %v8072 = vunpack.c.l.b16 %v6990
    %v8073 = vunpack.c.h.b16 %v6990
    %v8074 = vunpack.c.l.b16 %v6991
    %v8075 = vunpack.c.h.b16 %v6991
    %v8076 = vunpack.c.l.b16 %v6992
    %v8077 = vunpack.c.h.b16 %v6992
    %v8078 = vunpack.c.l.b16 %v6993
    %v8079 = vunpack.c.h.b16 %v6993
    %v8080 = vunpack.c.l.b16 %v6994
    %v8081 = vunpack.c.h.b16 %v6994
    %v8082 = vunpack.c.l.b16 %v6995
    %v8083 = vunpack.c.h.b16 %v6995
    %v8084 = vunpack.c.l.b16 %v6996
    %v8085 = vunpack.c.h.b16 %v6996
    %v8086 = vunpack.c.l.b16 %v6997
    %v8087 = vunpack.c.h.b16 %v6997
    %v8088 = vunpack.c.l.b16 %v6998
    %v8089 = vunpack.c.h.b16 %v6998
    %v8090 = vunpack.c.l.b16 %v6999
    %v8091 = vunpack.c.h.b16 %v6999
    %v8092 = vunpack.c.l.b16 %v7000
    %v8093 = vunpack.c.h.b16 %v7000
    %v8094 = vunpack.c.l.b16 %v7001
    %v8095 = vunpack.c.h.b16 %v7001
    %v8096 = vunpack.c.l.b16 %v7002
    %v8097 = vunpack.c.h.b16 %v7002
    %v8098 = vunpack.c.l.b16 %v7003
    %v8099 = vunpack.c.h.b16 %v7003
    %v8100 = vunpack.c.l.b16 %v7004
    %v8101 = vunpack.c.h.b16 %v7004
    %v8102 = vunpack.c.l.b16 %v7005
    %v8103 = vunpack.c.h.b16 %v7005
    %v8104 = vunpack.c.l.b16 %v7006
    %v8105 = vunpack.c.h.b16 %v7006
    %v8106 = vunpack.c.l.b16 %v7007
    %v8107 = vunpack.c.h.b16 %v7007
    %v8108 = vunpack.c.l.b16 %v7008
    %v8109 = vunpack.c.h.b16 %v7008
    %v8110 = vunpack.c.l.b16 %v7009
    %v8111 = vunpack.c.h.b16 %v7009
    %v8112 = vunpack.c.l.b16 %v7010
    %v8113 = vunpack.c.h.b16 %v7010
    %v8114 = vunpack.c.l.b16 %v7011
    %v8115 = vunpack.c.h.b16 %v7011
    %v8116 = vunpack.c.l.b16 %v7012
    %v8117 = vunpack.c.h.b16 %v7012
    %v8118 = vunpack.c.l.b16 %v7013
    %v8119 = vunpack.c.h.b16 %v7013
    %v8120 = vunpack.c.l.b16 %v7014
    %v8121 = vunpack.c.h.b16 %v7014
    %v8122 = vunpack.c.l.b16 %v7015
    %v8123 = vunpack.c.h.b16 %v7015
    %v8124 = vunpack.c.l.b16 %v7016
    %v8125 = vunpack.c.h.b16 %v7016
    %v8126 = vunpack.c.l.b16 %v7017
    %v8127 = vunpack.c.h.b16 %v7017
    %v8128 = vunpack.c.l.b16 %v7018
    %v8129 = vunpack.c.h.b16 %v7018
    %v8130 = vunpack.c.l.b16 %v7019
    %v8131 = vunpack.c.h.b16 %v7019
    %v8132 = vunpack.c.l.b16 %v7020
    %v8133 = vunpack.c.h.b16 %v7020
    %v8134 = vunpack.c.l.b16 %v7021
    %v8135 = vunpack.c.h.b16 %v7021
    %v8136 = vunpack.c.l.b16 %v7022
    %v8137 = vunpack.c.h.b16 %v7022
    %v8138 = vunpack.c.l.b16 %v7023
    %v8139 = vunpack.c.h.b16 %v7023
    %v8140 = vunpack.c.l.b16 %v7024
    %v8141 = vunpack.c.h.b16 %v7024
    %v8142 = vunpack.c.l.b16 %v7025
    %v8143 = vunpack.c.h.b16 %v7025
    %v8144 = vunpack.c.l.b16 %v7026
    %v8145 = vunpack.c.h.b16 %v7026
    %v8146 = vunpack.c.l.b16 %v7027
    %v8147 = vunpack.c.h.b16 %v7027
    %v8148 = vunpack.c.l.b16 %v7028
    %v8149 = vunpack.c.h.b16 %v7028
    %v8150 = vunpack.c.l.b16 %v7029
    %v8151 = vunpack.c.h.b16 %v7029
    %v8152 = vunpack.c.l.b16 %v7030
    %v8153 = vunpack.c.h.b16 %v7030
    %v8154 = vunpack.c.l.b16 %v7031
    %v8155 = vunpack.c.h.b16 %v7031
    %v8156 = vunpack.c.l.b16 %v7032
    %v8157 = vunpack.c.h.b16 %v7032
    %v8158 = vunpack.c.l.b16 %v7033
    %v8159 = vunpack.c.h.b16 %v7033
    %v8160 = vunpack.c.l.b16 %v7034
    %v8161 = vunpack.c.h.b16 %v7034
    %v8162 = vunpack.c.l.b16 %v7035
    %v8163 = vunpack.c.h.b16 %v7035
    %v8164 = vunpack.c.l.b16 %v7036
    %v8165 = vunpack.c.h.b16 %v7036
    %v8166 = vunpack.c.l.b16 %v7037
    %v8167 = vunpack.c.h.b16 %v7037
    %v8168 = vunpack.c.l.b16 %v7038
    %v8169 = vunpack.c.h.b16 %v7038
    %v8170 = vunpack.c.l.b16 %v7039
    %v8171 = vunpack.c.h.b16 %v7039
    %v8172 = vunpack.c.l.b16 %v7040
    %v8173 = vunpack.c.h.b16 %v7040
    %v8174 = vunpack.c.l.b16 %v7041
    %v8175 = vunpack.c.h.b16 %v7041
    %v8176 = vunpack.c.l.b16 %v7042
    %v8177 = vunpack.c.h.b16 %v7042
    %v8178 = vunpack.c.l.b16 %v7043
    %v8179 = vunpack.c.h.b16 %v7043
    %v8180 = vunpack.c.l.b16 %v7044
    %v8181 = vunpack.c.h.b16 %v7044
    %v8182 = vunpack.c.l.b16 %v7045
    %v8183 = vunpack.c.h.b16 %v7045
    %v8184 = vunpack.c.l.b16 %v7046
    %v8185 = vunpack.c.h.b16 %v7046
    %v8186 = vunpack.c.l.b16 %v7047
    %v8187 = vunpack.c.h.b16 %v7047
    %v8188 = vunpack.c.l.b16 %v7048
    %v8189 = vunpack.c.h.b16 %v7048
    %v8190 = vunpack.c.l.b16 %v7049
    %v8191 = vunpack.c.h.b16 %v7049
    %v8192 = vunpack.c.l.b16 %v7050
    %v8193 = vunpack.c.h.b16 %v7050
    %v8194 = vunpack.c.l.b16 %v7051
    %v8195 = vunpack.c.h.b16 %v7051
    %v8196 = vunpack.c.l.b16 %v7052
    %v8197 = vunpack.c.h.b16 %v7052
    %v8198 = vunpack.c.l.b16 %v7053
    %v8199 = vunpack.c.h.b16 %v7053
    %v8200 = vunpack.c.l.b16 %v7054
    %v8201 = vunpack.c.h.b16 %v7054
    %v8202 = vunpack.c.l.b16 %v7055
    %v8203 = vunpack.c.h.b16 %v7055
    %v8204 = vunpack.c.l.b16 %v7056
    %v8205 = vunpack.c.h.b16 %v7056
    %v8206 = vunpack.c.l.b16 %v7057
    %v8207 = vunpack.c.h.b16 %v7057
    %v8208 = vunpack.c.l.b16 %v7058
    %v8209 = vunpack.c.h.b16 %v7058
    %v8210 = vunpack.c.l.b16 %v7059
    %v8211 = vunpack.c.h.b16 %v7059
    %v8212 = vunpack.c.l.b16 %v7060
    %v8213 = vunpack.c.h.b16 %v7060
    %v8214 = vunpack.c.l.b16 %v7061
    %v8215 = vunpack.c.h.b16 %v7061
    %v8216 = vunpack.c.l.b16 %v7062
    %v8217 = vunpack.c.h.b16 %v7062
    %v8218 = vunpack.c.l.b16 %v7063
    %v8219 = vunpack.c.h.b16 %v7063
    %v8220 = vunpack.c.l.b16 %v7064
    %v8221 = vunpack.c.h.b16 %v7064
    %v8222 = vunpack.c.l.b16 %v7065
    %v8223 = vunpack.c.h.b16 %v7065
    %v8224 = vunpack.c.l.b16 %v7066
    %v8225 = vunpack.c.h.b16 %v7066
    %v8226 = vunpack.c.l.b16 %v7067
    %v8227 = vunpack.c.h.b16 %v7067
    %v8228 = vunpack.c.l.b16 %v7068
    %v8229 = vunpack.c.h.b16 %v7068
    %v8230 = vunpack.c.l.b16 %v7069
    %v8231 = vunpack.c.h.b16 %v7069
    %v8232 = vunpack.c.l.b16 %v7070
    %v8233 = vunpack.c.h.b16 %v7070
    %v8234 = vunpack.c.l.b16 %v7071
    %v8235 = vunpack.c.h.b16 %v7071
    %v8236 = vunpack.c.l.b16 %v7072
    %v8237 = vunpack.c.h.b16 %v7072
    %v8238 = vunpack.c.l.b16 %v7073
    %v8239 = vunpack.c.h.b16 %v7073
    %v8240 = vunpack.c.l.b16 %v7074
    %v8241 = vunpack.c.h.b16 %v7074
    %v8242 = vunpack.c.l.b16 %v7075
    %v8243 = vunpack.c.h.b16 %v7075
    %v8244 = vunpack.c.l.b16 %v7076
    %v8245 = vunpack.c.h.b16 %v7076
    %v8246 = vunpack.c.l.b16 %v7077
    %v8247 = vunpack.c.h.b16 %v7077
    %v8248 = vunpack.c.l.b16 %v7078
    %v8249 = vunpack.c.h.b16 %v7078
    %v8250 = vunpack.c.l.b16 %v7079
    %v8251 = vunpack.c.h.b16 %v7079
    %v8252 = vunpack.c.l.b16 %v7080
    %v8253 = vunpack.c.h.b16 %v7080
    %v8254 = vunpack.c.l.b16 %v7081
    %v8255 = vunpack.c.h.b16 %v7081
    %v8256 = vpack.c.b16 %v7492, %v7488
    %v8257 = vpack.c.b16 %v7493, %v7489
    %v8258 = vpack.c.b16 %v7494, %v7490
    %v8259 = vpack.c.b16 %v7495, %v7491
    %v8260 = vpack.c.b16 %v7500, %v7496
    %v8261 = vpack.c.b16 %v7501, %v7497
    %v8262 = vpack.c.b16 %v7502, %v7498
    %v8263 = vpack.c.b16 %v7503, %v7499
    %v8264 = vpack.c.b16 %v7508, %v7504
    %v8265 = vpack.c.b16 %v7509, %v7505
    %v8266 = vpack.c.b16 %v7510, %v7506
    %v8267 = vpack.c.b16 %v7511, %v7507
    %v8268 = vpack.c.b16 %v7516, %v7512
    %v8269 = vpack.c.b16 %v7517, %v7513
    %v8270 = vpack.c.b16 %v7518, %v7514
    %v8271 = vpack.c.b16 %v7519, %v7515
    %v8272 = vpack.c.b16 %v7524, %v7520
    %v8273 = vpack.c.b16 %v7525, %v7521
    %v8274 = vpack.c.b16 %v7526, %v7522
    %v8275 = vpack.c.b16 %v7527, %v7523
    %v8276 = vpack.c.b16 %v7532, %v7528
    %v8277 = vpack.c.b16 %v7533, %v7529
    %v8278 = vpack.c.b16 %v7534, %v7530
    %v8279 = vpack.c.b16 %v7535, %v7531
    %v8280 = vpack.c.b16 %v7540, %v7536
    %v8281 = vpack.c.b16 %v7541, %v7537
    %v8282 = vpack.c.b16 %v7542, %v7538
    %v8283 = vpack.c.b16 %v7543, %v7539
    %v8284 = vpack.c.b16 %v7548, %v7544
    %v8285 = vpack.c.b16 %v7549, %v7545
    %v8286 = vpack.c.b16 %v7550, %v7546
    %v8287 = vpack.c.b16 %v7551, %v7547
    %v8288 = vpack.c.b16 %v7556, %v7552
    %v8289 = vpack.c.b16 %v7557, %v7553
    %v8290 = vpack.c.b16 %v7558, %v7554
    %v8291 = vpack.c.b16 %v7559, %v7555
    %v8292 = vpack.c.b16 %v7564, %v7560
    %v8293 = vpack.c.b16 %v7565, %v7561
    %v8294 = vpack.c.b16 %v7566, %v7562
    %v8295 = vpack.c.b16 %v7567, %v7563
    %v8296 = vpack.c.b16 %v7572, %v7568
    %v8297 = vpack.c.b16 %v7573, %v7569
    %v8298 = vpack.c.b16 %v7574, %v7570
    %v8299 = vpack.c.b16 %v7575, %v7571
    %v8300 = vpack.c.b16 %v7580, %v7576
    %v8301 = vpack.c.b16 %v7581, %v7577
    %v8302 = vpack.c.b16 %v7582, %v7578
    %v8303 = vpack.c.b16 %v7583, %v7579
    %v8304 = vpack.c.b16 %v7588, %v7584
    %v8305 = vpack.c.b16 %v7589, %v7585
    %v8306 = vpack.c.b16 %v7590, %v7586
    %v8307 = vpack.c.b16 %v7591, %v7587
    %v8308 = vpack.c.b16 %v7596, %v7592
    %v8309 = vpack.c.b16 %v7597, %v7593
    %v8310 = vpack.c.b16 %v7598, %v7594
    %v8311 = vpack.c.b16 %v7599, %v7595
    %v8312 = vpack.c.b16 %v7604, %v7600
    %v8313 = vpack.c.b16 %v7605, %v7601
    %v8314 = vpack.c.b16 %v7606, %v7602
    %v8315 = vpack.c.b16 %v7607, %v7603
    %v8316 = vpack.c.b16 %v7612, %v7608
    %v8317 = vpack.c.b16 %v7613, %v7609
    %v8318 = vpack.c.b16 %v7614, %v7610
    %v8319 = vpack.c.b16 %v7615, %v7611
    %v8320 = vpack.c.b16 %v7620, %v7616
    %v8321 = vpack.c.b16 %v7621, %v7617
    %v8322 = vpack.c.b16 %v7622, %v7618
    %v8323 = vpack.c.b16 %v7623, %v7619
    %v8324 = vpack.c.b16 %v7628, %v7624
    %v8325 = vpack.c.b16 %v7629, %v7625
    %v8326 = vpack.c.b16 %v7630, %v7626
    %v8327 = vpack.c.b16 %v7631, %v7627
    %v8328 = vpack.c.b16 %v7636, %v7632
    %v8329 = vpack.c.b16 %v7637, %v7633
    %v8330 = vpack.c.b16 %v7638, %v7634
    %v8331 = vpack.c.b16 %v7639, %v7635
    %v8332 = vpack.c.b16 %v7644, %v7640
    %v8333 = vpack.c.b16 %v7645, %v7641
    %v8334 = vpack.c.b16 %v7646, %v7642
    %v8335 = vpack.c.b16 %v7647, %v7643
    %v8336 = vpack.c.b16 %v7652, %v7648
    %v8337 = vpack.c.b16 %v7653, %v7649
    %v8338 = vpack.c.b16 %v7654, %v7650
    %v8339 = vpack.c.b16 %v7655, %v7651
    %v8340 = vpack.c.b16 %v7660, %v7656
    %v8341 = vpack.c.b16 %v7661, %v7657
    %v8342 = vpack.c.b16 %v7662, %v7658
    %v8343 = vpack.c.b16 %v7663, %v7659
    %v8344 = vpack.c.b16 %v7668, %v7664
    %v8345 = vpack.c.b16 %v7669, %v7665
    %v8346 = vpack.c.b16 %v7670, %v7666
    %v8347 = vpack.c.b16 %v7671, %v7667
    %v8348 = vpack.c.b16 %v7676, %v7672
    %v8349 = vpack.c.b16 %v7677, %v7673
    %v8350 = vpack.c.b16 %v7678, %v7674
    %v8351 = vpack.c.b16 %v7679, %v7675
    %v8352 = vpack.c.b16 %v7684, %v7680
    %v8353 = vpack.c.b16 %v7685, %v7681
    %v8354 = vpack.c.b16 %v7686, %v7682
    %v8355 = vpack.c.b16 %v7687, %v7683
    %v8356 = vpack.c.b16 %v7692, %v7688
    %v8357 = vpack.c.b16 %v7693, %v7689
    %v8358 = vpack.c.b16 %v7694, %v7690
    %v8359 = vpack.c.b16 %v7695, %v7691
    %v8360 = vpack.c.b16 %v7700, %v7696
    %v8361 = vpack.c.b16 %v7701, %v7697
    %v8362 = vpack.c.b16 %v7702, %v7698
    %v8363 = vpack.c.b16 %v7703, %v7699
    %v8364 = vpack.c.b16 %v7708, %v7704
    %v8365 = vpack.c.b16 %v7709, %v7705
    %v8366 = vpack.c.b16 %v7710, %v7706
    %v8367 = vpack.c.b16 %v7711, %v7707
    %v8368 = vpack.c.b16 %v7716, %v7712
    %v8369 = vpack.c.b16 %v7717, %v7713
    %v8370 = vpack.c.b16 %v7718, %v7714
    %v8371 = vpack.c.b16 %v7719, %v7715
    %v8372 = vpack.c.b16 %v7724, %v7720
    %v8373 = vpack.c.b16 %v7725, %v7721
    %v8374 = vpack.c.b16 %v7726, %v7722
    %v8375 = vpack.c.b16 %v7727, %v7723
    %v8376 = vpack.c.b16 %v7732, %v7728
    %v8377 = vpack.c.b16 %v7733, %v7729
    %v8378 = vpack.c.b16 %v7734, %v7730
    %v8379 = vpack.c.b16 %v7735, %v7731
    %v8380 = vpack.c.b16 %v7740, %v7736
    %v8381 = vpack.c.b16 %v7741, %v7737
    %v8382 = vpack.c.b16 %v7742, %v7738
    %v8383 = vpack.c.b16 %v7743, %v7739
    %v8384 = vpack.c.b16 %v7748, %v7744
    %v8385 = vpack.c.b16 %v7749, %v7745
    %v8386 = vpack.c.b16 %v7750, %v7746
    %v8387 = vpack.c.b16 %v7751, %v7747
    %v8388 = vpack.c.b16 %v7756, %v7752
    %v8389 = vpack.c.b16 %v7757, %v7753
    %v8390 = vpack.c.b16 %v7758, %v7754
    %v8391 = vpack.c.b16 %v7759, %v7755
    %v8392 = vpack.c.b16 %v7764, %v7760
    %v8393 = vpack.c.b16 %v7765, %v7761
    %v8394 = vpack.c.b16 %v7766, %v7762
    %v8395 = vpack.c.b16 %v7767, %v7763
    %v8396 = vpack.c.b16 %v7772, %v7768
    %v8397 = vpack.c.b16 %v7773, %v7769
    %v8398 = vpack.c.b16 %v7774, %v7770
    %v8399 = vpack.c.b16 %v7775, %v7771
    %v8400 = vpack.c.b16 %v7780, %v7776
    %v8401 = vpack.c.b16 %v7781, %v7777
    %v8402 = vpack.c.b16 %v7782, %v7778
    %v8403 = vpack.c.b16 %v7783, %v7779
    %v8404 = vpack.c.b16 %v7788, %v7784
    %v8405 = vpack.c.b16 %v7789, %v7785
    %v8406 = vpack.c.b16 %v7790, %v7786
    %v8407 = vpack.c.b16 %v7791, %v7787
    %v8408 = vpack.c.b16 %v7796, %v7792
    %v8409 = vpack.c.b16 %v7797, %v7793
    %v8410 = vpack.c.b16 %v7798, %v7794
    %v8411 = vpack.c.b16 %v7799, %v7795
    %v8412 = vpack.c.b16 %v7804, %v7800
    %v8413 = vpack.c.b16 %v7805, %v7801
    %v8414 = vpack.c.b16 %v7806, %v7802
    %v8415 = vpack.c.b16 %v7807, %v7803
    %v8416 = vpack.c.b16 %v7812, %v7808
    %v8417 = vpack.c.b16 %v7813, %v7809
    %v8418 = vpack.c.b16 %v7814, %v7810
    %v8419 = vpack.c.b16 %v7815, %v7811
    %v8420 = vpack.c.b16 %v7820, %v7816
    %v8421 = vpack.c.b16 %v7821, %v7817
    %v8422 = vpack.c.b16 %v7822, %v7818
    %v8423 = vpack.c.b16 %v7823, %v7819
    %v8424 = vpack.c.b16 %v7828, %v7824
    %v8425 = vpack.c.b16 %v7829, %v7825
    %v8426 = vpack.c.b16 %v7830, %v7826
    %v8427 = vpack.c.b16 %v7831, %v7827
    %v8428 = vpack.c.b16 %v7836, %v7832
    %v8429 = vpack.c.b16 %v7837, %v7833
    %v8430 = vpack.c.b16 %v7838, %v7834
    %v8431 = vpack.c.b16 %v7839, %v7835
    %v8432 = vpack.c.b16 %v7844, %v7840
    %v8433 = vpack.c.b16 %v7845, %v7841
    %v8434 = vpack.c.b16 %v7846, %v7842
    %v8435 = vpack.c.b16 %v7847, %v7843
    %v8436 = vpack.c.b16 %v7852, %v7848
    %v8437 = vpack.c.b16 %v7853, %v7849
    %v8438 = vpack.c.b16 %v7854, %v7850
    %v8439 = vpack.c.b16 %v7855, %v7851
    %v8440 = vpack.c.b16 %v7860, %v7856
    %v8441 = vpack.c.b16 %v7861, %v7857
    %v8442 = vpack.c.b16 %v7862, %v7858
    %v8443 = vpack.c.b16 %v7863, %v7859
    %v8444 = vpack.c.b16 %v7868, %v7864
    %v8445 = vpack.c.b16 %v7869, %v7865
    %v8446 = vpack.c.b16 %v7870, %v7866
    %v8447 = vpack.c.b16 %v7871, %v7867
    %v8448 = vpack.c.b16 %v7876, %v7872
    %v8449 = vpack.c.b16 %v7877, %v7873
    %v8450 = vpack.c.b16 %v7878, %v7874
    %v8451 = vpack.c.b16 %v7879, %v7875
    %v8452 = vpack.c.b16 %v7884, %v7880
    %v8453 = vpack.c.b16 %v7885, %v7881
    %v8454 = vpack.c.b16 %v7886, %v7882
    %v8455 = vpack.c.b16 %v7887, %v7883
    %v8456 = vpack.c.b16 %v7892, %v7888
    %v8457 = vpack.c.b16 %v7893, %v7889
    %v8458 = vpack.c.b16 %v7894, %v7890
    %v8459 = vpack.c.b16 %v7895, %v7891
    %v8460 = vpack.c.b16 %v7900, %v7896
    %v8461 = vpack.c.b16 %v7901, %v7897
    %v8462 = vpack.c.b16 %v7902, %v7898
    %v8463 = vpack.c.b16 %v7903, %v7899
    %v8464 = vpack.c.b16 %v7908, %v7904
    %v8465 = vpack.c.b16 %v7909, %v7905
    %v8466 = vpack.c.b16 %v7910, %v7906
    %v8467 = vpack.c.b16 %v7911, %v7907
    %v8468 = vpack.c.b16 %v7916, %v7912
    %v8469 = vpack.c.b16 %v7917, %v7913
    %v8470 = vpack.c.b16 %v7918, %v7914
    %v8471 = vpack.c.b16 %v7919, %v7915
    %v8472 = vpack.c.b16 %v7924, %v7920
    %v8473 = vpack.c.b16 %v7925, %v7921
    %v8474 = vpack.c.b16 %v7926, %v7922
    %v8475 = vpack.c.b16 %v7927, %v7923
    %v8476 = vpack.c.b16 %v7932, %v7928
    %v8477 = vpack.c.b16 %v7933, %v7929
    %v8478 = vpack.c.b16 %v7934, %v7930
    %v8479 = vpack.c.b16 %v7935, %v7931
    %v8480 = vpack.c.b16 %v7940, %v7936
    %v8481 = vpack.c.b16 %v7941, %v7937
    %v8482 = vpack.c.b16 %v7942, %v7938
    %v8483 = vpack.c.b16 %v7943, %v7939
    %v8484 = vpack.c.b16 %v7948, %v7944
    %v8485 = vpack.c.b16 %v7949, %v7945
    %v8486 = vpack.c.b16 %v7950, %v7946
    %v8487 = vpack.c.b16 %v7951, %v7947
    %v8488 = vpack.c.b16 %v7956, %v7952
    %v8489 = vpack.c.b16 %v7957, %v7953
    %v8490 = vpack.c.b16 %v7958, %v7954
    %v8491 = vpack.c.b16 %v7959, %v7955
    %v8492 = vpack.c.b16 %v7964, %v7960
    %v8493 = vpack.c.b16 %v7965, %v7961
    %v8494 = vpack.c.b16 %v7966, %v7962
    %v8495 = vpack.c.b16 %v7967, %v7963
    %v8496 = vpack.c.b16 %v7972, %v7968
    %v8497 = vpack.c.b16 %v7973, %v7969
    %v8498 = vpack.c.b16 %v7974, %v7970
    %v8499 = vpack.c.b16 %v7975, %v7971
    %v8500 = vpack.c.b16 %v7980, %v7976
    %v8501 = vpack.c.b16 %v7981, %v7977
    %v8502 = vpack.c.b16 %v7982, %v7978
    %v8503 = vpack.c.b16 %v7983, %v7979
    %v8504 = vpack.c.b16 %v7988, %v7984
    %v8505 = vpack.c.b16 %v7989, %v7985
    %v8506 = vpack.c.b16 %v7990, %v7986
    %v8507 = vpack.c.b16 %v7991, %v7987
    %v8508 = vpack.c.b16 %v7996, %v7992
    %v8509 = vpack.c.b16 %v7997, %v7993
    %v8510 = vpack.c.b16 %v7998, %v7994
    %v8511 = vpack.c.b16 %v7999, %v7995
    %v8512 = vpack.c.b16 %v8004, %v8000
    %v8513 = vpack.c.b16 %v8005, %v8001
    %v8514 = vpack.c.b16 %v8006, %v8002
    %v8515 = vpack.c.b16 %v8007, %v8003
    %v8516 = vpack.c.b16 %v8012, %v8008
    %v8517 = vpack.c.b16 %v8013, %v8009
    %v8518 = vpack.c.b16 %v8014, %v8010
    %v8519 = vpack.c.b16 %v8015, %v8011
    %v8520 = vpack.c.b16 %v8020, %v8016
    %v8521 = vpack.c.b16 %v8021, %v8017
    %v8522 = vpack.c.b16 %v8022, %v8018
    %v8523 = vpack.c.b16 %v8023, %v8019
    %v8524 = vpack.c.b16 %v8028, %v8024
    %v8525 = vpack.c.b16 %v8029, %v8025
    %v8526 = vpack.c.b16 %v8030, %v8026
    %v8527 = vpack.c.b16 %v8031, %v8027
    %v8528 = vpack.c.b16 %v8036, %v8032
    %v8529 = vpack.c.b16 %v8037, %v8033
    %v8530 = vpack.c.b16 %v8038, %v8034
    %v8531 = vpack.c.b16 %v8039, %v8035
    %v8532 = vpack.c.b16 %v8044, %v8040
    %v8533 = vpack.c.b16 %v8045, %v8041
    %v8534 = vpack.c.b16 %v8046, %v8042
    %v8535 = vpack.c.b16 %v8047, %v8043
    %v8536 = vpack.c.b16 %v8052, %v8048
    %v8537 = vpack.c.b16 %v8053, %v8049
    %v8538 = vpack.c.b16 %v8054, %v8050
    %v8539 = vpack.c.b16 %v8055, %v8051
    %v8540 = vpack.c.b16 %v8060, %v8056
    %v8541 = vpack.c.b16 %v8061, %v8057
    %v8542 = vpack.c.b16 %v8062, %v8058
    %v8543 = vpack.c.b16 %v8063, %v8059
    %v8544 = vpack.c.b16 %v8068, %v8064
    %v8545 = vpack.c.b16 %v8069, %v8065
    %v8546 = vpack.c.b16 %v8070, %v8066
    %v8547 = vpack.c.b16 %v8071, %v8067
    %v8548 = vpack.c.b16 %v8076, %v8072
    %v8549 = vpack.c.b16 %v8077, %v8073
    %v8550 = vpack.c.b16 %v8078, %v8074
    %v8551 = vpack.c.b16 %v8079, %v8075
    %v8552 = vpack.c.b16 %v8084, %v8080
    %v8553 = vpack.c.b16 %v8085, %v8081
    %v8554 = vpack.c.b16 %v8086, %v8082
    %v8555 = vpack.c.b16 %v8087, %v8083
    %v8556 = vpack.c.b16 %v8092, %v8088
    %v8557 = vpack.c.b16 %v8093, %v8089
    %v8558 = vpack.c.b16 %v8094, %v8090
    %v8559 = vpack.c.b16 %v8095, %v8091
    %v8560 = vpack.c.b16 %v8100, %v8096
    %v8561 = vpack.c.b16 %v8101, %v8097
    %v8562 = vpack.c.b16 %v8102, %v8098
    %v8563 = vpack.c.b16 %v8103, %v8099
    %v8564 = vpack.c.b16 %v8108, %v8104
    %v8565 = vpack.c.b16 %v8109, %v8105
    %v8566 = vpack.c.b16 %v8110, %v8106
    %v8567 = vpack.c.b16 %v8111, %v8107
    %v8568 = vpack.c.b16 %v8116, %v8112
    %v8569 = vpack.c.b16 %v8117, %v8113
    %v8570 = vpack.c.b16 %v8118, %v8114
    %v8571 = vpack.c.b16 %v8119, %v8115
    %v8572 = vpack.c.b16 %v8124, %v8120
    %v8573 = vpack.c.b16 %v8125, %v8121
    %v8574 = vpack.c.b16 %v8126, %v8122
    %v8575 = vpack.c.b16 %v8127, %v8123
    %v8576 = vpack.c.b16 %v8132, %v8128
    %v8577 = vpack.c.b16 %v8133, %v8129
    %v8578 = vpack.c.b16 %v8134, %v8130
    %v8579 = vpack.c.b16 %v8135, %v8131
    %v8580 = vpack.c.b16 %v8140, %v8136
    %v8581 = vpack.c.b16 %v8141, %v8137
    %v8582 = vpack.c.b16 %v8142, %v8138
    %v8583 = vpack.c.b16 %v8143, %v8139
    %v8584 = vpack.c.b16 %v8148, %v8144
    %v8585 = vpack.c.b16 %v8149, %v8145
    %v8586 = vpack.c.b16 %v8150, %v8146
    %v8587 = vpack.c.b16 %v8151, %v8147
    %v8588 = vpack.c.b16 %v8156, %v8152
    %v8589 = vpack.c.b16 %v8157, %v8153
    %v8590 = vpack.c.b16 %v8158, %v8154
    %v8591 = vpack.c.b16 %v8159, %v8155
    %v8592 = vpack.c.b16 %v8164, %v8160
    %v8593 = vpack.c.b16 %v8165, %v8161
    %v8594 = vpack.c.b16 %v8166, %v8162
    %v8595 = vpack.c.b16 %v8167, %v8163
    %v8596 = vpack.c.b16 %v8172, %v8168
    %v8597 = vpack.c.b16 %v8173, %v8169
    %v8598 = vpack.c.b16 %v8174, %v8170
    %v8599 = vpack.c.b16 %v8175, %v8171
    %v8600 = vpack.c.b16 %v8180, %v8176
    %v8601 = vpack.c.b16 %v8181, %v8177
    %v8602 = vpack.c.b16 %v8182, %v8178
    %v8603 = vpack.c.b16 %v8183, %v8179
    %v8604 = vpack.c.b16 %v8188, %v8184
    %v8605 = vpack.c.b16 %v8189, %v8185
    %v8606 = vpack.c.b16 %v8190, %v8186
    %v8607 = vpack.c.b16 %v8191, %v8187
    %v8608 = vpack.c.b16 %v8196, %v8192
    %v8609 = vpack.c.b16 %v8197, %v8193
    %v8610 = vpack.c.b16 %v8198, %v8194
    %v8611 = vpack.c.b16 %v8199, %v8195
    %v8612 = vpack.c.b16 %v8204, %v8200
    %v8613 = vpack.c.b16 %v8205, %v8201
    %v8614 = vpack.c.b16 %v8206, %v8202
    %v8615 = vpack.c.b16 %v8207, %v8203
    %v8616 = vpack.c.b16 %v8212, %v8208
    %v8617 = vpack.c.b16 %v8213, %v8209
    %v8618 = vpack.c.b16 %v8214, %v8210
    %v8619 = vpack.c.b16 %v8215, %v8211
    %v8620 = vpack.c.b16 %v8220, %v8216
    %v8621 = vpack.c.b16 %v8221, %v8217
    %v8622 = vpack.c.b16 %v8222, %v8218
    %v8623 = vpack.c.b16 %v8223, %v8219
    %v8624 = vpack.c.b16 %v8228, %v8224
    %v8625 = vpack.c.b16 %v8229, %v8225
    %v8626 = vpack.c.b16 %v8230, %v8226
    %v8627 = vpack.c.b16 %v8231, %v8227
    %v8628 = vpack.c.b16 %v8236, %v8232
    %v8629 = vpack.c.b16 %v8237, %v8233
    %v8630 = vpack.c.b16 %v8238, %v8234
    %v8631 = vpack.c.b16 %v8239, %v8235
    %v8632 = vpack.c.b16 %v8244, %v8240
    %v8633 = vpack.c.b16 %v8245, %v8241
    %v8634 = vpack.c.b16 %v8246, %v8242
    %v8635 = vpack.c.b16 %v8247, %v8243
    %v8636 = vpack.c.b16 %v8252, %v8248
    %v8637 = vpack.c.b16 %v8253, %v8249
    %v8638 = vpack.c.b16 %v8254, %v8250
    %v8639 = vpack.c.b16 %v8255, %v8251
    %9024 = vmatprep.subr.bf16.mxu0 %v8257
    %9025 = vmatpush1.bf16.msra.mxu0 %v8256
    %9026 = vmatprep.subr.bf16.mxu0 %v8261
    %9027 = vmatpush1.bf16.msra.mxu0 %v8260
    %9028 = vmatprep.subr.bf16.mxu0 %v8265
    %9029 = vmatpush1.bf16.msra.mxu0 %v8264
    %9030 = vmatprep.subr.bf16.mxu0 %v8269
    %9031 = vmatpush1.bf16.msra.mxu0 %v8268
    %9032 = vmatprep.subr.bf16.mxu0 %v8273
    %9033 = vmatpush1.bf16.msra.mxu0 %v8272
    %9034 = vmatprep.subr.bf16.mxu0 %v8277
    %9035 = vmatpush1.bf16.msra.mxu0 %v8276
    %9036 = vmatprep.subr.bf16.mxu0 %v8281
    %9037 = vmatpush1.bf16.msra.mxu0 %v8280
    %9038 = vmatprep.subr.bf16.mxu0 %v8285
    %9039 = vmatpush1.bf16.msra.mxu0 %v8284
    %9040 = vmatprep.subr.bf16.mxu0 %v8289
    %9041 = vmatpush1.bf16.msra.mxu0 %v8288
    %9042 = vmatprep.subr.bf16.mxu0 %v8293
    %9043 = vmatpush1.bf16.msra.mxu0 %v8292
    %9044 = vmatprep.subr.bf16.mxu0 %v8297
    %9045 = vmatpush1.bf16.msra.mxu0 %v8296
    %9046 = vmatprep.subr.bf16.mxu0 %v8301
    %9047 = vmatpush1.bf16.msra.mxu0 %v8300
    %9048 = vmatprep.subr.bf16.mxu0 %v8305
    %9049 = vmatpush1.bf16.msra.mxu0 %v8304
    %9050 = vmatprep.subr.bf16.mxu0 %v8309
    %9051 = vmatpush1.bf16.msra.mxu0 %v8308
    %9052 = vmatprep.subr.bf16.mxu0 %v8313
    %9053 = vmatpush1.bf16.msra.mxu0 %v8312
    %9054 = vmatprep.subr.bf16.mxu0 %v8317
    %9055 = vmatpush1.bf16.msra.mxu0 %v8316
    %9056 = vmatprep.mubr.bf16.mxu0 %v6687
    %9057 = vmatmul.mubr.bf16.gmra.mrb[0].mxu0 %v6686
    %v9058 = vpop.f32.mrb[0].mxu0
    %v9059 = vadd.f32 %v7087, %v9058
    %v9060 = vpop.f32.mrb[0].mxu0
    %v9061 = vadd.f32 %v7091, %v9060
    %v9062 = vpop.f32.mrb[0].mxu0
    %v9063 = vadd.f32 %v7087, %v9062
    %v9064 = vpop.f32.mrb[0].mxu0
    %v9065 = vadd.f32 %v7091, %v9064
    %9066 = vdwg.mxu0
    %9067 = vmatprep.subr.bf16.mxu0 %v8321
    %9068 = vmatpush1.bf16.msra.mxu0 %v8320
    %9069 = vmatprep.subr.bf16.mxu0 %v8325
    %9070 = vmatpush1.bf16.msra.mxu0 %v8324
    %9071 = vmatprep.subr.bf16.mxu0 %v8329
    %9072 = vmatpush1.bf16.msra.mxu0 %v8328
    %9073 = vmatprep.subr.bf16.mxu0 %v8333
    %9074 = vmatpush1.bf16.msra.mxu0 %v8332
    %9075 = vmatprep.subr.bf16.mxu0 %v8337
    %9076 = vmatpush1.bf16.msra.mxu0 %v8336
    %9077 = vmatprep.subr.bf16.mxu0 %v8341
    %9078 = vmatpush1.bf16.msra.mxu0 %v8340
    %9079 = vmatprep.subr.bf16.mxu0 %v8345
    %9080 = vmatpush1.bf16.msra.mxu0 %v8344
    %9081 = vmatprep.subr.bf16.mxu0 %v8349
    %9082 = vmatpush1.bf16.msra.mxu0 %v8348
    %9083 = vmatprep.subr.bf16.mxu0 %v8353
    %9084 = vmatpush1.bf16.msra.mxu0 %v8352
    %9085 = vmatprep.subr.bf16.mxu0 %v8357
    %9086 = vmatpush1.bf16.msra.mxu0 %v8356
    %9087 = vmatprep.subr.bf16.mxu0 %v8361
    %9088 = vmatpush1.bf16.msra.mxu0 %v8360
    %9089 = vmatprep.subr.bf16.mxu0 %v8365
    %9090 = vmatpush1.bf16.msra.mxu0 %v8364
    %9091 = vmatprep.subr.bf16.mxu0 %v8369
    %9092 = vmatpush1.bf16.msra.mxu0 %v8368
    %9093 = vmatprep.subr.bf16.mxu0 %v8373
    %9094 = vmatpush1.bf16.msra.mxu0 %v8372
    %9095 = vmatprep.subr.bf16.mxu0 %v8377
    %9096 = vmatpush1.bf16.msra.mxu0 %v8376
    %9097 = vmatprep.subr.bf16.mxu0 %v8381
    %9098 = vmatpush1.bf16.msra.mxu0 %v8380
    %9099 = vmatprep.mubr.bf16.mxu0 %v6689
    %9100 = vmatmul.mubr.bf16.gmra.mrb[0].mxu0 %v6688
    %v9101 = vpop.f32.mrb[0].mxu0
    %v9102 = vadd.f32 %v9059, %v9101
    %v9103 = vpop.f32.mrb[0].mxu0
    %v9104 = vadd.f32 %v9061, %v9103
    %v9105 = vpop.f32.mrb[0].mxu0
    %v9106 = vadd.f32 %v9063, %v9105
    %v9107 = vpop.f32.mrb[0].mxu0
    %v9108 = vadd.f32 %v9065, %v9107
    %9109 = vdwg.mxu0
    %9110 = vmatprep.subr.bf16.mxu0 %v8385
    %9111 = vmatpush1.bf16.msra.mxu0 %v8384
    %9112 = vmatprep.subr.bf16.mxu0 %v8389
    %9113 = vmatpush1.bf16.msra.mxu0 %v8388
    %9114 = vmatprep.subr.bf16.mxu0 %v8393
    %9115 = vmatpush1.bf16.msra.mxu0 %v8392
    %9116 = vmatprep.subr.bf16.mxu0 %v8397
    %9117 = vmatpush1.bf16.msra.mxu0 %v8396
    %9118 = vmatprep.subr.bf16.mxu0 %v8401
    %9119 = vmatpush1.bf16.msra.mxu0 %v8400
    %9120 = vmatprep.subr.bf16.mxu0 %v8405
    %9121 = vmatpush1.bf16.msra.mxu0 %v8404
    %9122 = vmatprep.subr.bf16.mxu0 %v8409
    %9123 = vmatpush1.bf16.msra.mxu0 %v8408
    %9124 = vmatprep.subr.bf16.mxu0 %v8413
    %9125 = vmatpush1.bf16.msra.mxu0 %v8412
    %9126 = vmatprep.subr.bf16.mxu0 %v8417
    %9127 = vmatpush1.bf16.msra.mxu0 %v8416
    %9128 = vmatprep.subr.bf16.mxu0 %v8421
    %9129 = vmatpush1.bf16.msra.mxu0 %v8420
    %9130 = vmatprep.subr.bf16.mxu0 %v8425
    %9131 = vmatpush1.bf16.msra.mxu0 %v8424
    %9132 = vmatprep.subr.bf16.mxu0 %v8429
    %9133 = vmatpush1.bf16.msra.mxu0 %v8428
    %9134 = vmatprep.subr.bf16.mxu0 %v8433
    %9135 = vmatpush1.bf16.msra.mxu0 %v8432
    %9136 = vmatprep.subr.bf16.mxu0 %v8437
    %9137 = vmatpush1.bf16.msra.mxu0 %v8436
    %9138 = vmatprep.subr.bf16.mxu0 %v8441
    %9139 = vmatpush1.bf16.msra.mxu0 %v8440
    %9140 = vmatprep.subr.bf16.mxu0 %v8445
    %9141 = vmatpush1.bf16.msra.mxu0 %v8444
    %9142 = vmatprep.mubr.bf16.mxu0 %v6691
    %9143 = vmatmul.mubr.bf16.gmra.mrb[0].mxu0 %v6690
    %v9144 = vpop.f32.mrb[0].mxu0
    %v9145 = vadd.f32 %v9102, %v9144
    %v9146 = vpop.f32.mrb[0].mxu0
    %v9147 = vadd.f32 %v9104, %v9146
    %v9148 = vpop.f32.mrb[0].mxu0
    %v9149 = vadd.f32 %v9106, %v9148
    %v9150 = vpop.f32.mrb[0].mxu0
    %v9151 = vadd.f32 %v9108, %v9150
    %9152 = vdwg.mxu0
    %9153 = vmatprep.subr.bf16.mxu0 %v8449
    %9154 = vmatpush1.bf16.msra.mxu0 %v8448
    %9155 = vmatprep.subr.bf16.mxu0 %v8453
    %9156 = vmatpush1.bf16.msra.mxu0 %v8452
    %9157 = vmatprep.subr.bf16.mxu0 %v8457
    %9158 = vmatpush1.bf16.msra.mxu0 %v8456
    %9159 = vmatprep.subr.bf16.mxu0 %v8461
    %9160 = vmatpush1.bf16.msra.mxu0 %v8460
    %9161 = vmatprep.subr.bf16.mxu0 %v8465
    %9162 = vmatpush1.bf16.msra.mxu0 %v8464
    %9163 = vmatprep.subr.bf16.mxu0 %v8469
    %9164 = vmatpush1.bf16.msra.mxu0 %v8468
    %9165 = vmatprep.subr.bf16.mxu0 %v8473
    %9166 = vmatpush1.bf16.msra.mxu0 %v8472
    %9167 = vmatprep.subr.bf16.mxu0 %v8477
    %9168 = vmatpush1.bf16.msra.mxu0 %v8476
    %9169 = vmatprep.subr.bf16.mxu0 %v8481
    %9170 = vmatpush1.bf16.msra.mxu0 %v8480
    %9171 = vmatprep.subr.bf16.mxu0 %v8485
    %9172 = vmatpush1.bf16.msra.mxu0 %v8484
    %9173 = vmatprep.subr.bf16.mxu0 %v8489
    %9174 = vmatpush1.bf16.msra.mxu0 %v8488
    %9175 = vmatprep.subr.bf16.mxu0 %v8493
    %9176 = vmatpush1.bf16.msra.mxu0 %v8492
    %9177 = vmatprep.subr.bf16.mxu0 %v8497
    %9178 = vmatpush1.bf16.msra.mxu0 %v8496
    %9179 = vmatprep.subr.bf16.mxu0 %v8501
    %9180 = vmatpush1.bf16.msra.mxu0 %v8500
    %9181 = vmatprep.subr.bf16.mxu0 %v8505
    %9182 = vmatpush1.bf16.msra.mxu0 %v8504
    %9183 = vmatprep.subr.bf16.mxu0 %v8509
    %9184 = vmatpush1.bf16.msra.mxu0 %v8508
    %9185 = vmatprep.mubr.bf16.mxu0 %v6693
    %9186 = vmatmul.mubr.bf16.gmra.mrb[0].mxu0 %v6692
    %v9187 = vpop.f32.mrb[0].mxu0
    %v9188 = vadd.f32 %v9145, %v9187
    %v9189 = vpop.f32.mrb[0].mxu0
    %v9190 = vadd.f32 %v9147, %v9189
    %v9191 = vpop.f32.mrb[0].mxu0
    %v9192 = vadd.f32 %v9149, %v9191
    %v9193 = vpop.f32.mrb[0].mxu0
    %v9194 = vadd.f32 %v9151, %v9193
    %9195 = vdwg.mxu0
    %9196 = vmatprep.subr.bf16.mxu0 %v8513
    %9197 = vmatpush1.bf16.msra.mxu0 %v8512
    %9198 = vmatprep.subr.bf16.mxu0 %v8517
    %9199 = vmatpush1.bf16.msra.mxu0 %v8516
    %9200 = vmatprep.subr.bf16.mxu0 %v8521
    %9201 = vmatpush1.bf16.msra.mxu0 %v8520
    %9202 = vmatprep.subr.bf16.mxu0 %v8525
    %9203 = vmatpush1.bf16.msra.mxu0 %v8524
    %9204 = vmatprep.subr.bf16.mxu0 %v8529
    %9205 = vmatpush1.bf16.msra.mxu0 %v8528
    %9206 = vmatprep.subr.bf16.mxu0 %v8533
    %9207 = vmatpush1.bf16.msra.mxu0 %v8532
    %9208 = vmatprep.subr.bf16.mxu0 %v8537
    %9209 = vmatpush1.bf16.msra.mxu0 %v8536
    %9210 = vmatprep.subr.bf16.mxu0 %v8541
    %9211 = vmatpush1.bf16.msra.mxu0 %v8540
    %9212 = vmatprep.subr.bf16.mxu0 %v8545
    %9213 = vmatpush1.bf16.msra.mxu0 %v8544
    %9214 = vmatprep.subr.bf16.mxu0 %v8549
    %9215 = vmatpush1.bf16.msra.mxu0 %v8548
    %9216 = vmatprep.subr.bf16.mxu0 %v8553
    %9217 = vmatpush1.bf16.msra.mxu0 %v8552
    %9218 = vmatprep.subr.bf16.mxu0 %v8557
    %9219 = vmatpush1.bf16.msra.mxu0 %v8556
    %9220 = vmatprep.subr.bf16.mxu0 %v8561
    %9221 = vmatpush1.bf16.msra.mxu0 %v8560
    %9222 = vmatprep.subr.bf16.mxu0 %v8565
    %9223 = vmatpush1.bf16.msra.mxu0 %v8564
    %9224 = vmatprep.subr.bf16.mxu0 %v8569
    %9225 = vmatpush1.bf16.msra.mxu0 %v8568
    %9226 = vmatprep.subr.bf16.mxu0 %v8573
    %9227 = vmatpush1.bf16.msra.mxu0 %v8572
    %9228 = vmatprep.mubr.bf16.mxu0 %v6695
    %9229 = vmatmul.mubr.bf16.gmra.mrb[0].mxu0 %v6694
    %v9230 = vpop.f32.mrb[0].mxu0
    %v9231 = vadd.f32 %v9188, %v9230
    %v9232 = vpop.f32.mrb[0].mxu0
    %v9233 = vadd.f32 %v9190, %v9232
    %v9234 = vpop.f32.mrb[0].mxu0
    %v9235 = vadd.f32 %v9192, %v9234
    %v9236 = vpop.f32.mrb[0].mxu0
    %v9237 = vadd.f32 %v9194, %v9236
    %9238 = vdwg.mxu0
    %9239 = vmatprep.subr.bf16.mxu0 %v8577
    %9240 = vmatpush1.bf16.msra.mxu0 %v8576
    %9241 = vmatprep.subr.bf16.mxu0 %v8581
    %9242 = vmatpush1.bf16.msra.mxu0 %v8580
    %9243 = vmatprep.subr.bf16.mxu0 %v8585
    %9244 = vmatpush1.bf16.msra.mxu0 %v8584
    %9245 = vmatprep.subr.bf16.mxu0 %v8589
    %9246 = vmatpush1.bf16.msra.mxu0 %v8588
    %9247 = vmatprep.subr.bf16.mxu0 %v8593
    %9248 = vmatpush1.bf16.msra.mxu0 %v8592
    %9249 = vmatprep.subr.bf16.mxu0 %v8597
    %9250 = vmatpush1.bf16.msra.mxu0 %v8596
    %9251 = vmatprep.subr.bf16.mxu0 %v8601
    %9252 = vmatpush1.bf16.msra.mxu0 %v8600
    %9253 = vmatprep.subr.bf16.mxu0 %v8605
    %9254 = vmatpush1.bf16.msra.mxu0 %v8604
    %9255 = vmatprep.subr.bf16.mxu0 %v8609
    %9256 = vmatpush1.bf16.msra.mxu0 %v8608
    %9257 = vmatprep.subr.bf16.mxu0 %v8613
    %9258 = vmatpush1.bf16.msra.mxu0 %v8612
    %9259 = vmatprep.subr.bf16.mxu0 %v8617
    %9260 = vmatpush1.bf16.msra.mxu0 %v8616
    %9261 = vmatprep.subr.bf16.mxu0 %v8621
    %9262 = vmatpush1.bf16.msra.mxu0 %v8620
    %9263 = vmatprep.subr.bf16.mxu0 %v8625
    %9264 = vmatpush1.bf16.msra.mxu0 %v8624
    %9265 = vmatprep.subr.bf16.mxu0 %v8629
    %9266 = vmatpush1.bf16.msra.mxu0 %v8628
    %9267 = vmatprep.subr.bf16.mxu0 %v8633
    %9268 = vmatpush1.bf16.msra.mxu0 %v8632
    %9269 = vmatprep.subr.bf16.mxu0 %v8637
    %9270 = vmatpush1.bf16.msra.mxu0 %v8636
    %9271 = vmatprep.mubr.bf16.mxu0 %v6697
    %9272 = vmatmul.mubr.bf16.gmra.mrb[0].mxu0 %v6696
    %v9273 = vpop.f32.mrb[0].mxu0
    %v9274 = vadd.f32 %v9231, %v9273
    %v9275 = vpop.f32.mrb[0].mxu0
    %v9276 = vadd.f32 %v9233, %v9275
    %v9277 = vpop.f32.mrb[0].mxu0
    %v9278 = vadd.f32 %v9235, %v9277
    %v9279 = vpop.f32.mrb[0].mxu0
    %v9280 = vadd.f32 %v9237, %v9279
    %9281 = vdwg.mxu0
    %9282 = vmatprep.subr.bf16.mxu0 %v8259
    %9283 = vmatpush1.bf16.msra.mxu0 %v8258
    %9284 = vmatprep.subr.bf16.mxu0 %v8263
    %9285 = vmatpush1.bf16.msra.mxu0 %v8262
    %9286 = vmatprep.subr.bf16.mxu0 %v8267
    %9287 = vmatpush1.bf16.msra.mxu0 %v8266
    %9288 = vmatprep.subr.bf16.mxu0 %v8271
    %9289 = vmatpush1.bf16.msra.mxu0 %v8270
    %9290 = vmatprep.subr.bf16.mxu0 %v8275
    %9291 = vmatpush1.bf16.msra.mxu0 %v8274
    %9292 = vmatprep.subr.bf16.mxu0 %v8279
    %9293 = vmatpush1.bf16.msra.mxu0 %v8278
    %9294 = vmatprep.subr.bf16.mxu0 %v8283
    %9295 = vmatpush1.bf16.msra.mxu0 %v8282
    %9296 = vmatprep.subr.bf16.mxu0 %v8287
    %9297 = vmatpush1.bf16.msra.mxu0 %v8286
    %9298 = vmatprep.subr.bf16.mxu0 %v8291
    %9299 = vmatpush1.bf16.msra.mxu0 %v8290
    %9300 = vmatprep.subr.bf16.mxu0 %v8295
    %9301 = vmatpush1.bf16.msra.mxu0 %v8294
    %9302 = vmatprep.subr.bf16.mxu0 %v8299
    %9303 = vmatpush1.bf16.msra.mxu0 %v8298
    %9304 = vmatprep.subr.bf16.mxu0 %v8303
    %9305 = vmatpush1.bf16.msra.mxu0 %v8302
    %9306 = vmatprep.subr.bf16.mxu0 %v8307
    %9307 = vmatpush1.bf16.msra.mxu0 %v8306
    %9308 = vmatprep.subr.bf16.mxu0 %v8311
    %9309 = vmatpush1.bf16.msra.mxu0 %v8310
    %9310 = vmatprep.subr.bf16.mxu0 %v8315
    %9311 = vmatpush1.bf16.msra.mxu0 %v8314
    %9312 = vmatprep.subr.bf16.mxu0 %v8319
    %9313 = vmatpush1.bf16.msra.mxu0 %v8318
    %9314 = vmatprep.mubr.bf16.mxu0 %v6687
    %9315 = vmatmul.mubr.bf16.gmra.mrb[0].mxu0 %v6686
    %v9316 = vpop.f32.mrb[0].mxu0
    %v9317 = vadd.f32 %v7095, %v9316
    %v9318 = vpop.f32.mrb[0].mxu0
    %v9319 = vadd.f32 %v7099, %v9318
    %v9320 = vpop.f32.mrb[0].mxu0
    %v9321 = vadd.f32 %v7095, %v9320
    %v9322 = vpop.f32.mrb[0].mxu0
    %v9323 = vadd.f32 %v7099, %v9322
    %9324 = vdwg.mxu0
    %9325 = vmatprep.subr.bf16.mxu0 %v8323
    %9326 = vmatpush1.bf16.msra.mxu0 %v8322
    %9327 = vmatprep.subr.bf16.mxu0 %v8327
    %9328 = vmatpush1.bf16.msra.mxu0 %v8326
    %9329 = vmatprep.subr.bf16.mxu0 %v8331
    %9330 = vmatpush1.bf16.msra.mxu0 %v8330
    %9331 = vmatprep.subr.bf16.mxu0 %v8335
    %9332 = vmatpush1.bf16.msra.mxu0 %v8334
    %9333 = vmatprep.subr.bf16.mxu0 %v8339
    %9334 = vmatpush1.bf16.msra.mxu0 %v8338
    %9335 = vmatprep.subr.bf16.mxu0 %v8343
    %9336 = vmatpush1.bf16.msra.mxu0 %v8342
    %9337 = vmatprep.subr.bf16.mxu0 %v8347
    %9338 = vmatpush1.bf16.msra.mxu0 %v8346
    %9339 = vmatprep.subr.bf16.mxu0 %v8351
    %9340 = vmatpush1.bf16.msra.mxu0 %v8350
    %9341 = vmatprep.subr.bf16.mxu0 %v8355
    %9342 = vmatpush1.bf16.msra.mxu0 %v8354
    %9343 = vmatprep.subr.bf16.mxu0 %v8359
    %9344 = vmatpush1.bf16.msra.mxu0 %v8358
    %9345 = vmatprep.subr.bf16.mxu0 %v8363
    %9346 = vmatpush1.bf16.msra.mxu0 %v8362
    %9347 = vmatprep.subr.bf16.mxu0 %v8367
    %9348 = vmatpush1.bf16.msra.mxu0 %v8366
    %9349 = vmatprep.subr.bf16.mxu0 %v8371
    %9350 = vmatpush1.bf16.msra.mxu0 %v8370
    %9351 = vmatprep.subr.bf16.mxu0 %v8375
    %9352 = vmatpush1.bf16.msra.mxu0 %v8374
    %9353 = vmatprep.subr.bf16.mxu0 %v8379
    %9354 = vmatpush1.bf16.msra.mxu0 %v8378
    %9355 = vmatprep.subr.bf16.mxu0 %v8383
    %9356 = vmatpush1.bf16.msra.mxu0 %v8382
    %9357 = vmatprep.mubr.bf16.mxu0 %v6689
    %9358 = vmatmul.mubr.bf16.gmra.mrb[0].mxu0 %v6688
    %v9359 = vpop.f32.mrb[0].mxu0
    %v9360 = vadd.f32 %v9317, %v9359
    %v9361 = vpop.f32.mrb[0].mxu0
    %v9362 = vadd.f32 %v9319, %v9361
    %v9363 = vpop.f32.mrb[0].mxu0
    %v9364 = vadd.f32 %v9321, %v9363
    %v9365 = vpop.f32.mrb[0].mxu0
    %v9366 = vadd.f32 %v9323, %v9365
    %9367 = vdwg.mxu0
    %9368 = vmatprep.subr.bf16.mxu0 %v8387
    %9369 = vmatpush1.bf16.msra.mxu0 %v8386
    %9370 = vmatprep.subr.bf16.mxu0 %v8391
    %9371 = vmatpush1.bf16.msra.mxu0 %v8390
    %9372 = vmatprep.subr.bf16.mxu0 %v8395
    %9373 = vmatpush1.bf16.msra.mxu0 %v8394
    %9374 = vmatprep.subr.bf16.mxu0 %v8399
    %9375 = vmatpush1.bf16.msra.mxu0 %v8398
    %9376 = vmatprep.subr.bf16.mxu0 %v8403
    %9377 = vmatpush1.bf16.msra.mxu0 %v8402
    %9378 = vmatprep.subr.bf16.mxu0 %v8407
    %9379 = vmatpush1.bf16.msra.mxu0 %v8406
    %9380 = vmatprep.subr.bf16.mxu0 %v8411
    %9381 = vmatpush1.bf16.msra.mxu0 %v8410
    %9382 = vmatprep.subr.bf16.mxu0 %v8415
    %9383 = vmatpush1.bf16.msra.mxu0 %v8414
    %9384 = vmatprep.subr.bf16.mxu0 %v8419
    %9385 = vmatpush1.bf16.msra.mxu0 %v8418
    %9386 = vmatprep.subr.bf16.mxu0 %v8423
    %9387 = vmatpush1.bf16.msra.mxu0 %v8422
    %9388 = vmatprep.subr.bf16.mxu0 %v8427
    %9389 = vmatpush1.bf16.msra.mxu0 %v8426
    %9390 = vmatprep.subr.bf16.mxu0 %v8431
    %9391 = vmatpush1.bf16.msra.mxu0 %v8430
    %9392 = vmatprep.subr.bf16.mxu0 %v8435
    %9393 = vmatpush1.bf16.msra.mxu0 %v8434
    %9394 = vmatprep.subr.bf16.mxu0 %v8439
    %9395 = vmatpush1.bf16.msra.mxu0 %v8438
    %9396 = vmatprep.subr.bf16.mxu0 %v8443
    %9397 = vmatpush1.bf16.msra.mxu0 %v8442
    %9398 = vmatprep.subr.bf16.mxu0 %v8447
    %9399 = vmatpush1.bf16.msra.mxu0 %v8446
    %9400 = vmatprep.mubr.bf16.mxu0 %v6691
    %9401 = vmatmul.mubr.bf16.gmra.mrb[0].mxu0 %v6690
    %v9402 = vpop.f32.mrb[0].mxu0
    %v9403 = vadd.f32 %v9360, %v9402
    %v9404 = vpop.f32.mrb[0].mxu0
    %v9405 = vadd.f32 %v9362, %v9404
    %v9406 = vpop.f32.mrb[0].mxu0
    %v9407 = vadd.f32 %v9364, %v9406
    %v9408 = vpop.f32.mrb[0].mxu0
    %v9409 = vadd.f32 %v9366, %v9408
    %9410 = vdwg.mxu0
    %9411 = vmatprep.subr.bf16.mxu0 %v8451
    %9412 = vmatpush1.bf16.msra.mxu0 %v8450
    %9413 = vmatprep.subr.bf16.mxu0 %v8455
    %9414 = vmatpush1.bf16.msra.mxu0 %v8454
    %9415 = vmatprep.subr.bf16.mxu0 %v8459
    %9416 = vmatpush1.bf16.msra.mxu0 %v8458
    %9417 = vmatprep.subr.bf16.mxu0 %v8463
    %9418 = vmatpush1.bf16.msra.mxu0 %v8462
    %9419 = vmatprep.subr.bf16.mxu0 %v8467
    %9420 = vmatpush1.bf16.msra.mxu0 %v8466
    %9421 = vmatprep.subr.bf16.mxu0 %v8471
    %9422 = vmatpush1.bf16.msra.mxu0 %v8470
    %9423 = vmatprep.subr.bf16.mxu0 %v8475
    %9424 = vmatpush1.bf16.msra.mxu0 %v8474
    %9425 = vmatprep.subr.bf16.mxu0 %v8479
    %9426 = vmatpush1.bf16.msra.mxu0 %v8478
    %9427 = vmatprep.subr.bf16.mxu0 %v8483
    %9428 = vmatpush1.bf16.msra.mxu0 %v8482
    %9429 = vmatprep.subr.bf16.mxu0 %v8487
    %9430 = vmatpush1.bf16.msra.mxu0 %v8486
    %9431 = vmatprep.subr.bf16.mxu0 %v8491
    %9432 = vmatpush1.bf16.msra.mxu0 %v8490
    %9433 = vmatprep.subr.bf16.mxu0 %v8495
    %9434 = vmatpush1.bf16.msra.mxu0 %v8494
    %9435 = vmatprep.subr.bf16.mxu0 %v8499
    %9436 = vmatpush1.bf16.msra.mxu0 %v8498
    %9437 = vmatprep.subr.bf16.mxu0 %v8503
    %9438 = vmatpush1.bf16.msra.mxu0 %v8502
    %9439 = vmatprep.subr.bf16.mxu0 %v8507
    %9440 = vmatpush1.bf16.msra.mxu0 %v8506
    %9441 = vmatprep.subr.bf16.mxu0 %v8511
    %9442 = vmatpush1.bf16.msra.mxu0 %v8510
    %9443 = vmatprep.mubr.bf16.mxu0 %v6693
    %9444 = vmatmul.mubr.bf16.gmra.mrb[0].mxu0 %v6692
    %v9445 = vpop.f32.mrb[0].mxu0
    %v9446 = vadd.f32 %v9403, %v9445
    %v9447 = vpop.f32.mrb[0].mxu0
    %v9448 = vadd.f32 %v9405, %v9447
    %v9449 = vpop.f32.mrb[0].mxu0
    %v9450 = vadd.f32 %v9407, %v9449
    %v9451 = vpop.f32.mrb[0].mxu0
    %v9452 = vadd.f32 %v9409, %v9451
    %9453 = vdwg.mxu0
    %9454 = vmatprep.subr.bf16.mxu0 %v8515
    %9455 = vmatpush1.bf16.msra.mxu0 %v8514
    %9456 = vmatprep.subr.bf16.mxu0 %v8519
    %9457 = vmatpush1.bf16.msra.mxu0 %v8518
    %9458 = vmatprep.subr.bf16.mxu0 %v8523
    %9459 = vmatpush1.bf16.msra.mxu0 %v8522
    %9460 = vmatprep.subr.bf16.mxu0 %v8527
    %9461 = vmatpush1.bf16.msra.mxu0 %v8526
    %9462 = vmatprep.subr.bf16.mxu0 %v8531
    %9463 = vmatpush1.bf16.msra.mxu0 %v8530
    %9464 = vmatprep.subr.bf16.mxu0 %v8535
    %9465 = vmatpush1.bf16.msra.mxu0 %v8534
    %9466 = vmatprep.subr.bf16.mxu0 %v8539
    %9467 = vmatpush1.bf16.msra.mxu0 %v8538
    %9468 = vmatprep.subr.bf16.mxu0 %v8543
    %9469 = vmatpush1.bf16.msra.mxu0 %v8542
    %9470 = vmatprep.subr.bf16.mxu0 %v8547
    %9471 = vmatpush1.bf16.msra.mxu0 %v8546
    %9472 = vmatprep.subr.bf16.mxu0 %v8551
    %9473 = vmatpush1.bf16.msra.mxu0 %v8550
    %9474 = vmatprep.subr.bf16.mxu0 %v8555
    %9475 = vmatpush1.bf16.msra.mxu0 %v8554
    %9476 = vmatprep.subr.bf16.mxu0 %v8559
    %9477 = vmatpush1.bf16.msra.mxu0 %v8558
    %9478 = vmatprep.subr.bf16.mxu0 %v8563
    %9479 = vmatpush1.bf16.msra.mxu0 %v8562
    %9480 = vmatprep.subr.bf16.mxu0 %v8567
    %9481 = vmatpush1.bf16.msra.mxu0 %v8566
    %9482 = vmatprep.subr.bf16.mxu0 %v8571
    %9483 = vmatpush1.bf16.msra.mxu0 %v8570
    %9484 = vmatprep.subr.bf16.mxu0 %v8575
    %9485 = vmatpush1.bf16.msra.mxu0 %v8574
    %9486 = vmatprep.mubr.bf16.mxu0 %v6695
    %9487 = vmatmul.mubr.bf16.gmra.mrb[0].mxu0 %v6694
    %v9488 = vpop.f32.mrb[0].mxu0
    %v9489 = vadd.f32 %v9446, %v9488
    %v9490 = vpop.f32.mrb[0].mxu0
    %v9491 = vadd.f32 %v9448, %v9490
    %v9492 = vpop.f32.mrb[0].mxu0
    %v9493 = vadd.f32 %v9450, %v9492
    %v9494 = vpop.f32.mrb[0].mxu0
    %v9495 = vadd.f32 %v9452, %v9494
    %9496 = vdwg.mxu0
    %9497 = vmatprep.subr.bf16.mxu0 %v8579
    %9498 = vmatpush1.bf16.msra.mxu0 %v8578
    %9499 = vmatprep.subr.bf16.mxu0 %v8583
    %9500 = vmatpush1.bf16.msra.mxu0 %v8582
    %9501 = vmatprep.subr.bf16.mxu0 %v8587
    %9502 = vmatpush1.bf16.msra.mxu0 %v8586
    %9503 = vmatprep.subr.bf16.mxu0 %v8591
    %9504 = vmatpush1.bf16.msra.mxu0 %v8590
    %9505 = vmatprep.subr.bf16.mxu0 %v8595
    %9506 = vmatpush1.bf16.msra.mxu0 %v8594
    %9507 = vmatprep.subr.bf16.mxu0 %v8599
    %9508 = vmatpush1.bf16.msra.mxu0 %v8598
    %9509 = vmatprep.subr.bf16.mxu0 %v8603
    %9510 = vmatpush1.bf16.msra.mxu0 %v8602
    %9511 = vmatprep.subr.bf16.mxu0 %v8607
    %9512 = vmatpush1.bf16.msra.mxu0 %v8606
    %9513 = vmatprep.subr.bf16.mxu0 %v8611
    %9514 = vmatpush1.bf16.msra.mxu0 %v8610
    %9515 = vmatprep.subr.bf16.mxu0 %v8615
    %9516 = vmatpush1.bf16.msra.mxu0 %v8614
    %9517 = vmatprep.subr.bf16.mxu0 %v8619
    %9518 = vmatpush1.bf16.msra.mxu0 %v8618
    %9519 = vmatprep.subr.bf16.mxu0 %v8623
    %9520 = vmatpush1.bf16.msra.mxu0 %v8622
    %9521 = vmatprep.subr.bf16.mxu0 %v8627
    %9522 = vmatpush1.bf16.msra.mxu0 %v8626
    %9523 = vmatprep.subr.bf16.mxu0 %v8631
    %9524 = vmatpush1.bf16.msra.mxu0 %v8630
    %9525 = vmatprep.subr.bf16.mxu0 %v8635
    %9526 = vmatpush1.bf16.msra.mxu0 %v8634
    %9527 = vmatprep.subr.bf16.mxu0 %v8639
    %9528 = vmatpush1.bf16.msra.mxu0 %v8638
    %9529 = vmatprep.mubr.bf16.mxu0 %v6697
    %9530 = vmatmul.mubr.bf16.gmra.mrb[0].mxu0 %v6696
    %v9531 = vpop.f32.mrb[0].mxu0
    %v9532 = vadd.f32 %v9489, %v9531
    %v9533 = vpop.f32.mrb[0].mxu0
    %v9534 = vadd.f32 %v9491, %v9533
    %v9535 = vpop.f32.mrb[0].mxu0
    %v9536 = vadd.f32 %v9493, %v9535
    %v9537 = vpop.f32.mrb[0].mxu0
    %v9538 = vadd.f32 %v9495, %v9537
    %9539 = vdwg.mxu0
    %v9540 = vld [vmem:[#allocation51] sm:$0xff]
    %v9541 = vld [vmem:[#allocation51 + $0x8] sm:$0xff]
    %v9542 = vld [vmem:[#allocation51 + $0x10] sm:$0xff]
    %v9543 = vld [vmem:[#allocation51 + $0x18] sm:$0xff]
    %v9544 = vld [vmem:[#allocation51 + $0x20] sm:$0xff]
    %v9545 = vld [vmem:[#allocation51 + $0x28] sm:$0xff]
    %v9546 = vld [vmem:[#allocation51 + $0x30] sm:$0xff]
    %v9547 = vld [vmem:[#allocation51 + $0x38] sm:$0xff]
    %v9548 = vld [vmem:[#allocation51 + $0x40] sm:$0xff]
    %v9549 = vld [vmem:[#allocation51 + $0x48] sm:$0xff]
    %v9550 = vld [vmem:[#allocation51 + $0x50] sm:$0xff]
    %v9551 = vld [vmem:[#allocation51 + $0x58] sm:$0xff]
    %v9552 = vld [vmem:[#allocation51 + $0x60] sm:$0xff]
    %v9553 = vld [vmem:[#allocation51 + $0x68] sm:$0xff]
    %v9554 = vld [vmem:[#allocation51 + $0x70] sm:$0xff]
    %v9555 = vld [vmem:[#allocation51 + $0x78] sm:$0xff]
    %v9556 = vld [vmem:[#allocation51 + $0x80] sm:$0xff]
    %v9557 = vld [vmem:[#allocation51 + $0x88] sm:$0xff]
    %v9558 = vld [vmem:[#allocation51 + $0x90] sm:$0xff]
    %v9559 = vld [vmem:[#allocation51 + $0x98] sm:$0xff]
    %v9560 = vld [vmem:[#allocation51 + $0xa0] sm:$0xff]
    %v9561 = vld [vmem:[#allocation51 + $0xa8] sm:$0xff]
    %v9562 = vld [vmem:[#allocation51 + $0xb0] sm:$0xff]
    %v9563 = vld [vmem:[#allocation51 + $0xb8] sm:$0xff]
    %v9564 = vld [vmem:[#allocation51 + $0xc0] sm:$0xff]
    %v9565 = vld [vmem:[#allocation51 + $0xc8] sm:$0xff]
    %v9566 = vld [vmem:[#allocation51 + $0xd0] sm:$0xff]
    %v9567 = vld [vmem:[#allocation51 + $0xd8] sm:$0xff]
    %v9568 = vld [vmem:[#allocation51 + $0xe0] sm:$0xff]
    %v9569 = vld [vmem:[#allocation51 + $0xe8] sm:$0xff]
    %v9570 = vld [vmem:[#allocation51 + $0xf0] sm:$0xff]
    %v9571 = vld [vmem:[#allocation51 + $0xf8] sm:$0xff]
    %v9572 = vld [vmem:[#allocation51 + $0x100] sm:$0xff]
    %v9573 = vld [vmem:[#allocation51 + $0x108] sm:$0xff]
    %v9574 = vld [vmem:[#allocation51 + $0x110] sm:$0xff]
    %v9575 = vld [vmem:[#allocation51 + $0x118] sm:$0xff]
    %v9576 = vld [vmem:[#allocation51 + $0x120] sm:$0xff]
    %v9577 = vld [vmem:[#allocation51 + $0x128] sm:$0xff]
    %v9578 = vld [vmem:[#allocation51 + $0x130] sm:$0xff]
    %v9579 = vld [vmem:[#allocation51 + $0x138] sm:$0xff]
    %v9580 = vld [vmem:[#allocation51 + $0x140] sm:$0xff]
    %v9581 = vld [vmem:[#allocation51 + $0x148] sm:$0xff]
    %v9582 = vld [vmem:[#allocation51 + $0x150] sm:$0xff]
    %v9583 = vld [vmem:[#allocation51 + $0x158] sm:$0xff]
    %v9584 = vld [vmem:[#allocation51 + $0x160] sm:$0xff]
    %v9585 = vld [vmem:[#allocation51 + $0x168] sm:$0xff]
    %v9586 = vld [vmem:[#allocation51 + $0x170] sm:$0xff]
    %v9587 = vld [vmem:[#allocation51 + $0x178] sm:$0xff]
    %v9588 = vld [vmem:[#allocation51 + $0x180] sm:$0xff]
    %v9589 = vld [vmem:[#allocation51 + $0x188] sm:$0xff]
    %v9590 = vld [vmem:[#allocation51 + $0x190] sm:$0xff]
    %v9591 = vld [vmem:[#allocation51 + $0x198] sm:$0xff]
    %v9592 = vld [vmem:[#allocation51 + $0x1a0] sm:$0xff]
    %v9593 = vld [vmem:[#allocation51 + $0x1a8] sm:$0xff]
    %v9594 = vld [vmem:[#allocation51 + $0x1b0] sm:$0xff]
    %v9595 = vld [vmem:[#allocation51 + $0x1b8] sm:$0xff]
    %v9596 = vld [vmem:[#allocation51 + $0x1c0] sm:$0xff]
    %v9597 = vld [vmem:[#allocation51 + $0x1c8] sm:$0xff]
    %v9598 = vld [vmem:[#allocation51 + $0x1d0] sm:$0xff]
    %v9599 = vld [vmem:[#allocation51 + $0x1d8] sm:$0xff]
    %v9600 = vld [vmem:[#allocation51 + $0x1e0] sm:$0xff]
    %v9601 = vld [vmem:[#allocation51 + $0x1e8] sm:$0xff]
    %v9602 = vld [vmem:[#allocation51 + $0x1f0] sm:$0xff]
    %v9603 = vld [vmem:[#allocation51 + $0x1f8] sm:$0xff]
    %v9604 = vld [vmem:[#allocation52] sm:$0xf]
    %v9606 = vlaneseq
    %v9607 = vshrl.u32 %v9606, 7
    %v9608 = vsub.s32 0, %v9607
    %v9609 = vrot.slane %v9604, %v9608
    %v9610 = vlaneseq
    %v9611 = vshrl.u32 %v9610, 7
    %v9612 = vsub.s32 1, %v9611
    %v9613 = vrot.slane %v9604, %v9612
    %v9614 = vlaneseq
    %v9615 = vshrl.u32 %v9614, 7
    %v9616 = vsub.s32 2, %v9615
    %v9617 = vrot.slane %v9604, %v9616
    %v9618 = vlaneseq
    %v9619 = vshrl.u32 %v9618, 7
    %v9620 = vsub.s32 3, %v9619
    %v9621 = vrot.slane %v9604, %v9620
    %v9690 = vunpack.c.l.b16 %v9540
    %v9691 = vunpack.c.h.b16 %v9540
    %v9692 = vunpack.c.l.b16 %v9541
    %v9693 = vunpack.c.h.b16 %v9541
    %v9694 = vunpack.c.l.b16 %v9542
    %v9695 = vunpack.c.h.b16 %v9542
    %v9696 = vunpack.c.l.b16 %v9543
    %v9697 = vunpack.c.h.b16 %v9543
    %v9698 = vunpack.c.l.b16 %v9544
    %v9699 = vunpack.c.h.b16 %v9544
    %v9700 = vunpack.c.l.b16 %v9545
    %v9701 = vunpack.c.h.b16 %v9545
    %v9702 = vunpack.c.l.b16 %v9546
    %v9703 = vunpack.c.h.b16 %v9546
    %v9704 = vunpack.c.l.b16 %v9547
    %v9705 = vunpack.c.h.b16 %v9547
    %v9706 = vunpack.c.l.b16 %v9548
    %v9707 = vunpack.c.h.b16 %v9548
    %v9708 = vunpack.c.l.b16 %v9549
    %v9709 = vunpack.c.h.b16 %v9549
    %v9710 = vunpack.c.l.b16 %v9550
    %v9711 = vunpack.c.h.b16 %v9550
    %v9712 = vunpack.c.l.b16 %v9551
    %v9713 = vunpack.c.h.b16 %v9551
    %v9714 = vunpack.c.l.b16 %v9552
    %v9715 = vunpack.c.h.b16 %v9552
    %v9716 = vunpack.c.l.b16 %v9553
    %v9717 = vunpack.c.h.b16 %v9553
    %v9718 = vunpack.c.l.b16 %v9554
    %v9719 = vunpack.c.h.b16 %v9554
    %v9720 = vunpack.c.l.b16 %v9555
    %v9721 = vunpack.c.h.b16 %v9555
    %v9722 = vunpack.c.l.b16 %v9556
    %v9723 = vunpack.c.h.b16 %v9556
    %v9724 = vunpack.c.l.b16 %v9557
    %v9725 = vunpack.c.h.b16 %v9557
    %v9726 = vunpack.c.l.b16 %v9558
    %v9727 = vunpack.c.h.b16 %v9558
    %v9728 = vunpack.c.l.b16 %v9559
    %v9729 = vunpack.c.h.b16 %v9559
    %v9730 = vunpack.c.l.b16 %v9560
    %v9731 = vunpack.c.h.b16 %v9560
    %v9732 = vunpack.c.l.b16 %v9561
    %v9733 = vunpack.c.h.b16 %v9561
    %v9734 = vunpack.c.l.b16 %v9562
    %v9735 = vunpack.c.h.b16 %v9562
    %v9736 = vunpack.c.l.b16 %v9563
    %v9737 = vunpack.c.h.b16 %v9563
    %v9738 = vunpack.c.l.b16 %v9564
    %v9739 = vunpack.c.h.b16 %v9564
    %v9740 = vunpack.c.l.b16 %v9565
    %v9741 = vunpack.c.h.b16 %v9565
    %v9742 = vunpack.c.l.b16 %v9566
    %v9743 = vunpack.c.h.b16 %v9566
    %v9744 = vunpack.c.l.b16 %v9567
    %v9745 = vunpack.c.h.b16 %v9567
    %v9746 = vunpack.c.l.b16 %v9568
    %v9747 = vunpack.c.h.b16 %v9568
    %v9748 = vunpack.c.l.b16 %v9569
    %v9749 = vunpack.c.h.b16 %v9569
    %v9750 = vunpack.c.l.b16 %v9570
    %v9751 = vunpack.c.h.b16 %v9570
    %v9752 = vunpack.c.l.b16 %v9571
    %v9753 = vunpack.c.h.b16 %v9571
    %v9754 = vunpack.c.l.b16 %v9572
    %v9755 = vunpack.c.h.b16 %v9572
    %v9756 = vunpack.c.l.b16 %v9573
    %v9757 = vunpack.c.h.b16 %v9573
    %v9758 = vunpack.c.l.b16 %v9574
    %v9759 = vunpack.c.h.b16 %v9574
    %v9760 = vunpack.c.l.b16 %v9575
    %v9761 = vunpack.c.h.b16 %v9575
    %v9762 = vunpack.c.l.b16 %v9576
    %v9763 = vunpack.c.h.b16 %v9576
    %v9764 = vunpack.c.l.b16 %v9577
    %v9765 = vunpack.c.h.b16 %v9577
    %v9766 = vunpack.c.l.b16 %v9578
    %v9767 = vunpack.c.h.b16 %v9578
    %v9768 = vunpack.c.l.b16 %v9579
    %v9769 = vunpack.c.h.b16 %v9579
    %v9770 = vunpack.c.l.b16 %v9580
    %v9771 = vunpack.c.h.b16 %v9580
    %v9772 = vunpack.c.l.b16 %v9581
    %v9773 = vunpack.c.h.b16 %v9581
    %v9774 = vunpack.c.l.b16 %v9582
    %v9775 = vunpack.c.h.b16 %v9582
    %v9776 = vunpack.c.l.b16 %v9583
    %v9777 = vunpack.c.h.b16 %v9583
    %v9778 = vunpack.c.l.b16 %v9584
    %v9779 = vunpack.c.h.b16 %v9584
    %v9780 = vunpack.c.l.b16 %v9585
    %v9781 = vunpack.c.h.b16 %v9585
    %v9782 = vunpack.c.l.b16 %v9586
    %v9783 = vunpack.c.h.b16 %v9586
    %v9784 = vunpack.c.l.b16 %v9587
    %v9785 = vunpack.c.h.b16 %v9587
    %v9786 = vunpack.c.l.b16 %v9588
    %v9787 = vunpack.c.h.b16 %v9588
    %v9788 = vunpack.c.l.b16 %v9589
    %v9789 = vunpack.c.h.b16 %v9589
    %v9790 = vunpack.c.l.b16 %v9590
    %v9791 = vunpack.c.h.b16 %v9590
    %v9792 = vunpack.c.l.b16 %v9591
    %v9793 = vunpack.c.h.b16 %v9591
    %v9794 = vunpack.c.l.b16 %v9592
    %v9795 = vunpack.c.h.b16 %v9592
    %v9796 = vunpack.c.l.b16 %v9593
    %v9797 = vunpack.c.h.b16 %v9593
    %v9798 = vunpack.c.l.b16 %v9594
    %v9799 = vunpack.c.h.b16 %v9594
    %v9800 = vunpack.c.l.b16 %v9595
    %v9801 = vunpack.c.h.b16 %v9595
    %v9802 = vunpack.c.l.b16 %v9596
    %v9803 = vunpack.c.h.b16 %v9596
    %v9804 = vunpack.c.l.b16 %v9597
    %v9805 = vunpack.c.h.b16 %v9597
    %v9806 = vunpack.c.l.b16 %v9598
    %v9807 = vunpack.c.h.b16 %v9598
    %v9808 = vunpack.c.l.b16 %v9599
    %v9809 = vunpack.c.h.b16 %v9599
    %v9810 = vunpack.c.l.b16 %v9600
    %v9811 = vunpack.c.h.b16 %v9600
    %v9812 = vunpack.c.l.b16 %v9601
    %v9813 = vunpack.c.h.b16 %v9601
    %v9814 = vunpack.c.l.b16 %v9602
    %v9815 = vunpack.c.h.b16 %v9602
    %v9816 = vunpack.c.l.b16 %v9603
    %v9817 = vunpack.c.h.b16 %v9603
    %v9818 = vpack.c.b16 %v9694, %v9690
    %v9819 = vpack.c.b16 %v9695, %v9691
    %v9820 = vpack.c.b16 %v9696, %v9692
    %v9821 = vpack.c.b16 %v9697, %v9693
    %v9822 = vpack.c.b16 %v9702, %v9698
    %v9823 = vpack.c.b16 %v9703, %v9699
    %v9824 = vpack.c.b16 %v9704, %v9700
    %v9825 = vpack.c.b16 %v9705, %v9701
    %v9826 = vpack.c.b16 %v9710, %v9706
    %v9827 = vpack.c.b16 %v9711, %v9707
    %v9828 = vpack.c.b16 %v9712, %v9708
    %v9829 = vpack.c.b16 %v9713, %v9709
    %v9830 = vpack.c.b16 %v9718, %v9714
    %v9831 = vpack.c.b16 %v9719, %v9715
    %v9832 = vpack.c.b16 %v9720, %v9716
    %v9833 = vpack.c.b16 %v9721, %v9717
    %v9834 = vpack.c.b16 %v9726, %v9722
    %v9835 = vpack.c.b16 %v9727, %v9723
    %v9836 = vpack.c.b16 %v9728, %v9724
    %v9837 = vpack.c.b16 %v9729, %v9725
    %v9838 = vpack.c.b16 %v9734, %v9730
    %v9839 = vpack.c.b16 %v9735, %v9731
    %v9840 = vpack.c.b16 %v9736, %v9732
    %v9841 = vpack.c.b16 %v9737, %v9733
    %v9842 = vpack.c.b16 %v9742, %v9738
    %v9843 = vpack.c.b16 %v9743, %v9739
    %v9844 = vpack.c.b16 %v9744, %v9740
    %v9845 = vpack.c.b16 %v9745, %v9741
    %v9846 = vpack.c.b16 %v9750, %v9746
    %v9847 = vpack.c.b16 %v9751, %v9747
    %v9848 = vpack.c.b16 %v9752, %v9748
    %v9849 = vpack.c.b16 %v9753, %v9749
    %v9850 = vpack.c.b16 %v9758, %v9754
    %v9851 = vpack.c.b16 %v9759, %v9755
    %v9852 = vpack.c.b16 %v9760, %v9756
    %v9853 = vpack.c.b16 %v9761, %v9757
    %v9854 = vpack.c.b16 %v9766, %v9762
    %v9855 = vpack.c.b16 %v9767, %v9763
    %v9856 = vpack.c.b16 %v9768, %v9764
    %v9857 = vpack.c.b16 %v9769, %v9765
    %v9858 = vpack.c.b16 %v9774, %v9770
    %v9859 = vpack.c.b16 %v9775, %v9771
    %v9860 = vpack.c.b16 %v9776, %v9772
    %v9861 = vpack.c.b16 %v9777, %v9773
    %v9862 = vpack.c.b16 %v9782, %v9778
    %v9863 = vpack.c.b16 %v9783, %v9779
    %v9864 = vpack.c.b16 %v9784, %v9780
    %v9865 = vpack.c.b16 %v9785, %v9781
    %v9866 = vpack.c.b16 %v9790, %v9786
    %v9867 = vpack.c.b16 %v9791, %v9787
    %v9868 = vpack.c.b16 %v9792, %v9788
    %v9869 = vpack.c.b16 %v9793, %v9789
    %v9870 = vpack.c.b16 %v9798, %v9794
    %v9871 = vpack.c.b16 %v9799, %v9795
    %v9872 = vpack.c.b16 %v9800, %v9796
    %v9873 = vpack.c.b16 %v9801, %v9797
    %v9874 = vpack.c.b16 %v9806, %v9802
    %v9875 = vpack.c.b16 %v9807, %v9803
    %v9876 = vpack.c.b16 %v9808, %v9804
    %v9877 = vpack.c.b16 %v9809, %v9805
    %v9878 = vpack.c.b16 %v9814, %v9810
    %v9879 = vpack.c.b16 %v9815, %v9811
    %v9880 = vpack.c.b16 %v9816, %v9812
    %v9881 = vpack.c.b16 %v9817, %v9813
    %9946 = vmatprep.subr.bf16.mxu0 %v9819
    %9947 = vmatpush1.bf16.msra.mxu0 %v9818
    %9948 = vmatprep.subr.bf16.mxu0 %v9823
    %9949 = vmatpush1.bf16.msra.mxu0 %v9822
    %9950 = vmatprep.subr.bf16.mxu0 %v9827
    %9951 = vmatpush1.bf16.msra.mxu0 %v9826
    %9952 = vmatprep.subr.bf16.mxu0 %v9831
    %9953 = vmatpush1.bf16.msra.mxu0 %v9830
    %9954 = vmatprep.subr.bf16.mxu0 %v9835
    %9955 = vmatpush1.bf16.msra.mxu0 %v9834
    %9956 = vmatprep.subr.bf16.mxu0 %v9839
    %9957 = vmatpush1.bf16.msra.mxu0 %v9838
    %9958 = vmatprep.subr.bf16.mxu0 %v9843
    %9959 = vmatpush1.bf16.msra.mxu0 %v9842
    %9960 = vmatprep.subr.bf16.mxu0 %v9847
    %9961 = vmatpush1.bf16.msra.mxu0 %v9846
    %9962 = vmatprep.subr.bf16.mxu0 %v9851
    %9963 = vmatpush1.bf16.msra.mxu0 %v9850
    %9964 = vmatprep.subr.bf16.mxu0 %v9855
    %9965 = vmatpush1.bf16.msra.mxu0 %v9854
    %9966 = vmatprep.subr.bf16.mxu0 %v9859
    %9967 = vmatpush1.bf16.msra.mxu0 %v9858
    %9968 = vmatprep.subr.bf16.mxu0 %v9863
    %9969 = vmatpush1.bf16.msra.mxu0 %v9862
    %9970 = vmatprep.subr.bf16.mxu0 %v9867
    %9971 = vmatpush1.bf16.msra.mxu0 %v9866
    %9972 = vmatprep.subr.bf16.mxu0 %v9871
    %9973 = vmatpush1.bf16.msra.mxu0 %v9870
    %9974 = vmatprep.subr.bf16.mxu0 %v9875
    %9975 = vmatpush1.bf16.msra.mxu0 %v9874
    %9976 = vmatprep.subr.bf16.mxu0 %v9879
    %9977 = vmatpush1.bf16.msra.mxu0 %v9878
    %9978 = vmatprep.mubr.bf16.mxu0 %v5021
    %9979 = vmatmul.mubr.bf16.gmra.mrb[0].mxu0 %v5020
    %v9980 = vpop.f32.mrb[0].mxu0
    %v9981 = vadd.f32 %v9609, %v9980
    %v9982 = vpop.f32.mrb[0].mxu0
    %v9983 = vadd.f32 %v9613, %v9982
    %v9984 = vpop.f32.mrb[0].mxu0
    %v9985 = vadd.f32 %v9609, %v9984
    %v9986 = vpop.f32.mrb[0].mxu0
    %v9987 = vadd.f32 %v9613, %v9986
    %9988 = vdwg.mxu0
    %9989 = vmatprep.subr.bf16.mxu0 %v9821
    %9990 = vmatpush1.bf16.msra.mxu0 %v9820
    %9991 = vmatprep.subr.bf16.mxu0 %v9825
    %9992 = vmatpush1.bf16.msra.mxu0 %v9824
    %9993 = vmatprep.subr.bf16.mxu0 %v9829
    %9994 = vmatpush1.bf16.msra.mxu0 %v9828
    %9995 = vmatprep.subr.bf16.mxu0 %v9833
    %9996 = vmatpush1.bf16.msra.mxu0 %v9832
    %9997 = vmatprep.subr.bf16.mxu0 %v9837
    %9998 = vmatpush1.bf16.msra.mxu0 %v9836
    %9999 = vmatprep.subr.bf16.mxu0 %v9841
    %10000 = vmatpush1.bf16.msra.mxu0 %v9840
    %10001 = vmatprep.subr.bf16.mxu0 %v9845
    %10002 = vmatpush1.bf16.msra.mxu0 %v9844
    %10003 = vmatprep.subr.bf16.mxu0 %v9849
    %10004 = vmatpush1.bf16.msra.mxu0 %v9848
    %10005 = vmatprep.subr.bf16.mxu0 %v9853
    %10006 = vmatpush1.bf16.msra.mxu0 %v9852
    %10007 = vmatprep.subr.bf16.mxu0 %v9857
    %10008 = vmatpush1.bf16.msra.mxu0 %v9856
    %10009 = vmatprep.subr.bf16.mxu0 %v9861
    %10010 = vmatpush1.bf16.msra.mxu0 %v9860
    %10011 = vmatprep.subr.bf16.mxu0 %v9865
    %10012 = vmatpush1.bf16.msra.mxu0 %v9864
    %10013 = vmatprep.subr.bf16.mxu0 %v9869
    %10014 = vmatpush1.bf16.msra.mxu0 %v9868
    %10015 = vmatprep.subr.bf16.mxu0 %v9873
    %10016 = vmatpush1.bf16.msra.mxu0 %v9872
    %10017 = vmatprep.subr.bf16.mxu0 %v9877
    %10018 = vmatpush1.bf16.msra.mxu0 %v9876
    %10019 = vmatprep.subr.bf16.mxu0 %v9881
    %10020 = vmatpush1.bf16.msra.mxu0 %v9880
    %10021 = vmatprep.mubr.bf16.mxu0 %v5021
    %10022 = vmatmul.mubr.bf16.gmra.mrb[0].mxu0 %v5020
    %v10023 = vpop.f32.mrb[0].mxu0
    %v10024 = vadd.f32 %v9617, %v10023
    %v10025 = vpop.f32.mrb[0].mxu0
    %v10026 = vadd.f32 %v9621, %v10025
    %v10027 = vpop.f32.mrb[0].mxu0
    %v10028 = vadd.f32 %v9617, %v10027
    %v10029 = vpop.f32.mrb[0].mxu0
    %v10030 = vadd.f32 %v9621, %v10029
    %10031 = vdwg.mxu0
    %v10032 = vadd.f32 %v9274, %v9981
    %v10033 = vadd.f32 %v9276, %v9983
    %v10034 = vadd.f32 %v9532, %v10024
    %v10035 = vadd.f32 %v9534, %v10026
    %v10036 = vadd.f32 %v9278, %v9985
    %v10037 = vadd.f32 %v9280, %v9987
    %v10038 = vadd.f32 %v9536, %v10028
    %v10039 = vadd.f32 %v9538, %v10030
    %v10040 = vmax.f32 %v10032, 0.0
    %v10041 = vmax.f32 %v10033, 0.0
    %v10042 = vmax.f32 %v10034, 0.0
    %v10043 = vmax.f32 %v10035, 0.0
    %v10044 = vmax.f32 %v10036, 0.0
    %v10045 = vmax.f32 %v10037, 0.0
    %v10046 = vmax.f32 %v10038, 0.0
    %v10047 = vmax.f32 %v10039, 0.0
    %v10048 = vld [vmem:[#allocation54] sm:$0x3]
    %vm10049 = vcmask 130048
    %v10051 = vsel %vm10049, %v10048, 0
    %10053 = vmatprep.subr.mxu0 %v10041
    %10054 = vmatpush1.msra.mxu0 %v10040
    %10055 = vmatprep.subr.mxu0 %v10045
    %10056 = vmatpush1.msra.mxu0 %v10044
    %10057 = vmatprep.subr.mxu0 0.0
    %10058 = vmatpush1.msra.mxu0 0.0
    %10059 = vmatprep.subr.mxu0 0.0
    %10060 = vmatpush1.msra.mxu0 0.0
    %10061 = vmatprep.subr.mxu0 0.0
    %10062 = vmatpush1.msra.mxu0 0.0
    %10063 = vmatprep.subr.mxu0 0.0
    %10064 = vmatpush1.msra.mxu0 0.0
    %10065 = vmatprep.subr.mxu0 0.0
    %10066 = vmatpush1.msra.mxu0 0.0
    %10067 = vmatprep.subr.mxu0 0.0
    %10068 = vmatpush1.msra.mxu0 0.0
    %10069 = vmatprep.subr.mxu0 0.0
    %10070 = vmatpush1.msra.mxu0 0.0
    %10071 = vmatprep.subr.mxu0 0.0
    %10072 = vmatpush1.msra.mxu0 0.0
    %10073 = vmatprep.subr.mxu0 0.0
    %10074 = vmatpush1.msra.mxu0 0.0
    %10075 = vmatprep.subr.mxu0 0.0
    %10076 = vmatpush1.msra.mxu0 0.0
    %10077 = vmatprep.subr.mxu0 0.0
    %10078 = vmatpush1.msra.mxu0 0.0
    %10079 = vmatprep.subr.mxu0 0.0
    %10080 = vmatpush1.msra.mxu0 0.0
    %10081 = vmatprep.subr.mxu0 0.0
    %10082 = vmatpush1.msra.mxu0 0.0
    %10083 = vmatprep.subr.mxu0 0.0
    %10084 = vmatpush1.msra.mxu0 0.0
    %10085 = vmatprep.subr.mxu0 0.0
    %10086 = vmatpush1.msra.mxu0 0.0
    %10087 = vmatprep.subr.mxu0 0.0
    %10088 = vmatpush1.msra.mxu0 0.0
    %10089 = vmatprep.subr.mxu0 0.0
    %10090 = vmatpush1.msra.mxu0 0.0
    %10091 = vmatprep.subr.mxu0 0.0
    %10092 = vmatpush1.msra.mxu0 0.0
    %10093 = vmatprep.subr.mxu0 0.0
    %10094 = vmatpush1.msra.mxu0 0.0
    %10095 = vmatprep.subr.mxu0 0.0
    %10096 = vmatpush1.msra.mxu0 0.0
    %10097 = vmatprep.subr.mxu0 0.0
    %10098 = vmatpush1.msra.mxu0 0.0
    %10099 = vmatprep.subr.mxu0 0.0
    %10100 = vmatpush1.msra.mxu0 0.0
    %10101 = vmatprep.subr.mxu0 0.0
    %10102 = vmatpush1.msra.mxu0 0.0
    %10103 = vmatprep.subr.mxu0 0.0
    %10104 = vmatpush1.msra.mxu0 0.0
    %10105 = vmatprep.subr.mxu0 0.0
    %10106 = vmatpush1.msra.mxu0 0.0
    %10107 = vmatprep.subr.mxu0 0.0
    %10108 = vmatpush1.msra.mxu0 0.0
    %10109 = vmatprep.subr.mxu0 0.0
    %10110 = vmatpush1.msra.mxu0 0.0
    %10111 = vmatprep.subr.mxu0 0.0
    %10112 = vmatpush1.msra.mxu0 0.0
    %10113 = vmatprep.subr.mxu0 0.0
    %10114 = vmatpush1.msra.mxu0 0.0
    %10115 = vmatprep.subr.mxu0 0.0
    %10116 = vmatpush1.msra.mxu0 0.0
    %10117 = vmatprep.mubr.f32.mxu0 0.0
    %10118 = vmatmul.mubr.f32.gmra.mrb[0].mxu0 %v10051
    %v10119 = vpop.f32.mrb[0].mxu0
    %v10120 = vadd.f32 0.0, %v10119
    %v10121 = vpop.f32.mrb[0].mxu0
    %v10122 = vadd.f32 0.0, %v10121
    %10123 = vdwg.mxu0
    %10124 = vmatprep.subr.mxu0 %v10043
    %10125 = vmatpush1.msra.mxu0 %v10042
    %10126 = vmatprep.subr.mxu0 %v10047
    %10127 = vmatpush1.msra.mxu0 %v10046
    %10128 = vmatprep.subr.mxu0 0.0
    %10129 = vmatpush1.msra.mxu0 0.0
    %10130 = vmatprep.subr.mxu0 0.0
    %10131 = vmatpush1.msra.mxu0 0.0
    %10132 = vmatprep.subr.mxu0 0.0
    %10133 = vmatpush1.msra.mxu0 0.0
    %10134 = vmatprep.subr.mxu0 0.0
    %10135 = vmatpush1.msra.mxu0 0.0
    %10136 = vmatprep.subr.mxu0 0.0
    %10137 = vmatpush1.msra.mxu0 0.0
    %10138 = vmatprep.subr.mxu0 0.0
    %10139 = vmatpush1.msra.mxu0 0.0
    %10140 = vmatprep.subr.mxu0 0.0
    %10141 = vmatpush1.msra.mxu0 0.0
    %10142 = vmatprep.subr.mxu0 0.0
    %10143 = vmatpush1.msra.mxu0 0.0
    %10144 = vmatprep.subr.mxu0 0.0
    %10145 = vmatpush1.msra.mxu0 0.0
    %10146 = vmatprep.subr.mxu0 0.0
    %10147 = vmatpush1.msra.mxu0 0.0
    %10148 = vmatprep.subr.mxu0 0.0
    %10149 = vmatpush1.msra.mxu0 0.0
    %10150 = vmatprep.subr.mxu0 0.0
    %10151 = vmatpush1.msra.mxu0 0.0
    %10152 = vmatprep.subr.mxu0 0.0
    %10153 = vmatpush1.msra.mxu0 0.0
    %10154 = vmatprep.subr.mxu0 0.0
    %10155 = vmatpush1.msra.mxu0 0.0
    %10156 = vmatprep.subr.mxu0 0.0
    %10157 = vmatpush1.msra.mxu0 0.0
    %10158 = vmatprep.subr.mxu0 0.0
    %10159 = vmatpush1.msra.mxu0 0.0
    %10160 = vmatprep.subr.mxu0 0.0
    %10161 = vmatpush1.msra.mxu0 0.0
    %10162 = vmatprep.subr.mxu0 0.0
    %10163 = vmatpush1.msra.mxu0 0.0
    %10164 = vmatprep.subr.mxu0 0.0
    %10165 = vmatpush1.msra.mxu0 0.0
    %10166 = vmatprep.subr.mxu0 0.0
    %10167 = vmatpush1.msra.mxu0 0.0
    %10168 = vmatprep.subr.mxu0 0.0
    %10169 = vmatpush1.msra.mxu0 0.0
    %10170 = vmatprep.subr.mxu0 0.0
    %10171 = vmatpush1.msra.mxu0 0.0
    %10172 = vmatprep.subr.mxu0 0.0
    %10173 = vmatpush1.msra.mxu0 0.0
    %10174 = vmatprep.subr.mxu0 0.0
    %10175 = vmatpush1.msra.mxu0 0.0
    %10176 = vmatprep.subr.mxu0 0.0
    %10177 = vmatpush1.msra.mxu0 0.0
    %10178 = vmatprep.subr.mxu0 0.0
    %10179 = vmatpush1.msra.mxu0 0.0
    %10180 = vmatprep.subr.mxu0 0.0
    %10181 = vmatpush1.msra.mxu0 0.0
    %10182 = vmatprep.subr.mxu0 0.0
    %10183 = vmatpush1.msra.mxu0 0.0
    %10184 = vmatprep.subr.mxu0 0.0
    %10185 = vmatpush1.msra.mxu0 0.0
    %10186 = vmatprep.subr.mxu0 0.0
    %10187 = vmatpush1.msra.mxu0 0.0
    %10188 = vmatprep.mubr.f32.mxu0 0.0
    %10189 = vmatmul.mubr.f32.gmra.mrb[0].mxu0 %v10051
    %v10190 = vpop.f32.mrb[0].mxu0
    %v10191 = vadd.f32 0.0, %v10190
    %v10192 = vpop.f32.mrb[0].mxu0
    %v10193 = vadd.f32 0.0, %v10192
    %10194 = vdwg.mxu0
    %v10195 = vld [vmem:[%s73] sm:$0xff]
    %v10196 = vld [vmem:[%s73 + $0x8] sm:$0xff]
    %v10197 = vld [vmem:[%s73 + $0x10] sm:$0xff]
    %v10198 = vld [vmem:[%s73 + $0x18] sm:$0xff]
    %v10199 = vld [vmem:[%s73 + $0x20] sm:$0xff]
    %v10200 = vld [vmem:[%s73 + $0x28] sm:$0xff]
    %v10201 = vld [vmem:[%s73 + $0x30] sm:$0xff]
    %v10202 = vld [vmem:[%s73 + $0x38] sm:$0xff]
    %v10203 = vld [vmem:[%s73 + $0x40] sm:$0xff]
    %v10204 = vld [vmem:[%s73 + $0x48] sm:$0xff]
    %v10205 = vld [vmem:[%s73 + $0x50] sm:$0xff]
    %v10206 = vld [vmem:[%s73 + $0x58] sm:$0xff]
    %v10207 = vld [vmem:[%s73 + $0x60] sm:$0xff]
    %v10208 = vld [vmem:[%s73 + $0x68] sm:$0xff]
    %v10209 = vld [vmem:[%s73 + $0x70] sm:$0xff]
    %v10210 = vld [vmem:[%s73 + $0x78] sm:$0xff]
    %v10211 = vld [vmem:[%s73 + $0x80] sm:$0xff]
    %v10212 = vld [vmem:[%s73 + $0x88] sm:$0xff]
    %v10213 = vld [vmem:[%s73 + $0x90] sm:$0xff]
    %v10214 = vld [vmem:[%s73 + $0x98] sm:$0xff]
    %v10215 = vld [vmem:[%s73 + $0xa0] sm:$0xff]
    %v10216 = vld [vmem:[%s73 + $0xa8] sm:$0xff]
    %v10217 = vld [vmem:[%s73 + $0xb0] sm:$0xff]
    %v10218 = vld [vmem:[%s73 + $0xb8] sm:$0xff]
    %v10219 = vld [vmem:[%s73 + $0xc0] sm:$0xff]
    %v10220 = vld [vmem:[%s73 + $0xc8] sm:$0xff]
    %v10221 = vld [vmem:[%s73 + $0xd0] sm:$0xff]
    %v10222 = vld [vmem:[%s73 + $0xd8] sm:$0xff]
    %v10223 = vld [vmem:[%s73 + $0xe0] sm:$0xff]
    %v10224 = vld [vmem:[%s73 + $0xe8] sm:$0xff]
    %v10225 = vld [vmem:[%s73 + $0xf0] sm:$0xff]
    %v10226 = vld [vmem:[%s73 + $0xf8] sm:$0xff]
    %v10227 = vld [vmem:[%s73 + $0x100] sm:$0xff]
    %v10228 = vld [vmem:[%s73 + $0x108] sm:$0xff]
    %v10229 = vld [vmem:[%s73 + $0x110] sm:$0xff]
    %v10230 = vld [vmem:[%s73 + $0x118] sm:$0xff]
    %v10231 = vld [vmem:[%s73 + $0x120] sm:$0xff]
    %v10232 = vld [vmem:[%s73 + $0x128] sm:$0xff]
    %v10233 = vld [vmem:[%s73 + $0x130] sm:$0xff]
    %v10234 = vld [vmem:[%s73 + $0x138] sm:$0xff]
    %v10235 = vld [vmem:[%s73 + $0x140] sm:$0xff]
    %v10236 = vld [vmem:[%s73 + $0x148] sm:$0xff]
    %v10237 = vld [vmem:[%s73 + $0x150] sm:$0xff]
    %v10238 = vld [vmem:[%s73 + $0x158] sm:$0xff]
    %v10239 = vld [vmem:[%s73 + $0x160] sm:$0xff]
    %v10240 = vld [vmem:[%s73 + $0x168] sm:$0xff]
    %v10241 = vld [vmem:[%s73 + $0x170] sm:$0xff]
    %v10242 = vld [vmem:[%s73 + $0x178] sm:$0xff]
    %v10243 = vld [vmem:[%s73 + $0x180] sm:$0xff]
    %v10244 = vld [vmem:[%s73 + $0x188] sm:$0xff]
    %v10245 = vld [vmem:[%s73 + $0x190] sm:$0xff]
    %v10246 = vld [vmem:[%s73 + $0x198] sm:$0xff]
    %v10247 = vld [vmem:[%s73 + $0x1a0] sm:$0xff]
    %v10248 = vld [vmem:[%s73 + $0x1a8] sm:$0xff]
    %v10249 = vld [vmem:[%s73 + $0x1b0] sm:$0xff]
    %v10250 = vld [vmem:[%s73 + $0x1b8] sm:$0xff]
    %v10251 = vld [vmem:[%s73 + $0x1c0] sm:$0xff]
    %v10252 = vld [vmem:[%s73 + $0x1c8] sm:$0xff]
    %v10253 = vld [vmem:[%s73 + $0x1d0] sm:$0xff]
    %v10254 = vld [vmem:[%s73 + $0x1d8] sm:$0xff]
    %v10255 = vld [vmem:[%s73 + $0x1e0] sm:$0xff]
    %v10256 = vld [vmem:[%s73 + $0x1e8] sm:$0xff]
    %v10257 = vld [vmem:[%s73 + $0x1f0] sm:$0xff]
    %v10258 = vld [vmem:[%s73 + $0x1f8] sm:$0xff]
    %v10259 = vld [vmem:[#allocation55] sm:$0x1]
    %v10261 = vlaneseq
    %v10262 = vshrl.u32 %v10261, 7
    %v10263 = vsub.s32 0, %v10262
    %v10264 = vrot.slane %v10259, %v10263
    %10266 = vmatprep.subr.mxu0 0.0
    %10267 = vmatpush1.msra.mxu0 %v10195
    %10268 = vmatprep.subr.mxu0 0.0
    %10269 = vmatpush1.msra.mxu0 %v10196
    %10270 = vmatprep.subr.mxu0 0.0
    %10271 = vmatpush1.msra.mxu0 %v10197
    %10272 = vmatprep.subr.mxu0 0.0
    %10273 = vmatpush1.msra.mxu0 %v10198
    %10274 = vmatprep.subr.mxu0 0.0
    %10275 = vmatpush1.msra.mxu0 %v10199
    %10276 = vmatprep.subr.mxu0 0.0
    %10277 = vmatpush1.msra.mxu0 %v10200
    %10278 = vmatprep.subr.mxu0 0.0
    %10279 = vmatpush1.msra.mxu0 %v10201
    %10280 = vmatprep.subr.mxu0 0.0
    %10281 = vmatpush1.msra.mxu0 %v10202
    %10282 = vmatprep.subr.mxu0 0.0
    %10283 = vmatpush1.msra.mxu0 %v10203
    %10284 = vmatprep.subr.mxu0 0.0
    %10285 = vmatpush1.msra.mxu0 %v10204
    %10286 = vmatprep.subr.mxu0 0.0
    %10287 = vmatpush1.msra.mxu0 %v10205
    %10288 = vmatprep.subr.mxu0 0.0
    %10289 = vmatpush1.msra.mxu0 %v10206
    %10290 = vmatprep.subr.mxu0 0.0
    %10291 = vmatpush1.msra.mxu0 %v10207
    %10292 = vmatprep.subr.mxu0 0.0
    %10293 = vmatpush1.msra.mxu0 %v10208
    %10294 = vmatprep.subr.mxu0 0.0
    %10295 = vmatpush1.msra.mxu0 %v10209
    %10296 = vmatprep.subr.mxu0 0.0
    %10297 = vmatpush1.msra.mxu0 %v10210
    %10298 = vmatprep.subr.mxu0 0.0
    %10299 = vmatpush1.msra.mxu0 %v10211
    %10300 = vmatprep.subr.mxu0 0.0
    %10301 = vmatpush1.msra.mxu0 %v10212
    %10302 = vmatprep.subr.mxu0 0.0
    %10303 = vmatpush1.msra.mxu0 %v10213
    %10304 = vmatprep.subr.mxu0 0.0
    %10305 = vmatpush1.msra.mxu0 %v10214
    %10306 = vmatprep.subr.mxu0 0.0
    %10307 = vmatpush1.msra.mxu0 %v10215
    %10308 = vmatprep.subr.mxu0 0.0
    %10309 = vmatpush1.msra.mxu0 %v10216
    %10310 = vmatprep.subr.mxu0 0.0
    %10311 = vmatpush1.msra.mxu0 %v10217
    %10312 = vmatprep.subr.mxu0 0.0
    %10313 = vmatpush1.msra.mxu0 %v10218
    %10314 = vmatprep.subr.mxu0 0.0
    %10315 = vmatpush1.msra.mxu0 %v10219
    %10316 = vmatprep.subr.mxu0 0.0
    %10317 = vmatpush1.msra.mxu0 %v10220
    %10318 = vmatprep.subr.mxu0 0.0
    %10319 = vmatpush1.msra.mxu0 %v10221
    %10320 = vmatprep.subr.mxu0 0.0
    %10321 = vmatpush1.msra.mxu0 %v10222
    %10322 = vmatprep.subr.mxu0 0.0
    %10323 = vmatpush1.msra.mxu0 %v10223
    %10324 = vmatprep.subr.mxu0 0.0
    %10325 = vmatpush1.msra.mxu0 %v10224
    %10326 = vmatprep.subr.mxu0 0.0
    %10327 = vmatpush1.msra.mxu0 %v10225
    %10328 = vmatprep.subr.mxu0 0.0
    %10329 = vmatpush1.msra.mxu0 %v10226
    %10330 = vmatprep.mubr.f32.mxu0 %v10122
    %10331 = vmatmul.mubr.f32.gmra.mrb[0].mxu0 %v10120
    %v10332 = vpop.f32.mrb[0].mxu0
    %v10333 = vadd.f32 %v10264, %v10332
    %v10334 = vpop.f32.mrb[0].mxu0
    %10335 = vdwg.mxu0
    %10336 = vmatprep.subr.mxu0 0.0
    %10337 = vmatpush1.msra.mxu0 %v10227
    %10338 = vmatprep.subr.mxu0 0.0
    %10339 = vmatpush1.msra.mxu0 %v10228
    %10340 = vmatprep.subr.mxu0 0.0
    %10341 = vmatpush1.msra.mxu0 %v10229
    %10342 = vmatprep.subr.mxu0 0.0
    %10343 = vmatpush1.msra.mxu0 %v10230
    %10344 = vmatprep.subr.mxu0 0.0
    %10345 = vmatpush1.msra.mxu0 %v10231
    %10346 = vmatprep.subr.mxu0 0.0
    %10347 = vmatpush1.msra.mxu0 %v10232
    %10348 = vmatprep.subr.mxu0 0.0
    %10349 = vmatpush1.msra.mxu0 %v10233
    %10350 = vmatprep.subr.mxu0 0.0
    %10351 = vmatpush1.msra.mxu0 %v10234
    %10352 = vmatprep.subr.mxu0 0.0
    %10353 = vmatpush1.msra.mxu0 %v10235
    %10354 = vmatprep.subr.mxu0 0.0
    %10355 = vmatpush1.msra.mxu0 %v10236
    %10356 = vmatprep.subr.mxu0 0.0
    %10357 = vmatpush1.msra.mxu0 %v10237
    %10358 = vmatprep.subr.mxu0 0.0
    %10359 = vmatpush1.msra.mxu0 %v10238
    %10360 = vmatprep.subr.mxu0 0.0
    %10361 = vmatpush1.msra.mxu0 %v10239
    %10362 = vmatprep.subr.mxu0 0.0
    %10363 = vmatpush1.msra.mxu0 %v10240
    %10364 = vmatprep.subr.mxu0 0.0
    %10365 = vmatpush1.msra.mxu0 %v10241
    %10366 = vmatprep.subr.mxu0 0.0
    %10367 = vmatpush1.msra.mxu0 %v10242
    %10368 = vmatprep.subr.mxu0 0.0
    %10369 = vmatpush1.msra.mxu0 %v10243
    %10370 = vmatprep.subr.mxu0 0.0
    %10371 = vmatpush1.msra.mxu0 %v10244
    %10372 = vmatprep.subr.mxu0 0.0
    %10373 = vmatpush1.msra.mxu0 %v10245
    %10374 = vmatprep.subr.mxu0 0.0
    %10375 = vmatpush1.msra.mxu0 %v10246
    %10376 = vmatprep.subr.mxu0 0.0
    %10377 = vmatpush1.msra.mxu0 %v10247
    %10378 = vmatprep.subr.mxu0 0.0
    %10379 = vmatpush1.msra.mxu0 %v10248
    %10380 = vmatprep.subr.mxu0 0.0
    %10381 = vmatpush1.msra.mxu0 %v10249
    %10382 = vmatprep.subr.mxu0 0.0
    %10383 = vmatpush1.msra.mxu0 %v10250
    %10384 = vmatprep.subr.mxu0 0.0
    %10385 = vmatpush1.msra.mxu0 %v10251
    %10386 = vmatprep.subr.mxu0 0.0
    %10387 = vmatpush1.msra.mxu0 %v10252
    %10388 = vmatprep.subr.mxu0 0.0
    %10389 = vmatpush1.msra.mxu0 %v10253
    %10390 = vmatprep.subr.mxu0 0.0
    %10391 = vmatpush1.msra.mxu0 %v10254
    %10392 = vmatprep.subr.mxu0 0.0
    %10393 = vmatpush1.msra.mxu0 %v10255
    %10394 = vmatprep.subr.mxu0 0.0
    %10395 = vmatpush1.msra.mxu0 %v10256
    %10396 = vmatprep.subr.mxu0 0.0
    %10397 = vmatpush1.msra.mxu0 %v10257
    %10398 = vmatprep.subr.mxu0 0.0
    %10399 = vmatpush1.msra.mxu0 %v10258
    %10400 = vmatprep.mubr.f32.mxu0 %v10193
    %10401 = vmatmul.mubr.f32.gmra.mrb[0].mxu0 %v10191
    %v10402 = vpop.f32.mrb[0].mxu0
    %v10403 = vadd.f32 %v10333, %v10402
    %v10404 = vpop.f32.mrb[0].mxu0
    %10405 = vdwg.mxu0
    %vm10406 = vcmask 74752
    %10407 = vst.msk [vmem:[#allocation57] sm:$0x3] %vm10406, %v10403
    // Predicated region
    $region282: #{forward.1} parent=1 // pred_check
      _
    $region283: #{forward.1} parent=1 // pred_check_branch
      %10409 = sbr.rel (0) target = $region285
    $region284: #{forward.1} parent=1 // pred_region
      %s10411 = ssub.s32 32, 32
      %10412 = vsyncadd [#allocation9], %s10411
      %s10414 = sshll.u32 [#allocation57], 4
      %s10415 = int_to_ptr.vmem [resolvable:$true] %s10414
      %10417 = dma.vmem_to_hbm [thread:$0]  %s10415, 32, %s77, [#allocation9]
    $region285: #{forward.1} parent=1 // pred_fallthru
      _
    // Predicated region
    $region286: #{forward.1} parent=1 // pred_check
      _
    $region287: #{forward.1} parent=1 // pred_check_branch
      %10419 = sbr.rel (0) target = $region289
    $region288: #{forward.1} parent=1 // pred_region
      %10420 = dma.done [#allocation9], 32
    $region289: #{forward.1} parent=1 // pred_fallthru
      _
    %10421 = vsyncpa [#allocation8], 1
    %10422 = vsyncpa [#allocation11], 1
    %10423 = vsyncpa [#allocation14], 1
    %10424 = vsyncpa [#allocation17], 1
    %10425 = vsyncpa [#allocation20], 1
    %10426 = vsyncpa [#allocation23], 1
    %10427 = vsyncpa [#allocation26], 1
    %10428 = vsyncpa [#allocation29], 1
    %10429 = vsyncpa [#allocation32], 1
    %10430 = vsyncpa [#allocation35], 1
    %10431 = vsyncpa [#allocation38], 1
    %10432 = vsyncpa [#allocation41], 1
    %10433 = vsyncpa [#allocation44], 1
    %10434 = vsyncpa [#allocation47], 1
    %10435 = vsyncpa [#allocation50], 1
    %10436 = vsyncpa [#allocation53], 1
    %10437 = vsyncpa [#allocation56], 1
    %10438 = vsyncpa [#allocation9], 1

</llo_original>
